<compile_context>
chip_gen: v6e
topology: v6e:2x2x1
jax: 0.10.0
libtpu: 0.0.40
codegen_flags: <defaults>
</compile_context>

<pallas_src>
import numpy as np
import jax
import jax.numpy as jnp
from jax.experimental import pallas as pl
from jax.experimental.pallas import tpu as pltpu

BN_EPS = 1e-5


def _const0(nd):
    # index_map returning block index 0 along every axis (avoids late-binding closures)
    return lambda *_: (0,) * nd


# ------------------------------- Pallas kernel -------------------------------
def _network_kernel(x_ref,
                    w0_ref, b0_ref, w1_ref, b1_ref,
                    w2_ref, b2_ref, w3_ref, b3_ref,
                    wc_ref, bc_ref,
                    feat_ref, out_ref):
    h = x_ref[...]                                                   # (B, F) f32
    for w_ref, b_ref in ((w0_ref, b0_ref), (w1_ref, b1_ref),
                         (w2_ref, b2_ref), (w3_ref, b3_ref)):
        # Linear with BN folded in (weights stored bf16, accumulate f32 on MXU)
        y = jnp.dot(h.astype(jnp.bfloat16), w_ref[...],
                    preferred_element_type=jnp.float32) + b_ref[...]
        h = jnp.maximum(y, 0.0)                                      # ReLU
    feat_ref[...] = h                                                # (B, 256) f32

    logits = jnp.dot(h.astype(jnp.bfloat16), wc_ref[...],
                     preferred_element_type=jnp.float32) + bc_ref[...]
    # numerically-stable sigmoid: sigmoid(x) = 0.5 * (1 + tanh(x/2))  (EUP op, no overflow)
    out_ref[...] = 0.5 * (jnp.tanh(0.5 * logits) + 1.0)


def network_forward(p, x):
    B = x.shape[0]
    C = p["bc"].shape[1]
    H_last = p["layers"][-1][0].shape[1]

    args = [x]
    for w, b in p["layers"]:
        args += [w, b]
    args += [p["wc"], p["bc"]]

    in_specs = [pl.BlockSpec(a.shape, _const0(a.ndim)) for a in args]
    out_specs = (pl.BlockSpec((B, H_last), _const0(2)),
                 pl.BlockSpec((B, C), _const0(2)))
    out_shape = (jax.ShapeDtypeStruct((B, H_last), jnp.float32),
                 jax.ShapeDtypeStruct((B, C), jnp.float32))
    return pl.pallas_call(
        _network_kernel,
        grid=(1,),
        in_specs=in_specs,
        out_specs=out_specs,
        out_shape=out_shape,
        compiler_params=pltpu.CompilerParams(
            dimension_semantics=("arbitrary",),
            vmem_limit_bytes=48 * 1024 * 1024),
    )(*args)


@jax.jit
def network(params, x):
    x_feat, out = network_forward(params, x)
    return x_feat, out


# ------------------------------ parameter init -------------------------------
def init_params(key, feature_dim=256, class_num=6):
    f32 = jnp.float32
    keys = iter(jax.random.split(key, 16))

    def linear(kin, kout):                 # PyTorch nn.Linear default init, stored (in, out)
        kw, kb = jax.random.split(next(keys))
        bound = 1.0 / np.sqrt(kin)
        w = jax.random.uniform(kw, (kin, kout), f32, -bound, bound)
        b = jax.random.uniform(kb, (1, kout), f32, -bound, bound)
        return w, b

    def fold_bn(w, b, n):
        # BatchNorm1d eval-mode defaults: gamma=1, beta=0, running_mean=0, running_var=1
        gamma = jnp.ones((n,), f32)
        beta = jnp.zeros((n,), f32)
        mean = jnp.zeros((n,), f32)
        var = jnp.ones((n,), f32)
        scale = gamma / jnp.sqrt(var + BN_EPS)
        shift = beta - mean * scale
        w_f = (w * scale[None, :]).astype(jnp.bfloat16)       # bf16 weights in HBM
        b_f = (b * scale[None, :] + shift[None, :]).astype(f32)
        return w_f, b_f

    dims = [feature_dim, 2048, 1024, 512, 256]
    layers = []
    for din, dout in zip(dims[:-1], dims[1:]):
        w, b = linear(din, dout)
        layers.append(fold_bn(w, b, dout))
    wc, bc = linear(256, class_num)
    return {"layers": layers,
            "wc": wc.astype(jnp.bfloat16), "bc": bc.astype(f32)}


# ------------------------------ pure-JAX reference ---------------------------
def ref_forward(p, x):
    # Mirrors the kernel's numerics (same folded bf16 weights, f32 accumulation).
    h = x
    for w, b in p["layers"]:
        y = jnp.dot(h.astype(jnp.bfloat16), w,
                    preferred_element_type=jnp.float32) + b
        h = jnp.maximum(y, 0.0)
    logits = jnp.dot(h.astype(jnp.bfloat16), p["wc"],
                     preferred_element_type=jnp.float32) + p["bc"]
    return h, jax.nn.sigmoid(logits)


if __name__ == "__main__":
    B, F, C = 2, 32, 6                      # batch, feature_dim, class_num (small shapes)
    root = jax.random.PRNGKey(0)
    pkey, dkey = jax.random.split(root)
    params = init_params(pkey, feature_dim=F, class_num=C)
    x = jax.random.normal(dkey, (B, F), jnp.float32)

    x_feat, out = jax.block_until_ready(network(params, x))
    assert x_feat.shape == (B, 256) and x_feat.dtype == jnp.float32
    assert out.shape == (B, C) and out.dtype == jnp.float32

    ref_feat, ref_out = ref_forward(params, x)
    np.testing.assert_allclose(np.asarray(x_feat), np.asarray(ref_feat), rtol=1e-2, atol=1e-2)
    np.testing.assert_allclose(np.asarray(out), np.asarray(ref_out), rtol=1e-2, atol=1e-2)

    print("KERNEL_OK")
</pallas_src>

<mosaic_0001>
module attributes {stable_mosaic.version = 11 : i64} {
  func.func @_network_kernel(%arg0: i32, %arg1: memref<2x32xf32, #tpu.memory_space<vmem>>, %arg2: memref<32x2048xbf16, #tpu.memory_space<vmem>>, %arg3: memref<1x2048xf32, #tpu.memory_space<vmem>>, %arg4: memref<2048x1024xbf16, #tpu.memory_space<vmem>>, %arg5: memref<1x1024xf32, #tpu.memory_space<vmem>>, %arg6: memref<1024x512xbf16, #tpu.memory_space<vmem>>, %arg7: memref<1x512xf32, #tpu.memory_space<vmem>>, %arg8: memref<512x256xbf16, #tpu.memory_space<vmem>>, %arg9: memref<1x256xf32, #tpu.memory_space<vmem>>, %arg10: memref<256x6xbf16, #tpu.memory_space<vmem>>, %arg11: memref<1x6xf32, #tpu.memory_space<vmem>>, %arg12: memref<2x256xf32, #tpu.memory_space<vmem>>, %arg13: memref<2x6xf32, #tpu.memory_space<vmem>>) attributes {dimension_semantics = [#tpu.dimension_semantics<arbitrary>], iteration_bounds = array<i64: 1>, scalar_prefetch = 0 : i64, scratch_operands = 0 : i64, tpu.core_type = #tpu.core_type<tc>, window_params = [{pipeline_mode = #tpu.pipeline_mode<synchronous>, transform_indices = @transform_0, window_bounds = array<i64: 2, 32>}, {pipeline_mode = #tpu.pipeline_mode<synchronous>, transform_indices = @transform_1, window_bounds = array<i64: 32, 2048>}, {pipeline_mode = #tpu.pipeline_mode<synchronous>, transform_indices = @transform_2, window_bounds = array<i64: 1, 2048>}, {pipeline_mode = #tpu.pipeline_mode<synchronous>, transform_indices = @transform_3, window_bounds = array<i64: 2048, 1024>}, {pipeline_mode = #tpu.pipeline_mode<synchronous>, transform_indices = @transform_4, window_bounds = array<i64: 1, 1024>}, {pipeline_mode = #tpu.pipeline_mode<synchronous>, transform_indices = @transform_5, window_bounds = array<i64: 1024, 512>}, {pipeline_mode = #tpu.pipeline_mode<synchronous>, transform_indices = @transform_6, window_bounds = array<i64: 1, 512>}, {pipeline_mode = #tpu.pipeline_mode<synchronous>, transform_indices = @transform_7, window_bounds = array<i64: 512, 256>}, {pipeline_mode = #tpu.pipeline_mode<synchronous>, transform_indices = @transform_8, window_bounds = array<i64: 1, 256>}, {pipeline_mode = #tpu.pipeline_mode<synchronous>, transform_indices = @transform_9, window_bounds = array<i64: 256, 6>}, {pipeline_mode = #tpu.pipeline_mode<synchronous>, transform_indices = @transform_10, window_bounds = array<i64: 1, 6>}, {pipeline_mode = #tpu.pipeline_mode<synchronous>, transform_indices = @transform_11, window_bounds = array<i64: 2, 256>}, {pipeline_mode = #tpu.pipeline_mode<synchronous>, transform_indices = @transform_12, window_bounds = array<i64: 2, 6>}]} {
    %c0 = arith.constant 0 : index
    %c0_0 = arith.constant 0 : index
    %0 = vector.load %arg1[%c0, %c0_0] : memref<2x32xf32, #tpu.memory_space<vmem>>, vector<2x32xf32>
    %1 = arith.truncf %0 : vector<2x32xf32> to vector<2x32xbf16>
    %c0_1 = arith.constant 0 : index
    %c0_2 = arith.constant 0 : index
    %2 = vector.load %arg2[%c0_1, %c0_2] : memref<32x2048xbf16, #tpu.memory_space<vmem>>, vector<32x2048xbf16>
    %cst = arith.constant dense<0.000000e+00> : vector<2x2048xf32>
    %3 = tpu.matmul %1, %2, %cst {dimension_numbers = #tpu.dot_dimension_numbers<[1], [0], [0], [1], [0, 0, 1, 1], [], []>} : vector<2x32xbf16>, vector<32x2048xbf16>, vector<2x2048xf32> -> vector<2x2048xf32>
    %c0_3 = arith.constant 0 : index
    %c0_4 = arith.constant 0 : index
    %4 = vector.load %arg3[%c0_3, %c0_4] : memref<1x2048xf32, #tpu.memory_space<vmem>>, vector<1x2048xf32>
    %5 = vector.broadcast %4 : vector<1x2048xf32> to vector<2x2048xf32>
    %6 = arith.addf %3, %5 : vector<2x2048xf32>
    %cst_5 = arith.constant 0.000000e+00 : f32
    %7 = vector.broadcast %cst_5 : f32 to vector<2x2048xf32>
    %8 = arith.maximumf %6, %7 : vector<2x2048xf32>
    %9 = arith.truncf %8 : vector<2x2048xf32> to vector<2x2048xbf16>
    %c0_6 = arith.constant 0 : index
    %c0_7 = arith.constant 0 : index
    %10 = vector.load %arg4[%c0_6, %c0_7] : memref<2048x1024xbf16, #tpu.memory_space<vmem>>, vector<2048x1024xbf16>
    %cst_8 = arith.constant dense<0.000000e+00> : vector<2x1024xf32>
    %11 = tpu.matmul %9, %10, %cst_8 {dimension_numbers = #tpu.dot_dimension_numbers<[1], [0], [0], [1], [0, 0, 1, 1], [], []>} : vector<2x2048xbf16>, vector<2048x1024xbf16>, vector<2x1024xf32> -> vector<2x1024xf32>
    %c0_9 = arith.constant 0 : index
    %c0_10 = arith.constant 0 : index
    %12 = vector.load %arg5[%c0_9, %c0_10] : memref<1x1024xf32, #tpu.memory_space<vmem>>, vector<1x1024xf32>
    %13 = vector.broadcast %12 : vector<1x1024xf32> to vector<2x1024xf32>
    %14 = arith.addf %11, %13 : vector<2x1024xf32>
    %cst_11 = arith.constant 0.000000e+00 : f32
    %15 = vector.broadcast %cst_11 : f32 to vector<2x1024xf32>
    %16 = arith.maximumf %14, %15 : vector<2x1024xf32>
    %17 = arith.truncf %16 : vector<2x1024xf32> to vector<2x1024xbf16>
    %c0_12 = arith.constant 0 : index
    %c0_13 = arith.constant 0 : index
    %18 = vector.load %arg6[%c0_12, %c0_13] : memref<1024x512xbf16, #tpu.memory_space<vmem>>, vector<1024x512xbf16>
    %cst_14 = arith.constant dense<0.000000e+00> : vector<2x512xf32>
    %19 = tpu.matmul %17, %18, %cst_14 {dimension_numbers = #tpu.dot_dimension_numbers<[1], [0], [0], [1], [0, 0, 1, 1], [], []>} : vector<2x1024xbf16>, vector<1024x512xbf16>, vector<2x512xf32> -> vector<2x512xf32>
    %c0_15 = arith.constant 0 : index
    %c0_16 = arith.constant 0 : index
    %20 = vector.load %arg7[%c0_15, %c0_16] : memref<1x512xf32, #tpu.memory_space<vmem>>, vector<1x512xf32>
    %21 = vector.broadcast %20 : vector<1x512xf32> to vector<2x512xf32>
    %22 = arith.addf %19, %21 : vector<2x512xf32>
    %cst_17 = arith.constant 0.000000e+00 : f32
    %23 = vector.broadcast %cst_17 : f32 to vector<2x512xf32>
    %24 = arith.maximumf %22, %23 : vector<2x512xf32>
    %25 = arith.truncf %24 : vector<2x512xf32> to vector<2x512xbf16>
    %c0_18 = arith.constant 0 : index
    %c0_19 = arith.constant 0 : index
    %26 = vector.load %arg8[%c0_18, %c0_19] : memref<512x256xbf16, #tpu.memory_space<vmem>>, vector<512x256xbf16>
    %cst_20 = arith.constant dense<0.000000e+00> : vector<2x256xf32>
    %27 = tpu.matmul %25, %26, %cst_20 {dimension_numbers = #tpu.dot_dimension_numbers<[1], [0], [0], [1], [0, 0, 1, 1], [], []>} : vector<2x512xbf16>, vector<512x256xbf16>, vector<2x256xf32> -> vector<2x256xf32>
    %c0_21 = arith.constant 0 : index
    %c0_22 = arith.constant 0 : index
    %28 = vector.load %arg9[%c0_21, %c0_22] : memref<1x256xf32, #tpu.memory_space<vmem>>, vector<1x256xf32>
    %29 = vector.broadcast %28 : vector<1x256xf32> to vector<2x256xf32>
    %30 = arith.addf %27, %29 : vector<2x256xf32>
    %cst_23 = arith.constant 0.000000e+00 : f32
    %31 = vector.broadcast %cst_23 : f32 to vector<2x256xf32>
    %32 = arith.maximumf %30, %31 : vector<2x256xf32>
    %c0_24 = arith.constant 0 : index
    %c0_25 = arith.constant 0 : index
    %33 = vector.load %arg12[%c0_24, %c0_25] : memref<2x256xf32, #tpu.memory_space<vmem>>, vector<2x256xf32>
    tpu.vector_store %arg12[%c0_24, %c0_25], %32 {strides = array<i32>} : memref<2x256xf32, #tpu.memory_space<vmem>>, vector<2x256xf32>,
    %34 = arith.truncf %32 : vector<2x256xf32> to vector<2x256xbf16>
    %c0_26 = arith.constant 0 : index
    %c0_27 = arith.constant 0 : index
    %35 = vector.load %arg10[%c0_26, %c0_27] : memref<256x6xbf16, #tpu.memory_space<vmem>>, vector<256x6xbf16>
    %cst_28 = arith.constant dense<0.000000e+00> : vector<2x6xf32>
    %36 = tpu.matmul %34, %35, %cst_28 {dimension_numbers = #tpu.dot_dimension_numbers<[1], [0], [0], [1], [0, 0, 1, 1], [], []>} : vector<2x256xbf16>, vector<256x6xbf16>, vector<2x6xf32> -> vector<2x6xf32>
    %c0_29 = arith.constant 0 : index
    %c0_30 = arith.constant 0 : index
    %37 = vector.load %arg11[%c0_29, %c0_30] : memref<1x6xf32, #tpu.memory_space<vmem>>, vector<1x6xf32>
    %38 = vector.broadcast %37 : vector<1x6xf32> to vector<2x6xf32>
    %39 = arith.addf %36, %38 : vector<2x6xf32>
    %cst_31 = arith.constant 5.000000e-01 : f32
    %40 = vector.broadcast %cst_31 : f32 to vector<2x6xf32>
    %41 = arith.mulf %40, %39 : vector<2x6xf32>
    %42 = math.tanh %41 : vector<2x6xf32>
    %cst_32 = arith.constant 1.000000e+00 : f32
    %43 = vector.broadcast %cst_32 : f32 to vector<2x6xf32>
    %44 = arith.addf %42, %43 : vector<2x6xf32>
    %cst_33 = arith.constant 5.000000e-01 : f32
    %45 = vector.broadcast %cst_33 : f32 to vector<2x6xf32>
    %46 = arith.mulf %45, %44 : vector<2x6xf32>
    %c0_34 = arith.constant 0 : index
    %c0_35 = arith.constant 0 : index
    %47 = vector.load %arg13[%c0_34, %c0_35] : memref<2x6xf32, #tpu.memory_space<vmem>>, vector<2x6xf32>
    tpu.vector_store %arg13[%c0_34, %c0_35], %46 {strides = array<i32>} : memref<2x6xf32, #tpu.memory_space<vmem>>, vector<2x6xf32>,
    return
  }
  func.func @transform_0(%arg0: i32) -> (i32, i32) {
    %c0_i32 = arith.constant 0 : i32
    %c0_i32_0 = arith.constant 0 : i32
    %c0_i32_1 = arith.constant 0 : i32
    return %c0_i32, %c0_i32_0 : i32, i32
  }
  func.func @transform_1(%arg0: i32) -> (i32, i32) {
    %c0_i32 = arith.constant 0 : i32
    %c0_i32_0 = arith.constant 0 : i32
    %c0_i32_1 = arith.constant 0 : i32
    return %c0_i32, %c0_i32_0 : i32, i32
  }
  func.func @transform_2(%arg0: i32) -> (i32, i32) {
    %c0_i32 = arith.constant 0 : i32
    %c0_i32_0 = arith.constant 0 : i32
    %c0_i32_1 = arith.constant 0 : i32
    return %c0_i32, %c0_i32_0 : i32, i32
  }
  func.func @transform_3(%arg0: i32) -> (i32, i32) {
    %c0_i32 = arith.constant 0 : i32
    %c0_i32_0 = arith.constant 0 : i32
    %c0_i32_1 = arith.constant 0 : i32
    return %c0_i32, %c0_i32_0 : i32, i32
  }
  func.func @transform_4(%arg0: i32) -> (i32, i32) {
    %c0_i32 = arith.constant 0 : i32
    %c0_i32_0 = arith.constant 0 : i32
    %c0_i32_1 = arith.constant 0 : i32
    return %c0_i32, %c0_i32_0 : i32, i32
  }
  func.func @transform_5(%arg0: i32) -> (i32, i32) {
    %c0_i32 = arith.constant 0 : i32
    %c0_i32_0 = arith.constant 0 : i32
    %c0_i32_1 = arith.constant 0 : i32
    return %c0_i32, %c0_i32_0 : i32, i32
  }
  func.func @transform_6(%arg0: i32) -> (i32, i32) {
    %c0_i32 = arith.constant 0 : i32
    %c0_i32_0 = arith.constant 0 : i32
    %c0_i32_1 = arith.constant 0 : i32
    return %c0_i32, %c0_i32_0 : i32, i32
  }
  func.func @transform_7(%arg0: i32) -> (i32, i32) {
    %c0_i32 = arith.constant 0 : i32
    %c0_i32_0 = arith.constant 0 : i32
    %c0_i32_1 = arith.constant 0 : i32
    return %c0_i32, %c0_i32_0 : i32, i32
  }
  func.func @transform_8(%arg0: i32) -> (i32, i32) {
    %c0_i32 = arith.constant 0 : i32
    %c0_i32_0 = arith.constant 0 : i32
    %c0_i32_1 = arith.constant 0 : i32
    return %c0_i32, %c0_i32_0 : i32, i32
  }
  func.func @transform_9(%arg0: i32) -> (i32, i32) {
    %c0_i32 = arith.constant 0 : i32
    %c0_i32_0 = arith.constant 0 : i32
    %c0_i32_1 = arith.constant 0 : i32
    return %c0_i32, %c0_i32_0 : i32, i32
  }
  func.func @transform_10(%arg0: i32) -> (i32, i32) {
    %c0_i32 = arith.constant 0 : i32
    %c0_i32_0 = arith.constant 0 : i32
    %c0_i32_1 = arith.constant 0 : i32
    return %c0_i32, %c0_i32_0 : i32, i32
  }
  func.func @transform_11(%arg0: i32) -> (i32, i32) {
    %c0_i32 = arith.constant 0 : i32
    %c0_i32_0 = arith.constant 0 : i32
    %c0_i32_1 = arith.constant 0 : i32
    return %c0_i32, %c0_i32_0 : i32, i32
  }
  func.func @transform_12(%arg0: i32) -> (i32, i32) {
    %c0_i32 = arith.constant 0 : i32
    %c0_i32_0 = arith.constant 0 : i32
    %c0_i32_1 = arith.constant 0 : i32
    return %c0_i32, %c0_i32_0 : i32, i32
  }
}

</mosaic_0001>

<llo_original>
// kernel: network.1
$region0: #{network.1}
  #allocation0 [shape = 'u32[]', space=smem, size = 0x4, offset = 0x4, fixed_abs, tag = 'smem constant byte address 0x4 - core index']
  #allocation1 [shape = 'u32[144,128]{1,0:T(1,128)}', space=vmem, size = 0x12000, scoped, tag = 'internal scratch']
  %s0 = inlined_call_operand.hbm [shape: f32[2,32], index: 0, kind: input, shape index: {}]
  %s1 = inlined_call_operand.hbm [shape: bf16[32,2048], index: 1, kind: input, shape index: {}]
  %s2 = inlined_call_operand.hbm [shape: f32[1,2048], index: 2, kind: input, shape index: {}]
  %s3 = inlined_call_operand.hbm [shape: bf16[2048,1024], index: 3, kind: input, shape index: {}]
  %s4 = inlined_call_operand.hbm [shape: f32[1,1024], index: 4, kind: input, shape index: {}]
  %s5 = inlined_call_operand.hbm [shape: bf16[1024,512], index: 5, kind: input, shape index: {}]
  %s6 = inlined_call_operand.hbm [shape: f32[1,512], index: 6, kind: input, shape index: {}]
  %s7 = inlined_call_operand.hbm [shape: bf16[512,256], index: 7, kind: input, shape index: {}]
  %s8 = inlined_call_operand.hbm [shape: f32[1,256], index: 8, kind: input, shape index: {}]
  %s9 = inlined_call_operand.vmem [shape: bf16[256,6], index: 9, kind: input, shape index: {}]
  %s10 = inlined_call_operand.hbm [shape: f32[1,6], index: 10, kind: input, shape index: {}]
  %s11 = inlined_call_operand.hbm [shape: f32[2,256], index: 11, kind: output, shape index: {0}]
  %s12 = inlined_call_operand.hbm [shape: f32[2,6], index: 12, kind: output, shape index: {1}]
  %13 = xla_tuple %s11, %s12
  %s14 = sld [smem:[#allocation0]]
  $region102: #{network.1} parent=0
    _
  %s16 = ssub.s32 1, %s14
  %s17 = scalar_select 0, %s16, %s14
  $region1: #{network.1} parent=0
    #allocation2 [shape = 'u8[1024]{0}', space=vmem, size = 0x400, scoped, tag = 'input window, operand 0, single buffered']
    #allocation3 [shape = 's32[1]{0}', space=sflag, size = 0x4, scoped, tag = 'scoped memory for network.1']
    #allocation4 [shape = 's32[1]{0}', space=sflag, size = 0x4, scoped, tag = 'scoped memory for network.1']
    #allocation5 [shape = 'u8[131072]{0}', space=vmem, size = 0x20000, scoped, tag = 'input window, operand 1, single buffered']
    #allocation6 [shape = 's32[1]{0}', space=sflag, size = 0x4, scoped, tag = 'scoped memory for network.1']
    #allocation7 [shape = 'u8[8192]{0}', space=vmem, size = 0x2000, scoped, tag = 'input window, operand 2, single buffered']
    #allocation8 [shape = 'u8[4194304]{0}', space=vmem, size = 0x400000, scoped, tag = 'input window, operand 3, single buffered']
    #allocation9 [shape = 's32[1]{0}', space=sflag, size = 0x4, scoped, tag = 'scoped memory for network.1']
    #allocation10 [shape = 'u8[4096]{0}', space=vmem, size = 0x1000, scoped, tag = 'input window, operand 4, single buffered']
    #allocation11 [shape = 'u8[1048576]{0}', space=vmem, size = 0x100000, scoped, tag = 'input window, operand 5, single buffered']
    #allocation12 [shape = 's32[1]{0}', space=sflag, size = 0x4, scoped, tag = 'scoped memory for network.1']
    #allocation13 [shape = 'u8[2048]{0}', space=vmem, size = 0x800, scoped, tag = 'input window, operand 6, single buffered']
    #allocation14 [shape = 'u8[262144]{0}', space=vmem, size = 0x40000, scoped, tag = 'input window, operand 7, single buffered']
    #allocation15 [shape = 's32[1]{0}', space=sflag, size = 0x4, scoped, tag = 'scoped memory for network.1']
    #allocation16 [shape = 'u8[1024]{0}', space=vmem, size = 0x400, scoped, tag = 'input window, operand 8, single buffered']
    #allocation17 [shape = 'u8[512]{0}', space=vmem, size = 0x400, scoped, tag = 'input window, operand 10, single buffered']
    #allocation18 [shape = 's32[1]{0}', space=sflag, size = 0x4, scoped, tag = 'scoped memory for network.1']
    #allocation19 [shape = 'u8[2048]{0}', space=vmem, size = 0x800, scoped, tag = 'output window, operand 0, single buffered']
    #allocation20 [shape = 'u8[1024]{0}', space=vmem, size = 0x400, scoped, tag = 'output window, operand 1, single buffered']
    #allocation21 [shape = 's32[1]{0}', space=sflag, size = 0x4, scoped, tag = 'scoped memory for network.1']
    %18 = vsyncpa [#allocation3], 0
    %19 = vsyncpa [#allocation6], 0
    %20 = vsyncpa [#allocation9], 0
    %21 = vsyncpa [#allocation12], 0
    %22 = vsyncpa [#allocation15], 0
    %23 = vsyncpa [#allocation18], 0
    %24 = vsyncpa [#allocation4], 0
    %25 = vsyncpa [#allocation21], 0
    // Predicated region
    $region2: #{network.1} parent=1 // pred_check
      _
    $region3: #{network.1} parent=1 // pred_check_branch
      %27 = sbr.rel (0) target = $region5
    $region4: #{network.1} parent=1 // pred_region
      %s29 = ssub.s32 32, 32
      %30 = vsyncadd [#allocation3], %s29
      %s32 = sshll.u32 [#allocation2], 4
      %s33 = int_to_ptr.vmem [resolvable:$true] %s32
      %35 = dma.hbm_to_vmem [thread:$0]  %s0, 32, %s33, [#allocation3]
    $region5: #{network.1} parent=1 // pred_fallthru
      _
    // Predicated region
    $region6: #{network.1} parent=1 // pred_check
      _
    $region7: #{network.1} parent=1 // pred_check_branch
      %37 = sbr.rel (0) target = $region9
    $region8: #{network.1} parent=1 // pred_region
      %s39 = ssub.s32 4096, 4096
      %40 = vsyncadd [#allocation6], %s39
      %s41 = sshll.u32 [#allocation5], 4
      %s42 = int_to_ptr.vmem [resolvable:$true] %s41
      %47 = dma.hbm_to_vmem [thread:$0]  %s1, 4096, %s42, [#allocation6], 1024, 1024, 64
    $region9: #{network.1} parent=1 // pred_fallthru
      _
    // Predicated region
    $region10: #{network.1} parent=1 // pred_check
      _
    $region11: #{network.1} parent=1 // pred_check_branch
      %49 = sbr.rel (0) target = $region13
    $region12: #{network.1} parent=1 // pred_region
      %s51 = ssub.s32 256, 256
      %52 = vsyncadd [#allocation6], %s51
      %s54 = sshll.u32 [#allocation7], 4
      %s55 = int_to_ptr.vmem [resolvable:$true] %s54
      %57 = dma.hbm_to_vmem [thread:$0]  %s2, 256, %s55, [#allocation6]
    $region13: #{network.1} parent=1 // pred_fallthru
      _
    // Predicated region
    $region14: #{network.1} parent=1 // pred_check
      _
    $region15: #{network.1} parent=1 // pred_check_branch
      %59 = sbr.rel (0) target = $region17
    $region16: #{network.1} parent=1 // pred_region
      %s61 = ssub.s32 131072, 131072
      %62 = vsyncadd [#allocation9], %s61
      %s63 = sshll.u32 [#allocation8], 4
      %s64 = int_to_ptr.vmem [resolvable:$true] %s63
      %69 = dma.hbm_to_vmem [thread:$0]  %s3, 131072, %s64, [#allocation9], 512, 512, 32
    $region17: #{network.1} parent=1 // pred_fallthru
      _
    // Predicated region
    $region18: #{network.1} parent=1 // pred_check
      _
    $region19: #{network.1} parent=1 // pred_check_branch
      %71 = sbr.rel (0) target = $region21
    $region20: #{network.1} parent=1 // pred_region
      %s73 = ssub.s32 128, 128
      %74 = vsyncadd [#allocation9], %s73
      %s76 = sshll.u32 [#allocation10], 4
      %s77 = int_to_ptr.vmem [resolvable:$true] %s76
      %79 = dma.hbm_to_vmem [thread:$0]  %s4, 128, %s77, [#allocation9]
    $region21: #{network.1} parent=1 // pred_fallthru
      _
    // Predicated region
    $region22: #{network.1} parent=1 // pred_check
      _
    $region23: #{network.1} parent=1 // pred_check_branch
      %81 = sbr.rel (0) target = $region25
    $region24: #{network.1} parent=1 // pred_region
      %s83 = ssub.s32 32768, 32768
      %84 = vsyncadd [#allocation12], %s83
      %s85 = sshll.u32 [#allocation11], 4
      %s86 = int_to_ptr.vmem [resolvable:$true] %s85
      %91 = dma.hbm_to_vmem [thread:$0]  %s5, 32768, %s86, [#allocation12], 256, 256, 16
    $region25: #{network.1} parent=1 // pred_fallthru
      _
    // Predicated region
    $region26: #{network.1} parent=1 // pred_check
      _
    $region27: #{network.1} parent=1 // pred_check_branch
      %93 = sbr.rel (0) target = $region29
    $region28: #{network.1} parent=1 // pred_region
      %s95 = ssub.s32 64, 64
      %96 = vsyncadd [#allocation12], %s95
      %s98 = sshll.u32 [#allocation13], 4
      %s99 = int_to_ptr.vmem [resolvable:$true] %s98
      %101 = dma.hbm_to_vmem [thread:$0]  %s6, 64, %s99, [#allocation12]
    $region29: #{network.1} parent=1 // pred_fallthru
      _
    // Predicated region
    $region30: #{network.1} parent=1 // pred_check
      _
    $region31: #{network.1} parent=1 // pred_check_branch
      %103 = sbr.rel (0) target = $region33
    $region32: #{network.1} parent=1 // pred_region
      %s105 = ssub.s32 8192, 8192
      %106 = vsyncadd [#allocation15], %s105
      %s107 = sshll.u32 [#allocation14], 4
      %s108 = int_to_ptr.vmem [resolvable:$true] %s107
      %113 = dma.hbm_to_vmem [thread:$0]  %s7, 8192, %s108, [#allocation15], 128, 128, 8
    $region33: #{network.1} parent=1 // pred_fallthru
      _
    // Predicated region
    $region34: #{network.1} parent=1 // pred_check
      _
    $region35: #{network.1} parent=1 // pred_check_branch
      %115 = sbr.rel (0) target = $region37
    $region36: #{network.1} parent=1 // pred_region
      %s117 = ssub.s32 32, 32
      %118 = vsyncadd [#allocation15], %s117
      %s120 = sshll.u32 [#allocation16], 4
      %s121 = int_to_ptr.vmem [resolvable:$true] %s120
      %123 = dma.hbm_to_vmem [thread:$0]  %s8, 32, %s121, [#allocation15]
    $region37: #{network.1} parent=1 // pred_fallthru
      _
    // Predicated region
    $region38: #{network.1} parent=1 // pred_check
      _
    $region39: #{network.1} parent=1 // pred_check_branch
      %125 = sbr.rel (0) target = $region41
    $region40: #{network.1} parent=1 // pred_region
      _
    $region41: #{network.1} parent=1 // pred_fallthru
      _
    // Predicated region
    $region42: #{network.1} parent=1 // pred_check
      _
    $region43: #{network.1} parent=1 // pred_check_branch
      %127 = sbr.rel (0) target = $region45
    $region44: #{network.1} parent=1 // pred_region
      %s129 = ssub.s32 16, 16
      %130 = vsyncadd [#allocation18], %s129
      %s132 = sshll.u32 [#allocation17], 4
      %s133 = int_to_ptr.vmem [resolvable:$true] %s132
      %135 = dma.hbm_to_vmem [thread:$0]  %s10, 16, %s133, [#allocation18]
    $region45: #{network.1} parent=1 // pred_fallthru
      _
    // Predicated region
    $region46: #{network.1} parent=1 // pred_check
      _
    $region47: #{network.1} parent=1 // pred_check_branch
      %137 = sbr.rel (0) target = $region49
    $region48: #{network.1} parent=1 // pred_region
      %138 = dma.done [#allocation3], 32
    $region49: #{network.1} parent=1 // pred_fallthru
      _
    // Predicated region
    $region50: #{network.1} parent=1 // pred_check
      _
    $region51: #{network.1} parent=1 // pred_check_branch
      %140 = sbr.rel (0) target = $region53
    $region52: #{network.1} parent=1 // pred_region
      %141 = dma.done [#allocation6], 4096
    $region53: #{network.1} parent=1 // pred_fallthru
      _
    // Predicated region
    $region54: #{network.1} parent=1 // pred_check
      _
    $region55: #{network.1} parent=1 // pred_check_branch
      %143 = sbr.rel (0) target = $region57
    $region56: #{network.1} parent=1 // pred_region
      %144 = dma.done [#allocation6], 256
    $region57: #{network.1} parent=1 // pred_fallthru
      _
    // Predicated region
    $region58: #{network.1} parent=1 // pred_check
      _
    $region59: #{network.1} parent=1 // pred_check_branch
      %146 = sbr.rel (0) target = $region61
    $region60: #{network.1} parent=1 // pred_region
      %147 = dma.done [#allocation9], 131072
    $region61: #{network.1} parent=1 // pred_fallthru
      _
    // Predicated region
    $region62: #{network.1} parent=1 // pred_check
      _
    $region63: #{network.1} parent=1 // pred_check_branch
      %149 = sbr.rel (0) target = $region65
    $region64: #{network.1} parent=1 // pred_region
      %150 = dma.done [#allocation9], 128
    $region65: #{network.1} parent=1 // pred_fallthru
      _
    // Predicated region
    $region66: #{network.1} parent=1 // pred_check
      _
    $region67: #{network.1} parent=1 // pred_check_branch
      %152 = sbr.rel (0) target = $region69
    $region68: #{network.1} parent=1 // pred_region
      %153 = dma.done [#allocation12], 32768
    $region69: #{network.1} parent=1 // pred_fallthru
      _
    // Predicated region
    $region70: #{network.1} parent=1 // pred_check
      _
    $region71: #{network.1} parent=1 // pred_check_branch
      %155 = sbr.rel (0) target = $region73
    $region72: #{network.1} parent=1 // pred_region
      %156 = dma.done [#allocation12], 64
    $region73: #{network.1} parent=1 // pred_fallthru
      _
    // Predicated region
    $region74: #{network.1} parent=1 // pred_check
      _
    $region75: #{network.1} parent=1 // pred_check_branch
      %158 = sbr.rel (0) target = $region77
    $region76: #{network.1} parent=1 // pred_region
      %159 = dma.done [#allocation15], 8192
    $region77: #{network.1} parent=1 // pred_fallthru
      _
    // Predicated region
    $region78: #{network.1} parent=1 // pred_check
      _
    $region79: #{network.1} parent=1 // pred_check_branch
      %161 = sbr.rel (0) target = $region81
    $region80: #{network.1} parent=1 // pred_region
      %162 = dma.done [#allocation15], 32
    $region81: #{network.1} parent=1 // pred_fallthru
      _
    // Predicated region
    $region82: #{network.1} parent=1 // pred_check
      _
    $region83: #{network.1} parent=1 // pred_check_branch
      %164 = sbr.rel (0) target = $region85
    $region84: #{network.1} parent=1 // pred_region
      %165 = dma.done [#allocation18], 16
    $region85: #{network.1} parent=1 // pred_fallthru
      _
    %v167 = vld [vmem:[#allocation2] sm:$0x3]
    %v168 = vpack.c.bf16 %v167, %v167
    %v169 = vld [vmem:[#allocation5] sm:$0xff]
    %v170 = vld [vmem:[#allocation5 + $0x8] sm:$0xff]
    %v171 = vld [vmem:[#allocation5 + $0x10] sm:$0xff]
    %v172 = vld [vmem:[#allocation5 + $0x18] sm:$0xff]
    %v173 = vld [vmem:[#allocation5 + $0x20] sm:$0xff]
    %v174 = vld [vmem:[#allocation5 + $0x28] sm:$0xff]
    %v175 = vld [vmem:[#allocation5 + $0x30] sm:$0xff]
    %v176 = vld [vmem:[#allocation5 + $0x38] sm:$0xff]
    %v177 = vld [vmem:[#allocation5 + $0x40] sm:$0xff]
    %v178 = vld [vmem:[#allocation5 + $0x48] sm:$0xff]
    %v179 = vld [vmem:[#allocation5 + $0x50] sm:$0xff]
    %v180 = vld [vmem:[#allocation5 + $0x58] sm:$0xff]
    %v181 = vld [vmem:[#allocation5 + $0x60] sm:$0xff]
    %v182 = vld [vmem:[#allocation5 + $0x68] sm:$0xff]
    %v183 = vld [vmem:[#allocation5 + $0x70] sm:$0xff]
    %v184 = vld [vmem:[#allocation5 + $0x78] sm:$0xff]
    %v185 = vld [vmem:[#allocation5 + $0x80] sm:$0xff]
    %v186 = vld [vmem:[#allocation5 + $0x88] sm:$0xff]
    %v187 = vld [vmem:[#allocation5 + $0x90] sm:$0xff]
    %v188 = vld [vmem:[#allocation5 + $0x98] sm:$0xff]
    %v189 = vld [vmem:[#allocation5 + $0xa0] sm:$0xff]
    %v190 = vld [vmem:[#allocation5 + $0xa8] sm:$0xff]
    %v191 = vld [vmem:[#allocation5 + $0xb0] sm:$0xff]
    %v192 = vld [vmem:[#allocation5 + $0xb8] sm:$0xff]
    %v193 = vld [vmem:[#allocation5 + $0xc0] sm:$0xff]
    %v194 = vld [vmem:[#allocation5 + $0xc8] sm:$0xff]
    %v195 = vld [vmem:[#allocation5 + $0xd0] sm:$0xff]
    %v196 = vld [vmem:[#allocation5 + $0xd8] sm:$0xff]
    %v197 = vld [vmem:[#allocation5 + $0xe0] sm:$0xff]
    %v198 = vld [vmem:[#allocation5 + $0xe8] sm:$0xff]
    %v199 = vld [vmem:[#allocation5 + $0xf0] sm:$0xff]
    %v200 = vld [vmem:[#allocation5 + $0xf8] sm:$0xff]
    %v201 = vld [vmem:[#allocation7] sm:$0xff]
    %v202 = vld [vmem:[#allocation7 + $0x8] sm:$0xff]
    %v205 = vlaneseq
    %v206 = vshrl.u32 %v205, 7
    %v207 = vsub.s32 0, %v206
    %v208 = vrot.slane %v201, %v207
    %v209 = vlaneseq
    %v210 = vshrl.u32 %v209, 7
    %v211 = vsub.s32 1, %v210
    %v212 = vrot.slane %v201, %v211
    %v213 = vlaneseq
    %v214 = vshrl.u32 %v213, 7
    %v215 = vsub.s32 2, %v214
    %v216 = vrot.slane %v201, %v215
    %v217 = vlaneseq
    %v218 = vshrl.u32 %v217, 7
    %v219 = vsub.s32 3, %v218
    %v220 = vrot.slane %v201, %v219
    %v221 = vlaneseq
    %v222 = vshrl.u32 %v221, 7
    %v223 = vsub.s32 4, %v222
    %v224 = vrot.slane %v201, %v223
    %v225 = vlaneseq
    %v226 = vshrl.u32 %v225, 7
    %v227 = vsub.s32 5, %v226
    %v228 = vrot.slane %v201, %v227
    %v229 = vlaneseq
    %v230 = vshrl.u32 %v229, 7
    %v231 = vsub.s32 6, %v230
    %v232 = vrot.slane %v201, %v231
    %v233 = vlaneseq
    %v234 = vshrl.u32 %v233, 7
    %v235 = vsub.s32 7, %v234
    %v236 = vrot.slane %v201, %v235
    %v237 = vlaneseq
    %v238 = vshrl.u32 %v237, 7
    %v239 = vsub.s32 0, %v238
    %v240 = vrot.slane %v202, %v239
    %v241 = vlaneseq
    %v242 = vshrl.u32 %v241, 7
    %v243 = vsub.s32 1, %v242
    %v244 = vrot.slane %v202, %v243
    %v245 = vlaneseq
    %v246 = vshrl.u32 %v245, 7
    %v247 = vsub.s32 2, %v246
    %v248 = vrot.slane %v202, %v247
    %v249 = vlaneseq
    %v250 = vshrl.u32 %v249, 7
    %v251 = vsub.s32 3, %v250
    %v252 = vrot.slane %v202, %v251
    %v253 = vlaneseq
    %v254 = vshrl.u32 %v253, 7
    %v255 = vsub.s32 4, %v254
    %v256 = vrot.slane %v202, %v255
    %v257 = vlaneseq
    %v258 = vshrl.u32 %v257, 7
    %v259 = vsub.s32 5, %v258
    %v260 = vrot.slane %v202, %v259
    %v261 = vlaneseq
    %v262 = vshrl.u32 %v261, 7
    %v263 = vsub.s32 6, %v262
    %v264 = vrot.slane %v202, %v263
    %v265 = vlaneseq
    %v266 = vshrl.u32 %v265, 7
    %v267 = vsub.s32 7, %v266
    %v268 = vrot.slane %v202, %v267
    %v317 = vunpack.c.l.b16 %v169
    %v318 = vunpack.c.h.b16 %v169
    %v319 = vunpack.c.l.b16 %v170
    %v320 = vunpack.c.h.b16 %v170
    %v321 = vunpack.c.l.b16 %v171
    %v322 = vunpack.c.h.b16 %v171
    %v323 = vunpack.c.l.b16 %v172
    %v324 = vunpack.c.h.b16 %v172
    %v325 = vunpack.c.l.b16 %v173
    %v326 = vunpack.c.h.b16 %v173
    %v327 = vunpack.c.l.b16 %v174
    %v328 = vunpack.c.h.b16 %v174
    %v329 = vunpack.c.l.b16 %v175
    %v330 = vunpack.c.h.b16 %v175
    %v331 = vunpack.c.l.b16 %v176
    %v332 = vunpack.c.h.b16 %v176
    %v333 = vunpack.c.l.b16 %v177
    %v334 = vunpack.c.h.b16 %v177
    %v335 = vunpack.c.l.b16 %v178
    %v336 = vunpack.c.h.b16 %v178
    %v337 = vunpack.c.l.b16 %v179
    %v338 = vunpack.c.h.b16 %v179
    %v339 = vunpack.c.l.b16 %v180
    %v340 = vunpack.c.h.b16 %v180
    %v341 = vunpack.c.l.b16 %v181
    %v342 = vunpack.c.h.b16 %v181
    %v343 = vunpack.c.l.b16 %v182
    %v344 = vunpack.c.h.b16 %v182
    %v345 = vunpack.c.l.b16 %v183
    %v346 = vunpack.c.h.b16 %v183
    %v347 = vunpack.c.l.b16 %v184
    %v348 = vunpack.c.h.b16 %v184
    %v349 = vunpack.c.l.b16 %v185
    %v350 = vunpack.c.h.b16 %v185
    %v351 = vunpack.c.l.b16 %v186
    %v352 = vunpack.c.h.b16 %v186
    %v353 = vunpack.c.l.b16 %v187
    %v354 = vunpack.c.h.b16 %v187
    %v355 = vunpack.c.l.b16 %v188
    %v356 = vunpack.c.h.b16 %v188
    %v357 = vunpack.c.l.b16 %v189
    %v358 = vunpack.c.h.b16 %v189
    %v359 = vunpack.c.l.b16 %v190
    %v360 = vunpack.c.h.b16 %v190
    %v361 = vunpack.c.l.b16 %v191
    %v362 = vunpack.c.h.b16 %v191
    %v363 = vunpack.c.l.b16 %v192
    %v364 = vunpack.c.h.b16 %v192
    %v365 = vunpack.c.l.b16 %v193
    %v366 = vunpack.c.h.b16 %v193
    %v367 = vunpack.c.l.b16 %v194
    %v368 = vunpack.c.h.b16 %v194
    %v369 = vunpack.c.l.b16 %v195
    %v370 = vunpack.c.h.b16 %v195
    %v371 = vunpack.c.l.b16 %v196
    %v372 = vunpack.c.h.b16 %v196
    %v373 = vunpack.c.l.b16 %v197
    %v374 = vunpack.c.h.b16 %v197
    %v375 = vunpack.c.l.b16 %v198
    %v376 = vunpack.c.h.b16 %v198
    %v377 = vunpack.c.l.b16 %v199
    %v378 = vunpack.c.h.b16 %v199
    %v379 = vunpack.c.l.b16 %v200
    %v380 = vunpack.c.h.b16 %v200
    %v381 = vpack.c.b16 %v333, %v317
    %v382 = vpack.c.b16 %v334, %v318
    %v383 = vpack.c.b16 %v335, %v319
    %v384 = vpack.c.b16 %v336, %v320
    %v385 = vpack.c.b16 %v337, %v321
    %v386 = vpack.c.b16 %v338, %v322
    %v387 = vpack.c.b16 %v339, %v323
    %v388 = vpack.c.b16 %v340, %v324
    %v389 = vpack.c.b16 %v341, %v325
    %v390 = vpack.c.b16 %v342, %v326
    %v391 = vpack.c.b16 %v343, %v327
    %v392 = vpack.c.b16 %v344, %v328
    %v393 = vpack.c.b16 %v345, %v329
    %v394 = vpack.c.b16 %v346, %v330
    %v395 = vpack.c.b16 %v347, %v331
    %v396 = vpack.c.b16 %v348, %v332
    %v397 = vpack.c.b16 %v365, %v349
    %v398 = vpack.c.b16 %v366, %v350
    %v399 = vpack.c.b16 %v367, %v351
    %v400 = vpack.c.b16 %v368, %v352
    %v401 = vpack.c.b16 %v369, %v353
    %v402 = vpack.c.b16 %v370, %v354
    %v403 = vpack.c.b16 %v371, %v355
    %v404 = vpack.c.b16 %v372, %v356
    %v405 = vpack.c.b16 %v373, %v357
    %v406 = vpack.c.b16 %v374, %v358
    %v407 = vpack.c.b16 %v375, %v359
    %v408 = vpack.c.b16 %v376, %v360
    %v409 = vpack.c.b16 %v377, %v361
    %v410 = vpack.c.b16 %v378, %v362
    %v411 = vpack.c.b16 %v379, %v363
    %v412 = vpack.c.b16 %v380, %v364
    %vm445 = vcmask 261120
    %v447 = vsel %vm445, %v168, 0
    %449 = vmatprep.subr.bf16.mxu0 0
    %450 = vmatpush1.bf16.msra.mxu0 0
    %451 = vmatprep.subr.bf16.mxu0 0
    %452 = vmatpush1.bf16.msra.mxu0 0
    %453 = vmatprep.subr.bf16.mxu0 0
    %454 = vmatpush1.bf16.msra.mxu0 0
    %455 = vmatprep.subr.bf16.mxu0 0
    %456 = vmatpush1.bf16.msra.mxu0 0
    %457 = vmatprep.subr.bf16.mxu0 0
    %458 = vmatpush1.bf16.msra.mxu0 0
    %459 = vmatprep.subr.bf16.mxu0 0
    %460 = vmatpush1.bf16.msra.mxu0 0
    %461 = vmatprep.subr.bf16.mxu0 %v398
    %462 = vmatpush1.bf16.msra.mxu0 %v397
    %463 = vmatprep.subr.bf16.mxu0 %v382
    %464 = vmatpush1.bf16.msra.mxu0 %v381
    %465 = vmatprep.subr.bf16.mxu0 0
    %466 = vmatpush2.bf16.msra.mxu0 0
    %467 = vmatprep.subr.bf16.mxu0 0
    %468 = vmatpush2.bf16.msra.mxu0 0
    %469 = vmatprep.subr.bf16.mxu0 0
    %470 = vmatpush2.bf16.msra.mxu0 0
    %471 = vmatprep.subr.bf16.mxu0 0
    %472 = vmatpush2.bf16.msra.mxu0 0
    %473 = vmatprep.subr.bf16.mxu0 0
    %474 = vmatpush2.bf16.msra.mxu0 0
    %475 = vmatprep.subr.bf16.mxu0 0
    %476 = vmatpush2.bf16.msra.mxu0 0
    %477 = vmatprep.subr.bf16.mxu0 0
    %478 = vmatpush2.bf16.msra.mxu0 0
    %479 = vmatprep.subr.bf16.mxu0 0
    %480 = vmatpush2.bf16.msra.mxu0 0
    %481 = vmatprep.mubr.bf16.mxu0 0
    %482 = vmatmul.mubr.bf16.gmra.mxu0 %v447
    %v483 = vpop.f32.mrf.mxu0
    %v484 = vadd.f32 %v208, %v483
    %v485 = vpop.f32.mrf.mxu0
    %v486 = vadd.f32 %v212, %v485
    %v487 = vpop.f32.mrf.mxu0
    %v488 = vpop.f32.mrf.mxu0
    %489 = vdwg.mxu0
    %490 = vmatprep.subr.bf16.mxu0 0
    %491 = vmatpush1.bf16.msra.mxu0 0
    %492 = vmatprep.subr.bf16.mxu0 0
    %493 = vmatpush1.bf16.msra.mxu0 0
    %494 = vmatprep.subr.bf16.mxu0 0
    %495 = vmatpush1.bf16.msra.mxu0 0
    %496 = vmatprep.subr.bf16.mxu0 0
    %497 = vmatpush1.bf16.msra.mxu0 0
    %498 = vmatprep.subr.bf16.mxu0 0
    %499 = vmatpush1.bf16.msra.mxu0 0
    %500 = vmatprep.subr.bf16.mxu0 0
    %501 = vmatpush1.bf16.msra.mxu0 0
    %502 = vmatprep.subr.bf16.mxu0 %v400
    %503 = vmatpush1.bf16.msra.mxu0 %v399
    %504 = vmatprep.subr.bf16.mxu0 %v384
    %505 = vmatpush1.bf16.msra.mxu0 %v383
    %506 = vmatprep.subr.bf16.mxu0 0
    %507 = vmatpush2.bf16.msra.mxu0 0
    %508 = vmatprep.subr.bf16.mxu0 0
    %509 = vmatpush2.bf16.msra.mxu0 0
    %510 = vmatprep.subr.bf16.mxu0 0
    %511 = vmatpush2.bf16.msra.mxu0 0
    %512 = vmatprep.subr.bf16.mxu0 0
    %513 = vmatpush2.bf16.msra.mxu0 0
    %514 = vmatprep.subr.bf16.mxu0 0
    %515 = vmatpush2.bf16.msra.mxu0 0
    %516 = vmatprep.subr.bf16.mxu0 0
    %517 = vmatpush2.bf16.msra.mxu0 0
    %518 = vmatprep.subr.bf16.mxu0 0
    %519 = vmatpush2.bf16.msra.mxu0 0
    %520 = vmatprep.subr.bf16.mxu0 0
    %521 = vmatpush2.bf16.msra.mxu0 0
    %522 = vmatprep.mubr.bf16.mxu0 0
    %523 = vmatmul.mubr.bf16.gmra.mxu0 %v447
    %v524 = vpop.f32.mrf.mxu0
    %v525 = vadd.f32 %v216, %v524
    %v526 = vpop.f32.mrf.mxu0
    %v527 = vadd.f32 %v220, %v526
    %v528 = vpop.f32.mrf.mxu0
    %v529 = vpop.f32.mrf.mxu0
    %530 = vdwg.mxu0
    %531 = vmatprep.subr.bf16.mxu0 0
    %532 = vmatpush1.bf16.msra.mxu0 0
    %533 = vmatprep.subr.bf16.mxu0 0
    %534 = vmatpush1.bf16.msra.mxu0 0
    %535 = vmatprep.subr.bf16.mxu0 0
    %536 = vmatpush1.bf16.msra.mxu0 0
    %537 = vmatprep.subr.bf16.mxu0 0
    %538 = vmatpush1.bf16.msra.mxu0 0
    %539 = vmatprep.subr.bf16.mxu0 0
    %540 = vmatpush1.bf16.msra.mxu0 0
    %541 = vmatprep.subr.bf16.mxu0 0
    %542 = vmatpush1.bf16.msra.mxu0 0
    %543 = vmatprep.subr.bf16.mxu0 %v402
    %544 = vmatpush1.bf16.msra.mxu0 %v401
    %545 = vmatprep.subr.bf16.mxu0 %v386
    %546 = vmatpush1.bf16.msra.mxu0 %v385
    %547 = vmatprep.subr.bf16.mxu0 0
    %548 = vmatpush2.bf16.msra.mxu0 0
    %549 = vmatprep.subr.bf16.mxu0 0
    %550 = vmatpush2.bf16.msra.mxu0 0
    %551 = vmatprep.subr.bf16.mxu0 0
    %552 = vmatpush2.bf16.msra.mxu0 0
    %553 = vmatprep.subr.bf16.mxu0 0
    %554 = vmatpush2.bf16.msra.mxu0 0
    %555 = vmatprep.subr.bf16.mxu0 0
    %556 = vmatpush2.bf16.msra.mxu0 0
    %557 = vmatprep.subr.bf16.mxu0 0
    %558 = vmatpush2.bf16.msra.mxu0 0
    %559 = vmatprep.subr.bf16.mxu0 0
    %560 = vmatpush2.bf16.msra.mxu0 0
    %561 = vmatprep.subr.bf16.mxu0 0
    %562 = vmatpush2.bf16.msra.mxu0 0
    %563 = vmatprep.mubr.bf16.mxu0 0
    %564 = vmatmul.mubr.bf16.gmra.mxu0 %v447
    %v565 = vpop.f32.mrf.mxu0
    %v566 = vadd.f32 %v224, %v565
    %v567 = vpop.f32.mrf.mxu0
    %v568 = vadd.f32 %v228, %v567
    %v569 = vpop.f32.mrf.mxu0
    %v570 = vpop.f32.mrf.mxu0
    %571 = vdwg.mxu0
    %572 = vmatprep.subr.bf16.mxu0 0
    %573 = vmatpush1.bf16.msra.mxu0 0
    %574 = vmatprep.subr.bf16.mxu0 0
    %575 = vmatpush1.bf16.msra.mxu0 0
    %576 = vmatprep.subr.bf16.mxu0 0
    %577 = vmatpush1.bf16.msra.mxu0 0
    %578 = vmatprep.subr.bf16.mxu0 0
    %579 = vmatpush1.bf16.msra.mxu0 0
    %580 = vmatprep.subr.bf16.mxu0 0
    %581 = vmatpush1.bf16.msra.mxu0 0
    %582 = vmatprep.subr.bf16.mxu0 0
    %583 = vmatpush1.bf16.msra.mxu0 0
    %584 = vmatprep.subr.bf16.mxu0 %v404
    %585 = vmatpush1.bf16.msra.mxu0 %v403
    %586 = vmatprep.subr.bf16.mxu0 %v388
    %587 = vmatpush1.bf16.msra.mxu0 %v387
    %588 = vmatprep.subr.bf16.mxu0 0
    %589 = vmatpush2.bf16.msra.mxu0 0
    %590 = vmatprep.subr.bf16.mxu0 0
    %591 = vmatpush2.bf16.msra.mxu0 0
    %592 = vmatprep.subr.bf16.mxu0 0
    %593 = vmatpush2.bf16.msra.mxu0 0
    %594 = vmatprep.subr.bf16.mxu0 0
    %595 = vmatpush2.bf16.msra.mxu0 0
    %596 = vmatprep.subr.bf16.mxu0 0
    %597 = vmatpush2.bf16.msra.mxu0 0
    %598 = vmatprep.subr.bf16.mxu0 0
    %599 = vmatpush2.bf16.msra.mxu0 0
    %600 = vmatprep.subr.bf16.mxu0 0
    %601 = vmatpush2.bf16.msra.mxu0 0
    %602 = vmatprep.subr.bf16.mxu0 0
    %603 = vmatpush2.bf16.msra.mxu0 0
    %604 = vmatprep.mubr.bf16.mxu0 0
    %605 = vmatmul.mubr.bf16.gmra.mxu0 %v447
    %v606 = vpop.f32.mrf.mxu0
    %v607 = vadd.f32 %v232, %v606
    %v608 = vpop.f32.mrf.mxu0
    %v609 = vadd.f32 %v236, %v608
    %v610 = vpop.f32.mrf.mxu0
    %v611 = vpop.f32.mrf.mxu0
    %612 = vdwg.mxu0
    %613 = vmatprep.subr.bf16.mxu0 0
    %614 = vmatpush1.bf16.msra.mxu0 0
    %615 = vmatprep.subr.bf16.mxu0 0
    %616 = vmatpush1.bf16.msra.mxu0 0
    %617 = vmatprep.subr.bf16.mxu0 0
    %618 = vmatpush1.bf16.msra.mxu0 0
    %619 = vmatprep.subr.bf16.mxu0 0
    %620 = vmatpush1.bf16.msra.mxu0 0
    %621 = vmatprep.subr.bf16.mxu0 0
    %622 = vmatpush1.bf16.msra.mxu0 0
    %623 = vmatprep.subr.bf16.mxu0 0
    %624 = vmatpush1.bf16.msra.mxu0 0
    %625 = vmatprep.subr.bf16.mxu0 %v406
    %626 = vmatpush1.bf16.msra.mxu0 %v405
    %627 = vmatprep.subr.bf16.mxu0 %v390
    %628 = vmatpush1.bf16.msra.mxu0 %v389
    %629 = vmatprep.subr.bf16.mxu0 0
    %630 = vmatpush2.bf16.msra.mxu0 0
    %631 = vmatprep.subr.bf16.mxu0 0
    %632 = vmatpush2.bf16.msra.mxu0 0
    %633 = vmatprep.subr.bf16.mxu0 0
    %634 = vmatpush2.bf16.msra.mxu0 0
    %635 = vmatprep.subr.bf16.mxu0 0
    %636 = vmatpush2.bf16.msra.mxu0 0
    %637 = vmatprep.subr.bf16.mxu0 0
    %638 = vmatpush2.bf16.msra.mxu0 0
    %639 = vmatprep.subr.bf16.mxu0 0
    %640 = vmatpush2.bf16.msra.mxu0 0
    %641 = vmatprep.subr.bf16.mxu0 0
    %642 = vmatpush2.bf16.msra.mxu0 0
    %643 = vmatprep.subr.bf16.mxu0 0
    %644 = vmatpush2.bf16.msra.mxu0 0
    %645 = vmatprep.mubr.bf16.mxu0 0
    %646 = vmatmul.mubr.bf16.gmra.mxu0 %v447
    %v647 = vpop.f32.mrf.mxu0
    %v648 = vadd.f32 %v240, %v647
    %v649 = vpop.f32.mrf.mxu0
    %v650 = vadd.f32 %v244, %v649
    %v651 = vpop.f32.mrf.mxu0
    %v652 = vpop.f32.mrf.mxu0
    %653 = vdwg.mxu0
    %654 = vmatprep.subr.bf16.mxu0 0
    %655 = vmatpush1.bf16.msra.mxu0 0
    %656 = vmatprep.subr.bf16.mxu0 0
    %657 = vmatpush1.bf16.msra.mxu0 0
    %658 = vmatprep.subr.bf16.mxu0 0
    %659 = vmatpush1.bf16.msra.mxu0 0
    %660 = vmatprep.subr.bf16.mxu0 0
    %661 = vmatpush1.bf16.msra.mxu0 0
    %662 = vmatprep.subr.bf16.mxu0 0
    %663 = vmatpush1.bf16.msra.mxu0 0
    %664 = vmatprep.subr.bf16.mxu0 0
    %665 = vmatpush1.bf16.msra.mxu0 0
    %666 = vmatprep.subr.bf16.mxu0 %v408
    %667 = vmatpush1.bf16.msra.mxu0 %v407
    %668 = vmatprep.subr.bf16.mxu0 %v392
    %669 = vmatpush1.bf16.msra.mxu0 %v391
    %670 = vmatprep.subr.bf16.mxu0 0
    %671 = vmatpush2.bf16.msra.mxu0 0
    %672 = vmatprep.subr.bf16.mxu0 0
    %673 = vmatpush2.bf16.msra.mxu0 0
    %674 = vmatprep.subr.bf16.mxu0 0
    %675 = vmatpush2.bf16.msra.mxu0 0
    %676 = vmatprep.subr.bf16.mxu0 0
    %677 = vmatpush2.bf16.msra.mxu0 0
    %678 = vmatprep.subr.bf16.mxu0 0
    %679 = vmatpush2.bf16.msra.mxu0 0
    %680 = vmatprep.subr.bf16.mxu0 0
    %681 = vmatpush2.bf16.msra.mxu0 0
    %682 = vmatprep.subr.bf16.mxu0 0
    %683 = vmatpush2.bf16.msra.mxu0 0
    %684 = vmatprep.subr.bf16.mxu0 0
    %685 = vmatpush2.bf16.msra.mxu0 0
    %686 = vmatprep.mubr.bf16.mxu0 0
    %687 = vmatmul.mubr.bf16.gmra.mxu0 %v447
    %v688 = vpop.f32.mrf.mxu0
    %v689 = vadd.f32 %v248, %v688
    %v690 = vpop.f32.mrf.mxu0
    %v691 = vadd.f32 %v252, %v690
    %v692 = vpop.f32.mrf.mxu0
    %v693 = vpop.f32.mrf.mxu0
    %694 = vdwg.mxu0
    %695 = vmatprep.subr.bf16.mxu0 0
    %696 = vmatpush1.bf16.msra.mxu0 0
    %697 = vmatprep.subr.bf16.mxu0 0
    %698 = vmatpush1.bf16.msra.mxu0 0
    %699 = vmatprep.subr.bf16.mxu0 0
    %700 = vmatpush1.bf16.msra.mxu0 0
    %701 = vmatprep.subr.bf16.mxu0 0
    %702 = vmatpush1.bf16.msra.mxu0 0
    %703 = vmatprep.subr.bf16.mxu0 0
    %704 = vmatpush1.bf16.msra.mxu0 0
    %705 = vmatprep.subr.bf16.mxu0 0
    %706 = vmatpush1.bf16.msra.mxu0 0
    %707 = vmatprep.subr.bf16.mxu0 %v410
    %708 = vmatpush1.bf16.msra.mxu0 %v409
    %709 = vmatprep.subr.bf16.mxu0 %v394
    %710 = vmatpush1.bf16.msra.mxu0 %v393
    %711 = vmatprep.subr.bf16.mxu0 0
    %712 = vmatpush2.bf16.msra.mxu0 0
    %713 = vmatprep.subr.bf16.mxu0 0
    %714 = vmatpush2.bf16.msra.mxu0 0
    %715 = vmatprep.subr.bf16.mxu0 0
    %716 = vmatpush2.bf16.msra.mxu0 0
    %717 = vmatprep.subr.bf16.mxu0 0
    %718 = vmatpush2.bf16.msra.mxu0 0
    %719 = vmatprep.subr.bf16.mxu0 0
    %720 = vmatpush2.bf16.msra.mxu0 0
    %721 = vmatprep.subr.bf16.mxu0 0
    %722 = vmatpush2.bf16.msra.mxu0 0
    %723 = vmatprep.subr.bf16.mxu0 0
    %724 = vmatpush2.bf16.msra.mxu0 0
    %725 = vmatprep.subr.bf16.mxu0 0
    %726 = vmatpush2.bf16.msra.mxu0 0
    %727 = vmatprep.mubr.bf16.mxu0 0
    %728 = vmatmul.mubr.bf16.gmra.mxu0 %v447
    %v729 = vpop.f32.mrf.mxu0
    %v730 = vadd.f32 %v256, %v729
    %v731 = vpop.f32.mrf.mxu0
    %v732 = vadd.f32 %v260, %v731
    %v733 = vpop.f32.mrf.mxu0
    %v734 = vpop.f32.mrf.mxu0
    %735 = vdwg.mxu0
    %736 = vmatprep.subr.bf16.mxu0 0
    %737 = vmatpush1.bf16.msra.mxu0 0
    %738 = vmatprep.subr.bf16.mxu0 0
    %739 = vmatpush1.bf16.msra.mxu0 0
    %740 = vmatprep.subr.bf16.mxu0 0
    %741 = vmatpush1.bf16.msra.mxu0 0
    %742 = vmatprep.subr.bf16.mxu0 0
    %743 = vmatpush1.bf16.msra.mxu0 0
    %744 = vmatprep.subr.bf16.mxu0 0
    %745 = vmatpush1.bf16.msra.mxu0 0
    %746 = vmatprep.subr.bf16.mxu0 0
    %747 = vmatpush1.bf16.msra.mxu0 0
    %748 = vmatprep.subr.bf16.mxu0 %v412
    %749 = vmatpush1.bf16.msra.mxu0 %v411
    %750 = vmatprep.subr.bf16.mxu0 %v396
    %751 = vmatpush1.bf16.msra.mxu0 %v395
    %752 = vmatprep.subr.bf16.mxu0 0
    %753 = vmatpush2.bf16.msra.mxu0 0
    %754 = vmatprep.subr.bf16.mxu0 0
    %755 = vmatpush2.bf16.msra.mxu0 0
    %756 = vmatprep.subr.bf16.mxu0 0
    %757 = vmatpush2.bf16.msra.mxu0 0
    %758 = vmatprep.subr.bf16.mxu0 0
    %759 = vmatpush2.bf16.msra.mxu0 0
    %760 = vmatprep.subr.bf16.mxu0 0
    %761 = vmatpush2.bf16.msra.mxu0 0
    %762 = vmatprep.subr.bf16.mxu0 0
    %763 = vmatpush2.bf16.msra.mxu0 0
    %764 = vmatprep.subr.bf16.mxu0 0
    %765 = vmatpush2.bf16.msra.mxu0 0
    %766 = vmatprep.subr.bf16.mxu0 0
    %767 = vmatpush2.bf16.msra.mxu0 0
    %768 = vmatprep.mubr.bf16.mxu0 0
    %769 = vmatmul.mubr.bf16.gmra.mxu0 %v447
    %v770 = vpop.f32.mrf.mxu0
    %v771 = vadd.f32 %v264, %v770
    %v772 = vpop.f32.mrf.mxu0
    %v773 = vadd.f32 %v268, %v772
    %v774 = vpop.f32.mrf.mxu0
    %v775 = vpop.f32.mrf.mxu0
    %776 = vdwg.mxu0
    %v777 = vmax.f32 %v484, 0.0
    %v778 = vmax.f32 %v486, 0.0
    %v779 = vmax.f32 %v525, 0.0
    %v780 = vmax.f32 %v527, 0.0
    %v781 = vmax.f32 %v566, 0.0
    %v782 = vmax.f32 %v568, 0.0
    %v783 = vmax.f32 %v607, 0.0
    %v784 = vmax.f32 %v609, 0.0
    %v785 = vmax.f32 %v648, 0.0
    %v786 = vmax.f32 %v650, 0.0
    %v787 = vmax.f32 %v689, 0.0
    %v788 = vmax.f32 %v691, 0.0
    %v789 = vmax.f32 %v730, 0.0
    %v790 = vmax.f32 %v732, 0.0
    %v791 = vmax.f32 %v771, 0.0
    %v792 = vmax.f32 %v773, 0.0
    %v793 = vpack.c.bf16 %v777, %v777
    %v794 = vpack.c.bf16 %v778, %v778
    %v795 = vpack.c.bf16 %v779, %v779
    %v796 = vpack.c.bf16 %v780, %v780
    %v797 = vpack.c.bf16 %v781, %v781
    %v798 = vpack.c.bf16 %v782, %v782
    %v799 = vpack.c.bf16 %v783, %v783
    %v800 = vpack.c.bf16 %v784, %v784
    %v801 = vpack.c.bf16 %v785, %v785
    %v802 = vpack.c.bf16 %v786, %v786
    %v803 = vpack.c.bf16 %v787, %v787
    %v804 = vpack.c.bf16 %v788, %v788
    %v805 = vpack.c.bf16 %v789, %v789
    %v806 = vpack.c.bf16 %v790, %v790
    %v807 = vpack.c.bf16 %v791, %v791
    %v808 = vpack.c.bf16 %v792, %v792
    %v809 = vld [vmem:[#allocation8] sm:$0xff]
    %v810 = vld [vmem:[#allocation8 + $0x8] sm:$0xff]
    %v811 = vld [vmem:[#allocation8 + $0x10] sm:$0xff]
    %v812 = vld [vmem:[#allocation8 + $0x18] sm:$0xff]
    %v813 = vld [vmem:[#allocation8 + $0x20] sm:$0xff]
    %v814 = vld [vmem:[#allocation8 + $0x28] sm:$0xff]
    %v815 = vld [vmem:[#allocation8 + $0x30] sm:$0xff]
    %v816 = vld [vmem:[#allocation8 + $0x38] sm:$0xff]
    %v817 = vld [vmem:[#allocation8 + $0x40] sm:$0xff]
    %v818 = vld [vmem:[#allocation8 + $0x48] sm:$0xff]
    %v819 = vld [vmem:[#allocation8 + $0x50] sm:$0xff]
    %v820 = vld [vmem:[#allocation8 + $0x58] sm:$0xff]
    %v821 = vld [vmem:[#allocation8 + $0x60] sm:$0xff]
    %v822 = vld [vmem:[#allocation8 + $0x68] sm:$0xff]
    %v823 = vld [vmem:[#allocation8 + $0x70] sm:$0xff]
    %v824 = vld [vmem:[#allocation8 + $0x78] sm:$0xff]
    %v825 = vld [vmem:[#allocation8 + $0x80] sm:$0xff]
    %v826 = vld [vmem:[#allocation8 + $0x88] sm:$0xff]
    %v827 = vld [vmem:[#allocation8 + $0x90] sm:$0xff]
    %v828 = vld [vmem:[#allocation8 + $0x98] sm:$0xff]
    %v829 = vld [vmem:[#allocation8 + $0xa0] sm:$0xff]
    %v830 = vld [vmem:[#allocation8 + $0xa8] sm:$0xff]
    %v831 = vld [vmem:[#allocation8 + $0xb0] sm:$0xff]
    %v832 = vld [vmem:[#allocation8 + $0xb8] sm:$0xff]
    %v833 = vld [vmem:[#allocation8 + $0xc0] sm:$0xff]
    %v834 = vld [vmem:[#allocation8 + $0xc8] sm:$0xff]
    %v835 = vld [vmem:[#allocation8 + $0xd0] sm:$0xff]
    %v836 = vld [vmem:[#allocation8 + $0xd8] sm:$0xff]
    %v837 = vld [vmem:[#allocation8 + $0xe0] sm:$0xff]
    %v838 = vld [vmem:[#allocation8 + $0xe8] sm:$0xff]
    %v839 = vld [vmem:[#allocation8 + $0xf0] sm:$0xff]
    %v840 = vld [vmem:[#allocation8 + $0xf8] sm:$0xff]
    %v841 = vld [vmem:[#allocation8 + $0x100] sm:$0xff]
    %v842 = vld [vmem:[#allocation8 + $0x108] sm:$0xff]
    %v843 = vld [vmem:[#allocation8 + $0x110] sm:$0xff]
    %v844 = vld [vmem:[#allocation8 + $0x118] sm:$0xff]
    %v845 = vld [vmem:[#allocation8 + $0x120] sm:$0xff]
    %v846 = vld [vmem:[#allocation8 + $0x128] sm:$0xff]
    %v847 = vld [vmem:[#allocation8 + $0x130] sm:$0xff]
    %v848 = vld [vmem:[#allocation8 + $0x138] sm:$0xff]
    %v849 = vld [vmem:[#allocation8 + $0x140] sm:$0xff]
    %v850 = vld [vmem:[#allocation8 + $0x148] sm:$0xff]
    %v851 = vld [vmem:[#allocation8 + $0x150] sm:$0xff]
    %v852 = vld [vmem:[#allocation8 + $0x158] sm:$0xff]
    %v853 = vld [vmem:[#allocation8 + $0x160] sm:$0xff]
    %v854 = vld [vmem:[#allocation8 + $0x168] sm:$0xff]
    %v855 = vld [vmem:[#allocation8 + $0x170] sm:$0xff]
    %v856 = vld [vmem:[#allocation8 + $0x178] sm:$0xff]
    %v857 = vld [vmem:[#allocation8 + $0x180] sm:$0xff]
    %v858 = vld [vmem:[#allocation8 + $0x188] sm:$0xff]
    %v859 = vld [vmem:[#allocation8 + $0x190] sm:$0xff]
    %v860 = vld [vmem:[#allocation8 + $0x198] sm:$0xff]
    %v861 = vld [vmem:[#allocation8 + $0x1a0] sm:$0xff]
    %v862 = vld [vmem:[#allocation8 + $0x1a8] sm:$0xff]
    %v863 = vld [vmem:[#allocation8 + $0x1b0] sm:$0xff]
    %v864 = vld [vmem:[#allocation8 + $0x1b8] sm:$0xff]
    %v865 = vld [vmem:[#allocation8 + $0x1c0] sm:$0xff]
    %v866 = vld [vmem:[#allocation8 + $0x1c8] sm:$0xff]
    %v867 = vld [vmem:[#allocation8 + $0x1d0] sm:$0xff]
    %v868 = vld [vmem:[#allocation8 + $0x1d8] sm:$0xff]
    %v869 = vld [vmem:[#allocation8 + $0x1e0] sm:$0xff]
    %v870 = vld [vmem:[#allocation8 + $0x1e8] sm:$0xff]
    %v871 = vld [vmem:[#allocation8 + $0x1f0] sm:$0xff]
    %v872 = vld [vmem:[#allocation8 + $0x1f8] sm:$0xff]
    %v873 = vld [vmem:[#allocation8 + $0x200] sm:$0xff]
    %v874 = vld [vmem:[#allocation8 + $0x208] sm:$0xff]
    %v875 = vld [vmem:[#allocation8 + $0x210] sm:$0xff]
    %v876 = vld [vmem:[#allocation8 + $0x218] sm:$0xff]
    %v877 = vld [vmem:[#allocation8 + $0x220] sm:$0xff]
    %v878 = vld [vmem:[#allocation8 + $0x228] sm:$0xff]
    %v879 = vld [vmem:[#allocation8 + $0x230] sm:$0xff]
    %v880 = vld [vmem:[#allocation8 + $0x238] sm:$0xff]
    %v881 = vld [vmem:[#allocation8 + $0x240] sm:$0xff]
    %v882 = vld [vmem:[#allocation8 + $0x248] sm:$0xff]
    %v883 = vld [vmem:[#allocation8 + $0x250] sm:$0xff]
    %v884 = vld [vmem:[#allocation8 + $0x258] sm:$0xff]
    %v885 = vld [vmem:[#allocation8 + $0x260] sm:$0xff]
    %v886 = vld [vmem:[#allocation8 + $0x268] sm:$0xff]
    %v887 = vld [vmem:[#allocation8 + $0x270] sm:$0xff]
    %v888 = vld [vmem:[#allocation8 + $0x278] sm:$0xff]
    %v889 = vld [vmem:[#allocation8 + $0x280] sm:$0xff]
    %v890 = vld [vmem:[#allocation8 + $0x288] sm:$0xff]
    %v891 = vld [vmem:[#allocation8 + $0x290] sm:$0xff]
    %v892 = vld [vmem:[#allocation8 + $0x298] sm:$0xff]
    %v893 = vld [vmem:[#allocation8 + $0x2a0] sm:$0xff]
    %v894 = vld [vmem:[#allocation8 + $0x2a8] sm:$0xff]
    %v895 = vld [vmem:[#allocation8 + $0x2b0] sm:$0xff]
    %v896 = vld [vmem:[#allocation8 + $0x2b8] sm:$0xff]
    %v897 = vld [vmem:[#allocation8 + $0x2c0] sm:$0xff]
    %v898 = vld [vmem:[#allocation8 + $0x2c8] sm:$0xff]
    %v899 = vld [vmem:[#allocation8 + $0x2d0] sm:$0xff]
    %v900 = vld [vmem:[#allocation8 + $0x2d8] sm:$0xff]
    %v901 = vld [vmem:[#allocation8 + $0x2e0] sm:$0xff]
    %v902 = vld [vmem:[#allocation8 + $0x2e8] sm:$0xff]
    %v903 = vld [vmem:[#allocation8 + $0x2f0] sm:$0xff]
    %v904 = vld [vmem:[#allocation8 + $0x2f8] sm:$0xff]
    %v905 = vld [vmem:[#allocation8 + $0x300] sm:$0xff]
    %v906 = vld [vmem:[#allocation8 + $0x308] sm:$0xff]
    %v907 = vld [vmem:[#allocation8 + $0x310] sm:$0xff]
    %v908 = vld [vmem:[#allocation8 + $0x318] sm:$0xff]
    %v909 = vld [vmem:[#allocation8 + $0x320] sm:$0xff]
    %v910 = vld [vmem:[#allocation8 + $0x328] sm:$0xff]
    %v911 = vld [vmem:[#allocation8 + $0x330] sm:$0xff]
    %v912 = vld [vmem:[#allocation8 + $0x338] sm:$0xff]
    %v913 = vld [vmem:[#allocation8 + $0x340] sm:$0xff]
    %v914 = vld [vmem:[#allocation8 + $0x348] sm:$0xff]
    %v915 = vld [vmem:[#allocation8 + $0x350] sm:$0xff]
    %v916 = vld [vmem:[#allocation8 + $0x358] sm:$0xff]
    %v917 = vld [vmem:[#allocation8 + $0x360] sm:$0xff]
    %v918 = vld [vmem:[#allocation8 + $0x368] sm:$0xff]
    %v919 = vld [vmem:[#allocation8 + $0x370] sm:$0xff]
    %v920 = vld [vmem:[#allocation8 + $0x378] sm:$0xff]
    %v921 = vld [vmem:[#allocation8 + $0x380] sm:$0xff]
    %v922 = vld [vmem:[#allocation8 + $0x388] sm:$0xff]
    %v923 = vld [vmem:[#allocation8 + $0x390] sm:$0xff]
    %v924 = vld [vmem:[#allocation8 + $0x398] sm:$0xff]
    %v925 = vld [vmem:[#allocation8 + $0x3a0] sm:$0xff]
    %v926 = vld [vmem:[#allocation8 + $0x3a8] sm:$0xff]
    %v927 = vld [vmem:[#allocation8 + $0x3b0] sm:$0xff]
    %v928 = vld [vmem:[#allocation8 + $0x3b8] sm:$0xff]
    %v929 = vld [vmem:[#allocation8 + $0x3c0] sm:$0xff]
    %v930 = vld [vmem:[#allocation8 + $0x3c8] sm:$0xff]
    %v931 = vld [vmem:[#allocation8 + $0x3d0] sm:$0xff]
    %v932 = vld [vmem:[#allocation8 + $0x3d8] sm:$0xff]
    %v933 = vld [vmem:[#allocation8 + $0x3e0] sm:$0xff]
    %v934 = vld [vmem:[#allocation8 + $0x3e8] sm:$0xff]
    %v935 = vld [vmem:[#allocation8 + $0x3f0] sm:$0xff]
    %v936 = vld [vmem:[#allocation8 + $0x3f8] sm:$0xff]
    %v937 = vld [vmem:[#allocation8 + $0x400] sm:$0xff]
    %v938 = vld [vmem:[#allocation8 + $0x408] sm:$0xff]
    %v939 = vld [vmem:[#allocation8 + $0x410] sm:$0xff]
    %v940 = vld [vmem:[#allocation8 + $0x418] sm:$0xff]
    %v941 = vld [vmem:[#allocation8 + $0x420] sm:$0xff]
    %v942 = vld [vmem:[#allocation8 + $0x428] sm:$0xff]
    %v943 = vld [vmem:[#allocation8 + $0x430] sm:$0xff]
    %v944 = vld [vmem:[#allocation8 + $0x438] sm:$0xff]
    %v945 = vld [vmem:[#allocation8 + $0x440] sm:$0xff]
    %v946 = vld [vmem:[#allocation8 + $0x448] sm:$0xff]
    %v947 = vld [vmem:[#allocation8 + $0x450] sm:$0xff]
    %v948 = vld [vmem:[#allocation8 + $0x458] sm:$0xff]
    %v949 = vld [vmem:[#allocation8 + $0x460] sm:$0xff]
    %v950 = vld [vmem:[#allocation8 + $0x468] sm:$0xff]
    %v951 = vld [vmem:[#allocation8 + $0x470] sm:$0xff]
    %v952 = vld [vmem:[#allocation8 + $0x478] sm:$0xff]
    %v953 = vld [vmem:[#allocation8 + $0x480] sm:$0xff]
    %v954 = vld [vmem:[#allocation8 + $0x488] sm:$0xff]
    %v955 = vld [vmem:[#allocation8 + $0x490] sm:$0xff]
    %v956 = vld [vmem:[#allocation8 + $0x498] sm:$0xff]
    %v957 = vld [vmem:[#allocation8 + $0x4a0] sm:$0xff]
    %v958 = vld [vmem:[#allocation8 + $0x4a8] sm:$0xff]
    %v959 = vld [vmem:[#allocation8 + $0x4b0] sm:$0xff]
    %v960 = vld [vmem:[#allocation8 + $0x4b8] sm:$0xff]
    %v961 = vld [vmem:[#allocation8 + $0x4c0] sm:$0xff]
    %v962 = vld [vmem:[#allocation8 + $0x4c8] sm:$0xff]
    %v963 = vld [vmem:[#allocation8 + $0x4d0] sm:$0xff]
    %v964 = vld [vmem:[#allocation8 + $0x4d8] sm:$0xff]
    %v965 = vld [vmem:[#allocation8 + $0x4e0] sm:$0xff]
    %v966 = vld [vmem:[#allocation8 + $0x4e8] sm:$0xff]
    %v967 = vld [vmem:[#allocation8 + $0x4f0] sm:$0xff]
    %v968 = vld [vmem:[#allocation8 + $0x4f8] sm:$0xff]
    %v969 = vld [vmem:[#allocation8 + $0x500] sm:$0xff]
    %v970 = vld [vmem:[#allocation8 + $0x508] sm:$0xff]
    %v971 = vld [vmem:[#allocation8 + $0x510] sm:$0xff]
    %v972 = vld [vmem:[#allocation8 + $0x518] sm:$0xff]
    %v973 = vld [vmem:[#allocation8 + $0x520] sm:$0xff]
    %v974 = vld [vmem:[#allocation8 + $0x528] sm:$0xff]
    %v975 = vld [vmem:[#allocation8 + $0x530] sm:$0xff]
    %v976 = vld [vmem:[#allocation8 + $0x538] sm:$0xff]
    %v977 = vld [vmem:[#allocation8 + $0x540] sm:$0xff]
    %v978 = vld [vmem:[#allocation8 + $0x548] sm:$0xff]
    %v979 = vld [vmem:[#allocation8 + $0x550] sm:$0xff]
    %v980 = vld [vmem:[#allocation8 + $0x558] sm:$0xff]
    %v981 = vld [vmem:[#allocation8 + $0x560] sm:$0xff]
    %v982 = vld [vmem:[#allocation8 + $0x568] sm:$0xff]
    %v983 = vld [vmem:[#allocation8 + $0x570] sm:$0xff]
    %v984 = vld [vmem:[#allocation8 + $0x578] sm:$0xff]
    %v985 = vld [vmem:[#allocation8 + $0x580] sm:$0xff]
    %v986 = vld [vmem:[#allocation8 + $0x588] sm:$0xff]
    %v987 = vld [vmem:[#allocation8 + $0x590] sm:$0xff]
    %v988 = vld [vmem:[#allocation8 + $0x598] sm:$0xff]
    %v989 = vld [vmem:[#allocation8 + $0x5a0] sm:$0xff]
    %v990 = vld [vmem:[#allocation8 + $0x5a8] sm:$0xff]
    %v991 = vld [vmem:[#allocation8 + $0x5b0] sm:$0xff]
    %v992 = vld [vmem:[#allocation8 + $0x5b8] sm:$0xff]
    %v993 = vld [vmem:[#allocation8 + $0x5c0] sm:$0xff]
    %v994 = vld [vmem:[#allocation8 + $0x5c8] sm:$0xff]
    %v995 = vld [vmem:[#allocation8 + $0x5d0] sm:$0xff]
    %v996 = vld [vmem:[#allocation8 + $0x5d8] sm:$0xff]
    %v997 = vld [vmem:[#allocation8 + $0x5e0] sm:$0xff]
    %v998 = vld [vmem:[#allocation8 + $0x5e8] sm:$0xff]
    %v999 = vld [vmem:[#allocation8 + $0x5f0] sm:$0xff]
    %v1000 = vld [vmem:[#allocation8 + $0x5f8] sm:$0xff]
    %v1001 = vld [vmem:[#allocation8 + $0x600] sm:$0xff]
    %v1002 = vld [vmem:[#allocation8 + $0x608] sm:$0xff]
    %v1003 = vld [vmem:[#allocation8 + $0x610] sm:$0xff]
    %v1004 = vld [vmem:[#allocation8 + $0x618] sm:$0xff]
    %v1005 = vld [vmem:[#allocation8 + $0x620] sm:$0xff]
    %v1006 = vld [vmem:[#allocation8 + $0x628] sm:$0xff]
    %v1007 = vld [vmem:[#allocation8 + $0x630] sm:$0xff]
    %v1008 = vld [vmem:[#allocation8 + $0x638] sm:$0xff]
    %v1009 = vld [vmem:[#allocation8 + $0x640] sm:$0xff]
    %v1010 = vld [vmem:[#allocation8 + $0x648] sm:$0xff]
    %v1011 = vld [vmem:[#allocation8 + $0x650] sm:$0xff]
    %v1012 = vld [vmem:[#allocation8 + $0x658] sm:$0xff]
    %v1013 = vld [vmem:[#allocation8 + $0x660] sm:$0xff]
    %v1014 = vld [vmem:[#allocation8 + $0x668] sm:$0xff]
    %v1015 = vld [vmem:[#allocation8 + $0x670] sm:$0xff]
    %v1016 = vld [vmem:[#allocation8 + $0x678] sm:$0xff]
    %v1017 = vld [vmem:[#allocation8 + $0x680] sm:$0xff]
    %v1018 = vld [vmem:[#allocation8 + $0x688] sm:$0xff]
    %v1019 = vld [vmem:[#allocation8 + $0x690] sm:$0xff]
    %v1020 = vld [vmem:[#allocation8 + $0x698] sm:$0xff]
    %v1021 = vld [vmem:[#allocation8 + $0x6a0] sm:$0xff]
    %v1022 = vld [vmem:[#allocation8 + $0x6a8] sm:$0xff]
    %v1023 = vld [vmem:[#allocation8 + $0x6b0] sm:$0xff]
    %v1024 = vld [vmem:[#allocation8 + $0x6b8] sm:$0xff]
    %v1025 = vld [vmem:[#allocation8 + $0x6c0] sm:$0xff]
    %v1026 = vld [vmem:[#allocation8 + $0x6c8] sm:$0xff]
    %v1027 = vld [vmem:[#allocation8 + $0x6d0] sm:$0xff]
    %v1028 = vld [vmem:[#allocation8 + $0x6d8] sm:$0xff]
    %v1029 = vld [vmem:[#allocation8 + $0x6e0] sm:$0xff]
    %v1030 = vld [vmem:[#allocation8 + $0x6e8] sm:$0xff]
    %v1031 = vld [vmem:[#allocation8 + $0x6f0] sm:$0xff]
    %v1032 = vld [vmem:[#allocation8 + $0x6f8] sm:$0xff]
    %v1033 = vld [vmem:[#allocation8 + $0x700] sm:$0xff]
    %v1034 = vld [vmem:[#allocation8 + $0x708] sm:$0xff]
    %v1035 = vld [vmem:[#allocation8 + $0x710] sm:$0xff]
    %v1036 = vld [vmem:[#allocation8 + $0x718] sm:$0xff]
    %v1037 = vld [vmem:[#allocation8 + $0x720] sm:$0xff]
    %v1038 = vld [vmem:[#allocation8 + $0x728] sm:$0xff]
    %v1039 = vld [vmem:[#allocation8 + $0x730] sm:$0xff]
    %v1040 = vld [vmem:[#allocation8 + $0x738] sm:$0xff]
    %v1041 = vld [vmem:[#allocation8 + $0x740] sm:$0xff]
    %v1042 = vld [vmem:[#allocation8 + $0x748] sm:$0xff]
    %v1043 = vld [vmem:[#allocation8 + $0x750] sm:$0xff]
    %v1044 = vld [vmem:[#allocation8 + $0x758] sm:$0xff]
    %v1045 = vld [vmem:[#allocation8 + $0x760] sm:$0xff]
    %v1046 = vld [vmem:[#allocation8 + $0x768] sm:$0xff]
    %v1047 = vld [vmem:[#allocation8 + $0x770] sm:$0xff]
    %v1048 = vld [vmem:[#allocation8 + $0x778] sm:$0xff]
    %v1049 = vld [vmem:[#allocation8 + $0x780] sm:$0xff]
    %v1050 = vld [vmem:[#allocation8 + $0x788] sm:$0xff]
    %v1051 = vld [vmem:[#allocation8 + $0x790] sm:$0xff]
    %v1052 = vld [vmem:[#allocation8 + $0x798] sm:$0xff]
    %v1053 = vld [vmem:[#allocation8 + $0x7a0] sm:$0xff]
    %v1054 = vld [vmem:[#allocation8 + $0x7a8] sm:$0xff]
    %v1055 = vld [vmem:[#allocation8 + $0x7b0] sm:$0xff]
    %v1056 = vld [vmem:[#allocation8 + $0x7b8] sm:$0xff]
    %v1057 = vld [vmem:[#allocation8 + $0x7c0] sm:$0xff]
    %v1058 = vld [vmem:[#allocation8 + $0x7c8] sm:$0xff]
    %v1059 = vld [vmem:[#allocation8 + $0x7d0] sm:$0xff]
    %v1060 = vld [vmem:[#allocation8 + $0x7d8] sm:$0xff]
    %v1061 = vld [vmem:[#allocation8 + $0x7e0] sm:$0xff]
    %v1062 = vld [vmem:[#allocation8 + $0x7e8] sm:$0xff]
    %v1063 = vld [vmem:[#allocation8 + $0x7f0] sm:$0xff]
    %v1064 = vld [vmem:[#allocation8 + $0x7f8] sm:$0xff]
    %v1065 = vld [vmem:[#allocation8 + $0x800] sm:$0xff]
    %v1066 = vld [vmem:[#allocation8 + $0x808] sm:$0xff]
    %v1067 = vld [vmem:[#allocation8 + $0x810] sm:$0xff]
    %v1068 = vld [vmem:[#allocation8 + $0x818] sm:$0xff]
    %v1069 = vld [vmem:[#allocation8 + $0x820] sm:$0xff]
    %v1070 = vld [vmem:[#allocation8 + $0x828] sm:$0xff]
    %v1071 = vld [vmem:[#allocation8 + $0x830] sm:$0xff]
    %v1072 = vld [vmem:[#allocation8 + $0x838] sm:$0xff]
    %v1073 = vld [vmem:[#allocation8 + $0x840] sm:$0xff]
    %v1074 = vld [vmem:[#allocation8 + $0x848] sm:$0xff]
    %v1075 = vld [vmem:[#allocation8 + $0x850] sm:$0xff]
    %v1076 = vld [vmem:[#allocation8 + $0x858] sm:$0xff]
    %v1077 = vld [vmem:[#allocation8 + $0x860] sm:$0xff]
    %v1078 = vld [vmem:[#allocation8 + $0x868] sm:$0xff]
    %v1079 = vld [vmem:[#allocation8 + $0x870] sm:$0xff]
    %v1080 = vld [vmem:[#allocation8 + $0x878] sm:$0xff]
    %v1081 = vld [vmem:[#allocation8 + $0x880] sm:$0xff]
    %v1082 = vld [vmem:[#allocation8 + $0x888] sm:$0xff]
    %v1083 = vld [vmem:[#allocation8 + $0x890] sm:$0xff]
    %v1084 = vld [vmem:[#allocation8 + $0x898] sm:$0xff]
    %v1085 = vld [vmem:[#allocation8 + $0x8a0] sm:$0xff]
    %v1086 = vld [vmem:[#allocation8 + $0x8a8] sm:$0xff]
    %v1087 = vld [vmem:[#allocation8 + $0x8b0] sm:$0xff]
    %v1088 = vld [vmem:[#allocation8 + $0x8b8] sm:$0xff]
    %v1089 = vld [vmem:[#allocation8 + $0x8c0] sm:$0xff]
    %v1090 = vld [vmem:[#allocation8 + $0x8c8] sm:$0xff]
    %v1091 = vld [vmem:[#allocation8 + $0x8d0] sm:$0xff]
    %v1092 = vld [vmem:[#allocation8 + $0x8d8] sm:$0xff]
    %v1093 = vld [vmem:[#allocation8 + $0x8e0] sm:$0xff]
    %v1094 = vld [vmem:[#allocation8 + $0x8e8] sm:$0xff]
    %v1095 = vld [vmem:[#allocation8 + $0x8f0] sm:$0xff]
    %v1096 = vld [vmem:[#allocation8 + $0x8f8] sm:$0xff]
    %v1097 = vld [vmem:[#allocation8 + $0x900] sm:$0xff]
    %v1098 = vld [vmem:[#allocation8 + $0x908] sm:$0xff]
    %v1099 = vld [vmem:[#allocation8 + $0x910] sm:$0xff]
    %v1100 = vld [vmem:[#allocation8 + $0x918] sm:$0xff]
    %v1101 = vld [vmem:[#allocation8 + $0x920] sm:$0xff]
    %v1102 = vld [vmem:[#allocation8 + $0x928] sm:$0xff]
    %v1103 = vld [vmem:[#allocation8 + $0x930] sm:$0xff]
    %v1104 = vld [vmem:[#allocation8 + $0x938] sm:$0xff]
    %v1105 = vld [vmem:[#allocation8 + $0x940] sm:$0xff]
    %v1106 = vld [vmem:[#allocation8 + $0x948] sm:$0xff]
    %v1107 = vld [vmem:[#allocation8 + $0x950] sm:$0xff]
    %v1108 = vld [vmem:[#allocation8 + $0x958] sm:$0xff]
    %v1109 = vld [vmem:[#allocation8 + $0x960] sm:$0xff]
    %v1110 = vld [vmem:[#allocation8 + $0x968] sm:$0xff]
    %v1111 = vld [vmem:[#allocation8 + $0x970] sm:$0xff]
    %v1112 = vld [vmem:[#allocation8 + $0x978] sm:$0xff]
    %v1113 = vld [vmem:[#allocation8 + $0x980] sm:$0xff]
    %v1114 = vld [vmem:[#allocation8 + $0x988] sm:$0xff]
    %v1115 = vld [vmem:[#allocation8 + $0x990] sm:$0xff]
    %v1116 = vld [vmem:[#allocation8 + $0x998] sm:$0xff]
    %v1117 = vld [vmem:[#allocation8 + $0x9a0] sm:$0xff]
    %v1118 = vld [vmem:[#allocation8 + $0x9a8] sm:$0xff]
    %v1119 = vld [vmem:[#allocation8 + $0x9b0] sm:$0xff]
    %v1120 = vld [vmem:[#allocation8 + $0x9b8] sm:$0xff]
    %v1121 = vld [vmem:[#allocation8 + $0x9c0] sm:$0xff]
    %v1122 = vld [vmem:[#allocation8 + $0x9c8] sm:$0xff]
    %v1123 = vld [vmem:[#allocation8 + $0x9d0] sm:$0xff]
    %v1124 = vld [vmem:[#allocation8 + $0x9d8] sm:$0xff]
    %v1125 = vld [vmem:[#allocation8 + $0x9e0] sm:$0xff]
    %v1126 = vld [vmem:[#allocation8 + $0x9e8] sm:$0xff]
    %v1127 = vld [vmem:[#allocation8 + $0x9f0] sm:$0xff]
    %v1128 = vld [vmem:[#allocation8 + $0x9f8] sm:$0xff]
    %v1129 = vld [vmem:[#allocation8 + $0xa00] sm:$0xff]
    %v1130 = vld [vmem:[#allocation8 + $0xa08] sm:$0xff]
    %v1131 = vld [vmem:[#allocation8 + $0xa10] sm:$0xff]
    %v1132 = vld [vmem:[#allocation8 + $0xa18] sm:$0xff]
    %v1133 = vld [vmem:[#allocation8 + $0xa20] sm:$0xff]
    %v1134 = vld [vmem:[#allocation8 + $0xa28] sm:$0xff]
    %v1135 = vld [vmem:[#allocation8 + $0xa30] sm:$0xff]
    %v1136 = vld [vmem:[#allocation8 + $0xa38] sm:$0xff]
    %v1137 = vld [vmem:[#allocation8 + $0xa40] sm:$0xff]
    %v1138 = vld [vmem:[#allocation8 + $0xa48] sm:$0xff]
    %v1139 = vld [vmem:[#allocation8 + $0xa50] sm:$0xff]
    %v1140 = vld [vmem:[#allocation8 + $0xa58] sm:$0xff]
    %v1141 = vld [vmem:[#allocation8 + $0xa60] sm:$0xff]
    %v1142 = vld [vmem:[#allocation8 + $0xa68] sm:$0xff]
    %v1143 = vld [vmem:[#allocation8 + $0xa70] sm:$0xff]
    %v1144 = vld [vmem:[#allocation8 + $0xa78] sm:$0xff]
    %v1145 = vld [vmem:[#allocation8 + $0xa80] sm:$0xff]
    %v1146 = vld [vmem:[#allocation8 + $0xa88] sm:$0xff]
    %v1147 = vld [vmem:[#allocation8 + $0xa90] sm:$0xff]
    %v1148 = vld [vmem:[#allocation8 + $0xa98] sm:$0xff]
    %v1149 = vld [vmem:[#allocation8 + $0xaa0] sm:$0xff]
    %v1150 = vld [vmem:[#allocation8 + $0xaa8] sm:$0xff]
    %v1151 = vld [vmem:[#allocation8 + $0xab0] sm:$0xff]
    %v1152 = vld [vmem:[#allocation8 + $0xab8] sm:$0xff]
    %v1153 = vld [vmem:[#allocation8 + $0xac0] sm:$0xff]
    %v1154 = vld [vmem:[#allocation8 + $0xac8] sm:$0xff]
    %v1155 = vld [vmem:[#allocation8 + $0xad0] sm:$0xff]
    %v1156 = vld [vmem:[#allocation8 + $0xad8] sm:$0xff]
    %v1157 = vld [vmem:[#allocation8 + $0xae0] sm:$0xff]
    %v1158 = vld [vmem:[#allocation8 + $0xae8] sm:$0xff]
    %v1159 = vld [vmem:[#allocation8 + $0xaf0] sm:$0xff]
    %v1160 = vld [vmem:[#allocation8 + $0xaf8] sm:$0xff]
    %v1161 = vld [vmem:[#allocation8 + $0xb00] sm:$0xff]
    %v1162 = vld [vmem:[#allocation8 + $0xb08] sm:$0xff]
    %v1163 = vld [vmem:[#allocation8 + $0xb10] sm:$0xff]
    %v1164 = vld [vmem:[#allocation8 + $0xb18] sm:$0xff]
    %v1165 = vld [vmem:[#allocation8 + $0xb20] sm:$0xff]
    %v1166 = vld [vmem:[#allocation8 + $0xb28] sm:$0xff]
    %v1167 = vld [vmem:[#allocation8 + $0xb30] sm:$0xff]
    %v1168 = vld [vmem:[#allocation8 + $0xb38] sm:$0xff]
    %v1169 = vld [vmem:[#allocation8 + $0xb40] sm:$0xff]
    %v1170 = vld [vmem:[#allocation8 + $0xb48] sm:$0xff]
    %v1171 = vld [vmem:[#allocation8 + $0xb50] sm:$0xff]
    %v1172 = vld [vmem:[#allocation8 + $0xb58] sm:$0xff]
    %v1173 = vld [vmem:[#allocation8 + $0xb60] sm:$0xff]
    %v1174 = vld [vmem:[#allocation8 + $0xb68] sm:$0xff]
    %v1175 = vld [vmem:[#allocation8 + $0xb70] sm:$0xff]
    %v1176 = vld [vmem:[#allocation8 + $0xb78] sm:$0xff]
    %v1177 = vld [vmem:[#allocation8 + $0xb80] sm:$0xff]
    %v1178 = vld [vmem:[#allocation8 + $0xb88] sm:$0xff]
    %v1179 = vld [vmem:[#allocation8 + $0xb90] sm:$0xff]
    %v1180 = vld [vmem:[#allocation8 + $0xb98] sm:$0xff]
    %v1181 = vld [vmem:[#allocation8 + $0xba0] sm:$0xff]
    %v1182 = vld [vmem:[#allocation8 + $0xba8] sm:$0xff]
    %v1183 = vld [vmem:[#allocation8 + $0xbb0] sm:$0xff]
    %v1184 = vld [vmem:[#allocation8 + $0xbb8] sm:$0xff]
    %v1185 = vld [vmem:[#allocation8 + $0xbc0] sm:$0xff]
    %v1186 = vld [vmem:[#allocation8 + $0xbc8] sm:$0xff]
    %v1187 = vld [vmem:[#allocation8 + $0xbd0] sm:$0xff]
    %v1188 = vld [vmem:[#allocation8 + $0xbd8] sm:$0xff]
    %v1189 = vld [vmem:[#allocation8 + $0xbe0] sm:$0xff]
    %v1190 = vld [vmem:[#allocation8 + $0xbe8] sm:$0xff]
    %v1191 = vld [vmem:[#allocation8 + $0xbf0] sm:$0xff]
    %v1192 = vld [vmem:[#allocation8 + $0xbf8] sm:$0xff]
    %v1193 = vld [vmem:[#allocation8 + $0xc00] sm:$0xff]
    %v1194 = vld [vmem:[#allocation8 + $0xc08] sm:$0xff]
    %v1195 = vld [vmem:[#allocation8 + $0xc10] sm:$0xff]
    %v1196 = vld [vmem:[#allocation8 + $0xc18] sm:$0xff]
    %v1197 = vld [vmem:[#allocation8 + $0xc20] sm:$0xff]
    %v1198 = vld [vmem:[#allocation8 + $0xc28] sm:$0xff]
    %v1199 = vld [vmem:[#allocation8 + $0xc30] sm:$0xff]
    %v1200 = vld [vmem:[#allocation8 + $0xc38] sm:$0xff]
    %v1201 = vld [vmem:[#allocation8 + $0xc40] sm:$0xff]
    %v1202 = vld [vmem:[#allocation8 + $0xc48] sm:$0xff]
    %v1203 = vld [vmem:[#allocation8 + $0xc50] sm:$0xff]
    %v1204 = vld [vmem:[#allocation8 + $0xc58] sm:$0xff]
    %v1205 = vld [vmem:[#allocation8 + $0xc60] sm:$0xff]
    %v1206 = vld [vmem:[#allocation8 + $0xc68] sm:$0xff]
    %v1207 = vld [vmem:[#allocation8 + $0xc70] sm:$0xff]
    %v1208 = vld [vmem:[#allocation8 + $0xc78] sm:$0xff]
    %v1209 = vld [vmem:[#allocation8 + $0xc80] sm:$0xff]
    %v1210 = vld [vmem:[#allocation8 + $0xc88] sm:$0xff]
    %v1211 = vld [vmem:[#allocation8 + $0xc90] sm:$0xff]
    %v1212 = vld [vmem:[#allocation8 + $0xc98] sm:$0xff]
    %v1213 = vld [vmem:[#allocation8 + $0xca0] sm:$0xff]
    %v1214 = vld [vmem:[#allocation8 + $0xca8] sm:$0xff]
    %v1215 = vld [vmem:[#allocation8 + $0xcb0] sm:$0xff]
    %v1216 = vld [vmem:[#allocation8 + $0xcb8] sm:$0xff]
    %v1217 = vld [vmem:[#allocation8 + $0xcc0] sm:$0xff]
    %v1218 = vld [vmem:[#allocation8 + $0xcc8] sm:$0xff]
    %v1219 = vld [vmem:[#allocation8 + $0xcd0] sm:$0xff]
    %v1220 = vld [vmem:[#allocation8 + $0xcd8] sm:$0xff]
    %v1221 = vld [vmem:[#allocation8 + $0xce0] sm:$0xff]
    %v1222 = vld [vmem:[#allocation8 + $0xce8] sm:$0xff]
    %v1223 = vld [vmem:[#allocation8 + $0xcf0] sm:$0xff]
    %v1224 = vld [vmem:[#allocation8 + $0xcf8] sm:$0xff]
    %v1225 = vld [vmem:[#allocation8 + $0xd00] sm:$0xff]
    %v1226 = vld [vmem:[#allocation8 + $0xd08] sm:$0xff]
    %v1227 = vld [vmem:[#allocation8 + $0xd10] sm:$0xff]
    %v1228 = vld [vmem:[#allocation8 + $0xd18] sm:$0xff]
    %v1229 = vld [vmem:[#allocation8 + $0xd20] sm:$0xff]
    %v1230 = vld [vmem:[#allocation8 + $0xd28] sm:$0xff]
    %v1231 = vld [vmem:[#allocation8 + $0xd30] sm:$0xff]
    %v1232 = vld [vmem:[#allocation8 + $0xd38] sm:$0xff]
    %v1233 = vld [vmem:[#allocation8 + $0xd40] sm:$0xff]
    %v1234 = vld [vmem:[#allocation8 + $0xd48] sm:$0xff]
    %v1235 = vld [vmem:[#allocation8 + $0xd50] sm:$0xff]
    %v1236 = vld [vmem:[#allocation8 + $0xd58] sm:$0xff]
    %v1237 = vld [vmem:[#allocation8 + $0xd60] sm:$0xff]
    %v1238 = vld [vmem:[#allocation8 + $0xd68] sm:$0xff]
    %v1239 = vld [vmem:[#allocation8 + $0xd70] sm:$0xff]
    %v1240 = vld [vmem:[#allocation8 + $0xd78] sm:$0xff]
    %v1241 = vld [vmem:[#allocation8 + $0xd80] sm:$0xff]
    %v1242 = vld [vmem:[#allocation8 + $0xd88] sm:$0xff]
    %v1243 = vld [vmem:[#allocation8 + $0xd90] sm:$0xff]
    %v1244 = vld [vmem:[#allocation8 + $0xd98] sm:$0xff]
    %v1245 = vld [vmem:[#allocation8 + $0xda0] sm:$0xff]
    %v1246 = vld [vmem:[#allocation8 + $0xda8] sm:$0xff]
    %v1247 = vld [vmem:[#allocation8 + $0xdb0] sm:$0xff]
    %v1248 = vld [vmem:[#allocation8 + $0xdb8] sm:$0xff]
    %v1249 = vld [vmem:[#allocation8 + $0xdc0] sm:$0xff]
    %v1250 = vld [vmem:[#allocation8 + $0xdc8] sm:$0xff]
    %v1251 = vld [vmem:[#allocation8 + $0xdd0] sm:$0xff]
    %v1252 = vld [vmem:[#allocation8 + $0xdd8] sm:$0xff]
    %v1253 = vld [vmem:[#allocation8 + $0xde0] sm:$0xff]
    %v1254 = vld [vmem:[#allocation8 + $0xde8] sm:$0xff]
    %v1255 = vld [vmem:[#allocation8 + $0xdf0] sm:$0xff]
    %v1256 = vld [vmem:[#allocation8 + $0xdf8] sm:$0xff]
    %v1257 = vld [vmem:[#allocation8 + $0xe00] sm:$0xff]
    %v1258 = vld [vmem:[#allocation8 + $0xe08] sm:$0xff]
    %v1259 = vld [vmem:[#allocation8 + $0xe10] sm:$0xff]
    %v1260 = vld [vmem:[#allocation8 + $0xe18] sm:$0xff]
    %v1261 = vld [vmem:[#allocation8 + $0xe20] sm:$0xff]
    %v1262 = vld [vmem:[#allocation8 + $0xe28] sm:$0xff]
    %v1263 = vld [vmem:[#allocation8 + $0xe30] sm:$0xff]
    %v1264 = vld [vmem:[#allocation8 + $0xe38] sm:$0xff]
    %v1265 = vld [vmem:[#allocation8 + $0xe40] sm:$0xff]
    %v1266 = vld [vmem:[#allocation8 + $0xe48] sm:$0xff]
    %v1267 = vld [vmem:[#allocation8 + $0xe50] sm:$0xff]
    %v1268 = vld [vmem:[#allocation8 + $0xe58] sm:$0xff]
    %v1269 = vld [vmem:[#allocation8 + $0xe60] sm:$0xff]
    %v1270 = vld [vmem:[#allocation8 + $0xe68] sm:$0xff]
    %v1271 = vld [vmem:[#allocation8 + $0xe70] sm:$0xff]
    %v1272 = vld [vmem:[#allocation8 + $0xe78] sm:$0xff]
    %v1273 = vld [vmem:[#allocation8 + $0xe80] sm:$0xff]
    %v1274 = vld [vmem:[#allocation8 + $0xe88] sm:$0xff]
    %v1275 = vld [vmem:[#allocation8 + $0xe90] sm:$0xff]
    %v1276 = vld [vmem:[#allocation8 + $0xe98] sm:$0xff]
    %v1277 = vld [vmem:[#allocation8 + $0xea0] sm:$0xff]
    %v1278 = vld [vmem:[#allocation8 + $0xea8] sm:$0xff]
    %v1279 = vld [vmem:[#allocation8 + $0xeb0] sm:$0xff]
    %v1280 = vld [vmem:[#allocation8 + $0xeb8] sm:$0xff]
    %v1281 = vld [vmem:[#allocation8 + $0xec0] sm:$0xff]
    %v1282 = vld [vmem:[#allocation8 + $0xec8] sm:$0xff]
    %v1283 = vld [vmem:[#allocation8 + $0xed0] sm:$0xff]
    %v1284 = vld [vmem:[#allocation8 + $0xed8] sm:$0xff]
    %v1285 = vld [vmem:[#allocation8 + $0xee0] sm:$0xff]
    %v1286 = vld [vmem:[#allocation8 + $0xee8] sm:$0xff]
    %v1287 = vld [vmem:[#allocation8 + $0xef0] sm:$0xff]
    %v1288 = vld [vmem:[#allocation8 + $0xef8] sm:$0xff]
    %v1289 = vld [vmem:[#allocation8 + $0xf00] sm:$0xff]
    %v1290 = vld [vmem:[#allocation8 + $0xf08] sm:$0xff]
    %v1291 = vld [vmem:[#allocation8 + $0xf10] sm:$0xff]
    %v1292 = vld [vmem:[#allocation8 + $0xf18] sm:$0xff]
    %v1293 = vld [vmem:[#allocation8 + $0xf20] sm:$0xff]
    %v1294 = vld [vmem:[#allocation8 + $0xf28] sm:$0xff]
    %v1295 = vld [vmem:[#allocation8 + $0xf30] sm:$0xff]
    %v1296 = vld [vmem:[#allocation8 + $0xf38] sm:$0xff]
    %v1297 = vld [vmem:[#allocation8 + $0xf40] sm:$0xff]
    %v1298 = vld [vmem:[#allocation8 + $0xf48] sm:$0xff]
    %v1299 = vld [vmem:[#allocation8 + $0xf50] sm:$0xff]
    %v1300 = vld [vmem:[#allocation8 + $0xf58] sm:$0xff]
    %v1301 = vld [vmem:[#allocation8 + $0xf60] sm:$0xff]
    %v1302 = vld [vmem:[#allocation8 + $0xf68] sm:$0xff]
    %v1303 = vld [vmem:[#allocation8 + $0xf70] sm:$0xff]
    %v1304 = vld [vmem:[#allocation8 + $0xf78] sm:$0xff]
    %v1305 = vld [vmem:[#allocation8 + $0xf80] sm:$0xff]
    %v1306 = vld [vmem:[#allocation8 + $0xf88] sm:$0xff]
    %v1307 = vld [vmem:[#allocation8 + $0xf90] sm:$0xff]
    %v1308 = vld [vmem:[#allocation8 + $0xf98] sm:$0xff]
    %v1309 = vld [vmem:[#allocation8 + $0xfa0] sm:$0xff]
    %v1310 = vld [vmem:[#allocation8 + $0xfa8] sm:$0xff]
    %v1311 = vld [vmem:[#allocation8 + $0xfb0] sm:$0xff]
    %v1312 = vld [vmem:[#allocation8 + $0xfb8] sm:$0xff]
    %v1313 = vld [vmem:[#allocation8 + $0xfc0] sm:$0xff]
    %v1314 = vld [vmem:[#allocation8 + $0xfc8] sm:$0xff]
    %v1315 = vld [vmem:[#allocation8 + $0xfd0] sm:$0xff]
    %v1316 = vld [vmem:[#allocation8 + $0xfd8] sm:$0xff]
    %v1317 = vld [vmem:[#allocation8 + $0xfe0] sm:$0xff]
    %v1318 = vld [vmem:[#allocation8 + $0xfe8] sm:$0xff]
    %v1319 = vld [vmem:[#allocation8 + $0xff0] sm:$0xff]
    %v1320 = vld [vmem:[#allocation8 + $0xff8] sm:$0xff]
    %v1321 = vld [vmem:[#allocation8 + $0x1000] sm:$0xff]
    %v1322 = vld [vmem:[#allocation8 + $0x1008] sm:$0xff]
    %v1323 = vld [vmem:[#allocation8 + $0x1010] sm:$0xff]
    %v1324 = vld [vmem:[#allocation8 + $0x1018] sm:$0xff]
    %v1325 = vld [vmem:[#allocation8 + $0x1020] sm:$0xff]
    %v1326 = vld [vmem:[#allocation8 + $0x1028] sm:$0xff]
    %v1327 = vld [vmem:[#allocation8 + $0x1030] sm:$0xff]
    %v1328 = vld [vmem:[#allocation8 + $0x1038] sm:$0xff]
    %v1329 = vld [vmem:[#allocation8 + $0x1040] sm:$0xff]
    %v1330 = vld [vmem:[#allocation8 + $0x1048] sm:$0xff]
    %v1331 = vld [vmem:[#allocation8 + $0x1050] sm:$0xff]
    %v1332 = vld [vmem:[#allocation8 + $0x1058] sm:$0xff]
    %v1333 = vld [vmem:[#allocation8 + $0x1060] sm:$0xff]
    %v1334 = vld [vmem:[#allocation8 + $0x1068] sm:$0xff]
    %v1335 = vld [vmem:[#allocation8 + $0x1070] sm:$0xff]
    %v1336 = vld [vmem:[#allocation8 + $0x1078] sm:$0xff]
    %v1337 = vld [vmem:[#allocation8 + $0x1080] sm:$0xff]
    %v1338 = vld [vmem:[#allocation8 + $0x1088] sm:$0xff]
    %v1339 = vld [vmem:[#allocation8 + $0x1090] sm:$0xff]
    %v1340 = vld [vmem:[#allocation8 + $0x1098] sm:$0xff]
    %v1341 = vld [vmem:[#allocation8 + $0x10a0] sm:$0xff]
    %v1342 = vld [vmem:[#allocation8 + $0x10a8] sm:$0xff]
    %v1343 = vld [vmem:[#allocation8 + $0x10b0] sm:$0xff]
    %v1344 = vld [vmem:[#allocation8 + $0x10b8] sm:$0xff]
    %v1345 = vld [vmem:[#allocation8 + $0x10c0] sm:$0xff]
    %v1346 = vld [vmem:[#allocation8 + $0x10c8] sm:$0xff]
    %v1347 = vld [vmem:[#allocation8 + $0x10d0] sm:$0xff]
    %v1348 = vld [vmem:[#allocation8 + $0x10d8] sm:$0xff]
    %v1349 = vld [vmem:[#allocation8 + $0x10e0] sm:$0xff]
    %v1350 = vld [vmem:[#allocation8 + $0x10e8] sm:$0xff]
    %v1351 = vld [vmem:[#allocation8 + $0x10f0] sm:$0xff]
    %v1352 = vld [vmem:[#allocation8 + $0x10f8] sm:$0xff]
    %v1353 = vld [vmem:[#allocation8 + $0x1100] sm:$0xff]
    %v1354 = vld [vmem:[#allocation8 + $0x1108] sm:$0xff]
    %v1355 = vld [vmem:[#allocation8 + $0x1110] sm:$0xff]
    %v1356 = vld [vmem:[#allocation8 + $0x1118] sm:$0xff]
    %v1357 = vld [vmem:[#allocation8 + $0x1120] sm:$0xff]
    %v1358 = vld [vmem:[#allocation8 + $0x1128] sm:$0xff]
    %v1359 = vld [vmem:[#allocation8 + $0x1130] sm:$0xff]
    %v1360 = vld [vmem:[#allocation8 + $0x1138] sm:$0xff]
    %v1361 = vld [vmem:[#allocation8 + $0x1140] sm:$0xff]
    %v1362 = vld [vmem:[#allocation8 + $0x1148] sm:$0xff]
    %v1363 = vld [vmem:[#allocation8 + $0x1150] sm:$0xff]
    %v1364 = vld [vmem:[#allocation8 + $0x1158] sm:$0xff]
    %v1365 = vld [vmem:[#allocation8 + $0x1160] sm:$0xff]
    %v1366 = vld [vmem:[#allocation8 + $0x1168] sm:$0xff]
    %v1367 = vld [vmem:[#allocation8 + $0x1170] sm:$0xff]
    %v1368 = vld [vmem:[#allocation8 + $0x1178] sm:$0xff]
    %v1369 = vld [vmem:[#allocation8 + $0x1180] sm:$0xff]
    %v1370 = vld [vmem:[#allocation8 + $0x1188] sm:$0xff]
    %v1371 = vld [vmem:[#allocation8 + $0x1190] sm:$0xff]
    %v1372 = vld [vmem:[#allocation8 + $0x1198] sm:$0xff]
    %v1373 = vld [vmem:[#allocation8 + $0x11a0] sm:$0xff]
    %v1374 = vld [vmem:[#allocation8 + $0x11a8] sm:$0xff]
    %v1375 = vld [vmem:[#allocation8 + $0x11b0] sm:$0xff]
    %v1376 = vld [vmem:[#allocation8 + $0x11b8] sm:$0xff]
    %v1377 = vld [vmem:[#allocation8 + $0x11c0] sm:$0xff]
    %v1378 = vld [vmem:[#allocation8 + $0x11c8] sm:$0xff]
    %v1379 = vld [vmem:[#allocation8 + $0x11d0] sm:$0xff]
    %v1380 = vld [vmem:[#allocation8 + $0x11d8] sm:$0xff]
    %v1381 = vld [vmem:[#allocation8 + $0x11e0] sm:$0xff]
    %v1382 = vld [vmem:[#allocation8 + $0x11e8] sm:$0xff]
    %v1383 = vld [vmem:[#allocation8 + $0x11f0] sm:$0xff]
    %v1384 = vld [vmem:[#allocation8 + $0x11f8] sm:$0xff]
    %v1385 = vld [vmem:[#allocation8 + $0x1200] sm:$0xff]
    %v1386 = vld [vmem:[#allocation8 + $0x1208] sm:$0xff]
    %v1387 = vld [vmem:[#allocation8 + $0x1210] sm:$0xff]
    %v1388 = vld [vmem:[#allocation8 + $0x1218] sm:$0xff]
    %v1389 = vld [vmem:[#allocation8 + $0x1220] sm:$0xff]
    %v1390 = vld [vmem:[#allocation8 + $0x1228] sm:$0xff]
    %v1391 = vld [vmem:[#allocation8 + $0x1230] sm:$0xff]
    %v1392 = vld [vmem:[#allocation8 + $0x1238] sm:$0xff]
    %v1393 = vld [vmem:[#allocation8 + $0x1240] sm:$0xff]
    %v1394 = vld [vmem:[#allocation8 + $0x1248] sm:$0xff]
    %v1395 = vld [vmem:[#allocation8 + $0x1250] sm:$0xff]
    %v1396 = vld [vmem:[#allocation8 + $0x1258] sm:$0xff]
    %v1397 = vld [vmem:[#allocation8 + $0x1260] sm:$0xff]
    %v1398 = vld [vmem:[#allocation8 + $0x1268] sm:$0xff]
    %v1399 = vld [vmem:[#allocation8 + $0x1270] sm:$0xff]
    %v1400 = vld [vmem:[#allocation8 + $0x1278] sm:$0xff]
    %v1401 = vld [vmem:[#allocation8 + $0x1280] sm:$0xff]
    %v1402 = vld [vmem:[#allocation8 + $0x1288] sm:$0xff]
    %v1403 = vld [vmem:[#allocation8 + $0x1290] sm:$0xff]
    %v1404 = vld [vmem:[#allocation8 + $0x1298] sm:$0xff]
    %v1405 = vld [vmem:[#allocation8 + $0x12a0] sm:$0xff]
    %v1406 = vld [vmem:[#allocation8 + $0x12a8] sm:$0xff]
    %v1407 = vld [vmem:[#allocation8 + $0x12b0] sm:$0xff]
    %v1408 = vld [vmem:[#allocation8 + $0x12b8] sm:$0xff]
    %v1409 = vld [vmem:[#allocation8 + $0x12c0] sm:$0xff]
    %v1410 = vld [vmem:[#allocation8 + $0x12c8] sm:$0xff]
    %v1411 = vld [vmem:[#allocation8 + $0x12d0] sm:$0xff]
    %v1412 = vld [vmem:[#allocation8 + $0x12d8] sm:$0xff]
    %v1413 = vld [vmem:[#allocation8 + $0x12e0] sm:$0xff]
    %v1414 = vld [vmem:[#allocation8 + $0x12e8] sm:$0xff]
    %v1415 = vld [vmem:[#allocation8 + $0x12f0] sm:$0xff]
    %v1416 = vld [vmem:[#allocation8 + $0x12f8] sm:$0xff]
    %v1417 = vld [vmem:[#allocation8 + $0x1300] sm:$0xff]
    %v1418 = vld [vmem:[#allocation8 + $0x1308] sm:$0xff]
    %v1419 = vld [vmem:[#allocation8 + $0x1310] sm:$0xff]
    %v1420 = vld [vmem:[#allocation8 + $0x1318] sm:$0xff]
    %v1421 = vld [vmem:[#allocation8 + $0x1320] sm:$0xff]
    %v1422 = vld [vmem:[#allocation8 + $0x1328] sm:$0xff]
    %v1423 = vld [vmem:[#allocation8 + $0x1330] sm:$0xff]
    %v1424 = vld [vmem:[#allocation8 + $0x1338] sm:$0xff]
    %v1425 = vld [vmem:[#allocation8 + $0x1340] sm:$0xff]
    %v1426 = vld [vmem:[#allocation8 + $0x1348] sm:$0xff]
    %v1427 = vld [vmem:[#allocation8 + $0x1350] sm:$0xff]
    %v1428 = vld [vmem:[#allocation8 + $0x1358] sm:$0xff]
    %v1429 = vld [vmem:[#allocation8 + $0x1360] sm:$0xff]
    %v1430 = vld [vmem:[#allocation8 + $0x1368] sm:$0xff]
    %v1431 = vld [vmem:[#allocation8 + $0x1370] sm:$0xff]
    %v1432 = vld [vmem:[#allocation8 + $0x1378] sm:$0xff]
    %v1433 = vld [vmem:[#allocation8 + $0x1380] sm:$0xff]
    %v1434 = vld [vmem:[#allocation8 + $0x1388] sm:$0xff]
    %v1435 = vld [vmem:[#allocation8 + $0x1390] sm:$0xff]
    %v1436 = vld [vmem:[#allocation8 + $0x1398] sm:$0xff]
    %v1437 = vld [vmem:[#allocation8 + $0x13a0] sm:$0xff]
    %v1438 = vld [vmem:[#allocation8 + $0x13a8] sm:$0xff]
    %v1439 = vld [vmem:[#allocation8 + $0x13b0] sm:$0xff]
    %v1440 = vld [vmem:[#allocation8 + $0x13b8] sm:$0xff]
    %v1441 = vld [vmem:[#allocation8 + $0x13c0] sm:$0xff]
    %v1442 = vld [vmem:[#allocation8 + $0x13c8] sm:$0xff]
    %v1443 = vld [vmem:[#allocation8 + $0x13d0] sm:$0xff]
    %v1444 = vld [vmem:[#allocation8 + $0x13d8] sm:$0xff]
    %v1445 = vld [vmem:[#allocation8 + $0x13e0] sm:$0xff]
    %v1446 = vld [vmem:[#allocation8 + $0x13e8] sm:$0xff]
    %v1447 = vld [vmem:[#allocation8 + $0x13f0] sm:$0xff]
    %v1448 = vld [vmem:[#allocation8 + $0x13f8] sm:$0xff]
    %v1449 = vld [vmem:[#allocation8 + $0x1400] sm:$0xff]
    %v1450 = vld [vmem:[#allocation8 + $0x1408] sm:$0xff]
    %v1451 = vld [vmem:[#allocation8 + $0x1410] sm:$0xff]
    %v1452 = vld [vmem:[#allocation8 + $0x1418] sm:$0xff]
    %v1453 = vld [vmem:[#allocation8 + $0x1420] sm:$0xff]
    %v1454 = vld [vmem:[#allocation8 + $0x1428] sm:$0xff]
    %v1455 = vld [vmem:[#allocation8 + $0x1430] sm:$0xff]
    %v1456 = vld [vmem:[#allocation8 + $0x1438] sm:$0xff]
    %v1457 = vld [vmem:[#allocation8 + $0x1440] sm:$0xff]
    %v1458 = vld [vmem:[#allocation8 + $0x1448] sm:$0xff]
    %v1459 = vld [vmem:[#allocation8 + $0x1450] sm:$0xff]
    %v1460 = vld [vmem:[#allocation8 + $0x1458] sm:$0xff]
    %v1461 = vld [vmem:[#allocation8 + $0x1460] sm:$0xff]
    %v1462 = vld [vmem:[#allocation8 + $0x1468] sm:$0xff]
    %v1463 = vld [vmem:[#allocation8 + $0x1470] sm:$0xff]
    %v1464 = vld [vmem:[#allocation8 + $0x1478] sm:$0xff]
    %v1465 = vld [vmem:[#allocation8 + $0x1480] sm:$0xff]
    %v1466 = vld [vmem:[#allocation8 + $0x1488] sm:$0xff]
    %v1467 = vld [vmem:[#allocation8 + $0x1490] sm:$0xff]
    %v1468 = vld [vmem:[#allocation8 + $0x1498] sm:$0xff]
    %v1469 = vld [vmem:[#allocation8 + $0x14a0] sm:$0xff]
    %v1470 = vld [vmem:[#allocation8 + $0x14a8] sm:$0xff]
    %v1471 = vld [vmem:[#allocation8 + $0x14b0] sm:$0xff]
    %v1472 = vld [vmem:[#allocation8 + $0x14b8] sm:$0xff]
    %v1473 = vld [vmem:[#allocation8 + $0x14c0] sm:$0xff]
    %v1474 = vld [vmem:[#allocation8 + $0x14c8] sm:$0xff]
    %v1475 = vld [vmem:[#allocation8 + $0x14d0] sm:$0xff]
    %v1476 = vld [vmem:[#allocation8 + $0x14d8] sm:$0xff]
    %v1477 = vld [vmem:[#allocation8 + $0x14e0] sm:$0xff]
    %v1478 = vld [vmem:[#allocation8 + $0x14e8] sm:$0xff]
    %v1479 = vld [vmem:[#allocation8 + $0x14f0] sm:$0xff]
    %v1480 = vld [vmem:[#allocation8 + $0x14f8] sm:$0xff]
    %v1481 = vld [vmem:[#allocation8 + $0x1500] sm:$0xff]
    %v1482 = vld [vmem:[#allocation8 + $0x1508] sm:$0xff]
    %v1483 = vld [vmem:[#allocation8 + $0x1510] sm:$0xff]
    %v1484 = vld [vmem:[#allocation8 + $0x1518] sm:$0xff]
    %v1485 = vld [vmem:[#allocation8 + $0x1520] sm:$0xff]
    %v1486 = vld [vmem:[#allocation8 + $0x1528] sm:$0xff]
    %v1487 = vld [vmem:[#allocation8 + $0x1530] sm:$0xff]
    %v1488 = vld [vmem:[#allocation8 + $0x1538] sm:$0xff]
    %v1489 = vld [vmem:[#allocation8 + $0x1540] sm:$0xff]
    %v1490 = vld [vmem:[#allocation8 + $0x1548] sm:$0xff]
    %v1491 = vld [vmem:[#allocation8 + $0x1550] sm:$0xff]
    %v1492 = vld [vmem:[#allocation8 + $0x1558] sm:$0xff]
    %v1493 = vld [vmem:[#allocation8 + $0x1560] sm:$0xff]
    %v1494 = vld [vmem:[#allocation8 + $0x1568] sm:$0xff]
    %v1495 = vld [vmem:[#allocation8 + $0x1570] sm:$0xff]
    %v1496 = vld [vmem:[#allocation8 + $0x1578] sm:$0xff]
    %v1497 = vld [vmem:[#allocation8 + $0x1580] sm:$0xff]
    %v1498 = vld [vmem:[#allocation8 + $0x1588] sm:$0xff]
    %v1499 = vld [vmem:[#allocation8 + $0x1590] sm:$0xff]
    %v1500 = vld [vmem:[#allocation8 + $0x1598] sm:$0xff]
    %v1501 = vld [vmem:[#allocation8 + $0x15a0] sm:$0xff]
    %v1502 = vld [vmem:[#allocation8 + $0x15a8] sm:$0xff]
    %v1503 = vld [vmem:[#allocation8 + $0x15b0] sm:$0xff]
    %v1504 = vld [vmem:[#allocation8 + $0x15b8] sm:$0xff]
    %v1505 = vld [vmem:[#allocation8 + $0x15c0] sm:$0xff]
    %v1506 = vld [vmem:[#allocation8 + $0x15c8] sm:$0xff]
    %v1507 = vld [vmem:[#allocation8 + $0x15d0] sm:$0xff]
    %v1508 = vld [vmem:[#allocation8 + $0x15d8] sm:$0xff]
    %v1509 = vld [vmem:[#allocation8 + $0x15e0] sm:$0xff]
    %v1510 = vld [vmem:[#allocation8 + $0x15e8] sm:$0xff]
    %v1511 = vld [vmem:[#allocation8 + $0x15f0] sm:$0xff]
    %v1512 = vld [vmem:[#allocation8 + $0x15f8] sm:$0xff]
    %v1513 = vld [vmem:[#allocation8 + $0x1600] sm:$0xff]
    %v1514 = vld [vmem:[#allocation8 + $0x1608] sm:$0xff]
    %v1515 = vld [vmem:[#allocation8 + $0x1610] sm:$0xff]
    %v1516 = vld [vmem:[#allocation8 + $0x1618] sm:$0xff]
    %v1517 = vld [vmem:[#allocation8 + $0x1620] sm:$0xff]
    %v1518 = vld [vmem:[#allocation8 + $0x1628] sm:$0xff]
    %v1519 = vld [vmem:[#allocation8 + $0x1630] sm:$0xff]
    %v1520 = vld [vmem:[#allocation8 + $0x1638] sm:$0xff]
    %v1521 = vld [vmem:[#allocation8 + $0x1640] sm:$0xff]
    %v1522 = vld [vmem:[#allocation8 + $0x1648] sm:$0xff]
    %v1523 = vld [vmem:[#allocation8 + $0x1650] sm:$0xff]
    %v1524 = vld [vmem:[#allocation8 + $0x1658] sm:$0xff]
    %v1525 = vld [vmem:[#allocation8 + $0x1660] sm:$0xff]
    %v1526 = vld [vmem:[#allocation8 + $0x1668] sm:$0xff]
    %v1527 = vld [vmem:[#allocation8 + $0x1670] sm:$0xff]
    %v1528 = vld [vmem:[#allocation8 + $0x1678] sm:$0xff]
    %v1529 = vld [vmem:[#allocation8 + $0x1680] sm:$0xff]
    %v1530 = vld [vmem:[#allocation8 + $0x1688] sm:$0xff]
    %v1531 = vld [vmem:[#allocation8 + $0x1690] sm:$0xff]
    %v1532 = vld [vmem:[#allocation8 + $0x1698] sm:$0xff]
    %v1533 = vld [vmem:[#allocation8 + $0x16a0] sm:$0xff]
    %v1534 = vld [vmem:[#allocation8 + $0x16a8] sm:$0xff]
    %v1535 = vld [vmem:[#allocation8 + $0x16b0] sm:$0xff]
    %v1536 = vld [vmem:[#allocation8 + $0x16b8] sm:$0xff]
    %v1537 = vld [vmem:[#allocation8 + $0x16c0] sm:$0xff]
    %v1538 = vld [vmem:[#allocation8 + $0x16c8] sm:$0xff]
    %v1539 = vld [vmem:[#allocation8 + $0x16d0] sm:$0xff]
    %v1540 = vld [vmem:[#allocation8 + $0x16d8] sm:$0xff]
    %v1541 = vld [vmem:[#allocation8 + $0x16e0] sm:$0xff]
    %v1542 = vld [vmem:[#allocation8 + $0x16e8] sm:$0xff]
    %v1543 = vld [vmem:[#allocation8 + $0x16f0] sm:$0xff]
    %v1544 = vld [vmem:[#allocation8 + $0x16f8] sm:$0xff]
    %v1545 = vld [vmem:[#allocation8 + $0x1700] sm:$0xff]
    %v1546 = vld [vmem:[#allocation8 + $0x1708] sm:$0xff]
    %v1547 = vld [vmem:[#allocation8 + $0x1710] sm:$0xff]
    %v1548 = vld [vmem:[#allocation8 + $0x1718] sm:$0xff]
    %v1549 = vld [vmem:[#allocation8 + $0x1720] sm:$0xff]
    %v1550 = vld [vmem:[#allocation8 + $0x1728] sm:$0xff]
    %v1551 = vld [vmem:[#allocation8 + $0x1730] sm:$0xff]
    %v1552 = vld [vmem:[#allocation8 + $0x1738] sm:$0xff]
    %v1553 = vld [vmem:[#allocation8 + $0x1740] sm:$0xff]
    %v1554 = vld [vmem:[#allocation8 + $0x1748] sm:$0xff]
    %v1555 = vld [vmem:[#allocation8 + $0x1750] sm:$0xff]
    %v1556 = vld [vmem:[#allocation8 + $0x1758] sm:$0xff]
    %v1557 = vld [vmem:[#allocation8 + $0x1760] sm:$0xff]
    %v1558 = vld [vmem:[#allocation8 + $0x1768] sm:$0xff]
    %v1559 = vld [vmem:[#allocation8 + $0x1770] sm:$0xff]
    %v1560 = vld [vmem:[#allocation8 + $0x1778] sm:$0xff]
    %v1561 = vld [vmem:[#allocation8 + $0x1780] sm:$0xff]
    %v1562 = vld [vmem:[#allocation8 + $0x1788] sm:$0xff]
    %v1563 = vld [vmem:[#allocation8 + $0x1790] sm:$0xff]
    %v1564 = vld [vmem:[#allocation8 + $0x1798] sm:$0xff]
    %v1565 = vld [vmem:[#allocation8 + $0x17a0] sm:$0xff]
    %v1566 = vld [vmem:[#allocation8 + $0x17a8] sm:$0xff]
    %v1567 = vld [vmem:[#allocation8 + $0x17b0] sm:$0xff]
    %v1568 = vld [vmem:[#allocation8 + $0x17b8] sm:$0xff]
    %v1569 = vld [vmem:[#allocation8 + $0x17c0] sm:$0xff]
    %v1570 = vld [vmem:[#allocation8 + $0x17c8] sm:$0xff]
    %v1571 = vld [vmem:[#allocation8 + $0x17d0] sm:$0xff]
    %v1572 = vld [vmem:[#allocation8 + $0x17d8] sm:$0xff]
    %v1573 = vld [vmem:[#allocation8 + $0x17e0] sm:$0xff]
    %v1574 = vld [vmem:[#allocation8 + $0x17e8] sm:$0xff]
    %v1575 = vld [vmem:[#allocation8 + $0x17f0] sm:$0xff]
    %v1576 = vld [vmem:[#allocation8 + $0x17f8] sm:$0xff]
    %v1577 = vld [vmem:[#allocation8 + $0x1800] sm:$0xff]
    %v1578 = vld [vmem:[#allocation8 + $0x1808] sm:$0xff]
    %v1579 = vld [vmem:[#allocation8 + $0x1810] sm:$0xff]
    %v1580 = vld [vmem:[#allocation8 + $0x1818] sm:$0xff]
    %v1581 = vld [vmem:[#allocation8 + $0x1820] sm:$0xff]
    %v1582 = vld [vmem:[#allocation8 + $0x1828] sm:$0xff]
    %v1583 = vld [vmem:[#allocation8 + $0x1830] sm:$0xff]
    %v1584 = vld [vmem:[#allocation8 + $0x1838] sm:$0xff]
    %v1585 = vld [vmem:[#allocation8 + $0x1840] sm:$0xff]
    %v1586 = vld [vmem:[#allocation8 + $0x1848] sm:$0xff]
    %v1587 = vld [vmem:[#allocation8 + $0x1850] sm:$0xff]
    %v1588 = vld [vmem:[#allocation8 + $0x1858] sm:$0xff]
    %v1589 = vld [vmem:[#allocation8 + $0x1860] sm:$0xff]
    %v1590 = vld [vmem:[#allocation8 + $0x1868] sm:$0xff]
    %v1591 = vld [vmem:[#allocation8 + $0x1870] sm:$0xff]
    %v1592 = vld [vmem:[#allocation8 + $0x1878] sm:$0xff]
    %v1593 = vld [vmem:[#allocation8 + $0x1880] sm:$0xff]
    %v1594 = vld [vmem:[#allocation8 + $0x1888] sm:$0xff]
    %v1595 = vld [vmem:[#allocation8 + $0x1890] sm:$0xff]
    %v1596 = vld [vmem:[#allocation8 + $0x1898] sm:$0xff]
    %v1597 = vld [vmem:[#allocation8 + $0x18a0] sm:$0xff]
    %v1598 = vld [vmem:[#allocation8 + $0x18a8] sm:$0xff]
    %v1599 = vld [vmem:[#allocation8 + $0x18b0] sm:$0xff]
    %v1600 = vld [vmem:[#allocation8 + $0x18b8] sm:$0xff]
    %v1601 = vld [vmem:[#allocation8 + $0x18c0] sm:$0xff]
    %v1602 = vld [vmem:[#allocation8 + $0x18c8] sm:$0xff]
    %v1603 = vld [vmem:[#allocation8 + $0x18d0] sm:$0xff]
    %v1604 = vld [vmem:[#allocation8 + $0x18d8] sm:$0xff]
    %v1605 = vld [vmem:[#allocation8 + $0x18e0] sm:$0xff]
    %v1606 = vld [vmem:[#allocation8 + $0x18e8] sm:$0xff]
    %v1607 = vld [vmem:[#allocation8 + $0x18f0] sm:$0xff]
    %v1608 = vld [vmem:[#allocation8 + $0x18f8] sm:$0xff]
    %v1609 = vld [vmem:[#allocation8 + $0x1900] sm:$0xff]
    %v1610 = vld [vmem:[#allocation8 + $0x1908] sm:$0xff]
    %v1611 = vld [vmem:[#allocation8 + $0x1910] sm:$0xff]
    %v1612 = vld [vmem:[#allocation8 + $0x1918] sm:$0xff]
    %v1613 = vld [vmem:[#allocation8 + $0x1920] sm:$0xff]
    %v1614 = vld [vmem:[#allocation8 + $0x1928] sm:$0xff]
    %v1615 = vld [vmem:[#allocation8 + $0x1930] sm:$0xff]
    %v1616 = vld [vmem:[#allocation8 + $0x1938] sm:$0xff]
    %v1617 = vld [vmem:[#allocation8 + $0x1940] sm:$0xff]
    %v1618 = vld [vmem:[#allocation8 + $0x1948] sm:$0xff]
    %v1619 = vld [vmem:[#allocation8 + $0x1950] sm:$0xff]
    %v1620 = vld [vmem:[#allocation8 + $0x1958] sm:$0xff]
    %v1621 = vld [vmem:[#allocation8 + $0x1960] sm:$0xff]
    %v1622 = vld [vmem:[#allocation8 + $0x1968] sm:$0xff]
    %v1623 = vld [vmem:[#allocation8 + $0x1970] sm:$0xff]
    %v1624 = vld [vmem:[#allocation8 + $0x1978] sm:$0xff]
    %v1625 = vld [vmem:[#allocation8 + $0x1980] sm:$0xff]
    %v1626 = vld [vmem:[#allocation8 + $0x1988] sm:$0xff]
    %v1627 = vld [vmem:[#allocation8 + $0x1990] sm:$0xff]
    %v1628 = vld [vmem:[#allocation8 + $0x1998] sm:$0xff]
    %v1629 = vld [vmem:[#allocation8 + $0x19a0] sm:$0xff]
    %v1630 = vld [vmem:[#allocation8 + $0x19a8] sm:$0xff]
    %v1631 = vld [vmem:[#allocation8 + $0x19b0] sm:$0xff]
    %v1632 = vld [vmem:[#allocation8 + $0x19b8] sm:$0xff]
    %v1633 = vld [vmem:[#allocation8 + $0x19c0] sm:$0xff]
    %v1634 = vld [vmem:[#allocation8 + $0x19c8] sm:$0xff]
    %v1635 = vld [vmem:[#allocation8 + $0x19d0] sm:$0xff]
    %v1636 = vld [vmem:[#allocation8 + $0x19d8] sm:$0xff]
    %v1637 = vld [vmem:[#allocation8 + $0x19e0] sm:$0xff]
    %v1638 = vld [vmem:[#allocation8 + $0x19e8] sm:$0xff]
    %v1639 = vld [vmem:[#allocation8 + $0x19f0] sm:$0xff]
    %v1640 = vld [vmem:[#allocation8 + $0x19f8] sm:$0xff]
    %v1641 = vld [vmem:[#allocation8 + $0x1a00] sm:$0xff]
    %v1642 = vld [vmem:[#allocation8 + $0x1a08] sm:$0xff]
    %v1643 = vld [vmem:[#allocation8 + $0x1a10] sm:$0xff]
    %v1644 = vld [vmem:[#allocation8 + $0x1a18] sm:$0xff]
    %v1645 = vld [vmem:[#allocation8 + $0x1a20] sm:$0xff]
    %v1646 = vld [vmem:[#allocation8 + $0x1a28] sm:$0xff]
    %v1647 = vld [vmem:[#allocation8 + $0x1a30] sm:$0xff]
    %v1648 = vld [vmem:[#allocation8 + $0x1a38] sm:$0xff]
    %v1649 = vld [vmem:[#allocation8 + $0x1a40] sm:$0xff]
    %v1650 = vld [vmem:[#allocation8 + $0x1a48] sm:$0xff]
    %v1651 = vld [vmem:[#allocation8 + $0x1a50] sm:$0xff]
    %v1652 = vld [vmem:[#allocation8 + $0x1a58] sm:$0xff]
    %v1653 = vld [vmem:[#allocation8 + $0x1a60] sm:$0xff]
    %v1654 = vld [vmem:[#allocation8 + $0x1a68] sm:$0xff]
    %v1655 = vld [vmem:[#allocation8 + $0x1a70] sm:$0xff]
    %v1656 = vld [vmem:[#allocation8 + $0x1a78] sm:$0xff]
    %v1657 = vld [vmem:[#allocation8 + $0x1a80] sm:$0xff]
    %v1658 = vld [vmem:[#allocation8 + $0x1a88] sm:$0xff]
    %v1659 = vld [vmem:[#allocation8 + $0x1a90] sm:$0xff]
    %v1660 = vld [vmem:[#allocation8 + $0x1a98] sm:$0xff]
    %v1661 = vld [vmem:[#allocation8 + $0x1aa0] sm:$0xff]
    %v1662 = vld [vmem:[#allocation8 + $0x1aa8] sm:$0xff]
    %v1663 = vld [vmem:[#allocation8 + $0x1ab0] sm:$0xff]
    %v1664 = vld [vmem:[#allocation8 + $0x1ab8] sm:$0xff]
    %v1665 = vld [vmem:[#allocation8 + $0x1ac0] sm:$0xff]
    %v1666 = vld [vmem:[#allocation8 + $0x1ac8] sm:$0xff]
    %v1667 = vld [vmem:[#allocation8 + $0x1ad0] sm:$0xff]
    %v1668 = vld [vmem:[#allocation8 + $0x1ad8] sm:$0xff]
    %v1669 = vld [vmem:[#allocation8 + $0x1ae0] sm:$0xff]
    %v1670 = vld [vmem:[#allocation8 + $0x1ae8] sm:$0xff]
    %v1671 = vld [vmem:[#allocation8 + $0x1af0] sm:$0xff]
    %v1672 = vld [vmem:[#allocation8 + $0x1af8] sm:$0xff]
    %v1673 = vld [vmem:[#allocation8 + $0x1b00] sm:$0xff]
    %v1674 = vld [vmem:[#allocation8 + $0x1b08] sm:$0xff]
    %v1675 = vld [vmem:[#allocation8 + $0x1b10] sm:$0xff]
    %v1676 = vld [vmem:[#allocation8 + $0x1b18] sm:$0xff]
    %v1677 = vld [vmem:[#allocation8 + $0x1b20] sm:$0xff]
    %v1678 = vld [vmem:[#allocation8 + $0x1b28] sm:$0xff]
    %v1679 = vld [vmem:[#allocation8 + $0x1b30] sm:$0xff]
    %v1680 = vld [vmem:[#allocation8 + $0x1b38] sm:$0xff]
    %v1681 = vld [vmem:[#allocation8 + $0x1b40] sm:$0xff]
    %v1682 = vld [vmem:[#allocation8 + $0x1b48] sm:$0xff]
    %v1683 = vld [vmem:[#allocation8 + $0x1b50] sm:$0xff]
    %v1684 = vld [vmem:[#allocation8 + $0x1b58] sm:$0xff]
    %v1685 = vld [vmem:[#allocation8 + $0x1b60] sm:$0xff]
    %v1686 = vld [vmem:[#allocation8 + $0x1b68] sm:$0xff]
    %v1687 = vld [vmem:[#allocation8 + $0x1b70] sm:$0xff]
    %v1688 = vld [vmem:[#allocation8 + $0x1b78] sm:$0xff]
    %v1689 = vld [vmem:[#allocation8 + $0x1b80] sm:$0xff]
    %v1690 = vld [vmem:[#allocation8 + $0x1b88] sm:$0xff]
    %v1691 = vld [vmem:[#allocation8 + $0x1b90] sm:$0xff]
    %v1692 = vld [vmem:[#allocation8 + $0x1b98] sm:$0xff]
    %v1693 = vld [vmem:[#allocation8 + $0x1ba0] sm:$0xff]
    %v1694 = vld [vmem:[#allocation8 + $0x1ba8] sm:$0xff]
    %v1695 = vld [vmem:[#allocation8 + $0x1bb0] sm:$0xff]
    %v1696 = vld [vmem:[#allocation8 + $0x1bb8] sm:$0xff]
    %v1697 = vld [vmem:[#allocation8 + $0x1bc0] sm:$0xff]
    %v1698 = vld [vmem:[#allocation8 + $0x1bc8] sm:$0xff]
    %v1699 = vld [vmem:[#allocation8 + $0x1bd0] sm:$0xff]
    %v1700 = vld [vmem:[#allocation8 + $0x1bd8] sm:$0xff]
    %v1701 = vld [vmem:[#allocation8 + $0x1be0] sm:$0xff]
    %v1702 = vld [vmem:[#allocation8 + $0x1be8] sm:$0xff]
    %v1703 = vld [vmem:[#allocation8 + $0x1bf0] sm:$0xff]
    %v1704 = vld [vmem:[#allocation8 + $0x1bf8] sm:$0xff]
    %v1705 = vld [vmem:[#allocation8 + $0x1c00] sm:$0xff]
    %v1706 = vld [vmem:[#allocation8 + $0x1c08] sm:$0xff]
    %v1707 = vld [vmem:[#allocation8 + $0x1c10] sm:$0xff]
    %v1708 = vld [vmem:[#allocation8 + $0x1c18] sm:$0xff]
    %v1709 = vld [vmem:[#allocation8 + $0x1c20] sm:$0xff]
    %v1710 = vld [vmem:[#allocation8 + $0x1c28] sm:$0xff]
    %v1711 = vld [vmem:[#allocation8 + $0x1c30] sm:$0xff]
    %v1712 = vld [vmem:[#allocation8 + $0x1c38] sm:$0xff]
    %v1713 = vld [vmem:[#allocation8 + $0x1c40] sm:$0xff]
    %v1714 = vld [vmem:[#allocation8 + $0x1c48] sm:$0xff]
    %v1715 = vld [vmem:[#allocation8 + $0x1c50] sm:$0xff]
    %v1716 = vld [vmem:[#allocation8 + $0x1c58] sm:$0xff]
    %v1717 = vld [vmem:[#allocation8 + $0x1c60] sm:$0xff]
    %v1718 = vld [vmem:[#allocation8 + $0x1c68] sm:$0xff]
    %v1719 = vld [vmem:[#allocation8 + $0x1c70] sm:$0xff]
    %v1720 = vld [vmem:[#allocation8 + $0x1c78] sm:$0xff]
    %v1721 = vld [vmem:[#allocation8 + $0x1c80] sm:$0xff]
    %v1722 = vld [vmem:[#allocation8 + $0x1c88] sm:$0xff]
    %v1723 = vld [vmem:[#allocation8 + $0x1c90] sm:$0xff]
    %v1724 = vld [vmem:[#allocation8 + $0x1c98] sm:$0xff]
    %v1725 = vld [vmem:[#allocation8 + $0x1ca0] sm:$0xff]
    %v1726 = vld [vmem:[#allocation8 + $0x1ca8] sm:$0xff]
    %v1727 = vld [vmem:[#allocation8 + $0x1cb0] sm:$0xff]
    %v1728 = vld [vmem:[#allocation8 + $0x1cb8] sm:$0xff]
    %v1729 = vld [vmem:[#allocation8 + $0x1cc0] sm:$0xff]
    %v1730 = vld [vmem:[#allocation8 + $0x1cc8] sm:$0xff]
    %v1731 = vld [vmem:[#allocation8 + $0x1cd0] sm:$0xff]
    %v1732 = vld [vmem:[#allocation8 + $0x1cd8] sm:$0xff]
    %v1733 = vld [vmem:[#allocation8 + $0x1ce0] sm:$0xff]
    %v1734 = vld [vmem:[#allocation8 + $0x1ce8] sm:$0xff]
    %v1735 = vld [vmem:[#allocation8 + $0x1cf0] sm:$0xff]
    %v1736 = vld [vmem:[#allocation8 + $0x1cf8] sm:$0xff]
    %v1737 = vld [vmem:[#allocation8 + $0x1d00] sm:$0xff]
    %v1738 = vld [vmem:[#allocation8 + $0x1d08] sm:$0xff]
    %v1739 = vld [vmem:[#allocation8 + $0x1d10] sm:$0xff]
    %v1740 = vld [vmem:[#allocation8 + $0x1d18] sm:$0xff]
    %v1741 = vld [vmem:[#allocation8 + $0x1d20] sm:$0xff]
    %v1742 = vld [vmem:[#allocation8 + $0x1d28] sm:$0xff]
    %v1743 = vld [vmem:[#allocation8 + $0x1d30] sm:$0xff]
    %v1744 = vld [vmem:[#allocation8 + $0x1d38] sm:$0xff]
    %v1745 = vld [vmem:[#allocation8 + $0x1d40] sm:$0xff]
    %v1746 = vld [vmem:[#allocation8 + $0x1d48] sm:$0xff]
    %v1747 = vld [vmem:[#allocation8 + $0x1d50] sm:$0xff]
    %v1748 = vld [vmem:[#allocation8 + $0x1d58] sm:$0xff]
    %v1749 = vld [vmem:[#allocation8 + $0x1d60] sm:$0xff]
    %v1750 = vld [vmem:[#allocation8 + $0x1d68] sm:$0xff]
    %v1751 = vld [vmem:[#allocation8 + $0x1d70] sm:$0xff]
    %v1752 = vld [vmem:[#allocation8 + $0x1d78] sm:$0xff]
    %v1753 = vld [vmem:[#allocation8 + $0x1d80] sm:$0xff]
    %v1754 = vld [vmem:[#allocation8 + $0x1d88] sm:$0xff]
    %v1755 = vld [vmem:[#allocation8 + $0x1d90] sm:$0xff]
    %v1756 = vld [vmem:[#allocation8 + $0x1d98] sm:$0xff]
    %v1757 = vld [vmem:[#allocation8 + $0x1da0] sm:$0xff]
    %v1758 = vld [vmem:[#allocation8 + $0x1da8] sm:$0xff]
    %v1759 = vld [vmem:[#allocation8 + $0x1db0] sm:$0xff]
    %v1760 = vld [vmem:[#allocation8 + $0x1db8] sm:$0xff]
    %v1761 = vld [vmem:[#allocation8 + $0x1dc0] sm:$0xff]
    %v1762 = vld [vmem:[#allocation8 + $0x1dc8] sm:$0xff]
    %v1763 = vld [vmem:[#allocation8 + $0x1dd0] sm:$0xff]
    %v1764 = vld [vmem:[#allocation8 + $0x1dd8] sm:$0xff]
    %v1765 = vld [vmem:[#allocation8 + $0x1de0] sm:$0xff]
    %v1766 = vld [vmem:[#allocation8 + $0x1de8] sm:$0xff]
    %v1767 = vld [vmem:[#allocation8 + $0x1df0] sm:$0xff]
    %v1768 = vld [vmem:[#allocation8 + $0x1df8] sm:$0xff]
    %v1769 = vld [vmem:[#allocation8 + $0x1e00] sm:$0xff]
    %v1770 = vld [vmem:[#allocation8 + $0x1e08] sm:$0xff]
    %v1771 = vld [vmem:[#allocation8 + $0x1e10] sm:$0xff]
    %v1772 = vld [vmem:[#allocation8 + $0x1e18] sm:$0xff]
    %v1773 = vld [vmem:[#allocation8 + $0x1e20] sm:$0xff]
    %v1774 = vld [vmem:[#allocation8 + $0x1e28] sm:$0xff]
    %v1775 = vld [vmem:[#allocation8 + $0x1e30] sm:$0xff]
    %v1776 = vld [vmem:[#allocation8 + $0x1e38] sm:$0xff]
    %v1777 = vld [vmem:[#allocation8 + $0x1e40] sm:$0xff]
    %v1778 = vld [vmem:[#allocation8 + $0x1e48] sm:$0xff]
    %v1779 = vld [vmem:[#allocation8 + $0x1e50] sm:$0xff]
    %v1780 = vld [vmem:[#allocation8 + $0x1e58] sm:$0xff]
    %v1781 = vld [vmem:[#allocation8 + $0x1e60] sm:$0xff]
    %v1782 = vld [vmem:[#allocation8 + $0x1e68] sm:$0xff]
    %v1783 = vld [vmem:[#allocation8 + $0x1e70] sm:$0xff]
    %v1784 = vld [vmem:[#allocation8 + $0x1e78] sm:$0xff]
    %v1785 = vld [vmem:[#allocation8 + $0x1e80] sm:$0xff]
    %v1786 = vld [vmem:[#allocation8 + $0x1e88] sm:$0xff]
    %v1787 = vld [vmem:[#allocation8 + $0x1e90] sm:$0xff]
    %v1788 = vld [vmem:[#allocation8 + $0x1e98] sm:$0xff]
    %v1789 = vld [vmem:[#allocation8 + $0x1ea0] sm:$0xff]
    %v1790 = vld [vmem:[#allocation8 + $0x1ea8] sm:$0xff]
    %v1791 = vld [vmem:[#allocation8 + $0x1eb0] sm:$0xff]
    %v1792 = vld [vmem:[#allocation8 + $0x1eb8] sm:$0xff]
    %v1793 = vld [vmem:[#allocation8 + $0x1ec0] sm:$0xff]
    %v1794 = vld [vmem:[#allocation8 + $0x1ec8] sm:$0xff]
    %v1795 = vld [vmem:[#allocation8 + $0x1ed0] sm:$0xff]
    %v1796 = vld [vmem:[#allocation8 + $0x1ed8] sm:$0xff]
    %v1797 = vld [vmem:[#allocation8 + $0x1ee0] sm:$0xff]
    %v1798 = vld [vmem:[#allocation8 + $0x1ee8] sm:$0xff]
    %v1799 = vld [vmem:[#allocation8 + $0x1ef0] sm:$0xff]
    %v1800 = vld [vmem:[#allocation8 + $0x1ef8] sm:$0xff]
    %v1801 = vld [vmem:[#allocation8 + $0x1f00] sm:$0xff]
    %v1802 = vld [vmem:[#allocation8 + $0x1f08] sm:$0xff]
    %v1803 = vld [vmem:[#allocation8 + $0x1f10] sm:$0xff]
    %v1804 = vld [vmem:[#allocation8 + $0x1f18] sm:$0xff]
    %v1805 = vld [vmem:[#allocation8 + $0x1f20] sm:$0xff]
    %v1806 = vld [vmem:[#allocation8 + $0x1f28] sm:$0xff]
    %v1807 = vld [vmem:[#allocation8 + $0x1f30] sm:$0xff]
    %v1808 = vld [vmem:[#allocation8 + $0x1f38] sm:$0xff]
    %v1809 = vld [vmem:[#allocation8 + $0x1f40] sm:$0xff]
    %v1810 = vld [vmem:[#allocation8 + $0x1f48] sm:$0xff]
    %v1811 = vld [vmem:[#allocation8 + $0x1f50] sm:$0xff]
    %v1812 = vld [vmem:[#allocation8 + $0x1f58] sm:$0xff]
    %v1813 = vld [vmem:[#allocation8 + $0x1f60] sm:$0xff]
    %v1814 = vld [vmem:[#allocation8 + $0x1f68] sm:$0xff]
    %v1815 = vld [vmem:[#allocation8 + $0x1f70] sm:$0xff]
    %v1816 = vld [vmem:[#allocation8 + $0x1f78] sm:$0xff]
    %v1817 = vld [vmem:[#allocation8 + $0x1f80] sm:$0xff]
    %v1818 = vld [vmem:[#allocation8 + $0x1f88] sm:$0xff]
    %v1819 = vld [vmem:[#allocation8 + $0x1f90] sm:$0xff]
    %v1820 = vld [vmem:[#allocation8 + $0x1f98] sm:$0xff]
    %v1821 = vld [vmem:[#allocation8 + $0x1fa0] sm:$0xff]
    %v1822 = vld [vmem:[#allocation8 + $0x1fa8] sm:$0xff]
    %v1823 = vld [vmem:[#allocation8 + $0x1fb0] sm:$0xff]
    %v1824 = vld [vmem:[#allocation8 + $0x1fb8] sm:$0xff]
    %v1825 = vld [vmem:[#allocation8 + $0x1fc0] sm:$0xff]
    %v1826 = vld [vmem:[#allocation8 + $0x1fc8] sm:$0xff]
    %v1827 = vld [vmem:[#allocation8 + $0x1fd0] sm:$0xff]
    %v1828 = vld [vmem:[#allocation8 + $0x1fd8] sm:$0xff]
    %v1829 = vld [vmem:[#allocation8 + $0x1fe0] sm:$0xff]
    %v1830 = vld [vmem:[#allocation8 + $0x1fe8] sm:$0xff]
    %v1831 = vld [vmem:[#allocation8 + $0x1ff0] sm:$0xff]
    %v1832 = vld [vmem:[#allocation8 + $0x1ff8] sm:$0xff]
    %v1833 = vld [vmem:[#allocation10] sm:$0xff]
    %v1835 = vlaneseq
    %v1836 = vshrl.u32 %v1835, 7
    %v1837 = vsub.s32 0, %v1836
    %v1838 = vrot.slane %v1833, %v1837
    %v1839 = vlaneseq
    %v1840 = vshrl.u32 %v1839, 7
    %v1841 = vsub.s32 1, %v1840
    %v1842 = vrot.slane %v1833, %v1841
    %v1843 = vlaneseq
    %v1844 = vshrl.u32 %v1843, 7
    %v1845 = vsub.s32 2, %v1844
    %v1846 = vrot.slane %v1833, %v1845
    %v1847 = vlaneseq
    %v1848 = vshrl.u32 %v1847, 7
    %v1849 = vsub.s32 3, %v1848
    %v1850 = vrot.slane %v1833, %v1849
    %v1851 = vlaneseq
    %v1852 = vshrl.u32 %v1851, 7
    %v1853 = vsub.s32 4, %v1852
    %v1854 = vrot.slane %v1833, %v1853
    %v1855 = vlaneseq
    %v1856 = vshrl.u32 %v1855, 7
    %v1857 = vsub.s32 5, %v1856
    %v1858 = vrot.slane %v1833, %v1857
    %v1859 = vlaneseq
    %v1860 = vshrl.u32 %v1859, 7
    %v1861 = vsub.s32 6, %v1860
    %v1862 = vrot.slane %v1833, %v1861
    %v1863 = vlaneseq
    %v1864 = vshrl.u32 %v1863, 7
    %v1865 = vsub.s32 7, %v1864
    %v1866 = vrot.slane %v1833, %v1865
    %v2899 = vunpack.c.l.b16 %v809
    %v2900 = vunpack.c.h.b16 %v809
    %v2901 = vunpack.c.l.b16 %v810
    %v2902 = vunpack.c.h.b16 %v810
    %v2903 = vunpack.c.l.b16 %v811
    %v2904 = vunpack.c.h.b16 %v811
    %v2905 = vunpack.c.l.b16 %v812
    %v2906 = vunpack.c.h.b16 %v812
    %v2907 = vunpack.c.l.b16 %v813
    %v2908 = vunpack.c.h.b16 %v813
    %v2909 = vunpack.c.l.b16 %v814
    %v2910 = vunpack.c.h.b16 %v814
    %v2911 = vunpack.c.l.b16 %v815
    %v2912 = vunpack.c.h.b16 %v815
    %v2913 = vunpack.c.l.b16 %v816
    %v2914 = vunpack.c.h.b16 %v816
    %v2915 = vunpack.c.l.b16 %v817
    %v2916 = vunpack.c.h.b16 %v817
    %v2917 = vunpack.c.l.b16 %v818
    %v2918 = vunpack.c.h.b16 %v818
    %v2919 = vunpack.c.l.b16 %v819
    %v2920 = vunpack.c.h.b16 %v819
    %v2921 = vunpack.c.l.b16 %v820
    %v2922 = vunpack.c.h.b16 %v820
    %v2923 = vunpack.c.l.b16 %v821
    %v2924 = vunpack.c.h.b16 %v821
    %v2925 = vunpack.c.l.b16 %v822
    %v2926 = vunpack.c.h.b16 %v822
    %v2927 = vunpack.c.l.b16 %v823
    %v2928 = vunpack.c.h.b16 %v823
    %v2929 = vunpack.c.l.b16 %v824
    %v2930 = vunpack.c.h.b16 %v824
    %v2931 = vunpack.c.l.b16 %v825
    %v2932 = vunpack.c.h.b16 %v825
    %v2933 = vunpack.c.l.b16 %v826
    %v2934 = vunpack.c.h.b16 %v826
    %v2935 = vunpack.c.l.b16 %v827
    %v2936 = vunpack.c.h.b16 %v827
    %v2937 = vunpack.c.l.b16 %v828
    %v2938 = vunpack.c.h.b16 %v828
    %v2939 = vunpack.c.l.b16 %v829
    %v2940 = vunpack.c.h.b16 %v829
    %v2941 = vunpack.c.l.b16 %v830
    %v2942 = vunpack.c.h.b16 %v830
    %v2943 = vunpack.c.l.b16 %v831
    %v2944 = vunpack.c.h.b16 %v831
    %v2945 = vunpack.c.l.b16 %v832
    %v2946 = vunpack.c.h.b16 %v832
    %v2947 = vunpack.c.l.b16 %v833
    %v2948 = vunpack.c.h.b16 %v833
    %v2949 = vunpack.c.l.b16 %v834
    %v2950 = vunpack.c.h.b16 %v834
    %v2951 = vunpack.c.l.b16 %v835
    %v2952 = vunpack.c.h.b16 %v835
    %v2953 = vunpack.c.l.b16 %v836
    %v2954 = vunpack.c.h.b16 %v836
    %v2955 = vunpack.c.l.b16 %v837
    %v2956 = vunpack.c.h.b16 %v837
    %v2957 = vunpack.c.l.b16 %v838
    %v2958 = vunpack.c.h.b16 %v838
    %v2959 = vunpack.c.l.b16 %v839
    %v2960 = vunpack.c.h.b16 %v839
    %v2961 = vunpack.c.l.b16 %v840
    %v2962 = vunpack.c.h.b16 %v840
    %v2963 = vunpack.c.l.b16 %v841
    %v2964 = vunpack.c.h.b16 %v841
    %v2965 = vunpack.c.l.b16 %v842
    %v2966 = vunpack.c.h.b16 %v842
    %v2967 = vunpack.c.l.b16 %v843
    %v2968 = vunpack.c.h.b16 %v843
    %v2969 = vunpack.c.l.b16 %v844
    %v2970 = vunpack.c.h.b16 %v844
    %v2971 = vunpack.c.l.b16 %v845
    %v2972 = vunpack.c.h.b16 %v845
    %v2973 = vunpack.c.l.b16 %v846
    %v2974 = vunpack.c.h.b16 %v846
    %v2975 = vunpack.c.l.b16 %v847
    %v2976 = vunpack.c.h.b16 %v847
    %v2977 = vunpack.c.l.b16 %v848
    %v2978 = vunpack.c.h.b16 %v848
    %v2979 = vunpack.c.l.b16 %v849
    %v2980 = vunpack.c.h.b16 %v849
    %v2981 = vunpack.c.l.b16 %v850
    %v2982 = vunpack.c.h.b16 %v850
    %v2983 = vunpack.c.l.b16 %v851
    %v2984 = vunpack.c.h.b16 %v851
    %v2985 = vunpack.c.l.b16 %v852
    %v2986 = vunpack.c.h.b16 %v852
    %v2987 = vunpack.c.l.b16 %v853
    %v2988 = vunpack.c.h.b16 %v853
    %v2989 = vunpack.c.l.b16 %v854
    %v2990 = vunpack.c.h.b16 %v854
    %v2991 = vunpack.c.l.b16 %v855
    %v2992 = vunpack.c.h.b16 %v855
    %v2993 = vunpack.c.l.b16 %v856
    %v2994 = vunpack.c.h.b16 %v856
    %v2995 = vunpack.c.l.b16 %v857
    %v2996 = vunpack.c.h.b16 %v857
    %v2997 = vunpack.c.l.b16 %v858
    %v2998 = vunpack.c.h.b16 %v858
    %v2999 = vunpack.c.l.b16 %v859
    %v3000 = vunpack.c.h.b16 %v859
    %v3001 = vunpack.c.l.b16 %v860
    %v3002 = vunpack.c.h.b16 %v860
    %v3003 = vunpack.c.l.b16 %v861
    %v3004 = vunpack.c.h.b16 %v861
    %v3005 = vunpack.c.l.b16 %v862
    %v3006 = vunpack.c.h.b16 %v862
    %v3007 = vunpack.c.l.b16 %v863
    %v3008 = vunpack.c.h.b16 %v863
    %v3009 = vunpack.c.l.b16 %v864
    %v3010 = vunpack.c.h.b16 %v864
    %v3011 = vunpack.c.l.b16 %v865
    %v3012 = vunpack.c.h.b16 %v865
    %v3013 = vunpack.c.l.b16 %v866
    %v3014 = vunpack.c.h.b16 %v866
    %v3015 = vunpack.c.l.b16 %v867
    %v3016 = vunpack.c.h.b16 %v867
    %v3017 = vunpack.c.l.b16 %v868
    %v3018 = vunpack.c.h.b16 %v868
    %v3019 = vunpack.c.l.b16 %v869
    %v3020 = vunpack.c.h.b16 %v869
    %v3021 = vunpack.c.l.b16 %v870
    %v3022 = vunpack.c.h.b16 %v870
    %v3023 = vunpack.c.l.b16 %v871
    %v3024 = vunpack.c.h.b16 %v871
    %v3025 = vunpack.c.l.b16 %v872
    %v3026 = vunpack.c.h.b16 %v872
    %v3027 = vunpack.c.l.b16 %v873
    %v3028 = vunpack.c.h.b16 %v873
    %v3029 = vunpack.c.l.b16 %v874
    %v3030 = vunpack.c.h.b16 %v874
    %v3031 = vunpack.c.l.b16 %v875
    %v3032 = vunpack.c.h.b16 %v875
    %v3033 = vunpack.c.l.b16 %v876
    %v3034 = vunpack.c.h.b16 %v876
    %v3035 = vunpack.c.l.b16 %v877
    %v3036 = vunpack.c.h.b16 %v877
    %v3037 = vunpack.c.l.b16 %v878
    %v3038 = vunpack.c.h.b16 %v878
    %v3039 = vunpack.c.l.b16 %v879
    %v3040 = vunpack.c.h.b16 %v879
    %v3041 = vunpack.c.l.b16 %v880
    %v3042 = vunpack.c.h.b16 %v880
    %v3043 = vunpack.c.l.b16 %v881
    %v3044 = vunpack.c.h.b16 %v881
    %v3045 = vunpack.c.l.b16 %v882
    %v3046 = vunpack.c.h.b16 %v882
    %v3047 = vunpack.c.l.b16 %v883
    %v3048 = vunpack.c.h.b16 %v883
    %v3049 = vunpack.c.l.b16 %v884
    %v3050 = vunpack.c.h.b16 %v884
    %v3051 = vunpack.c.l.b16 %v885
    %v3052 = vunpack.c.h.b16 %v885
    %v3053 = vunpack.c.l.b16 %v886
    %v3054 = vunpack.c.h.b16 %v886
    %v3055 = vunpack.c.l.b16 %v887
    %v3056 = vunpack.c.h.b16 %v887
    %v3057 = vunpack.c.l.b16 %v888
    %v3058 = vunpack.c.h.b16 %v888
    %v3059 = vunpack.c.l.b16 %v889
    %v3060 = vunpack.c.h.b16 %v889
    %v3061 = vunpack.c.l.b16 %v890
    %v3062 = vunpack.c.h.b16 %v890
    %v3063 = vunpack.c.l.b16 %v891
    %v3064 = vunpack.c.h.b16 %v891
    %v3065 = vunpack.c.l.b16 %v892
    %v3066 = vunpack.c.h.b16 %v892
    %v3067 = vunpack.c.l.b16 %v893
    %v3068 = vunpack.c.h.b16 %v893
    %v3069 = vunpack.c.l.b16 %v894
    %v3070 = vunpack.c.h.b16 %v894
    %v3071 = vunpack.c.l.b16 %v895
    %v3072 = vunpack.c.h.b16 %v895
    %v3073 = vunpack.c.l.b16 %v896
    %v3074 = vunpack.c.h.b16 %v896
    %v3075 = vunpack.c.l.b16 %v897
    %v3076 = vunpack.c.h.b16 %v897
    %v3077 = vunpack.c.l.b16 %v898
    %v3078 = vunpack.c.h.b16 %v898
    %v3079 = vunpack.c.l.b16 %v899
    %v3080 = vunpack.c.h.b16 %v899
    %v3081 = vunpack.c.l.b16 %v900
    %v3082 = vunpack.c.h.b16 %v900
    %v3083 = vunpack.c.l.b16 %v901
    %v3084 = vunpack.c.h.b16 %v901
    %v3085 = vunpack.c.l.b16 %v902
    %v3086 = vunpack.c.h.b16 %v902
    %v3087 = vunpack.c.l.b16 %v903
    %v3088 = vunpack.c.h.b16 %v903
    %v3089 = vunpack.c.l.b16 %v904
    %v3090 = vunpack.c.h.b16 %v904
    %v3091 = vunpack.c.l.b16 %v905
    %v3092 = vunpack.c.h.b16 %v905
    %v3093 = vunpack.c.l.b16 %v906
    %v3094 = vunpack.c.h.b16 %v906
    %v3095 = vunpack.c.l.b16 %v907
    %v3096 = vunpack.c.h.b16 %v907
    %v3097 = vunpack.c.l.b16 %v908
    %v3098 = vunpack.c.h.b16 %v908
    %v3099 = vunpack.c.l.b16 %v909
    %v3100 = vunpack.c.h.b16 %v909
    %v3101 = vunpack.c.l.b16 %v910
    %v3102 = vunpack.c.h.b16 %v910
    %v3103 = vunpack.c.l.b16 %v911
    %v3104 = vunpack.c.h.b16 %v911
    %v3105 = vunpack.c.l.b16 %v912
    %v3106 = vunpack.c.h.b16 %v912
    %v3107 = vunpack.c.l.b16 %v913
    %v3108 = vunpack.c.h.b16 %v913
    %v3109 = vunpack.c.l.b16 %v914
    %v3110 = vunpack.c.h.b16 %v914
    %v3111 = vunpack.c.l.b16 %v915
    %v3112 = vunpack.c.h.b16 %v915
    %v3113 = vunpack.c.l.b16 %v916
    %v3114 = vunpack.c.h.b16 %v916
    %v3115 = vunpack.c.l.b16 %v917
    %v3116 = vunpack.c.h.b16 %v917
    %v3117 = vunpack.c.l.b16 %v918
    %v3118 = vunpack.c.h.b16 %v918
    %v3119 = vunpack.c.l.b16 %v919
    %v3120 = vunpack.c.h.b16 %v919
    %v3121 = vunpack.c.l.b16 %v920
    %v3122 = vunpack.c.h.b16 %v920
    %v3123 = vunpack.c.l.b16 %v921
    %v3124 = vunpack.c.h.b16 %v921
    %v3125 = vunpack.c.l.b16 %v922
    %v3126 = vunpack.c.h.b16 %v922
    %v3127 = vunpack.c.l.b16 %v923
    %v3128 = vunpack.c.h.b16 %v923
    %v3129 = vunpack.c.l.b16 %v924
    %v3130 = vunpack.c.h.b16 %v924
    %v3131 = vunpack.c.l.b16 %v925
    %v3132 = vunpack.c.h.b16 %v925
    %v3133 = vunpack.c.l.b16 %v926
    %v3134 = vunpack.c.h.b16 %v926
    %v3135 = vunpack.c.l.b16 %v927
    %v3136 = vunpack.c.h.b16 %v927
    %v3137 = vunpack.c.l.b16 %v928
    %v3138 = vunpack.c.h.b16 %v928
    %v3139 = vunpack.c.l.b16 %v929
    %v3140 = vunpack.c.h.b16 %v929
    %v3141 = vunpack.c.l.b16 %v930
    %v3142 = vunpack.c.h.b16 %v930
    %v3143 = vunpack.c.l.b16 %v931
    %v3144 = vunpack.c.h.b16 %v931
    %v3145 = vunpack.c.l.b16 %v932
    %v3146 = vunpack.c.h.b16 %v932
    %v3147 = vunpack.c.l.b16 %v933
    %v3148 = vunpack.c.h.b16 %v933
    %v3149 = vunpack.c.l.b16 %v934
    %v3150 = vunpack.c.h.b16 %v934
    %v3151 = vunpack.c.l.b16 %v935
    %v3152 = vunpack.c.h.b16 %v935
    %v3153 = vunpack.c.l.b16 %v936
    %v3154 = vunpack.c.h.b16 %v936
    %v3155 = vunpack.c.l.b16 %v937
    %v3156 = vunpack.c.h.b16 %v937
    %v3157 = vunpack.c.l.b16 %v938
    %v3158 = vunpack.c.h.b16 %v938
    %v3159 = vunpack.c.l.b16 %v939
    %v3160 = vunpack.c.h.b16 %v939
    %v3161 = vunpack.c.l.b16 %v940
    %v3162 = vunpack.c.h.b16 %v940
    %v3163 = vunpack.c.l.b16 %v941
    %v3164 = vunpack.c.h.b16 %v941
    %v3165 = vunpack.c.l.b16 %v942
    %v3166 = vunpack.c.h.b16 %v942
    %v3167 = vunpack.c.l.b16 %v943
    %v3168 = vunpack.c.h.b16 %v943
    %v3169 = vunpack.c.l.b16 %v944
    %v3170 = vunpack.c.h.b16 %v944
    %v3171 = vunpack.c.l.b16 %v945
    %v3172 = vunpack.c.h.b16 %v945
    %v3173 = vunpack.c.l.b16 %v946
    %v3174 = vunpack.c.h.b16 %v946
    %v3175 = vunpack.c.l.b16 %v947
    %v3176 = vunpack.c.h.b16 %v947
    %v3177 = vunpack.c.l.b16 %v948
    %v3178 = vunpack.c.h.b16 %v948
    %v3179 = vunpack.c.l.b16 %v949
    %v3180 = vunpack.c.h.b16 %v949
    %v3181 = vunpack.c.l.b16 %v950
    %v3182 = vunpack.c.h.b16 %v950
    %v3183 = vunpack.c.l.b16 %v951
    %v3184 = vunpack.c.h.b16 %v951
    %v3185 = vunpack.c.l.b16 %v952
    %v3186 = vunpack.c.h.b16 %v952
    %v3187 = vunpack.c.l.b16 %v953
    %v3188 = vunpack.c.h.b16 %v953
    %v3189 = vunpack.c.l.b16 %v954
    %v3190 = vunpack.c.h.b16 %v954
    %v3191 = vunpack.c.l.b16 %v955
    %v3192 = vunpack.c.h.b16 %v955
    %v3193 = vunpack.c.l.b16 %v956
    %v3194 = vunpack.c.h.b16 %v956
    %v3195 = vunpack.c.l.b16 %v957
    %v3196 = vunpack.c.h.b16 %v957
    %v3197 = vunpack.c.l.b16 %v958
    %v3198 = vunpack.c.h.b16 %v958
    %v3199 = vunpack.c.l.b16 %v959
    %v3200 = vunpack.c.h.b16 %v959
    %v3201 = vunpack.c.l.b16 %v960
    %v3202 = vunpack.c.h.b16 %v960
    %v3203 = vunpack.c.l.b16 %v961
    %v3204 = vunpack.c.h.b16 %v961
    %v3205 = vunpack.c.l.b16 %v962
    %v3206 = vunpack.c.h.b16 %v962
    %v3207 = vunpack.c.l.b16 %v963
    %v3208 = vunpack.c.h.b16 %v963
    %v3209 = vunpack.c.l.b16 %v964
    %v3210 = vunpack.c.h.b16 %v964
    %v3211 = vunpack.c.l.b16 %v965
    %v3212 = vunpack.c.h.b16 %v965
    %v3213 = vunpack.c.l.b16 %v966
    %v3214 = vunpack.c.h.b16 %v966
    %v3215 = vunpack.c.l.b16 %v967
    %v3216 = vunpack.c.h.b16 %v967
    %v3217 = vunpack.c.l.b16 %v968
    %v3218 = vunpack.c.h.b16 %v968
    %v3219 = vunpack.c.l.b16 %v969
    %v3220 = vunpack.c.h.b16 %v969
    %v3221 = vunpack.c.l.b16 %v970
    %v3222 = vunpack.c.h.b16 %v970
    %v3223 = vunpack.c.l.b16 %v971
    %v3224 = vunpack.c.h.b16 %v971
    %v3225 = vunpack.c.l.b16 %v972
    %v3226 = vunpack.c.h.b16 %v972
    %v3227 = vunpack.c.l.b16 %v973
    %v3228 = vunpack.c.h.b16 %v973
    %v3229 = vunpack.c.l.b16 %v974
    %v3230 = vunpack.c.h.b16 %v974
    %v3231 = vunpack.c.l.b16 %v975
    %v3232 = vunpack.c.h.b16 %v975
    %v3233 = vunpack.c.l.b16 %v976
    %v3234 = vunpack.c.h.b16 %v976
    %v3235 = vunpack.c.l.b16 %v977
    %v3236 = vunpack.c.h.b16 %v977
    %v3237 = vunpack.c.l.b16 %v978
    %v3238 = vunpack.c.h.b16 %v978
    %v3239 = vunpack.c.l.b16 %v979
    %v3240 = vunpack.c.h.b16 %v979
    %v3241 = vunpack.c.l.b16 %v980
    %v3242 = vunpack.c.h.b16 %v980
    %v3243 = vunpack.c.l.b16 %v981
    %v3244 = vunpack.c.h.b16 %v981
    %v3245 = vunpack.c.l.b16 %v982
    %v3246 = vunpack.c.h.b16 %v982
    %v3247 = vunpack.c.l.b16 %v983
    %v3248 = vunpack.c.h.b16 %v983
    %v3249 = vunpack.c.l.b16 %v984
    %v3250 = vunpack.c.h.b16 %v984
    %v3251 = vunpack.c.l.b16 %v985
    %v3252 = vunpack.c.h.b16 %v985
    %v3253 = vunpack.c.l.b16 %v986
    %v3254 = vunpack.c.h.b16 %v986
    %v3255 = vunpack.c.l.b16 %v987
    %v3256 = vunpack.c.h.b16 %v987
    %v3257 = vunpack.c.l.b16 %v988
    %v3258 = vunpack.c.h.b16 %v988
    %v3259 = vunpack.c.l.b16 %v989
    %v3260 = vunpack.c.h.b16 %v989
    %v3261 = vunpack.c.l.b16 %v990
    %v3262 = vunpack.c.h.b16 %v990
    %v3263 = vunpack.c.l.b16 %v991
    %v3264 = vunpack.c.h.b16 %v991
    %v3265 = vunpack.c.l.b16 %v992
    %v3266 = vunpack.c.h.b16 %v992
    %v3267 = vunpack.c.l.b16 %v993
    %v3268 = vunpack.c.h.b16 %v993
    %v3269 = vunpack.c.l.b16 %v994
    %v3270 = vunpack.c.h.b16 %v994
    %v3271 = vunpack.c.l.b16 %v995
    %v3272 = vunpack.c.h.b16 %v995
    %v3273 = vunpack.c.l.b16 %v996
    %v3274 = vunpack.c.h.b16 %v996
    %v3275 = vunpack.c.l.b16 %v997
    %v3276 = vunpack.c.h.b16 %v997
    %v3277 = vunpack.c.l.b16 %v998
    %v3278 = vunpack.c.h.b16 %v998
    %v3279 = vunpack.c.l.b16 %v999
    %v3280 = vunpack.c.h.b16 %v999
    %v3281 = vunpack.c.l.b16 %v1000
    %v3282 = vunpack.c.h.b16 %v1000
    %v3283 = vunpack.c.l.b16 %v1001
    %v3284 = vunpack.c.h.b16 %v1001
    %v3285 = vunpack.c.l.b16 %v1002
    %v3286 = vunpack.c.h.b16 %v1002
    %v3287 = vunpack.c.l.b16 %v1003
    %v3288 = vunpack.c.h.b16 %v1003
    %v3289 = vunpack.c.l.b16 %v1004
    %v3290 = vunpack.c.h.b16 %v1004
    %v3291 = vunpack.c.l.b16 %v1005
    %v3292 = vunpack.c.h.b16 %v1005
    %v3293 = vunpack.c.l.b16 %v1006
    %v3294 = vunpack.c.h.b16 %v1006
    %v3295 = vunpack.c.l.b16 %v1007
    %v3296 = vunpack.c.h.b16 %v1007
    %v3297 = vunpack.c.l.b16 %v1008
    %v3298 = vunpack.c.h.b16 %v1008
    %v3299 = vunpack.c.l.b16 %v1009
    %v3300 = vunpack.c.h.b16 %v1009
    %v3301 = vunpack.c.l.b16 %v1010
    %v3302 = vunpack.c.h.b16 %v1010
    %v3303 = vunpack.c.l.b16 %v1011
    %v3304 = vunpack.c.h.b16 %v1011
    %v3305 = vunpack.c.l.b16 %v1012
    %v3306 = vunpack.c.h.b16 %v1012
    %v3307 = vunpack.c.l.b16 %v1013
    %v3308 = vunpack.c.h.b16 %v1013
    %v3309 = vunpack.c.l.b16 %v1014
    %v3310 = vunpack.c.h.b16 %v1014
    %v3311 = vunpack.c.l.b16 %v1015
    %v3312 = vunpack.c.h.b16 %v1015
    %v3313 = vunpack.c.l.b16 %v1016
    %v3314 = vunpack.c.h.b16 %v1016
    %v3315 = vunpack.c.l.b16 %v1017
    %v3316 = vunpack.c.h.b16 %v1017
    %v3317 = vunpack.c.l.b16 %v1018
    %v3318 = vunpack.c.h.b16 %v1018
    %v3319 = vunpack.c.l.b16 %v1019
    %v3320 = vunpack.c.h.b16 %v1019
    %v3321 = vunpack.c.l.b16 %v1020
    %v3322 = vunpack.c.h.b16 %v1020
    %v3323 = vunpack.c.l.b16 %v1021
    %v3324 = vunpack.c.h.b16 %v1021
    %v3325 = vunpack.c.l.b16 %v1022
    %v3326 = vunpack.c.h.b16 %v1022
    %v3327 = vunpack.c.l.b16 %v1023
    %v3328 = vunpack.c.h.b16 %v1023
    %v3329 = vunpack.c.l.b16 %v1024
    %v3330 = vunpack.c.h.b16 %v1024
    %v3331 = vunpack.c.l.b16 %v1025
    %v3332 = vunpack.c.h.b16 %v1025
    %v3333 = vunpack.c.l.b16 %v1026
    %v3334 = vunpack.c.h.b16 %v1026
    %v3335 = vunpack.c.l.b16 %v1027
    %v3336 = vunpack.c.h.b16 %v1027
    %v3337 = vunpack.c.l.b16 %v1028
    %v3338 = vunpack.c.h.b16 %v1028
    %v3339 = vunpack.c.l.b16 %v1029
    %v3340 = vunpack.c.h.b16 %v1029
    %v3341 = vunpack.c.l.b16 %v1030
    %v3342 = vunpack.c.h.b16 %v1030
    %v3343 = vunpack.c.l.b16 %v1031
    %v3344 = vunpack.c.h.b16 %v1031
    %v3345 = vunpack.c.l.b16 %v1032
    %v3346 = vunpack.c.h.b16 %v1032
    %v3347 = vunpack.c.l.b16 %v1033
    %v3348 = vunpack.c.h.b16 %v1033
    %v3349 = vunpack.c.l.b16 %v1034
    %v3350 = vunpack.c.h.b16 %v1034
    %v3351 = vunpack.c.l.b16 %v1035
    %v3352 = vunpack.c.h.b16 %v1035
    %v3353 = vunpack.c.l.b16 %v1036
    %v3354 = vunpack.c.h.b16 %v1036
    %v3355 = vunpack.c.l.b16 %v1037
    %v3356 = vunpack.c.h.b16 %v1037
    %v3357 = vunpack.c.l.b16 %v1038
    %v3358 = vunpack.c.h.b16 %v1038
    %v3359 = vunpack.c.l.b16 %v1039
    %v3360 = vunpack.c.h.b16 %v1039
    %v3361 = vunpack.c.l.b16 %v1040
    %v3362 = vunpack.c.h.b16 %v1040
    %v3363 = vunpack.c.l.b16 %v1041
    %v3364 = vunpack.c.h.b16 %v1041
    %v3365 = vunpack.c.l.b16 %v1042
    %v3366 = vunpack.c.h.b16 %v1042
    %v3367 = vunpack.c.l.b16 %v1043
    %v3368 = vunpack.c.h.b16 %v1043
    %v3369 = vunpack.c.l.b16 %v1044
    %v3370 = vunpack.c.h.b16 %v1044
    %v3371 = vunpack.c.l.b16 %v1045
    %v3372 = vunpack.c.h.b16 %v1045
    %v3373 = vunpack.c.l.b16 %v1046
    %v3374 = vunpack.c.h.b16 %v1046
    %v3375 = vunpack.c.l.b16 %v1047
    %v3376 = vunpack.c.h.b16 %v1047
    %v3377 = vunpack.c.l.b16 %v1048
    %v3378 = vunpack.c.h.b16 %v1048
    %v3379 = vunpack.c.l.b16 %v1049
    %v3380 = vunpack.c.h.b16 %v1049
    %v3381 = vunpack.c.l.b16 %v1050
    %v3382 = vunpack.c.h.b16 %v1050
    %v3383 = vunpack.c.l.b16 %v1051
    %v3384 = vunpack.c.h.b16 %v1051
    %v3385 = vunpack.c.l.b16 %v1052
    %v3386 = vunpack.c.h.b16 %v1052
    %v3387 = vunpack.c.l.b16 %v1053
    %v3388 = vunpack.c.h.b16 %v1053
    %v3389 = vunpack.c.l.b16 %v1054
    %v3390 = vunpack.c.h.b16 %v1054
    %v3391 = vunpack.c.l.b16 %v1055
    %v3392 = vunpack.c.h.b16 %v1055
    %v3393 = vunpack.c.l.b16 %v1056
    %v3394 = vunpack.c.h.b16 %v1056
    %v3395 = vunpack.c.l.b16 %v1057
    %v3396 = vunpack.c.h.b16 %v1057
    %v3397 = vunpack.c.l.b16 %v1058
    %v3398 = vunpack.c.h.b16 %v1058
    %v3399 = vunpack.c.l.b16 %v1059
    %v3400 = vunpack.c.h.b16 %v1059
    %v3401 = vunpack.c.l.b16 %v1060
    %v3402 = vunpack.c.h.b16 %v1060
    %v3403 = vunpack.c.l.b16 %v1061
    %v3404 = vunpack.c.h.b16 %v1061
    %v3405 = vunpack.c.l.b16 %v1062
    %v3406 = vunpack.c.h.b16 %v1062
    %v3407 = vunpack.c.l.b16 %v1063
    %v3408 = vunpack.c.h.b16 %v1063
    %v3409 = vunpack.c.l.b16 %v1064
    %v3410 = vunpack.c.h.b16 %v1064
    %v3411 = vunpack.c.l.b16 %v1065
    %v3412 = vunpack.c.h.b16 %v1065
    %v3413 = vunpack.c.l.b16 %v1066
    %v3414 = vunpack.c.h.b16 %v1066
    %v3415 = vunpack.c.l.b16 %v1067
    %v3416 = vunpack.c.h.b16 %v1067
    %v3417 = vunpack.c.l.b16 %v1068
    %v3418 = vunpack.c.h.b16 %v1068
    %v3419 = vunpack.c.l.b16 %v1069
    %v3420 = vunpack.c.h.b16 %v1069
    %v3421 = vunpack.c.l.b16 %v1070
    %v3422 = vunpack.c.h.b16 %v1070
    %v3423 = vunpack.c.l.b16 %v1071
    %v3424 = vunpack.c.h.b16 %v1071
    %v3425 = vunpack.c.l.b16 %v1072
    %v3426 = vunpack.c.h.b16 %v1072
    %v3427 = vunpack.c.l.b16 %v1073
    %v3428 = vunpack.c.h.b16 %v1073
    %v3429 = vunpack.c.l.b16 %v1074
    %v3430 = vunpack.c.h.b16 %v1074
    %v3431 = vunpack.c.l.b16 %v1075
    %v3432 = vunpack.c.h.b16 %v1075
    %v3433 = vunpack.c.l.b16 %v1076
    %v3434 = vunpack.c.h.b16 %v1076
    %v3435 = vunpack.c.l.b16 %v1077
    %v3436 = vunpack.c.h.b16 %v1077
    %v3437 = vunpack.c.l.b16 %v1078
    %v3438 = vunpack.c.h.b16 %v1078
    %v3439 = vunpack.c.l.b16 %v1079
    %v3440 = vunpack.c.h.b16 %v1079
    %v3441 = vunpack.c.l.b16 %v1080
    %v3442 = vunpack.c.h.b16 %v1080
    %v3443 = vunpack.c.l.b16 %v1081
    %v3444 = vunpack.c.h.b16 %v1081
    %v3445 = vunpack.c.l.b16 %v1082
    %v3446 = vunpack.c.h.b16 %v1082
    %v3447 = vunpack.c.l.b16 %v1083
    %v3448 = vunpack.c.h.b16 %v1083
    %v3449 = vunpack.c.l.b16 %v1084
    %v3450 = vunpack.c.h.b16 %v1084
    %v3451 = vunpack.c.l.b16 %v1085
    %v3452 = vunpack.c.h.b16 %v1085
    %v3453 = vunpack.c.l.b16 %v1086
    %v3454 = vunpack.c.h.b16 %v1086
    %v3455 = vunpack.c.l.b16 %v1087
    %v3456 = vunpack.c.h.b16 %v1087
    %v3457 = vunpack.c.l.b16 %v1088
    %v3458 = vunpack.c.h.b16 %v1088
    %v3459 = vunpack.c.l.b16 %v1089
    %v3460 = vunpack.c.h.b16 %v1089
    %v3461 = vunpack.c.l.b16 %v1090
    %v3462 = vunpack.c.h.b16 %v1090
    %v3463 = vunpack.c.l.b16 %v1091
    %v3464 = vunpack.c.h.b16 %v1091
    %v3465 = vunpack.c.l.b16 %v1092
    %v3466 = vunpack.c.h.b16 %v1092
    %v3467 = vunpack.c.l.b16 %v1093
    %v3468 = vunpack.c.h.b16 %v1093
    %v3469 = vunpack.c.l.b16 %v1094
    %v3470 = vunpack.c.h.b16 %v1094
    %v3471 = vunpack.c.l.b16 %v1095
    %v3472 = vunpack.c.h.b16 %v1095
    %v3473 = vunpack.c.l.b16 %v1096
    %v3474 = vunpack.c.h.b16 %v1096
    %v3475 = vunpack.c.l.b16 %v1097
    %v3476 = vunpack.c.h.b16 %v1097
    %v3477 = vunpack.c.l.b16 %v1098
    %v3478 = vunpack.c.h.b16 %v1098
    %v3479 = vunpack.c.l.b16 %v1099
    %v3480 = vunpack.c.h.b16 %v1099
    %v3481 = vunpack.c.l.b16 %v1100
    %v3482 = vunpack.c.h.b16 %v1100
    %v3483 = vunpack.c.l.b16 %v1101
    %v3484 = vunpack.c.h.b16 %v1101
    %v3485 = vunpack.c.l.b16 %v1102
    %v3486 = vunpack.c.h.b16 %v1102
    %v3487 = vunpack.c.l.b16 %v1103
    %v3488 = vunpack.c.h.b16 %v1103
    %v3489 = vunpack.c.l.b16 %v1104
    %v3490 = vunpack.c.h.b16 %v1104
    %v3491 = vunpack.c.l.b16 %v1105
    %v3492 = vunpack.c.h.b16 %v1105
    %v3493 = vunpack.c.l.b16 %v1106
    %v3494 = vunpack.c.h.b16 %v1106
    %v3495 = vunpack.c.l.b16 %v1107
    %v3496 = vunpack.c.h.b16 %v1107
    %v3497 = vunpack.c.l.b16 %v1108
    %v3498 = vunpack.c.h.b16 %v1108
    %v3499 = vunpack.c.l.b16 %v1109
    %v3500 = vunpack.c.h.b16 %v1109
    %v3501 = vunpack.c.l.b16 %v1110
    %v3502 = vunpack.c.h.b16 %v1110
    %v3503 = vunpack.c.l.b16 %v1111
    %v3504 = vunpack.c.h.b16 %v1111
    %v3505 = vunpack.c.l.b16 %v1112
    %v3506 = vunpack.c.h.b16 %v1112
    %v3507 = vunpack.c.l.b16 %v1113
    %v3508 = vunpack.c.h.b16 %v1113
    %v3509 = vunpack.c.l.b16 %v1114
    %v3510 = vunpack.c.h.b16 %v1114
    %v3511 = vunpack.c.l.b16 %v1115
    %v3512 = vunpack.c.h.b16 %v1115
    %v3513 = vunpack.c.l.b16 %v1116
    %v3514 = vunpack.c.h.b16 %v1116
    %v3515 = vunpack.c.l.b16 %v1117
    %v3516 = vunpack.c.h.b16 %v1117
    %v3517 = vunpack.c.l.b16 %v1118
    %v3518 = vunpack.c.h.b16 %v1118
    %v3519 = vunpack.c.l.b16 %v1119
    %v3520 = vunpack.c.h.b16 %v1119
    %v3521 = vunpack.c.l.b16 %v1120
    %v3522 = vunpack.c.h.b16 %v1120
    %v3523 = vunpack.c.l.b16 %v1121
    %v3524 = vunpack.c.h.b16 %v1121
    %v3525 = vunpack.c.l.b16 %v1122
    %v3526 = vunpack.c.h.b16 %v1122
    %v3527 = vunpack.c.l.b16 %v1123
    %v3528 = vunpack.c.h.b16 %v1123
    %v3529 = vunpack.c.l.b16 %v1124
    %v3530 = vunpack.c.h.b16 %v1124
    %v3531 = vunpack.c.l.b16 %v1125
    %v3532 = vunpack.c.h.b16 %v1125
    %v3533 = vunpack.c.l.b16 %v1126
    %v3534 = vunpack.c.h.b16 %v1126
    %v3535 = vunpack.c.l.b16 %v1127
    %v3536 = vunpack.c.h.b16 %v1127
    %v3537 = vunpack.c.l.b16 %v1128
    %v3538 = vunpack.c.h.b16 %v1128
    %v3539 = vunpack.c.l.b16 %v1129
    %v3540 = vunpack.c.h.b16 %v1129
    %v3541 = vunpack.c.l.b16 %v1130
    %v3542 = vunpack.c.h.b16 %v1130
    %v3543 = vunpack.c.l.b16 %v1131
    %v3544 = vunpack.c.h.b16 %v1131
    %v3545 = vunpack.c.l.b16 %v1132
    %v3546 = vunpack.c.h.b16 %v1132
    %v3547 = vunpack.c.l.b16 %v1133
    %v3548 = vunpack.c.h.b16 %v1133
    %v3549 = vunpack.c.l.b16 %v1134
    %v3550 = vunpack.c.h.b16 %v1134
    %v3551 = vunpack.c.l.b16 %v1135
    %v3552 = vunpack.c.h.b16 %v1135
    %v3553 = vunpack.c.l.b16 %v1136
    %v3554 = vunpack.c.h.b16 %v1136
    %v3555 = vunpack.c.l.b16 %v1137
    %v3556 = vunpack.c.h.b16 %v1137
    %v3557 = vunpack.c.l.b16 %v1138
    %v3558 = vunpack.c.h.b16 %v1138
    %v3559 = vunpack.c.l.b16 %v1139
    %v3560 = vunpack.c.h.b16 %v1139
    %v3561 = vunpack.c.l.b16 %v1140
    %v3562 = vunpack.c.h.b16 %v1140
    %v3563 = vunpack.c.l.b16 %v1141
    %v3564 = vunpack.c.h.b16 %v1141
    %v3565 = vunpack.c.l.b16 %v1142
    %v3566 = vunpack.c.h.b16 %v1142
    %v3567 = vunpack.c.l.b16 %v1143
    %v3568 = vunpack.c.h.b16 %v1143
    %v3569 = vunpack.c.l.b16 %v1144
    %v3570 = vunpack.c.h.b16 %v1144
    %v3571 = vunpack.c.l.b16 %v1145
    %v3572 = vunpack.c.h.b16 %v1145
    %v3573 = vunpack.c.l.b16 %v1146
    %v3574 = vunpack.c.h.b16 %v1146
    %v3575 = vunpack.c.l.b16 %v1147
    %v3576 = vunpack.c.h.b16 %v1147
    %v3577 = vunpack.c.l.b16 %v1148
    %v3578 = vunpack.c.h.b16 %v1148
    %v3579 = vunpack.c.l.b16 %v1149
    %v3580 = vunpack.c.h.b16 %v1149
    %v3581 = vunpack.c.l.b16 %v1150
    %v3582 = vunpack.c.h.b16 %v1150
    %v3583 = vunpack.c.l.b16 %v1151
    %v3584 = vunpack.c.h.b16 %v1151
    %v3585 = vunpack.c.l.b16 %v1152
    %v3586 = vunpack.c.h.b16 %v1152
    %v3587 = vunpack.c.l.b16 %v1153
    %v3588 = vunpack.c.h.b16 %v1153
    %v3589 = vunpack.c.l.b16 %v1154
    %v3590 = vunpack.c.h.b16 %v1154
    %v3591 = vunpack.c.l.b16 %v1155
    %v3592 = vunpack.c.h.b16 %v1155
    %v3593 = vunpack.c.l.b16 %v1156
    %v3594 = vunpack.c.h.b16 %v1156
    %v3595 = vunpack.c.l.b16 %v1157
    %v3596 = vunpack.c.h.b16 %v1157
    %v3597 = vunpack.c.l.b16 %v1158
    %v3598 = vunpack.c.h.b16 %v1158
    %v3599 = vunpack.c.l.b16 %v1159
    %v3600 = vunpack.c.h.b16 %v1159
    %v3601 = vunpack.c.l.b16 %v1160
    %v3602 = vunpack.c.h.b16 %v1160
    %v3603 = vunpack.c.l.b16 %v1161
    %v3604 = vunpack.c.h.b16 %v1161
    %v3605 = vunpack.c.l.b16 %v1162
    %v3606 = vunpack.c.h.b16 %v1162
    %v3607 = vunpack.c.l.b16 %v1163
    %v3608 = vunpack.c.h.b16 %v1163
    %v3609 = vunpack.c.l.b16 %v1164
    %v3610 = vunpack.c.h.b16 %v1164
    %v3611 = vunpack.c.l.b16 %v1165
    %v3612 = vunpack.c.h.b16 %v1165
    %v3613 = vunpack.c.l.b16 %v1166
    %v3614 = vunpack.c.h.b16 %v1166
    %v3615 = vunpack.c.l.b16 %v1167
    %v3616 = vunpack.c.h.b16 %v1167
    %v3617 = vunpack.c.l.b16 %v1168
    %v3618 = vunpack.c.h.b16 %v1168
    %v3619 = vunpack.c.l.b16 %v1169
    %v3620 = vunpack.c.h.b16 %v1169
    %v3621 = vunpack.c.l.b16 %v1170
    %v3622 = vunpack.c.h.b16 %v1170
    %v3623 = vunpack.c.l.b16 %v1171
    %v3624 = vunpack.c.h.b16 %v1171
    %v3625 = vunpack.c.l.b16 %v1172
    %v3626 = vunpack.c.h.b16 %v1172
    %v3627 = vunpack.c.l.b16 %v1173
    %v3628 = vunpack.c.h.b16 %v1173
    %v3629 = vunpack.c.l.b16 %v1174
    %v3630 = vunpack.c.h.b16 %v1174
    %v3631 = vunpack.c.l.b16 %v1175
    %v3632 = vunpack.c.h.b16 %v1175
    %v3633 = vunpack.c.l.b16 %v1176
    %v3634 = vunpack.c.h.b16 %v1176
    %v3635 = vunpack.c.l.b16 %v1177
    %v3636 = vunpack.c.h.b16 %v1177
    %v3637 = vunpack.c.l.b16 %v1178
    %v3638 = vunpack.c.h.b16 %v1178
    %v3639 = vunpack.c.l.b16 %v1179
    %v3640 = vunpack.c.h.b16 %v1179
    %v3641 = vunpack.c.l.b16 %v1180
    %v3642 = vunpack.c.h.b16 %v1180
    %v3643 = vunpack.c.l.b16 %v1181
    %v3644 = vunpack.c.h.b16 %v1181
    %v3645 = vunpack.c.l.b16 %v1182
    %v3646 = vunpack.c.h.b16 %v1182
    %v3647 = vunpack.c.l.b16 %v1183
    %v3648 = vunpack.c.h.b16 %v1183
    %v3649 = vunpack.c.l.b16 %v1184
    %v3650 = vunpack.c.h.b16 %v1184
    %v3651 = vunpack.c.l.b16 %v1185
    %v3652 = vunpack.c.h.b16 %v1185
    %v3653 = vunpack.c.l.b16 %v1186
    %v3654 = vunpack.c.h.b16 %v1186
    %v3655 = vunpack.c.l.b16 %v1187
    %v3656 = vunpack.c.h.b16 %v1187
    %v3657 = vunpack.c.l.b16 %v1188
    %v3658 = vunpack.c.h.b16 %v1188
    %v3659 = vunpack.c.l.b16 %v1189
    %v3660 = vunpack.c.h.b16 %v1189
    %v3661 = vunpack.c.l.b16 %v1190
    %v3662 = vunpack.c.h.b16 %v1190
    %v3663 = vunpack.c.l.b16 %v1191
    %v3664 = vunpack.c.h.b16 %v1191
    %v3665 = vunpack.c.l.b16 %v1192
    %v3666 = vunpack.c.h.b16 %v1192
    %v3667 = vunpack.c.l.b16 %v1193
    %v3668 = vunpack.c.h.b16 %v1193
    %v3669 = vunpack.c.l.b16 %v1194
    %v3670 = vunpack.c.h.b16 %v1194
    %v3671 = vunpack.c.l.b16 %v1195
    %v3672 = vunpack.c.h.b16 %v1195
    %v3673 = vunpack.c.l.b16 %v1196
    %v3674 = vunpack.c.h.b16 %v1196
    %v3675 = vunpack.c.l.b16 %v1197
    %v3676 = vunpack.c.h.b16 %v1197
    %v3677 = vunpack.c.l.b16 %v1198
    %v3678 = vunpack.c.h.b16 %v1198
    %v3679 = vunpack.c.l.b16 %v1199
    %v3680 = vunpack.c.h.b16 %v1199
    %v3681 = vunpack.c.l.b16 %v1200
    %v3682 = vunpack.c.h.b16 %v1200
    %v3683 = vunpack.c.l.b16 %v1201
    %v3684 = vunpack.c.h.b16 %v1201
    %v3685 = vunpack.c.l.b16 %v1202
    %v3686 = vunpack.c.h.b16 %v1202
    %v3687 = vunpack.c.l.b16 %v1203
    %v3688 = vunpack.c.h.b16 %v1203
    %v3689 = vunpack.c.l.b16 %v1204
    %v3690 = vunpack.c.h.b16 %v1204
    %v3691 = vunpack.c.l.b16 %v1205
    %v3692 = vunpack.c.h.b16 %v1205
    %v3693 = vunpack.c.l.b16 %v1206
    %v3694 = vunpack.c.h.b16 %v1206
    %v3695 = vunpack.c.l.b16 %v1207
    %v3696 = vunpack.c.h.b16 %v1207
    %v3697 = vunpack.c.l.b16 %v1208
    %v3698 = vunpack.c.h.b16 %v1208
    %v3699 = vunpack.c.l.b16 %v1209
    %v3700 = vunpack.c.h.b16 %v1209
    %v3701 = vunpack.c.l.b16 %v1210
    %v3702 = vunpack.c.h.b16 %v1210
    %v3703 = vunpack.c.l.b16 %v1211
    %v3704 = vunpack.c.h.b16 %v1211
    %v3705 = vunpack.c.l.b16 %v1212
    %v3706 = vunpack.c.h.b16 %v1212
    %v3707 = vunpack.c.l.b16 %v1213
    %v3708 = vunpack.c.h.b16 %v1213
    %v3709 = vunpack.c.l.b16 %v1214
    %v3710 = vunpack.c.h.b16 %v1214
    %v3711 = vunpack.c.l.b16 %v1215
    %v3712 = vunpack.c.h.b16 %v1215
    %v3713 = vunpack.c.l.b16 %v1216
    %v3714 = vunpack.c.h.b16 %v1216
    %v3715 = vunpack.c.l.b16 %v1217
    %v3716 = vunpack.c.h.b16 %v1217
    %v3717 = vunpack.c.l.b16 %v1218
    %v3718 = vunpack.c.h.b16 %v1218
    %v3719 = vunpack.c.l.b16 %v1219
    %v3720 = vunpack.c.h.b16 %v1219
    %v3721 = vunpack.c.l.b16 %v1220
    %v3722 = vunpack.c.h.b16 %v1220
    %v3723 = vunpack.c.l.b16 %v1221
    %v3724 = vunpack.c.h.b16 %v1221
    %v3725 = vunpack.c.l.b16 %v1222
    %v3726 = vunpack.c.h.b16 %v1222
    %v3727 = vunpack.c.l.b16 %v1223
    %v3728 = vunpack.c.h.b16 %v1223
    %v3729 = vunpack.c.l.b16 %v1224
    %v3730 = vunpack.c.h.b16 %v1224
    %v3731 = vunpack.c.l.b16 %v1225
    %v3732 = vunpack.c.h.b16 %v1225
    %v3733 = vunpack.c.l.b16 %v1226
    %v3734 = vunpack.c.h.b16 %v1226
    %v3735 = vunpack.c.l.b16 %v1227
    %v3736 = vunpack.c.h.b16 %v1227
    %v3737 = vunpack.c.l.b16 %v1228
    %v3738 = vunpack.c.h.b16 %v1228
    %v3739 = vunpack.c.l.b16 %v1229
    %v3740 = vunpack.c.h.b16 %v1229
    %v3741 = vunpack.c.l.b16 %v1230
    %v3742 = vunpack.c.h.b16 %v1230
    %v3743 = vunpack.c.l.b16 %v1231
    %v3744 = vunpack.c.h.b16 %v1231
    %v3745 = vunpack.c.l.b16 %v1232
    %v3746 = vunpack.c.h.b16 %v1232
    %v3747 = vunpack.c.l.b16 %v1233
    %v3748 = vunpack.c.h.b16 %v1233
    %v3749 = vunpack.c.l.b16 %v1234
    %v3750 = vunpack.c.h.b16 %v1234
    %v3751 = vunpack.c.l.b16 %v1235
    %v3752 = vunpack.c.h.b16 %v1235
    %v3753 = vunpack.c.l.b16 %v1236
    %v3754 = vunpack.c.h.b16 %v1236
    %v3755 = vunpack.c.l.b16 %v1237
    %v3756 = vunpack.c.h.b16 %v1237
    %v3757 = vunpack.c.l.b16 %v1238
    %v3758 = vunpack.c.h.b16 %v1238
    %v3759 = vunpack.c.l.b16 %v1239
    %v3760 = vunpack.c.h.b16 %v1239
    %v3761 = vunpack.c.l.b16 %v1240
    %v3762 = vunpack.c.h.b16 %v1240
    %v3763 = vunpack.c.l.b16 %v1241
    %v3764 = vunpack.c.h.b16 %v1241
    %v3765 = vunpack.c.l.b16 %v1242
    %v3766 = vunpack.c.h.b16 %v1242
    %v3767 = vunpack.c.l.b16 %v1243
    %v3768 = vunpack.c.h.b16 %v1243
    %v3769 = vunpack.c.l.b16 %v1244
    %v3770 = vunpack.c.h.b16 %v1244
    %v3771 = vunpack.c.l.b16 %v1245
    %v3772 = vunpack.c.h.b16 %v1245
    %v3773 = vunpack.c.l.b16 %v1246
    %v3774 = vunpack.c.h.b16 %v1246
    %v3775 = vunpack.c.l.b16 %v1247
    %v3776 = vunpack.c.h.b16 %v1247
    %v3777 = vunpack.c.l.b16 %v1248
    %v3778 = vunpack.c.h.b16 %v1248
    %v3779 = vunpack.c.l.b16 %v1249
    %v3780 = vunpack.c.h.b16 %v1249
    %v3781 = vunpack.c.l.b16 %v1250
    %v3782 = vunpack.c.h.b16 %v1250
    %v3783 = vunpack.c.l.b16 %v1251
    %v3784 = vunpack.c.h.b16 %v1251
    %v3785 = vunpack.c.l.b16 %v1252
    %v3786 = vunpack.c.h.b16 %v1252
    %v3787 = vunpack.c.l.b16 %v1253
    %v3788 = vunpack.c.h.b16 %v1253
    %v3789 = vunpack.c.l.b16 %v1254
    %v3790 = vunpack.c.h.b16 %v1254
    %v3791 = vunpack.c.l.b16 %v1255
    %v3792 = vunpack.c.h.b16 %v1255
    %v3793 = vunpack.c.l.b16 %v1256
    %v3794 = vunpack.c.h.b16 %v1256
    %v3795 = vunpack.c.l.b16 %v1257
    %v3796 = vunpack.c.h.b16 %v1257
    %v3797 = vunpack.c.l.b16 %v1258
    %v3798 = vunpack.c.h.b16 %v1258
    %v3799 = vunpack.c.l.b16 %v1259
    %v3800 = vunpack.c.h.b16 %v1259
    %v3801 = vunpack.c.l.b16 %v1260
    %v3802 = vunpack.c.h.b16 %v1260
    %v3803 = vunpack.c.l.b16 %v1261
    %v3804 = vunpack.c.h.b16 %v1261
    %v3805 = vunpack.c.l.b16 %v1262
    %v3806 = vunpack.c.h.b16 %v1262
    %v3807 = vunpack.c.l.b16 %v1263
    %v3808 = vunpack.c.h.b16 %v1263
    %v3809 = vunpack.c.l.b16 %v1264
    %v3810 = vunpack.c.h.b16 %v1264
    %v3811 = vunpack.c.l.b16 %v1265
    %v3812 = vunpack.c.h.b16 %v1265
    %v3813 = vunpack.c.l.b16 %v1266
    %v3814 = vunpack.c.h.b16 %v1266
    %v3815 = vunpack.c.l.b16 %v1267
    %v3816 = vunpack.c.h.b16 %v1267
    %v3817 = vunpack.c.l.b16 %v1268
    %v3818 = vunpack.c.h.b16 %v1268
    %v3819 = vunpack.c.l.b16 %v1269
    %v3820 = vunpack.c.h.b16 %v1269
    %v3821 = vunpack.c.l.b16 %v1270
    %v3822 = vunpack.c.h.b16 %v1270
    %v3823 = vunpack.c.l.b16 %v1271
    %v3824 = vunpack.c.h.b16 %v1271
    %v3825 = vunpack.c.l.b16 %v1272
    %v3826 = vunpack.c.h.b16 %v1272
    %v3827 = vunpack.c.l.b16 %v1273
    %v3828 = vunpack.c.h.b16 %v1273
    %v3829 = vunpack.c.l.b16 %v1274
    %v3830 = vunpack.c.h.b16 %v1274
    %v3831 = vunpack.c.l.b16 %v1275
    %v3832 = vunpack.c.h.b16 %v1275
    %v3833 = vunpack.c.l.b16 %v1276
    %v3834 = vunpack.c.h.b16 %v1276
    %v3835 = vunpack.c.l.b16 %v1277
    %v3836 = vunpack.c.h.b16 %v1277
    %v3837 = vunpack.c.l.b16 %v1278
    %v3838 = vunpack.c.h.b16 %v1278
    %v3839 = vunpack.c.l.b16 %v1279
    %v3840 = vunpack.c.h.b16 %v1279
    %v3841 = vunpack.c.l.b16 %v1280
    %v3842 = vunpack.c.h.b16 %v1280
    %v3843 = vunpack.c.l.b16 %v1281
    %v3844 = vunpack.c.h.b16 %v1281
    %v3845 = vunpack.c.l.b16 %v1282
    %v3846 = vunpack.c.h.b16 %v1282
    %v3847 = vunpack.c.l.b16 %v1283
    %v3848 = vunpack.c.h.b16 %v1283
    %v3849 = vunpack.c.l.b16 %v1284
    %v3850 = vunpack.c.h.b16 %v1284
    %v3851 = vunpack.c.l.b16 %v1285
    %v3852 = vunpack.c.h.b16 %v1285
    %v3853 = vunpack.c.l.b16 %v1286
    %v3854 = vunpack.c.h.b16 %v1286
    %v3855 = vunpack.c.l.b16 %v1287
    %v3856 = vunpack.c.h.b16 %v1287
    %v3857 = vunpack.c.l.b16 %v1288
    %v3858 = vunpack.c.h.b16 %v1288
    %v3859 = vunpack.c.l.b16 %v1289
    %v3860 = vunpack.c.h.b16 %v1289
    %v3861 = vunpack.c.l.b16 %v1290
    %v3862 = vunpack.c.h.b16 %v1290
    %v3863 = vunpack.c.l.b16 %v1291
    %v3864 = vunpack.c.h.b16 %v1291
    %v3865 = vunpack.c.l.b16 %v1292
    %v3866 = vunpack.c.h.b16 %v1292
    %v3867 = vunpack.c.l.b16 %v1293
    %v3868 = vunpack.c.h.b16 %v1293
    %v3869 = vunpack.c.l.b16 %v1294
    %v3870 = vunpack.c.h.b16 %v1294
    %v3871 = vunpack.c.l.b16 %v1295
    %v3872 = vunpack.c.h.b16 %v1295
    %v3873 = vunpack.c.l.b16 %v1296
    %v3874 = vunpack.c.h.b16 %v1296
    %v3875 = vunpack.c.l.b16 %v1297
    %v3876 = vunpack.c.h.b16 %v1297
    %v3877 = vunpack.c.l.b16 %v1298
    %v3878 = vunpack.c.h.b16 %v1298
    %v3879 = vunpack.c.l.b16 %v1299
    %v3880 = vunpack.c.h.b16 %v1299
    %v3881 = vunpack.c.l.b16 %v1300
    %v3882 = vunpack.c.h.b16 %v1300
    %v3883 = vunpack.c.l.b16 %v1301
    %v3884 = vunpack.c.h.b16 %v1301
    %v3885 = vunpack.c.l.b16 %v1302
    %v3886 = vunpack.c.h.b16 %v1302
    %v3887 = vunpack.c.l.b16 %v1303
    %v3888 = vunpack.c.h.b16 %v1303
    %v3889 = vunpack.c.l.b16 %v1304
    %v3890 = vunpack.c.h.b16 %v1304
    %v3891 = vunpack.c.l.b16 %v1305
    %v3892 = vunpack.c.h.b16 %v1305
    %v3893 = vunpack.c.l.b16 %v1306
    %v3894 = vunpack.c.h.b16 %v1306
    %v3895 = vunpack.c.l.b16 %v1307
    %v3896 = vunpack.c.h.b16 %v1307
    %v3897 = vunpack.c.l.b16 %v1308
    %v3898 = vunpack.c.h.b16 %v1308
    %v3899 = vunpack.c.l.b16 %v1309
    %v3900 = vunpack.c.h.b16 %v1309
    %v3901 = vunpack.c.l.b16 %v1310
    %v3902 = vunpack.c.h.b16 %v1310
    %v3903 = vunpack.c.l.b16 %v1311
    %v3904 = vunpack.c.h.b16 %v1311
    %v3905 = vunpack.c.l.b16 %v1312
    %v3906 = vunpack.c.h.b16 %v1312
    %v3907 = vunpack.c.l.b16 %v1313
    %v3908 = vunpack.c.h.b16 %v1313
    %v3909 = vunpack.c.l.b16 %v1314
    %v3910 = vunpack.c.h.b16 %v1314
    %v3911 = vunpack.c.l.b16 %v1315
    %v3912 = vunpack.c.h.b16 %v1315
    %v3913 = vunpack.c.l.b16 %v1316
    %v3914 = vunpack.c.h.b16 %v1316
    %v3915 = vunpack.c.l.b16 %v1317
    %v3916 = vunpack.c.h.b16 %v1317
    %v3917 = vunpack.c.l.b16 %v1318
    %v3918 = vunpack.c.h.b16 %v1318
    %v3919 = vunpack.c.l.b16 %v1319
    %v3920 = vunpack.c.h.b16 %v1319
    %v3921 = vunpack.c.l.b16 %v1320
    %v3922 = vunpack.c.h.b16 %v1320
    %v3923 = vunpack.c.l.b16 %v1321
    %v3924 = vunpack.c.h.b16 %v1321
    %v3925 = vunpack.c.l.b16 %v1322
    %v3926 = vunpack.c.h.b16 %v1322
    %v3927 = vunpack.c.l.b16 %v1323
    %v3928 = vunpack.c.h.b16 %v1323
    %v3929 = vunpack.c.l.b16 %v1324
    %v3930 = vunpack.c.h.b16 %v1324
    %v3931 = vunpack.c.l.b16 %v1325
    %v3932 = vunpack.c.h.b16 %v1325
    %v3933 = vunpack.c.l.b16 %v1326
    %v3934 = vunpack.c.h.b16 %v1326
    %v3935 = vunpack.c.l.b16 %v1327
    %v3936 = vunpack.c.h.b16 %v1327
    %v3937 = vunpack.c.l.b16 %v1328
    %v3938 = vunpack.c.h.b16 %v1328
    %v3939 = vunpack.c.l.b16 %v1329
    %v3940 = vunpack.c.h.b16 %v1329
    %v3941 = vunpack.c.l.b16 %v1330
    %v3942 = vunpack.c.h.b16 %v1330
    %v3943 = vunpack.c.l.b16 %v1331
    %v3944 = vunpack.c.h.b16 %v1331
    %v3945 = vunpack.c.l.b16 %v1332
    %v3946 = vunpack.c.h.b16 %v1332
    %v3947 = vunpack.c.l.b16 %v1333
    %v3948 = vunpack.c.h.b16 %v1333
    %v3949 = vunpack.c.l.b16 %v1334
    %v3950 = vunpack.c.h.b16 %v1334
    %v3951 = vunpack.c.l.b16 %v1335
    %v3952 = vunpack.c.h.b16 %v1335
    %v3953 = vunpack.c.l.b16 %v1336
    %v3954 = vunpack.c.h.b16 %v1336
    %v3955 = vunpack.c.l.b16 %v1337
    %v3956 = vunpack.c.h.b16 %v1337
    %v3957 = vunpack.c.l.b16 %v1338
    %v3958 = vunpack.c.h.b16 %v1338
    %v3959 = vunpack.c.l.b16 %v1339
    %v3960 = vunpack.c.h.b16 %v1339
    %v3961 = vunpack.c.l.b16 %v1340
    %v3962 = vunpack.c.h.b16 %v1340
    %v3963 = vunpack.c.l.b16 %v1341
    %v3964 = vunpack.c.h.b16 %v1341
    %v3965 = vunpack.c.l.b16 %v1342
    %v3966 = vunpack.c.h.b16 %v1342
    %v3967 = vunpack.c.l.b16 %v1343
    %v3968 = vunpack.c.h.b16 %v1343
    %v3969 = vunpack.c.l.b16 %v1344
    %v3970 = vunpack.c.h.b16 %v1344
    %v3971 = vunpack.c.l.b16 %v1345
    %v3972 = vunpack.c.h.b16 %v1345
    %v3973 = vunpack.c.l.b16 %v1346
    %v3974 = vunpack.c.h.b16 %v1346
    %v3975 = vunpack.c.l.b16 %v1347
    %v3976 = vunpack.c.h.b16 %v1347
    %v3977 = vunpack.c.l.b16 %v1348
    %v3978 = vunpack.c.h.b16 %v1348
    %v3979 = vunpack.c.l.b16 %v1349
    %v3980 = vunpack.c.h.b16 %v1349
    %v3981 = vunpack.c.l.b16 %v1350
    %v3982 = vunpack.c.h.b16 %v1350
    %v3983 = vunpack.c.l.b16 %v1351
    %v3984 = vunpack.c.h.b16 %v1351
    %v3985 = vunpack.c.l.b16 %v1352
    %v3986 = vunpack.c.h.b16 %v1352
    %v3987 = vunpack.c.l.b16 %v1353
    %v3988 = vunpack.c.h.b16 %v1353
    %v3989 = vunpack.c.l.b16 %v1354
    %v3990 = vunpack.c.h.b16 %v1354
    %v3991 = vunpack.c.l.b16 %v1355
    %v3992 = vunpack.c.h.b16 %v1355
    %v3993 = vunpack.c.l.b16 %v1356
    %v3994 = vunpack.c.h.b16 %v1356
    %v3995 = vunpack.c.l.b16 %v1357
    %v3996 = vunpack.c.h.b16 %v1357
    %v3997 = vunpack.c.l.b16 %v1358
    %v3998 = vunpack.c.h.b16 %v1358
    %v3999 = vunpack.c.l.b16 %v1359
    %v4000 = vunpack.c.h.b16 %v1359
    %v4001 = vunpack.c.l.b16 %v1360
    %v4002 = vunpack.c.h.b16 %v1360
    %v4003 = vunpack.c.l.b16 %v1361
    %v4004 = vunpack.c.h.b16 %v1361
    %v4005 = vunpack.c.l.b16 %v1362
    %v4006 = vunpack.c.h.b16 %v1362
    %v4007 = vunpack.c.l.b16 %v1363
    %v4008 = vunpack.c.h.b16 %v1363
    %v4009 = vunpack.c.l.b16 %v1364
    %v4010 = vunpack.c.h.b16 %v1364
    %v4011 = vunpack.c.l.b16 %v1365
    %v4012 = vunpack.c.h.b16 %v1365
    %v4013 = vunpack.c.l.b16 %v1366
    %v4014 = vunpack.c.h.b16 %v1366
    %v4015 = vunpack.c.l.b16 %v1367
    %v4016 = vunpack.c.h.b16 %v1367
    %v4017 = vunpack.c.l.b16 %v1368
    %v4018 = vunpack.c.h.b16 %v1368
    %v4019 = vunpack.c.l.b16 %v1369
    %v4020 = vunpack.c.h.b16 %v1369
    %v4021 = vunpack.c.l.b16 %v1370
    %v4022 = vunpack.c.h.b16 %v1370
    %v4023 = vunpack.c.l.b16 %v1371
    %v4024 = vunpack.c.h.b16 %v1371
    %v4025 = vunpack.c.l.b16 %v1372
    %v4026 = vunpack.c.h.b16 %v1372
    %v4027 = vunpack.c.l.b16 %v1373
    %v4028 = vunpack.c.h.b16 %v1373
    %v4029 = vunpack.c.l.b16 %v1374
    %v4030 = vunpack.c.h.b16 %v1374
    %v4031 = vunpack.c.l.b16 %v1375
    %v4032 = vunpack.c.h.b16 %v1375
    %v4033 = vunpack.c.l.b16 %v1376
    %v4034 = vunpack.c.h.b16 %v1376
    %v4035 = vunpack.c.l.b16 %v1377
    %v4036 = vunpack.c.h.b16 %v1377
    %v4037 = vunpack.c.l.b16 %v1378
    %v4038 = vunpack.c.h.b16 %v1378
    %v4039 = vunpack.c.l.b16 %v1379
    %v4040 = vunpack.c.h.b16 %v1379
    %v4041 = vunpack.c.l.b16 %v1380
    %v4042 = vunpack.c.h.b16 %v1380
    %v4043 = vunpack.c.l.b16 %v1381
    %v4044 = vunpack.c.h.b16 %v1381
    %v4045 = vunpack.c.l.b16 %v1382
    %v4046 = vunpack.c.h.b16 %v1382
    %v4047 = vunpack.c.l.b16 %v1383
    %v4048 = vunpack.c.h.b16 %v1383
    %v4049 = vunpack.c.l.b16 %v1384
    %v4050 = vunpack.c.h.b16 %v1384
    %v4051 = vunpack.c.l.b16 %v1385
    %v4052 = vunpack.c.h.b16 %v1385
    %v4053 = vunpack.c.l.b16 %v1386
    %v4054 = vunpack.c.h.b16 %v1386
    %v4055 = vunpack.c.l.b16 %v1387
    %v4056 = vunpack.c.h.b16 %v1387
    %v4057 = vunpack.c.l.b16 %v1388
    %v4058 = vunpack.c.h.b16 %v1388
    %v4059 = vunpack.c.l.b16 %v1389
    %v4060 = vunpack.c.h.b16 %v1389
    %v4061 = vunpack.c.l.b16 %v1390
    %v4062 = vunpack.c.h.b16 %v1390
    %v4063 = vunpack.c.l.b16 %v1391
    %v4064 = vunpack.c.h.b16 %v1391
    %v4065 = vunpack.c.l.b16 %v1392
    %v4066 = vunpack.c.h.b16 %v1392
    %v4067 = vunpack.c.l.b16 %v1393
    %v4068 = vunpack.c.h.b16 %v1393
    %v4069 = vunpack.c.l.b16 %v1394
    %v4070 = vunpack.c.h.b16 %v1394
    %v4071 = vunpack.c.l.b16 %v1395
    %v4072 = vunpack.c.h.b16 %v1395
    %v4073 = vunpack.c.l.b16 %v1396
    %v4074 = vunpack.c.h.b16 %v1396
    %v4075 = vunpack.c.l.b16 %v1397
    %v4076 = vunpack.c.h.b16 %v1397
    %v4077 = vunpack.c.l.b16 %v1398
    %v4078 = vunpack.c.h.b16 %v1398
    %v4079 = vunpack.c.l.b16 %v1399
    %v4080 = vunpack.c.h.b16 %v1399
    %v4081 = vunpack.c.l.b16 %v1400
    %v4082 = vunpack.c.h.b16 %v1400
    %v4083 = vunpack.c.l.b16 %v1401
    %v4084 = vunpack.c.h.b16 %v1401
    %v4085 = vunpack.c.l.b16 %v1402
    %v4086 = vunpack.c.h.b16 %v1402
    %v4087 = vunpack.c.l.b16 %v1403
    %v4088 = vunpack.c.h.b16 %v1403
    %v4089 = vunpack.c.l.b16 %v1404
    %v4090 = vunpack.c.h.b16 %v1404
    %v4091 = vunpack.c.l.b16 %v1405
    %v4092 = vunpack.c.h.b16 %v1405
    %v4093 = vunpack.c.l.b16 %v1406
    %v4094 = vunpack.c.h.b16 %v1406
    %v4095 = vunpack.c.l.b16 %v1407
    %v4096 = vunpack.c.h.b16 %v1407
    %v4097 = vunpack.c.l.b16 %v1408
    %v4098 = vunpack.c.h.b16 %v1408
    %v4099 = vunpack.c.l.b16 %v1409
    %v4100 = vunpack.c.h.b16 %v1409
    %v4101 = vunpack.c.l.b16 %v1410
    %v4102 = vunpack.c.h.b16 %v1410
    %v4103 = vunpack.c.l.b16 %v1411
    %v4104 = vunpack.c.h.b16 %v1411
    %v4105 = vunpack.c.l.b16 %v1412
    %v4106 = vunpack.c.h.b16 %v1412
    %v4107 = vunpack.c.l.b16 %v1413
    %v4108 = vunpack.c.h.b16 %v1413
    %v4109 = vunpack.c.l.b16 %v1414
    %v4110 = vunpack.c.h.b16 %v1414
    %v4111 = vunpack.c.l.b16 %v1415
    %v4112 = vunpack.c.h.b16 %v1415
    %v4113 = vunpack.c.l.b16 %v1416
    %v4114 = vunpack.c.h.b16 %v1416
    %v4115 = vunpack.c.l.b16 %v1417
    %v4116 = vunpack.c.h.b16 %v1417
    %v4117 = vunpack.c.l.b16 %v1418
    %v4118 = vunpack.c.h.b16 %v1418
    %v4119 = vunpack.c.l.b16 %v1419
    %v4120 = vunpack.c.h.b16 %v1419
    %v4121 = vunpack.c.l.b16 %v1420
    %v4122 = vunpack.c.h.b16 %v1420
    %v4123 = vunpack.c.l.b16 %v1421
    %v4124 = vunpack.c.h.b16 %v1421
    %v4125 = vunpack.c.l.b16 %v1422
    %v4126 = vunpack.c.h.b16 %v1422
    %v4127 = vunpack.c.l.b16 %v1423
    %v4128 = vunpack.c.h.b16 %v1423
    %v4129 = vunpack.c.l.b16 %v1424
    %v4130 = vunpack.c.h.b16 %v1424
    %v4131 = vunpack.c.l.b16 %v1425
    %v4132 = vunpack.c.h.b16 %v1425
    %v4133 = vunpack.c.l.b16 %v1426
    %v4134 = vunpack.c.h.b16 %v1426
    %v4135 = vunpack.c.l.b16 %v1427
    %v4136 = vunpack.c.h.b16 %v1427
    %v4137 = vunpack.c.l.b16 %v1428
    %v4138 = vunpack.c.h.b16 %v1428
    %v4139 = vunpack.c.l.b16 %v1429
    %v4140 = vunpack.c.h.b16 %v1429
    %v4141 = vunpack.c.l.b16 %v1430
    %v4142 = vunpack.c.h.b16 %v1430
    %v4143 = vunpack.c.l.b16 %v1431
    %v4144 = vunpack.c.h.b16 %v1431
    %v4145 = vunpack.c.l.b16 %v1432
    %v4146 = vunpack.c.h.b16 %v1432
    %v4147 = vunpack.c.l.b16 %v1433
    %v4148 = vunpack.c.h.b16 %v1433
    %v4149 = vunpack.c.l.b16 %v1434
    %v4150 = vunpack.c.h.b16 %v1434
    %v4151 = vunpack.c.l.b16 %v1435
    %v4152 = vunpack.c.h.b16 %v1435
    %v4153 = vunpack.c.l.b16 %v1436
    %v4154 = vunpack.c.h.b16 %v1436
    %v4155 = vunpack.c.l.b16 %v1437
    %v4156 = vunpack.c.h.b16 %v1437
    %v4157 = vunpack.c.l.b16 %v1438
    %v4158 = vunpack.c.h.b16 %v1438
    %v4159 = vunpack.c.l.b16 %v1439
    %v4160 = vunpack.c.h.b16 %v1439
    %v4161 = vunpack.c.l.b16 %v1440
    %v4162 = vunpack.c.h.b16 %v1440
    %v4163 = vunpack.c.l.b16 %v1441
    %v4164 = vunpack.c.h.b16 %v1441
    %v4165 = vunpack.c.l.b16 %v1442
    %v4166 = vunpack.c.h.b16 %v1442
    %v4167 = vunpack.c.l.b16 %v1443
    %v4168 = vunpack.c.h.b16 %v1443
    %v4169 = vunpack.c.l.b16 %v1444
    %v4170 = vunpack.c.h.b16 %v1444
    %v4171 = vunpack.c.l.b16 %v1445
    %v4172 = vunpack.c.h.b16 %v1445
    %v4173 = vunpack.c.l.b16 %v1446
    %v4174 = vunpack.c.h.b16 %v1446
    %v4175 = vunpack.c.l.b16 %v1447
    %v4176 = vunpack.c.h.b16 %v1447
    %v4177 = vunpack.c.l.b16 %v1448
    %v4178 = vunpack.c.h.b16 %v1448
    %v4179 = vunpack.c.l.b16 %v1449
    %v4180 = vunpack.c.h.b16 %v1449
    %v4181 = vunpack.c.l.b16 %v1450
    %v4182 = vunpack.c.h.b16 %v1450
    %v4183 = vunpack.c.l.b16 %v1451
    %v4184 = vunpack.c.h.b16 %v1451
    %v4185 = vunpack.c.l.b16 %v1452
    %v4186 = vunpack.c.h.b16 %v1452
    %v4187 = vunpack.c.l.b16 %v1453
    %v4188 = vunpack.c.h.b16 %v1453
    %v4189 = vunpack.c.l.b16 %v1454
    %v4190 = vunpack.c.h.b16 %v1454
    %v4191 = vunpack.c.l.b16 %v1455
    %v4192 = vunpack.c.h.b16 %v1455
    %v4193 = vunpack.c.l.b16 %v1456
    %v4194 = vunpack.c.h.b16 %v1456
    %v4195 = vunpack.c.l.b16 %v1457
    %v4196 = vunpack.c.h.b16 %v1457
    %v4197 = vunpack.c.l.b16 %v1458
    %v4198 = vunpack.c.h.b16 %v1458
    %v4199 = vunpack.c.l.b16 %v1459
    %v4200 = vunpack.c.h.b16 %v1459
    %v4201 = vunpack.c.l.b16 %v1460
    %v4202 = vunpack.c.h.b16 %v1460
    %v4203 = vunpack.c.l.b16 %v1461
    %v4204 = vunpack.c.h.b16 %v1461
    %v4205 = vunpack.c.l.b16 %v1462
    %v4206 = vunpack.c.h.b16 %v1462
    %v4207 = vunpack.c.l.b16 %v1463
    %v4208 = vunpack.c.h.b16 %v1463
    %v4209 = vunpack.c.l.b16 %v1464
    %v4210 = vunpack.c.h.b16 %v1464
    %v4211 = vunpack.c.l.b16 %v1465
    %v4212 = vunpack.c.h.b16 %v1465
    %v4213 = vunpack.c.l.b16 %v1466
    %v4214 = vunpack.c.h.b16 %v1466
    %v4215 = vunpack.c.l.b16 %v1467
    %v4216 = vunpack.c.h.b16 %v1467
    %v4217 = vunpack.c.l.b16 %v1468
    %v4218 = vunpack.c.h.b16 %v1468
    %v4219 = vunpack.c.l.b16 %v1469
    %v4220 = vunpack.c.h.b16 %v1469
    %v4221 = vunpack.c.l.b16 %v1470
    %v4222 = vunpack.c.h.b16 %v1470
    %v4223 = vunpack.c.l.b16 %v1471
    %v4224 = vunpack.c.h.b16 %v1471
    %v4225 = vunpack.c.l.b16 %v1472
    %v4226 = vunpack.c.h.b16 %v1472
    %v4227 = vunpack.c.l.b16 %v1473
    %v4228 = vunpack.c.h.b16 %v1473
    %v4229 = vunpack.c.l.b16 %v1474
    %v4230 = vunpack.c.h.b16 %v1474
    %v4231 = vunpack.c.l.b16 %v1475
    %v4232 = vunpack.c.h.b16 %v1475
    %v4233 = vunpack.c.l.b16 %v1476
    %v4234 = vunpack.c.h.b16 %v1476
    %v4235 = vunpack.c.l.b16 %v1477
    %v4236 = vunpack.c.h.b16 %v1477
    %v4237 = vunpack.c.l.b16 %v1478
    %v4238 = vunpack.c.h.b16 %v1478
    %v4239 = vunpack.c.l.b16 %v1479
    %v4240 = vunpack.c.h.b16 %v1479
    %v4241 = vunpack.c.l.b16 %v1480
    %v4242 = vunpack.c.h.b16 %v1480
    %v4243 = vunpack.c.l.b16 %v1481
    %v4244 = vunpack.c.h.b16 %v1481
    %v4245 = vunpack.c.l.b16 %v1482
    %v4246 = vunpack.c.h.b16 %v1482
    %v4247 = vunpack.c.l.b16 %v1483
    %v4248 = vunpack.c.h.b16 %v1483
    %v4249 = vunpack.c.l.b16 %v1484
    %v4250 = vunpack.c.h.b16 %v1484
    %v4251 = vunpack.c.l.b16 %v1485
    %v4252 = vunpack.c.h.b16 %v1485
    %v4253 = vunpack.c.l.b16 %v1486
    %v4254 = vunpack.c.h.b16 %v1486
    %v4255 = vunpack.c.l.b16 %v1487
    %v4256 = vunpack.c.h.b16 %v1487
    %v4257 = vunpack.c.l.b16 %v1488
    %v4258 = vunpack.c.h.b16 %v1488
    %v4259 = vunpack.c.l.b16 %v1489
    %v4260 = vunpack.c.h.b16 %v1489
    %v4261 = vunpack.c.l.b16 %v1490
    %v4262 = vunpack.c.h.b16 %v1490
    %v4263 = vunpack.c.l.b16 %v1491
    %v4264 = vunpack.c.h.b16 %v1491
    %v4265 = vunpack.c.l.b16 %v1492
    %v4266 = vunpack.c.h.b16 %v1492
    %v4267 = vunpack.c.l.b16 %v1493
    %v4268 = vunpack.c.h.b16 %v1493
    %v4269 = vunpack.c.l.b16 %v1494
    %v4270 = vunpack.c.h.b16 %v1494
    %v4271 = vunpack.c.l.b16 %v1495
    %v4272 = vunpack.c.h.b16 %v1495
    %v4273 = vunpack.c.l.b16 %v1496
    %v4274 = vunpack.c.h.b16 %v1496
    %v4275 = vunpack.c.l.b16 %v1497
    %v4276 = vunpack.c.h.b16 %v1497
    %v4277 = vunpack.c.l.b16 %v1498
    %v4278 = vunpack.c.h.b16 %v1498
    %v4279 = vunpack.c.l.b16 %v1499
    %v4280 = vunpack.c.h.b16 %v1499
    %v4281 = vunpack.c.l.b16 %v1500
    %v4282 = vunpack.c.h.b16 %v1500
    %v4283 = vunpack.c.l.b16 %v1501
    %v4284 = vunpack.c.h.b16 %v1501
    %v4285 = vunpack.c.l.b16 %v1502
    %v4286 = vunpack.c.h.b16 %v1502
    %v4287 = vunpack.c.l.b16 %v1503
    %v4288 = vunpack.c.h.b16 %v1503
    %v4289 = vunpack.c.l.b16 %v1504
    %v4290 = vunpack.c.h.b16 %v1504
    %v4291 = vunpack.c.l.b16 %v1505
    %v4292 = vunpack.c.h.b16 %v1505
    %v4293 = vunpack.c.l.b16 %v1506
    %v4294 = vunpack.c.h.b16 %v1506
    %v4295 = vunpack.c.l.b16 %v1507
    %v4296 = vunpack.c.h.b16 %v1507
    %v4297 = vunpack.c.l.b16 %v1508
    %v4298 = vunpack.c.h.b16 %v1508
    %v4299 = vunpack.c.l.b16 %v1509
    %v4300 = vunpack.c.h.b16 %v1509
    %v4301 = vunpack.c.l.b16 %v1510
    %v4302 = vunpack.c.h.b16 %v1510
    %v4303 = vunpack.c.l.b16 %v1511
    %v4304 = vunpack.c.h.b16 %v1511
    %v4305 = vunpack.c.l.b16 %v1512
    %v4306 = vunpack.c.h.b16 %v1512
    %v4307 = vunpack.c.l.b16 %v1513
    %v4308 = vunpack.c.h.b16 %v1513
    %v4309 = vunpack.c.l.b16 %v1514
    %v4310 = vunpack.c.h.b16 %v1514
    %v4311 = vunpack.c.l.b16 %v1515
    %v4312 = vunpack.c.h.b16 %v1515
    %v4313 = vunpack.c.l.b16 %v1516
    %v4314 = vunpack.c.h.b16 %v1516
    %v4315 = vunpack.c.l.b16 %v1517
    %v4316 = vunpack.c.h.b16 %v1517
    %v4317 = vunpack.c.l.b16 %v1518
    %v4318 = vunpack.c.h.b16 %v1518
    %v4319 = vunpack.c.l.b16 %v1519
    %v4320 = vunpack.c.h.b16 %v1519
    %v4321 = vunpack.c.l.b16 %v1520
    %v4322 = vunpack.c.h.b16 %v1520
    %v4323 = vunpack.c.l.b16 %v1521
    %v4324 = vunpack.c.h.b16 %v1521
    %v4325 = vunpack.c.l.b16 %v1522
    %v4326 = vunpack.c.h.b16 %v1522
    %v4327 = vunpack.c.l.b16 %v1523
    %v4328 = vunpack.c.h.b16 %v1523
    %v4329 = vunpack.c.l.b16 %v1524
    %v4330 = vunpack.c.h.b16 %v1524
    %v4331 = vunpack.c.l.b16 %v1525
    %v4332 = vunpack.c.h.b16 %v1525
    %v4333 = vunpack.c.l.b16 %v1526
    %v4334 = vunpack.c.h.b16 %v1526
    %v4335 = vunpack.c.l.b16 %v1527
    %v4336 = vunpack.c.h.b16 %v1527
    %v4337 = vunpack.c.l.b16 %v1528
    %v4338 = vunpack.c.h.b16 %v1528
    %v4339 = vunpack.c.l.b16 %v1529
    %v4340 = vunpack.c.h.b16 %v1529
    %v4341 = vunpack.c.l.b16 %v1530
    %v4342 = vunpack.c.h.b16 %v1530
    %v4343 = vunpack.c.l.b16 %v1531
    %v4344 = vunpack.c.h.b16 %v1531
    %v4345 = vunpack.c.l.b16 %v1532
    %v4346 = vunpack.c.h.b16 %v1532
    %v4347 = vunpack.c.l.b16 %v1533
    %v4348 = vunpack.c.h.b16 %v1533
    %v4349 = vunpack.c.l.b16 %v1534
    %v4350 = vunpack.c.h.b16 %v1534
    %v4351 = vunpack.c.l.b16 %v1535
    %v4352 = vunpack.c.h.b16 %v1535
    %v4353 = vunpack.c.l.b16 %v1536
    %v4354 = vunpack.c.h.b16 %v1536
    %v4355 = vunpack.c.l.b16 %v1537
    %v4356 = vunpack.c.h.b16 %v1537
    %v4357 = vunpack.c.l.b16 %v1538
    %v4358 = vunpack.c.h.b16 %v1538
    %v4359 = vunpack.c.l.b16 %v1539
    %v4360 = vunpack.c.h.b16 %v1539
    %v4361 = vunpack.c.l.b16 %v1540
    %v4362 = vunpack.c.h.b16 %v1540
    %v4363 = vunpack.c.l.b16 %v1541
    %v4364 = vunpack.c.h.b16 %v1541
    %v4365 = vunpack.c.l.b16 %v1542
    %v4366 = vunpack.c.h.b16 %v1542
    %v4367 = vunpack.c.l.b16 %v1543
    %v4368 = vunpack.c.h.b16 %v1543
    %v4369 = vunpack.c.l.b16 %v1544
    %v4370 = vunpack.c.h.b16 %v1544
    %v4371 = vunpack.c.l.b16 %v1545
    %v4372 = vunpack.c.h.b16 %v1545
    %v4373 = vunpack.c.l.b16 %v1546
    %v4374 = vunpack.c.h.b16 %v1546
    %v4375 = vunpack.c.l.b16 %v1547
    %v4376 = vunpack.c.h.b16 %v1547
    %v4377 = vunpack.c.l.b16 %v1548
    %v4378 = vunpack.c.h.b16 %v1548
    %v4379 = vunpack.c.l.b16 %v1549
    %v4380 = vunpack.c.h.b16 %v1549
    %v4381 = vunpack.c.l.b16 %v1550
    %v4382 = vunpack.c.h.b16 %v1550
    %v4383 = vunpack.c.l.b16 %v1551
    %v4384 = vunpack.c.h.b16 %v1551
    %v4385 = vunpack.c.l.b16 %v1552
    %v4386 = vunpack.c.h.b16 %v1552
    %v4387 = vunpack.c.l.b16 %v1553
    %v4388 = vunpack.c.h.b16 %v1553
    %v4389 = vunpack.c.l.b16 %v1554
    %v4390 = vunpack.c.h.b16 %v1554
    %v4391 = vunpack.c.l.b16 %v1555
    %v4392 = vunpack.c.h.b16 %v1555
    %v4393 = vunpack.c.l.b16 %v1556
    %v4394 = vunpack.c.h.b16 %v1556
    %v4395 = vunpack.c.l.b16 %v1557
    %v4396 = vunpack.c.h.b16 %v1557
    %v4397 = vunpack.c.l.b16 %v1558
    %v4398 = vunpack.c.h.b16 %v1558
    %v4399 = vunpack.c.l.b16 %v1559
    %v4400 = vunpack.c.h.b16 %v1559
    %v4401 = vunpack.c.l.b16 %v1560
    %v4402 = vunpack.c.h.b16 %v1560
    %v4403 = vunpack.c.l.b16 %v1561
    %v4404 = vunpack.c.h.b16 %v1561
    %v4405 = vunpack.c.l.b16 %v1562
    %v4406 = vunpack.c.h.b16 %v1562
    %v4407 = vunpack.c.l.b16 %v1563
    %v4408 = vunpack.c.h.b16 %v1563
    %v4409 = vunpack.c.l.b16 %v1564
    %v4410 = vunpack.c.h.b16 %v1564
    %v4411 = vunpack.c.l.b16 %v1565
    %v4412 = vunpack.c.h.b16 %v1565
    %v4413 = vunpack.c.l.b16 %v1566
    %v4414 = vunpack.c.h.b16 %v1566
    %v4415 = vunpack.c.l.b16 %v1567
    %v4416 = vunpack.c.h.b16 %v1567
    %v4417 = vunpack.c.l.b16 %v1568
    %v4418 = vunpack.c.h.b16 %v1568
    %v4419 = vunpack.c.l.b16 %v1569
    %v4420 = vunpack.c.h.b16 %v1569
    %v4421 = vunpack.c.l.b16 %v1570
    %v4422 = vunpack.c.h.b16 %v1570
    %v4423 = vunpack.c.l.b16 %v1571
    %v4424 = vunpack.c.h.b16 %v1571
    %v4425 = vunpack.c.l.b16 %v1572
    %v4426 = vunpack.c.h.b16 %v1572
    %v4427 = vunpack.c.l.b16 %v1573
    %v4428 = vunpack.c.h.b16 %v1573
    %v4429 = vunpack.c.l.b16 %v1574
    %v4430 = vunpack.c.h.b16 %v1574
    %v4431 = vunpack.c.l.b16 %v1575
    %v4432 = vunpack.c.h.b16 %v1575
    %v4433 = vunpack.c.l.b16 %v1576
    %v4434 = vunpack.c.h.b16 %v1576
    %v4435 = vunpack.c.l.b16 %v1577
    %v4436 = vunpack.c.h.b16 %v1577
    %v4437 = vunpack.c.l.b16 %v1578
    %v4438 = vunpack.c.h.b16 %v1578
    %v4439 = vunpack.c.l.b16 %v1579
    %v4440 = vunpack.c.h.b16 %v1579
    %v4441 = vunpack.c.l.b16 %v1580
    %v4442 = vunpack.c.h.b16 %v1580
    %v4443 = vunpack.c.l.b16 %v1581
    %v4444 = vunpack.c.h.b16 %v1581
    %v4445 = vunpack.c.l.b16 %v1582
    %v4446 = vunpack.c.h.b16 %v1582
    %v4447 = vunpack.c.l.b16 %v1583
    %v4448 = vunpack.c.h.b16 %v1583
    %v4449 = vunpack.c.l.b16 %v1584
    %v4450 = vunpack.c.h.b16 %v1584
    %v4451 = vunpack.c.l.b16 %v1585
    %v4452 = vunpack.c.h.b16 %v1585
    %v4453 = vunpack.c.l.b16 %v1586
    %v4454 = vunpack.c.h.b16 %v1586
    %v4455 = vunpack.c.l.b16 %v1587
    %v4456 = vunpack.c.h.b16 %v1587
    %v4457 = vunpack.c.l.b16 %v1588
    %v4458 = vunpack.c.h.b16 %v1588
    %v4459 = vunpack.c.l.b16 %v1589
    %v4460 = vunpack.c.h.b16 %v1589
    %v4461 = vunpack.c.l.b16 %v1590
    %v4462 = vunpack.c.h.b16 %v1590
    %v4463 = vunpack.c.l.b16 %v1591
    %v4464 = vunpack.c.h.b16 %v1591
    %v4465 = vunpack.c.l.b16 %v1592
    %v4466 = vunpack.c.h.b16 %v1592
    %v4467 = vunpack.c.l.b16 %v1593
    %v4468 = vunpack.c.h.b16 %v1593
    %v4469 = vunpack.c.l.b16 %v1594
    %v4470 = vunpack.c.h.b16 %v1594
    %v4471 = vunpack.c.l.b16 %v1595
    %v4472 = vunpack.c.h.b16 %v1595
    %v4473 = vunpack.c.l.b16 %v1596
    %v4474 = vunpack.c.h.b16 %v1596
    %v4475 = vunpack.c.l.b16 %v1597
    %v4476 = vunpack.c.h.b16 %v1597
    %v4477 = vunpack.c.l.b16 %v1598
    %v4478 = vunpack.c.h.b16 %v1598
    %v4479 = vunpack.c.l.b16 %v1599
    %v4480 = vunpack.c.h.b16 %v1599
    %v4481 = vunpack.c.l.b16 %v1600
    %v4482 = vunpack.c.h.b16 %v1600
    %v4483 = vunpack.c.l.b16 %v1601
    %v4484 = vunpack.c.h.b16 %v1601
    %v4485 = vunpack.c.l.b16 %v1602
    %v4486 = vunpack.c.h.b16 %v1602
    %v4487 = vunpack.c.l.b16 %v1603
    %v4488 = vunpack.c.h.b16 %v1603
    %v4489 = vunpack.c.l.b16 %v1604
    %v4490 = vunpack.c.h.b16 %v1604
    %v4491 = vunpack.c.l.b16 %v1605
    %v4492 = vunpack.c.h.b16 %v1605
    %v4493 = vunpack.c.l.b16 %v1606
    %v4494 = vunpack.c.h.b16 %v1606
    %v4495 = vunpack.c.l.b16 %v1607
    %v4496 = vunpack.c.h.b16 %v1607
    %v4497 = vunpack.c.l.b16 %v1608
    %v4498 = vunpack.c.h.b16 %v1608
    %v4499 = vunpack.c.l.b16 %v1609
    %v4500 = vunpack.c.h.b16 %v1609
    %v4501 = vunpack.c.l.b16 %v1610
    %v4502 = vunpack.c.h.b16 %v1610
    %v4503 = vunpack.c.l.b16 %v1611
    %v4504 = vunpack.c.h.b16 %v1611
    %v4505 = vunpack.c.l.b16 %v1612
    %v4506 = vunpack.c.h.b16 %v1612
    %v4507 = vunpack.c.l.b16 %v1613
    %v4508 = vunpack.c.h.b16 %v1613
    %v4509 = vunpack.c.l.b16 %v1614
    %v4510 = vunpack.c.h.b16 %v1614
    %v4511 = vunpack.c.l.b16 %v1615
    %v4512 = vunpack.c.h.b16 %v1615
    %v4513 = vunpack.c.l.b16 %v1616
    %v4514 = vunpack.c.h.b16 %v1616
    %v4515 = vunpack.c.l.b16 %v1617
    %v4516 = vunpack.c.h.b16 %v1617
    %v4517 = vunpack.c.l.b16 %v1618
    %v4518 = vunpack.c.h.b16 %v1618
    %v4519 = vunpack.c.l.b16 %v1619
    %v4520 = vunpack.c.h.b16 %v1619
    %v4521 = vunpack.c.l.b16 %v1620
    %v4522 = vunpack.c.h.b16 %v1620
    %v4523 = vunpack.c.l.b16 %v1621
    %v4524 = vunpack.c.h.b16 %v1621
    %v4525 = vunpack.c.l.b16 %v1622
    %v4526 = vunpack.c.h.b16 %v1622
    %v4527 = vunpack.c.l.b16 %v1623
    %v4528 = vunpack.c.h.b16 %v1623
    %v4529 = vunpack.c.l.b16 %v1624
    %v4530 = vunpack.c.h.b16 %v1624
    %v4531 = vunpack.c.l.b16 %v1625
    %v4532 = vunpack.c.h.b16 %v1625
    %v4533 = vunpack.c.l.b16 %v1626
    %v4534 = vunpack.c.h.b16 %v1626
    %v4535 = vunpack.c.l.b16 %v1627
    %v4536 = vunpack.c.h.b16 %v1627
    %v4537 = vunpack.c.l.b16 %v1628
    %v4538 = vunpack.c.h.b16 %v1628
    %v4539 = vunpack.c.l.b16 %v1629
    %v4540 = vunpack.c.h.b16 %v1629
    %v4541 = vunpack.c.l.b16 %v1630
    %v4542 = vunpack.c.h.b16 %v1630
    %v4543 = vunpack.c.l.b16 %v1631
    %v4544 = vunpack.c.h.b16 %v1631
    %v4545 = vunpack.c.l.b16 %v1632
    %v4546 = vunpack.c.h.b16 %v1632
    %v4547 = vunpack.c.l.b16 %v1633
    %v4548 = vunpack.c.h.b16 %v1633
    %v4549 = vunpack.c.l.b16 %v1634
    %v4550 = vunpack.c.h.b16 %v1634
    %v4551 = vunpack.c.l.b16 %v1635
    %v4552 = vunpack.c.h.b16 %v1635
    %v4553 = vunpack.c.l.b16 %v1636
    %v4554 = vunpack.c.h.b16 %v1636
    %v4555 = vunpack.c.l.b16 %v1637
    %v4556 = vunpack.c.h.b16 %v1637
    %v4557 = vunpack.c.l.b16 %v1638
    %v4558 = vunpack.c.h.b16 %v1638
    %v4559 = vunpack.c.l.b16 %v1639
    %v4560 = vunpack.c.h.b16 %v1639
    %v4561 = vunpack.c.l.b16 %v1640
    %v4562 = vunpack.c.h.b16 %v1640
    %v4563 = vunpack.c.l.b16 %v1641
    %v4564 = vunpack.c.h.b16 %v1641
    %v4565 = vunpack.c.l.b16 %v1642
    %v4566 = vunpack.c.h.b16 %v1642
    %v4567 = vunpack.c.l.b16 %v1643
    %v4568 = vunpack.c.h.b16 %v1643
    %v4569 = vunpack.c.l.b16 %v1644
    %v4570 = vunpack.c.h.b16 %v1644
    %v4571 = vunpack.c.l.b16 %v1645
    %v4572 = vunpack.c.h.b16 %v1645
    %v4573 = vunpack.c.l.b16 %v1646
    %v4574 = vunpack.c.h.b16 %v1646
    %v4575 = vunpack.c.l.b16 %v1647
    %v4576 = vunpack.c.h.b16 %v1647
    %v4577 = vunpack.c.l.b16 %v1648
    %v4578 = vunpack.c.h.b16 %v1648
    %v4579 = vunpack.c.l.b16 %v1649
    %v4580 = vunpack.c.h.b16 %v1649
    %v4581 = vunpack.c.l.b16 %v1650
    %v4582 = vunpack.c.h.b16 %v1650
    %v4583 = vunpack.c.l.b16 %v1651
    %v4584 = vunpack.c.h.b16 %v1651
    %v4585 = vunpack.c.l.b16 %v1652
    %v4586 = vunpack.c.h.b16 %v1652
    %v4587 = vunpack.c.l.b16 %v1653
    %v4588 = vunpack.c.h.b16 %v1653
    %v4589 = vunpack.c.l.b16 %v1654
    %v4590 = vunpack.c.h.b16 %v1654
    %v4591 = vunpack.c.l.b16 %v1655
    %v4592 = vunpack.c.h.b16 %v1655
    %v4593 = vunpack.c.l.b16 %v1656
    %v4594 = vunpack.c.h.b16 %v1656
    %v4595 = vunpack.c.l.b16 %v1657
    %v4596 = vunpack.c.h.b16 %v1657
    %v4597 = vunpack.c.l.b16 %v1658
    %v4598 = vunpack.c.h.b16 %v1658
    %v4599 = vunpack.c.l.b16 %v1659
    %v4600 = vunpack.c.h.b16 %v1659
    %v4601 = vunpack.c.l.b16 %v1660
    %v4602 = vunpack.c.h.b16 %v1660
    %v4603 = vunpack.c.l.b16 %v1661
    %v4604 = vunpack.c.h.b16 %v1661
    %v4605 = vunpack.c.l.b16 %v1662
    %v4606 = vunpack.c.h.b16 %v1662
    %v4607 = vunpack.c.l.b16 %v1663
    %v4608 = vunpack.c.h.b16 %v1663
    %v4609 = vunpack.c.l.b16 %v1664
    %v4610 = vunpack.c.h.b16 %v1664
    %v4611 = vunpack.c.l.b16 %v1665
    %v4612 = vunpack.c.h.b16 %v1665
    %v4613 = vunpack.c.l.b16 %v1666
    %v4614 = vunpack.c.h.b16 %v1666
    %v4615 = vunpack.c.l.b16 %v1667
    %v4616 = vunpack.c.h.b16 %v1667
    %v4617 = vunpack.c.l.b16 %v1668
    %v4618 = vunpack.c.h.b16 %v1668
    %v4619 = vunpack.c.l.b16 %v1669
    %v4620 = vunpack.c.h.b16 %v1669
    %v4621 = vunpack.c.l.b16 %v1670
    %v4622 = vunpack.c.h.b16 %v1670
    %v4623 = vunpack.c.l.b16 %v1671
    %v4624 = vunpack.c.h.b16 %v1671
    %v4625 = vunpack.c.l.b16 %v1672
    %v4626 = vunpack.c.h.b16 %v1672
    %v4627 = vunpack.c.l.b16 %v1673
    %v4628 = vunpack.c.h.b16 %v1673
    %v4629 = vunpack.c.l.b16 %v1674
    %v4630 = vunpack.c.h.b16 %v1674
    %v4631 = vunpack.c.l.b16 %v1675
    %v4632 = vunpack.c.h.b16 %v1675
    %v4633 = vunpack.c.l.b16 %v1676
    %v4634 = vunpack.c.h.b16 %v1676
    %v4635 = vunpack.c.l.b16 %v1677
    %v4636 = vunpack.c.h.b16 %v1677
    %v4637 = vunpack.c.l.b16 %v1678
    %v4638 = vunpack.c.h.b16 %v1678
    %v4639 = vunpack.c.l.b16 %v1679
    %v4640 = vunpack.c.h.b16 %v1679
    %v4641 = vunpack.c.l.b16 %v1680
    %v4642 = vunpack.c.h.b16 %v1680
    %v4643 = vunpack.c.l.b16 %v1681
    %v4644 = vunpack.c.h.b16 %v1681
    %v4645 = vunpack.c.l.b16 %v1682
    %v4646 = vunpack.c.h.b16 %v1682
    %v4647 = vunpack.c.l.b16 %v1683
    %v4648 = vunpack.c.h.b16 %v1683
    %v4649 = vunpack.c.l.b16 %v1684
    %v4650 = vunpack.c.h.b16 %v1684
    %v4651 = vunpack.c.l.b16 %v1685
    %v4652 = vunpack.c.h.b16 %v1685
    %v4653 = vunpack.c.l.b16 %v1686
    %v4654 = vunpack.c.h.b16 %v1686
    %v4655 = vunpack.c.l.b16 %v1687
    %v4656 = vunpack.c.h.b16 %v1687
    %v4657 = vunpack.c.l.b16 %v1688
    %v4658 = vunpack.c.h.b16 %v1688
    %v4659 = vunpack.c.l.b16 %v1689
    %v4660 = vunpack.c.h.b16 %v1689
    %v4661 = vunpack.c.l.b16 %v1690
    %v4662 = vunpack.c.h.b16 %v1690
    %v4663 = vunpack.c.l.b16 %v1691
    %v4664 = vunpack.c.h.b16 %v1691
    %v4665 = vunpack.c.l.b16 %v1692
    %v4666 = vunpack.c.h.b16 %v1692
    %v4667 = vunpack.c.l.b16 %v1693
    %v4668 = vunpack.c.h.b16 %v1693
    %v4669 = vunpack.c.l.b16 %v1694
    %v4670 = vunpack.c.h.b16 %v1694
    %v4671 = vunpack.c.l.b16 %v1695
    %v4672 = vunpack.c.h.b16 %v1695
    %v4673 = vunpack.c.l.b16 %v1696
    %v4674 = vunpack.c.h.b16 %v1696
    %v4675 = vunpack.c.l.b16 %v1697
    %v4676 = vunpack.c.h.b16 %v1697
    %v4677 = vunpack.c.l.b16 %v1698
    %v4678 = vunpack.c.h.b16 %v1698
    %v4679 = vunpack.c.l.b16 %v1699
    %v4680 = vunpack.c.h.b16 %v1699
    %v4681 = vunpack.c.l.b16 %v1700
    %v4682 = vunpack.c.h.b16 %v1700
    %v4683 = vunpack.c.l.b16 %v1701
    %v4684 = vunpack.c.h.b16 %v1701
    %v4685 = vunpack.c.l.b16 %v1702
    %v4686 = vunpack.c.h.b16 %v1702
    %v4687 = vunpack.c.l.b16 %v1703
    %v4688 = vunpack.c.h.b16 %v1703
    %v4689 = vunpack.c.l.b16 %v1704
    %v4690 = vunpack.c.h.b16 %v1704
    %v4691 = vunpack.c.l.b16 %v1705
    %v4692 = vunpack.c.h.b16 %v1705
    %v4693 = vunpack.c.l.b16 %v1706
    %v4694 = vunpack.c.h.b16 %v1706
    %v4695 = vunpack.c.l.b16 %v1707
    %v4696 = vunpack.c.h.b16 %v1707
    %v4697 = vunpack.c.l.b16 %v1708
    %v4698 = vunpack.c.h.b16 %v1708
    %v4699 = vunpack.c.l.b16 %v1709
    %v4700 = vunpack.c.h.b16 %v1709
    %v4701 = vunpack.c.l.b16 %v1710
    %v4702 = vunpack.c.h.b16 %v1710
    %v4703 = vunpack.c.l.b16 %v1711
    %v4704 = vunpack.c.h.b16 %v1711
    %v4705 = vunpack.c.l.b16 %v1712
    %v4706 = vunpack.c.h.b16 %v1712
    %v4707 = vunpack.c.l.b16 %v1713
    %v4708 = vunpack.c.h.b16 %v1713
    %v4709 = vunpack.c.l.b16 %v1714
    %v4710 = vunpack.c.h.b16 %v1714
    %v4711 = vunpack.c.l.b16 %v1715
    %v4712 = vunpack.c.h.b16 %v1715
    %v4713 = vunpack.c.l.b16 %v1716
    %v4714 = vunpack.c.h.b16 %v1716
    %v4715 = vunpack.c.l.b16 %v1717
    %v4716 = vunpack.c.h.b16 %v1717
    %v4717 = vunpack.c.l.b16 %v1718
    %v4718 = vunpack.c.h.b16 %v1718
    %v4719 = vunpack.c.l.b16 %v1719
    %v4720 = vunpack.c.h.b16 %v1719
    %v4721 = vunpack.c.l.b16 %v1720
    %v4722 = vunpack.c.h.b16 %v1720
    %v4723 = vunpack.c.l.b16 %v1721
    %v4724 = vunpack.c.h.b16 %v1721
    %v4725 = vunpack.c.l.b16 %v1722
    %v4726 = vunpack.c.h.b16 %v1722
    %v4727 = vunpack.c.l.b16 %v1723
    %v4728 = vunpack.c.h.b16 %v1723
    %v4729 = vunpack.c.l.b16 %v1724
    %v4730 = vunpack.c.h.b16 %v1724
    %v4731 = vunpack.c.l.b16 %v1725
    %v4732 = vunpack.c.h.b16 %v1725
    %v4733 = vunpack.c.l.b16 %v1726
    %v4734 = vunpack.c.h.b16 %v1726
    %v4735 = vunpack.c.l.b16 %v1727
    %v4736 = vunpack.c.h.b16 %v1727
    %v4737 = vunpack.c.l.b16 %v1728
    %v4738 = vunpack.c.h.b16 %v1728
    %v4739 = vunpack.c.l.b16 %v1729
    %v4740 = vunpack.c.h.b16 %v1729
    %v4741 = vunpack.c.l.b16 %v1730
    %v4742 = vunpack.c.h.b16 %v1730
    %v4743 = vunpack.c.l.b16 %v1731
    %v4744 = vunpack.c.h.b16 %v1731
    %v4745 = vunpack.c.l.b16 %v1732
    %v4746 = vunpack.c.h.b16 %v1732
    %v4747 = vunpack.c.l.b16 %v1733
    %v4748 = vunpack.c.h.b16 %v1733
    %v4749 = vunpack.c.l.b16 %v1734
    %v4750 = vunpack.c.h.b16 %v1734
    %v4751 = vunpack.c.l.b16 %v1735
    %v4752 = vunpack.c.h.b16 %v1735
    %v4753 = vunpack.c.l.b16 %v1736
    %v4754 = vunpack.c.h.b16 %v1736
    %v4755 = vunpack.c.l.b16 %v1737
    %v4756 = vunpack.c.h.b16 %v1737
    %v4757 = vunpack.c.l.b16 %v1738
    %v4758 = vunpack.c.h.b16 %v1738
    %v4759 = vunpack.c.l.b16 %v1739
    %v4760 = vunpack.c.h.b16 %v1739
    %v4761 = vunpack.c.l.b16 %v1740
    %v4762 = vunpack.c.h.b16 %v1740
    %v4763 = vunpack.c.l.b16 %v1741
    %v4764 = vunpack.c.h.b16 %v1741
    %v4765 = vunpack.c.l.b16 %v1742
    %v4766 = vunpack.c.h.b16 %v1742
    %v4767 = vunpack.c.l.b16 %v1743
    %v4768 = vunpack.c.h.b16 %v1743
    %v4769 = vunpack.c.l.b16 %v1744
    %v4770 = vunpack.c.h.b16 %v1744
    %v4771 = vunpack.c.l.b16 %v1745
    %v4772 = vunpack.c.h.b16 %v1745
    %v4773 = vunpack.c.l.b16 %v1746
    %v4774 = vunpack.c.h.b16 %v1746
    %v4775 = vunpack.c.l.b16 %v1747
    %v4776 = vunpack.c.h.b16 %v1747
    %v4777 = vunpack.c.l.b16 %v1748
    %v4778 = vunpack.c.h.b16 %v1748
    %v4779 = vunpack.c.l.b16 %v1749
    %v4780 = vunpack.c.h.b16 %v1749
    %v4781 = vunpack.c.l.b16 %v1750
    %v4782 = vunpack.c.h.b16 %v1750
    %v4783 = vunpack.c.l.b16 %v1751
    %v4784 = vunpack.c.h.b16 %v1751
    %v4785 = vunpack.c.l.b16 %v1752
    %v4786 = vunpack.c.h.b16 %v1752
    %v4787 = vunpack.c.l.b16 %v1753
    %v4788 = vunpack.c.h.b16 %v1753
    %v4789 = vunpack.c.l.b16 %v1754
    %v4790 = vunpack.c.h.b16 %v1754
    %v4791 = vunpack.c.l.b16 %v1755
    %v4792 = vunpack.c.h.b16 %v1755
    %v4793 = vunpack.c.l.b16 %v1756
    %v4794 = vunpack.c.h.b16 %v1756
    %v4795 = vunpack.c.l.b16 %v1757
    %v4796 = vunpack.c.h.b16 %v1757
    %v4797 = vunpack.c.l.b16 %v1758
    %v4798 = vunpack.c.h.b16 %v1758
    %v4799 = vunpack.c.l.b16 %v1759
    %v4800 = vunpack.c.h.b16 %v1759
    %v4801 = vunpack.c.l.b16 %v1760
    %v4802 = vunpack.c.h.b16 %v1760
    %v4803 = vunpack.c.l.b16 %v1761
    %v4804 = vunpack.c.h.b16 %v1761
    %v4805 = vunpack.c.l.b16 %v1762
    %v4806 = vunpack.c.h.b16 %v1762
    %v4807 = vunpack.c.l.b16 %v1763
    %v4808 = vunpack.c.h.b16 %v1763
    %v4809 = vunpack.c.l.b16 %v1764
    %v4810 = vunpack.c.h.b16 %v1764
    %v4811 = vunpack.c.l.b16 %v1765
    %v4812 = vunpack.c.h.b16 %v1765
    %v4813 = vunpack.c.l.b16 %v1766
    %v4814 = vunpack.c.h.b16 %v1766
    %v4815 = vunpack.c.l.b16 %v1767
    %v4816 = vunpack.c.h.b16 %v1767
    %v4817 = vunpack.c.l.b16 %v1768
    %v4818 = vunpack.c.h.b16 %v1768
    %v4819 = vunpack.c.l.b16 %v1769
    %v4820 = vunpack.c.h.b16 %v1769
    %v4821 = vunpack.c.l.b16 %v1770
    %v4822 = vunpack.c.h.b16 %v1770
    %v4823 = vunpack.c.l.b16 %v1771
    %v4824 = vunpack.c.h.b16 %v1771
    %v4825 = vunpack.c.l.b16 %v1772
    %v4826 = vunpack.c.h.b16 %v1772
    %v4827 = vunpack.c.l.b16 %v1773
    %v4828 = vunpack.c.h.b16 %v1773
    %v4829 = vunpack.c.l.b16 %v1774
    %v4830 = vunpack.c.h.b16 %v1774
    %v4831 = vunpack.c.l.b16 %v1775
    %v4832 = vunpack.c.h.b16 %v1775
    %v4833 = vunpack.c.l.b16 %v1776
    %v4834 = vunpack.c.h.b16 %v1776
    %v4835 = vunpack.c.l.b16 %v1777
    %v4836 = vunpack.c.h.b16 %v1777
    %v4837 = vunpack.c.l.b16 %v1778
    %v4838 = vunpack.c.h.b16 %v1778
    %v4839 = vunpack.c.l.b16 %v1779
    %v4840 = vunpack.c.h.b16 %v1779
    %v4841 = vunpack.c.l.b16 %v1780
    %v4842 = vunpack.c.h.b16 %v1780
    %v4843 = vunpack.c.l.b16 %v1781
    %v4844 = vunpack.c.h.b16 %v1781
    %v4845 = vunpack.c.l.b16 %v1782
    %v4846 = vunpack.c.h.b16 %v1782
    %v4847 = vunpack.c.l.b16 %v1783
    %v4848 = vunpack.c.h.b16 %v1783
    %v4849 = vunpack.c.l.b16 %v1784
    %v4850 = vunpack.c.h.b16 %v1784
    %v4851 = vunpack.c.l.b16 %v1785
    %v4852 = vunpack.c.h.b16 %v1785
    %v4853 = vunpack.c.l.b16 %v1786
    %v4854 = vunpack.c.h.b16 %v1786
    %v4855 = vunpack.c.l.b16 %v1787
    %v4856 = vunpack.c.h.b16 %v1787
    %v4857 = vunpack.c.l.b16 %v1788
    %v4858 = vunpack.c.h.b16 %v1788
    %v4859 = vunpack.c.l.b16 %v1789
    %v4860 = vunpack.c.h.b16 %v1789
    %v4861 = vunpack.c.l.b16 %v1790
    %v4862 = vunpack.c.h.b16 %v1790
    %v4863 = vunpack.c.l.b16 %v1791
    %v4864 = vunpack.c.h.b16 %v1791
    %v4865 = vunpack.c.l.b16 %v1792
    %v4866 = vunpack.c.h.b16 %v1792
    %v4867 = vunpack.c.l.b16 %v1793
    %v4868 = vunpack.c.h.b16 %v1793
    %v4869 = vunpack.c.l.b16 %v1794
    %v4870 = vunpack.c.h.b16 %v1794
    %v4871 = vunpack.c.l.b16 %v1795
    %v4872 = vunpack.c.h.b16 %v1795
    %v4873 = vunpack.c.l.b16 %v1796
    %v4874 = vunpack.c.h.b16 %v1796
    %v4875 = vunpack.c.l.b16 %v1797
    %v4876 = vunpack.c.h.b16 %v1797
    %v4877 = vunpack.c.l.b16 %v1798
    %v4878 = vunpack.c.h.b16 %v1798
    %v4879 = vunpack.c.l.b16 %v1799
    %v4880 = vunpack.c.h.b16 %v1799
    %v4881 = vunpack.c.l.b16 %v1800
    %v4882 = vunpack.c.h.b16 %v1800
    %v4883 = vunpack.c.l.b16 %v1801
    %v4884 = vunpack.c.h.b16 %v1801
    %v4885 = vunpack.c.l.b16 %v1802
    %v4886 = vunpack.c.h.b16 %v1802
    %v4887 = vunpack.c.l.b16 %v1803
    %v4888 = vunpack.c.h.b16 %v1803
    %v4889 = vunpack.c.l.b16 %v1804
    %v4890 = vunpack.c.h.b16 %v1804
    %v4891 = vunpack.c.l.b16 %v1805
    %v4892 = vunpack.c.h.b16 %v1805
    %v4893 = vunpack.c.l.b16 %v1806
    %v4894 = vunpack.c.h.b16 %v1806
    %v4895 = vunpack.c.l.b16 %v1807
    %v4896 = vunpack.c.h.b16 %v1807
    %v4897 = vunpack.c.l.b16 %v1808
    %v4898 = vunpack.c.h.b16 %v1808
    %v4899 = vunpack.c.l.b16 %v1809
    %v4900 = vunpack.c.h.b16 %v1809
    %v4901 = vunpack.c.l.b16 %v1810
    %v4902 = vunpack.c.h.b16 %v1810
    %v4903 = vunpack.c.l.b16 %v1811
    %v4904 = vunpack.c.h.b16 %v1811
    %v4905 = vunpack.c.l.b16 %v1812
    %v4906 = vunpack.c.h.b16 %v1812
    %v4907 = vunpack.c.l.b16 %v1813
    %v4908 = vunpack.c.h.b16 %v1813
    %v4909 = vunpack.c.l.b16 %v1814
    %v4910 = vunpack.c.h.b16 %v1814
    %v4911 = vunpack.c.l.b16 %v1815
    %v4912 = vunpack.c.h.b16 %v1815
    %v4913 = vunpack.c.l.b16 %v1816
    %v4914 = vunpack.c.h.b16 %v1816
    %v4915 = vunpack.c.l.b16 %v1817
    %v4916 = vunpack.c.h.b16 %v1817
    %v4917 = vunpack.c.l.b16 %v1818
    %v4918 = vunpack.c.h.b16 %v1818
    %v4919 = vunpack.c.l.b16 %v1819
    %v4920 = vunpack.c.h.b16 %v1819
    %v4921 = vunpack.c.l.b16 %v1820
    %v4922 = vunpack.c.h.b16 %v1820
    %v4923 = vunpack.c.l.b16 %v1821
    %v4924 = vunpack.c.h.b16 %v1821
    %v4925 = vunpack.c.l.b16 %v1822
    %v4926 = vunpack.c.h.b16 %v1822
    %v4927 = vunpack.c.l.b16 %v1823
    %v4928 = vunpack.c.h.b16 %v1823
    %v4929 = vunpack.c.l.b16 %v1824
    %v4930 = vunpack.c.h.b16 %v1824
    %v4931 = vunpack.c.l.b16 %v1825
    %v4932 = vunpack.c.h.b16 %v1825
    %v4933 = vunpack.c.l.b16 %v1826
    %v4934 = vunpack.c.h.b16 %v1826
    %v4935 = vunpack.c.l.b16 %v1827
    %v4936 = vunpack.c.h.b16 %v1827
    %v4937 = vunpack.c.l.b16 %v1828
    %v4938 = vunpack.c.h.b16 %v1828
    %v4939 = vunpack.c.l.b16 %v1829
    %v4940 = vunpack.c.h.b16 %v1829
    %v4941 = vunpack.c.l.b16 %v1830
    %v4942 = vunpack.c.h.b16 %v1830
    %v4943 = vunpack.c.l.b16 %v1831
    %v4944 = vunpack.c.h.b16 %v1831
    %v4945 = vunpack.c.l.b16 %v1832
    %v4946 = vunpack.c.h.b16 %v1832
    %v4947 = vpack.c.b16 %v2907, %v2899
    %v4948 = vpack.c.b16 %v2908, %v2900
    %v4949 = vpack.c.b16 %v2909, %v2901
    %v4950 = vpack.c.b16 %v2910, %v2902
    %v4951 = vpack.c.b16 %v2911, %v2903
    %v4952 = vpack.c.b16 %v2912, %v2904
    %v4953 = vpack.c.b16 %v2913, %v2905
    %v4954 = vpack.c.b16 %v2914, %v2906
    %v4955 = vpack.c.b16 %v2923, %v2915
    %v4956 = vpack.c.b16 %v2924, %v2916
    %v4957 = vpack.c.b16 %v2925, %v2917
    %v4958 = vpack.c.b16 %v2926, %v2918
    %v4959 = vpack.c.b16 %v2927, %v2919
    %v4960 = vpack.c.b16 %v2928, %v2920
    %v4961 = vpack.c.b16 %v2929, %v2921
    %v4962 = vpack.c.b16 %v2930, %v2922
    %v4963 = vpack.c.b16 %v2939, %v2931
    %v4964 = vpack.c.b16 %v2940, %v2932
    %v4965 = vpack.c.b16 %v2941, %v2933
    %v4966 = vpack.c.b16 %v2942, %v2934
    %v4967 = vpack.c.b16 %v2943, %v2935
    %v4968 = vpack.c.b16 %v2944, %v2936
    %v4969 = vpack.c.b16 %v2945, %v2937
    %v4970 = vpack.c.b16 %v2946, %v2938
    %v4971 = vpack.c.b16 %v2955, %v2947
    %v4972 = vpack.c.b16 %v2956, %v2948
    %v4973 = vpack.c.b16 %v2957, %v2949
    %v4974 = vpack.c.b16 %v2958, %v2950
    %v4975 = vpack.c.b16 %v2959, %v2951
    %v4976 = vpack.c.b16 %v2960, %v2952
    %v4977 = vpack.c.b16 %v2961, %v2953
    %v4978 = vpack.c.b16 %v2962, %v2954
    %v4979 = vpack.c.b16 %v2971, %v2963
    %v4980 = vpack.c.b16 %v2972, %v2964
    %v4981 = vpack.c.b16 %v2973, %v2965
    %v4982 = vpack.c.b16 %v2974, %v2966
    %v4983 = vpack.c.b16 %v2975, %v2967
    %v4984 = vpack.c.b16 %v2976, %v2968
    %v4985 = vpack.c.b16 %v2977, %v2969
    %v4986 = vpack.c.b16 %v2978, %v2970
    %v4987 = vpack.c.b16 %v2987, %v2979
    %v4988 = vpack.c.b16 %v2988, %v2980
    %v4989 = vpack.c.b16 %v2989, %v2981
    %v4990 = vpack.c.b16 %v2990, %v2982
    %v4991 = vpack.c.b16 %v2991, %v2983
    %v4992 = vpack.c.b16 %v2992, %v2984
    %v4993 = vpack.c.b16 %v2993, %v2985
    %v4994 = vpack.c.b16 %v2994, %v2986
    %v4995 = vpack.c.b16 %v3003, %v2995
    %v4996 = vpack.c.b16 %v3004, %v2996
    %v4997 = vpack.c.b16 %v3005, %v2997
    %v4998 = vpack.c.b16 %v3006, %v2998
    %v4999 = vpack.c.b16 %v3007, %v2999
    %v5000 = vpack.c.b16 %v3008, %v3000
    %v5001 = vpack.c.b16 %v3009, %v3001
    %v5002 = vpack.c.b16 %v3010, %v3002
    %v5003 = vpack.c.b16 %v3019, %v3011
    %v5004 = vpack.c.b16 %v3020, %v3012
    %v5005 = vpack.c.b16 %v3021, %v3013
    %v5006 = vpack.c.b16 %v3022, %v3014
    %v5007 = vpack.c.b16 %v3023, %v3015
    %v5008 = vpack.c.b16 %v3024, %v3016
    %v5009 = vpack.c.b16 %v3025, %v3017
    %v5010 = vpack.c.b16 %v3026, %v3018
    %v5011 = vpack.c.b16 %v3035, %v3027
    %v5012 = vpack.c.b16 %v3036, %v3028
    %v5013 = vpack.c.b16 %v3037, %v3029
    %v5014 = vpack.c.b16 %v3038, %v3030
    %v5015 = vpack.c.b16 %v3039, %v3031
    %v5016 = vpack.c.b16 %v3040, %v3032
    %v5017 = vpack.c.b16 %v3041, %v3033
    %v5018 = vpack.c.b16 %v3042, %v3034
    %v5019 = vpack.c.b16 %v3051, %v3043
    %v5020 = vpack.c.b16 %v3052, %v3044
    %v5021 = vpack.c.b16 %v3053, %v3045
    %v5022 = vpack.c.b16 %v3054, %v3046
    %v5023 = vpack.c.b16 %v3055, %v3047
    %v5024 = vpack.c.b16 %v3056, %v3048
    %v5025 = vpack.c.b16 %v3057, %v3049
    %v5026 = vpack.c.b16 %v3058, %v3050
    %v5027 = vpack.c.b16 %v3067, %v3059
    %v5028 = vpack.c.b16 %v3068, %v3060
    %v5029 = vpack.c.b16 %v3069, %v3061
    %v5030 = vpack.c.b16 %v3070, %v3062
    %v5031 = vpack.c.b16 %v3071, %v3063
    %v5032 = vpack.c.b16 %v3072, %v3064
    %v5033 = vpack.c.b16 %v3073, %v3065
    %v5034 = vpack.c.b16 %v3074, %v3066
    %v5035 = vpack.c.b16 %v3083, %v3075
    %v5036 = vpack.c.b16 %v3084, %v3076
    %v5037 = vpack.c.b16 %v3085, %v3077
    %v5038 = vpack.c.b16 %v3086, %v3078
    %v5039 = vpack.c.b16 %v3087, %v3079
    %v5040 = vpack.c.b16 %v3088, %v3080
    %v5041 = vpack.c.b16 %v3089, %v3081
    %v5042 = vpack.c.b16 %v3090, %v3082
    %v5043 = vpack.c.b16 %v3099, %v3091
    %v5044 = vpack.c.b16 %v3100, %v3092
    %v5045 = vpack.c.b16 %v3101, %v3093
    %v5046 = vpack.c.b16 %v3102, %v3094
    %v5047 = vpack.c.b16 %v3103, %v3095
    %v5048 = vpack.c.b16 %v3104, %v3096
    %v5049 = vpack.c.b16 %v3105, %v3097
    %v5050 = vpack.c.b16 %v3106, %v3098
    %v5051 = vpack.c.b16 %v3115, %v3107
    %v5052 = vpack.c.b16 %v3116, %v3108
    %v5053 = vpack.c.b16 %v3117, %v3109
    %v5054 = vpack.c.b16 %v3118, %v3110
    %v5055 = vpack.c.b16 %v3119, %v3111
    %v5056 = vpack.c.b16 %v3120, %v3112
    %v5057 = vpack.c.b16 %v3121, %v3113
    %v5058 = vpack.c.b16 %v3122, %v3114
    %v5059 = vpack.c.b16 %v3131, %v3123
    %v5060 = vpack.c.b16 %v3132, %v3124
    %v5061 = vpack.c.b16 %v3133, %v3125
    %v5062 = vpack.c.b16 %v3134, %v3126
    %v5063 = vpack.c.b16 %v3135, %v3127
    %v5064 = vpack.c.b16 %v3136, %v3128
    %v5065 = vpack.c.b16 %v3137, %v3129
    %v5066 = vpack.c.b16 %v3138, %v3130
    %v5067 = vpack.c.b16 %v3147, %v3139
    %v5068 = vpack.c.b16 %v3148, %v3140
    %v5069 = vpack.c.b16 %v3149, %v3141
    %v5070 = vpack.c.b16 %v3150, %v3142
    %v5071 = vpack.c.b16 %v3151, %v3143
    %v5072 = vpack.c.b16 %v3152, %v3144
    %v5073 = vpack.c.b16 %v3153, %v3145
    %v5074 = vpack.c.b16 %v3154, %v3146
    %v5075 = vpack.c.b16 %v3163, %v3155
    %v5076 = vpack.c.b16 %v3164, %v3156
    %v5077 = vpack.c.b16 %v3165, %v3157
    %v5078 = vpack.c.b16 %v3166, %v3158
    %v5079 = vpack.c.b16 %v3167, %v3159
    %v5080 = vpack.c.b16 %v3168, %v3160
    %v5081 = vpack.c.b16 %v3169, %v3161
    %v5082 = vpack.c.b16 %v3170, %v3162
    %v5083 = vpack.c.b16 %v3179, %v3171
    %v5084 = vpack.c.b16 %v3180, %v3172
    %v5085 = vpack.c.b16 %v3181, %v3173
    %v5086 = vpack.c.b16 %v3182, %v3174
    %v5087 = vpack.c.b16 %v3183, %v3175
    %v5088 = vpack.c.b16 %v3184, %v3176
    %v5089 = vpack.c.b16 %v3185, %v3177
    %v5090 = vpack.c.b16 %v3186, %v3178
    %v5091 = vpack.c.b16 %v3195, %v3187
    %v5092 = vpack.c.b16 %v3196, %v3188
    %v5093 = vpack.c.b16 %v3197, %v3189
    %v5094 = vpack.c.b16 %v3198, %v3190
    %v5095 = vpack.c.b16 %v3199, %v3191
    %v5096 = vpack.c.b16 %v3200, %v3192
    %v5097 = vpack.c.b16 %v3201, %v3193
    %v5098 = vpack.c.b16 %v3202, %v3194
    %v5099 = vpack.c.b16 %v3211, %v3203
    %v5100 = vpack.c.b16 %v3212, %v3204
    %v5101 = vpack.c.b16 %v3213, %v3205
    %v5102 = vpack.c.b16 %v3214, %v3206
    %v5103 = vpack.c.b16 %v3215, %v3207
    %v5104 = vpack.c.b16 %v3216, %v3208
    %v5105 = vpack.c.b16 %v3217, %v3209
    %v5106 = vpack.c.b16 %v3218, %v3210
    %v5107 = vpack.c.b16 %v3227, %v3219
    %v5108 = vpack.c.b16 %v3228, %v3220
    %v5109 = vpack.c.b16 %v3229, %v3221
    %v5110 = vpack.c.b16 %v3230, %v3222
    %v5111 = vpack.c.b16 %v3231, %v3223
    %v5112 = vpack.c.b16 %v3232, %v3224
    %v5113 = vpack.c.b16 %v3233, %v3225
    %v5114 = vpack.c.b16 %v3234, %v3226
    %v5115 = vpack.c.b16 %v3243, %v3235
    %v5116 = vpack.c.b16 %v3244, %v3236
    %v5117 = vpack.c.b16 %v3245, %v3237
    %v5118 = vpack.c.b16 %v3246, %v3238
    %v5119 = vpack.c.b16 %v3247, %v3239
    %v5120 = vpack.c.b16 %v3248, %v3240
    %v5121 = vpack.c.b16 %v3249, %v3241
    %v5122 = vpack.c.b16 %v3250, %v3242
    %v5123 = vpack.c.b16 %v3259, %v3251
    %v5124 = vpack.c.b16 %v3260, %v3252
    %v5125 = vpack.c.b16 %v3261, %v3253
    %v5126 = vpack.c.b16 %v3262, %v3254
    %v5127 = vpack.c.b16 %v3263, %v3255
    %v5128 = vpack.c.b16 %v3264, %v3256
    %v5129 = vpack.c.b16 %v3265, %v3257
    %v5130 = vpack.c.b16 %v3266, %v3258
    %v5131 = vpack.c.b16 %v3275, %v3267
    %v5132 = vpack.c.b16 %v3276, %v3268
    %v5133 = vpack.c.b16 %v3277, %v3269
    %v5134 = vpack.c.b16 %v3278, %v3270
    %v5135 = vpack.c.b16 %v3279, %v3271
    %v5136 = vpack.c.b16 %v3280, %v3272
    %v5137 = vpack.c.b16 %v3281, %v3273
    %v5138 = vpack.c.b16 %v3282, %v3274
    %v5139 = vpack.c.b16 %v3291, %v3283
    %v5140 = vpack.c.b16 %v3292, %v3284
    %v5141 = vpack.c.b16 %v3293, %v3285
    %v5142 = vpack.c.b16 %v3294, %v3286
    %v5143 = vpack.c.b16 %v3295, %v3287
    %v5144 = vpack.c.b16 %v3296, %v3288
    %v5145 = vpack.c.b16 %v3297, %v3289
    %v5146 = vpack.c.b16 %v3298, %v3290
    %v5147 = vpack.c.b16 %v3307, %v3299
    %v5148 = vpack.c.b16 %v3308, %v3300
    %v5149 = vpack.c.b16 %v3309, %v3301
    %v5150 = vpack.c.b16 %v3310, %v3302
    %v5151 = vpack.c.b16 %v3311, %v3303
    %v5152 = vpack.c.b16 %v3312, %v3304
    %v5153 = vpack.c.b16 %v3313, %v3305
    %v5154 = vpack.c.b16 %v3314, %v3306
    %v5155 = vpack.c.b16 %v3323, %v3315
    %v5156 = vpack.c.b16 %v3324, %v3316
    %v5157 = vpack.c.b16 %v3325, %v3317
    %v5158 = vpack.c.b16 %v3326, %v3318
    %v5159 = vpack.c.b16 %v3327, %v3319
    %v5160 = vpack.c.b16 %v3328, %v3320
    %v5161 = vpack.c.b16 %v3329, %v3321
    %v5162 = vpack.c.b16 %v3330, %v3322
    %v5163 = vpack.c.b16 %v3339, %v3331
    %v5164 = vpack.c.b16 %v3340, %v3332
    %v5165 = vpack.c.b16 %v3341, %v3333
    %v5166 = vpack.c.b16 %v3342, %v3334
    %v5167 = vpack.c.b16 %v3343, %v3335
    %v5168 = vpack.c.b16 %v3344, %v3336
    %v5169 = vpack.c.b16 %v3345, %v3337
    %v5170 = vpack.c.b16 %v3346, %v3338
    %v5171 = vpack.c.b16 %v3355, %v3347
    %v5172 = vpack.c.b16 %v3356, %v3348
    %v5173 = vpack.c.b16 %v3357, %v3349
    %v5174 = vpack.c.b16 %v3358, %v3350
    %v5175 = vpack.c.b16 %v3359, %v3351
    %v5176 = vpack.c.b16 %v3360, %v3352
    %v5177 = vpack.c.b16 %v3361, %v3353
    %v5178 = vpack.c.b16 %v3362, %v3354
    %v5179 = vpack.c.b16 %v3371, %v3363
    %v5180 = vpack.c.b16 %v3372, %v3364
    %v5181 = vpack.c.b16 %v3373, %v3365
    %v5182 = vpack.c.b16 %v3374, %v3366
    %v5183 = vpack.c.b16 %v3375, %v3367
    %v5184 = vpack.c.b16 %v3376, %v3368
    %v5185 = vpack.c.b16 %v3377, %v3369
    %v5186 = vpack.c.b16 %v3378, %v3370
    %v5187 = vpack.c.b16 %v3387, %v3379
    %v5188 = vpack.c.b16 %v3388, %v3380
    %v5189 = vpack.c.b16 %v3389, %v3381
    %v5190 = vpack.c.b16 %v3390, %v3382
    %v5191 = vpack.c.b16 %v3391, %v3383
    %v5192 = vpack.c.b16 %v3392, %v3384
    %v5193 = vpack.c.b16 %v3393, %v3385
    %v5194 = vpack.c.b16 %v3394, %v3386
    %v5195 = vpack.c.b16 %v3403, %v3395
    %v5196 = vpack.c.b16 %v3404, %v3396
    %v5197 = vpack.c.b16 %v3405, %v3397
    %v5198 = vpack.c.b16 %v3406, %v3398
    %v5199 = vpack.c.b16 %v3407, %v3399
    %v5200 = vpack.c.b16 %v3408, %v3400
    %v5201 = vpack.c.b16 %v3409, %v3401
    %v5202 = vpack.c.b16 %v3410, %v3402
    %v5203 = vpack.c.b16 %v3419, %v3411
    %v5204 = vpack.c.b16 %v3420, %v3412
    %v5205 = vpack.c.b16 %v3421, %v3413
    %v5206 = vpack.c.b16 %v3422, %v3414
    %v5207 = vpack.c.b16 %v3423, %v3415
    %v5208 = vpack.c.b16 %v3424, %v3416
    %v5209 = vpack.c.b16 %v3425, %v3417
    %v5210 = vpack.c.b16 %v3426, %v3418
    %v5211 = vpack.c.b16 %v3435, %v3427
    %v5212 = vpack.c.b16 %v3436, %v3428
    %v5213 = vpack.c.b16 %v3437, %v3429
    %v5214 = vpack.c.b16 %v3438, %v3430
    %v5215 = vpack.c.b16 %v3439, %v3431
    %v5216 = vpack.c.b16 %v3440, %v3432
    %v5217 = vpack.c.b16 %v3441, %v3433
    %v5218 = vpack.c.b16 %v3442, %v3434
    %v5219 = vpack.c.b16 %v3451, %v3443
    %v5220 = vpack.c.b16 %v3452, %v3444
    %v5221 = vpack.c.b16 %v3453, %v3445
    %v5222 = vpack.c.b16 %v3454, %v3446
    %v5223 = vpack.c.b16 %v3455, %v3447
    %v5224 = vpack.c.b16 %v3456, %v3448
    %v5225 = vpack.c.b16 %v3457, %v3449
    %v5226 = vpack.c.b16 %v3458, %v3450
    %v5227 = vpack.c.b16 %v3467, %v3459
    %v5228 = vpack.c.b16 %v3468, %v3460
    %v5229 = vpack.c.b16 %v3469, %v3461
    %v5230 = vpack.c.b16 %v3470, %v3462
    %v5231 = vpack.c.b16 %v3471, %v3463
    %v5232 = vpack.c.b16 %v3472, %v3464
    %v5233 = vpack.c.b16 %v3473, %v3465
    %v5234 = vpack.c.b16 %v3474, %v3466
    %v5235 = vpack.c.b16 %v3483, %v3475
    %v5236 = vpack.c.b16 %v3484, %v3476
    %v5237 = vpack.c.b16 %v3485, %v3477
    %v5238 = vpack.c.b16 %v3486, %v3478
    %v5239 = vpack.c.b16 %v3487, %v3479
    %v5240 = vpack.c.b16 %v3488, %v3480
    %v5241 = vpack.c.b16 %v3489, %v3481
    %v5242 = vpack.c.b16 %v3490, %v3482
    %v5243 = vpack.c.b16 %v3499, %v3491
    %v5244 = vpack.c.b16 %v3500, %v3492
    %v5245 = vpack.c.b16 %v3501, %v3493
    %v5246 = vpack.c.b16 %v3502, %v3494
    %v5247 = vpack.c.b16 %v3503, %v3495
    %v5248 = vpack.c.b16 %v3504, %v3496
    %v5249 = vpack.c.b16 %v3505, %v3497
    %v5250 = vpack.c.b16 %v3506, %v3498
    %v5251 = vpack.c.b16 %v3515, %v3507
    %v5252 = vpack.c.b16 %v3516, %v3508
    %v5253 = vpack.c.b16 %v3517, %v3509
    %v5254 = vpack.c.b16 %v3518, %v3510
    %v5255 = vpack.c.b16 %v3519, %v3511
    %v5256 = vpack.c.b16 %v3520, %v3512
    %v5257 = vpack.c.b16 %v3521, %v3513
    %v5258 = vpack.c.b16 %v3522, %v3514
    %v5259 = vpack.c.b16 %v3531, %v3523
    %v5260 = vpack.c.b16 %v3532, %v3524
    %v5261 = vpack.c.b16 %v3533, %v3525
    %v5262 = vpack.c.b16 %v3534, %v3526
    %v5263 = vpack.c.b16 %v3535, %v3527
    %v5264 = vpack.c.b16 %v3536, %v3528
    %v5265 = vpack.c.b16 %v3537, %v3529
    %v5266 = vpack.c.b16 %v3538, %v3530
    %v5267 = vpack.c.b16 %v3547, %v3539
    %v5268 = vpack.c.b16 %v3548, %v3540
    %v5269 = vpack.c.b16 %v3549, %v3541
    %v5270 = vpack.c.b16 %v3550, %v3542
    %v5271 = vpack.c.b16 %v3551, %v3543
    %v5272 = vpack.c.b16 %v3552, %v3544
    %v5273 = vpack.c.b16 %v3553, %v3545
    %v5274 = vpack.c.b16 %v3554, %v3546
    %v5275 = vpack.c.b16 %v3563, %v3555
    %v5276 = vpack.c.b16 %v3564, %v3556
    %v5277 = vpack.c.b16 %v3565, %v3557
    %v5278 = vpack.c.b16 %v3566, %v3558
    %v5279 = vpack.c.b16 %v3567, %v3559
    %v5280 = vpack.c.b16 %v3568, %v3560
    %v5281 = vpack.c.b16 %v3569, %v3561
    %v5282 = vpack.c.b16 %v3570, %v3562
    %v5283 = vpack.c.b16 %v3579, %v3571
    %v5284 = vpack.c.b16 %v3580, %v3572
    %v5285 = vpack.c.b16 %v3581, %v3573
    %v5286 = vpack.c.b16 %v3582, %v3574
    %v5287 = vpack.c.b16 %v3583, %v3575
    %v5288 = vpack.c.b16 %v3584, %v3576
    %v5289 = vpack.c.b16 %v3585, %v3577
    %v5290 = vpack.c.b16 %v3586, %v3578
    %v5291 = vpack.c.b16 %v3595, %v3587
    %v5292 = vpack.c.b16 %v3596, %v3588
    %v5293 = vpack.c.b16 %v3597, %v3589
    %v5294 = vpack.c.b16 %v3598, %v3590
    %v5295 = vpack.c.b16 %v3599, %v3591
    %v5296 = vpack.c.b16 %v3600, %v3592
    %v5297 = vpack.c.b16 %v3601, %v3593
    %v5298 = vpack.c.b16 %v3602, %v3594
    %v5299 = vpack.c.b16 %v3611, %v3603
    %v5300 = vpack.c.b16 %v3612, %v3604
    %v5301 = vpack.c.b16 %v3613, %v3605
    %v5302 = vpack.c.b16 %v3614, %v3606
    %v5303 = vpack.c.b16 %v3615, %v3607
    %v5304 = vpack.c.b16 %v3616, %v3608
    %v5305 = vpack.c.b16 %v3617, %v3609
    %v5306 = vpack.c.b16 %v3618, %v3610
    %v5307 = vpack.c.b16 %v3627, %v3619
    %v5308 = vpack.c.b16 %v3628, %v3620
    %v5309 = vpack.c.b16 %v3629, %v3621
    %v5310 = vpack.c.b16 %v3630, %v3622
    %v5311 = vpack.c.b16 %v3631, %v3623
    %v5312 = vpack.c.b16 %v3632, %v3624
    %v5313 = vpack.c.b16 %v3633, %v3625
    %v5314 = vpack.c.b16 %v3634, %v3626
    %v5315 = vpack.c.b16 %v3643, %v3635
    %v5316 = vpack.c.b16 %v3644, %v3636
    %v5317 = vpack.c.b16 %v3645, %v3637
    %v5318 = vpack.c.b16 %v3646, %v3638
    %v5319 = vpack.c.b16 %v3647, %v3639
    %v5320 = vpack.c.b16 %v3648, %v3640
    %v5321 = vpack.c.b16 %v3649, %v3641
    %v5322 = vpack.c.b16 %v3650, %v3642
    %v5323 = vpack.c.b16 %v3659, %v3651
    %v5324 = vpack.c.b16 %v3660, %v3652
    %v5325 = vpack.c.b16 %v3661, %v3653
    %v5326 = vpack.c.b16 %v3662, %v3654
    %v5327 = vpack.c.b16 %v3663, %v3655
    %v5328 = vpack.c.b16 %v3664, %v3656
    %v5329 = vpack.c.b16 %v3665, %v3657
    %v5330 = vpack.c.b16 %v3666, %v3658
    %v5331 = vpack.c.b16 %v3675, %v3667
    %v5332 = vpack.c.b16 %v3676, %v3668
    %v5333 = vpack.c.b16 %v3677, %v3669
    %v5334 = vpack.c.b16 %v3678, %v3670
    %v5335 = vpack.c.b16 %v3679, %v3671
    %v5336 = vpack.c.b16 %v3680, %v3672
    %v5337 = vpack.c.b16 %v3681, %v3673
    %v5338 = vpack.c.b16 %v3682, %v3674
    %v5339 = vpack.c.b16 %v3691, %v3683
    %v5340 = vpack.c.b16 %v3692, %v3684
    %v5341 = vpack.c.b16 %v3693, %v3685
    %v5342 = vpack.c.b16 %v3694, %v3686
    %v5343 = vpack.c.b16 %v3695, %v3687
    %v5344 = vpack.c.b16 %v3696, %v3688
    %v5345 = vpack.c.b16 %v3697, %v3689
    %v5346 = vpack.c.b16 %v3698, %v3690
    %v5347 = vpack.c.b16 %v3707, %v3699
    %v5348 = vpack.c.b16 %v3708, %v3700
    %v5349 = vpack.c.b16 %v3709, %v3701
    %v5350 = vpack.c.b16 %v3710, %v3702
    %v5351 = vpack.c.b16 %v3711, %v3703
    %v5352 = vpack.c.b16 %v3712, %v3704
    %v5353 = vpack.c.b16 %v3713, %v3705
    %v5354 = vpack.c.b16 %v3714, %v3706
    %v5355 = vpack.c.b16 %v3723, %v3715
    %v5356 = vpack.c.b16 %v3724, %v3716
    %v5357 = vpack.c.b16 %v3725, %v3717
    %v5358 = vpack.c.b16 %v3726, %v3718
    %v5359 = vpack.c.b16 %v3727, %v3719
    %v5360 = vpack.c.b16 %v3728, %v3720
    %v5361 = vpack.c.b16 %v3729, %v3721
    %v5362 = vpack.c.b16 %v3730, %v3722
    %v5363 = vpack.c.b16 %v3739, %v3731
    %v5364 = vpack.c.b16 %v3740, %v3732
    %v5365 = vpack.c.b16 %v3741, %v3733
    %v5366 = vpack.c.b16 %v3742, %v3734
    %v5367 = vpack.c.b16 %v3743, %v3735
    %v5368 = vpack.c.b16 %v3744, %v3736
    %v5369 = vpack.c.b16 %v3745, %v3737
    %v5370 = vpack.c.b16 %v3746, %v3738
    %v5371 = vpack.c.b16 %v3755, %v3747
    %v5372 = vpack.c.b16 %v3756, %v3748
    %v5373 = vpack.c.b16 %v3757, %v3749
    %v5374 = vpack.c.b16 %v3758, %v3750
    %v5375 = vpack.c.b16 %v3759, %v3751
    %v5376 = vpack.c.b16 %v3760, %v3752
    %v5377 = vpack.c.b16 %v3761, %v3753
    %v5378 = vpack.c.b16 %v3762, %v3754
    %v5379 = vpack.c.b16 %v3771, %v3763
    %v5380 = vpack.c.b16 %v3772, %v3764
    %v5381 = vpack.c.b16 %v3773, %v3765
    %v5382 = vpack.c.b16 %v3774, %v3766
    %v5383 = vpack.c.b16 %v3775, %v3767
    %v5384 = vpack.c.b16 %v3776, %v3768
    %v5385 = vpack.c.b16 %v3777, %v3769
    %v5386 = vpack.c.b16 %v3778, %v3770
    %v5387 = vpack.c.b16 %v3787, %v3779
    %v5388 = vpack.c.b16 %v3788, %v3780
    %v5389 = vpack.c.b16 %v3789, %v3781
    %v5390 = vpack.c.b16 %v3790, %v3782
    %v5391 = vpack.c.b16 %v3791, %v3783
    %v5392 = vpack.c.b16 %v3792, %v3784
    %v5393 = vpack.c.b16 %v3793, %v3785
    %v5394 = vpack.c.b16 %v3794, %v3786
    %v5395 = vpack.c.b16 %v3803, %v3795
    %v5396 = vpack.c.b16 %v3804, %v3796
    %v5397 = vpack.c.b16 %v3805, %v3797
    %v5398 = vpack.c.b16 %v3806, %v3798
    %v5399 = vpack.c.b16 %v3807, %v3799
    %v5400 = vpack.c.b16 %v3808, %v3800
    %v5401 = vpack.c.b16 %v3809, %v3801
    %v5402 = vpack.c.b16 %v3810, %v3802
    %v5403 = vpack.c.b16 %v3819, %v3811
    %v5404 = vpack.c.b16 %v3820, %v3812
    %v5405 = vpack.c.b16 %v3821, %v3813
    %v5406 = vpack.c.b16 %v3822, %v3814
    %v5407 = vpack.c.b16 %v3823, %v3815
    %v5408 = vpack.c.b16 %v3824, %v3816
    %v5409 = vpack.c.b16 %v3825, %v3817
    %v5410 = vpack.c.b16 %v3826, %v3818
    %v5411 = vpack.c.b16 %v3835, %v3827
    %v5412 = vpack.c.b16 %v3836, %v3828
    %v5413 = vpack.c.b16 %v3837, %v3829
    %v5414 = vpack.c.b16 %v3838, %v3830
    %v5415 = vpack.c.b16 %v3839, %v3831
    %v5416 = vpack.c.b16 %v3840, %v3832
    %v5417 = vpack.c.b16 %v3841, %v3833
    %v5418 = vpack.c.b16 %v3842, %v3834
    %v5419 = vpack.c.b16 %v3851, %v3843
    %v5420 = vpack.c.b16 %v3852, %v3844
    %v5421 = vpack.c.b16 %v3853, %v3845
    %v5422 = vpack.c.b16 %v3854, %v3846
    %v5423 = vpack.c.b16 %v3855, %v3847
    %v5424 = vpack.c.b16 %v3856, %v3848
    %v5425 = vpack.c.b16 %v3857, %v3849
    %v5426 = vpack.c.b16 %v3858, %v3850
    %v5427 = vpack.c.b16 %v3867, %v3859
    %v5428 = vpack.c.b16 %v3868, %v3860
    %v5429 = vpack.c.b16 %v3869, %v3861
    %v5430 = vpack.c.b16 %v3870, %v3862
    %v5431 = vpack.c.b16 %v3871, %v3863
    %v5432 = vpack.c.b16 %v3872, %v3864
    %v5433 = vpack.c.b16 %v3873, %v3865
    %v5434 = vpack.c.b16 %v3874, %v3866
    %v5435 = vpack.c.b16 %v3883, %v3875
    %v5436 = vpack.c.b16 %v3884, %v3876
    %v5437 = vpack.c.b16 %v3885, %v3877
    %v5438 = vpack.c.b16 %v3886, %v3878
    %v5439 = vpack.c.b16 %v3887, %v3879
    %v5440 = vpack.c.b16 %v3888, %v3880
    %v5441 = vpack.c.b16 %v3889, %v3881
    %v5442 = vpack.c.b16 %v3890, %v3882
    %v5443 = vpack.c.b16 %v3899, %v3891
    %v5444 = vpack.c.b16 %v3900, %v3892
    %v5445 = vpack.c.b16 %v3901, %v3893
    %v5446 = vpack.c.b16 %v3902, %v3894
    %v5447 = vpack.c.b16 %v3903, %v3895
    %v5448 = vpack.c.b16 %v3904, %v3896
    %v5449 = vpack.c.b16 %v3905, %v3897
    %v5450 = vpack.c.b16 %v3906, %v3898
    %v5451 = vpack.c.b16 %v3915, %v3907
    %v5452 = vpack.c.b16 %v3916, %v3908
    %v5453 = vpack.c.b16 %v3917, %v3909
    %v5454 = vpack.c.b16 %v3918, %v3910
    %v5455 = vpack.c.b16 %v3919, %v3911
    %v5456 = vpack.c.b16 %v3920, %v3912
    %v5457 = vpack.c.b16 %v3921, %v3913
    %v5458 = vpack.c.b16 %v3922, %v3914
    %v5459 = vpack.c.b16 %v3931, %v3923
    %v5460 = vpack.c.b16 %v3932, %v3924
    %v5461 = vpack.c.b16 %v3933, %v3925
    %v5462 = vpack.c.b16 %v3934, %v3926
    %v5463 = vpack.c.b16 %v3935, %v3927
    %v5464 = vpack.c.b16 %v3936, %v3928
    %v5465 = vpack.c.b16 %v3937, %v3929
    %v5466 = vpack.c.b16 %v3938, %v3930
    %v5467 = vpack.c.b16 %v3947, %v3939
    %v5468 = vpack.c.b16 %v3948, %v3940
    %v5469 = vpack.c.b16 %v3949, %v3941
    %v5470 = vpack.c.b16 %v3950, %v3942
    %v5471 = vpack.c.b16 %v3951, %v3943
    %v5472 = vpack.c.b16 %v3952, %v3944
    %v5473 = vpack.c.b16 %v3953, %v3945
    %v5474 = vpack.c.b16 %v3954, %v3946
    %v5475 = vpack.c.b16 %v3963, %v3955
    %v5476 = vpack.c.b16 %v3964, %v3956
    %v5477 = vpack.c.b16 %v3965, %v3957
    %v5478 = vpack.c.b16 %v3966, %v3958
    %v5479 = vpack.c.b16 %v3967, %v3959
    %v5480 = vpack.c.b16 %v3968, %v3960
    %v5481 = vpack.c.b16 %v3969, %v3961
    %v5482 = vpack.c.b16 %v3970, %v3962
    %v5483 = vpack.c.b16 %v3979, %v3971
    %v5484 = vpack.c.b16 %v3980, %v3972
    %v5485 = vpack.c.b16 %v3981, %v3973
    %v5486 = vpack.c.b16 %v3982, %v3974
    %v5487 = vpack.c.b16 %v3983, %v3975
    %v5488 = vpack.c.b16 %v3984, %v3976
    %v5489 = vpack.c.b16 %v3985, %v3977
    %v5490 = vpack.c.b16 %v3986, %v3978
    %v5491 = vpack.c.b16 %v3995, %v3987
    %v5492 = vpack.c.b16 %v3996, %v3988
    %v5493 = vpack.c.b16 %v3997, %v3989
    %v5494 = vpack.c.b16 %v3998, %v3990
    %v5495 = vpack.c.b16 %v3999, %v3991
    %v5496 = vpack.c.b16 %v4000, %v3992
    %v5497 = vpack.c.b16 %v4001, %v3993
    %v5498 = vpack.c.b16 %v4002, %v3994
    %v5499 = vpack.c.b16 %v4011, %v4003
    %v5500 = vpack.c.b16 %v4012, %v4004
    %v5501 = vpack.c.b16 %v4013, %v4005
    %v5502 = vpack.c.b16 %v4014, %v4006
    %v5503 = vpack.c.b16 %v4015, %v4007
    %v5504 = vpack.c.b16 %v4016, %v4008
    %v5505 = vpack.c.b16 %v4017, %v4009
    %v5506 = vpack.c.b16 %v4018, %v4010
    %v5507 = vpack.c.b16 %v4027, %v4019
    %v5508 = vpack.c.b16 %v4028, %v4020
    %v5509 = vpack.c.b16 %v4029, %v4021
    %v5510 = vpack.c.b16 %v4030, %v4022
    %v5511 = vpack.c.b16 %v4031, %v4023
    %v5512 = vpack.c.b16 %v4032, %v4024
    %v5513 = vpack.c.b16 %v4033, %v4025
    %v5514 = vpack.c.b16 %v4034, %v4026
    %v5515 = vpack.c.b16 %v4043, %v4035
    %v5516 = vpack.c.b16 %v4044, %v4036
    %v5517 = vpack.c.b16 %v4045, %v4037
    %v5518 = vpack.c.b16 %v4046, %v4038
    %v5519 = vpack.c.b16 %v4047, %v4039
    %v5520 = vpack.c.b16 %v4048, %v4040
    %v5521 = vpack.c.b16 %v4049, %v4041
    %v5522 = vpack.c.b16 %v4050, %v4042
    %v5523 = vpack.c.b16 %v4059, %v4051
    %v5524 = vpack.c.b16 %v4060, %v4052
    %v5525 = vpack.c.b16 %v4061, %v4053
    %v5526 = vpack.c.b16 %v4062, %v4054
    %v5527 = vpack.c.b16 %v4063, %v4055
    %v5528 = vpack.c.b16 %v4064, %v4056
    %v5529 = vpack.c.b16 %v4065, %v4057
    %v5530 = vpack.c.b16 %v4066, %v4058
    %v5531 = vpack.c.b16 %v4075, %v4067
    %v5532 = vpack.c.b16 %v4076, %v4068
    %v5533 = vpack.c.b16 %v4077, %v4069
    %v5534 = vpack.c.b16 %v4078, %v4070
    %v5535 = vpack.c.b16 %v4079, %v4071
    %v5536 = vpack.c.b16 %v4080, %v4072
    %v5537 = vpack.c.b16 %v4081, %v4073
    %v5538 = vpack.c.b16 %v4082, %v4074
    %v5539 = vpack.c.b16 %v4091, %v4083
    %v5540 = vpack.c.b16 %v4092, %v4084
    %v5541 = vpack.c.b16 %v4093, %v4085
    %v5542 = vpack.c.b16 %v4094, %v4086
    %v5543 = vpack.c.b16 %v4095, %v4087
    %v5544 = vpack.c.b16 %v4096, %v4088
    %v5545 = vpack.c.b16 %v4097, %v4089
    %v5546 = vpack.c.b16 %v4098, %v4090
    %v5547 = vpack.c.b16 %v4107, %v4099
    %v5548 = vpack.c.b16 %v4108, %v4100
    %v5549 = vpack.c.b16 %v4109, %v4101
    %v5550 = vpack.c.b16 %v4110, %v4102
    %v5551 = vpack.c.b16 %v4111, %v4103
    %v5552 = vpack.c.b16 %v4112, %v4104
    %v5553 = vpack.c.b16 %v4113, %v4105
    %v5554 = vpack.c.b16 %v4114, %v4106
    %v5555 = vpack.c.b16 %v4123, %v4115
    %v5556 = vpack.c.b16 %v4124, %v4116
    %v5557 = vpack.c.b16 %v4125, %v4117
    %v5558 = vpack.c.b16 %v4126, %v4118
    %v5559 = vpack.c.b16 %v4127, %v4119
    %v5560 = vpack.c.b16 %v4128, %v4120
    %v5561 = vpack.c.b16 %v4129, %v4121
    %v5562 = vpack.c.b16 %v4130, %v4122
    %v5563 = vpack.c.b16 %v4139, %v4131
    %v5564 = vpack.c.b16 %v4140, %v4132
    %v5565 = vpack.c.b16 %v4141, %v4133
    %v5566 = vpack.c.b16 %v4142, %v4134
    %v5567 = vpack.c.b16 %v4143, %v4135
    %v5568 = vpack.c.b16 %v4144, %v4136
    %v5569 = vpack.c.b16 %v4145, %v4137
    %v5570 = vpack.c.b16 %v4146, %v4138
    %v5571 = vpack.c.b16 %v4155, %v4147
    %v5572 = vpack.c.b16 %v4156, %v4148
    %v5573 = vpack.c.b16 %v4157, %v4149
    %v5574 = vpack.c.b16 %v4158, %v4150
    %v5575 = vpack.c.b16 %v4159, %v4151
    %v5576 = vpack.c.b16 %v4160, %v4152
    %v5577 = vpack.c.b16 %v4161, %v4153
    %v5578 = vpack.c.b16 %v4162, %v4154
    %v5579 = vpack.c.b16 %v4171, %v4163
    %v5580 = vpack.c.b16 %v4172, %v4164
    %v5581 = vpack.c.b16 %v4173, %v4165
    %v5582 = vpack.c.b16 %v4174, %v4166
    %v5583 = vpack.c.b16 %v4175, %v4167
    %v5584 = vpack.c.b16 %v4176, %v4168
    %v5585 = vpack.c.b16 %v4177, %v4169
    %v5586 = vpack.c.b16 %v4178, %v4170
    %v5587 = vpack.c.b16 %v4187, %v4179
    %v5588 = vpack.c.b16 %v4188, %v4180
    %v5589 = vpack.c.b16 %v4189, %v4181
    %v5590 = vpack.c.b16 %v4190, %v4182
    %v5591 = vpack.c.b16 %v4191, %v4183
    %v5592 = vpack.c.b16 %v4192, %v4184
    %v5593 = vpack.c.b16 %v4193, %v4185
    %v5594 = vpack.c.b16 %v4194, %v4186
    %v5595 = vpack.c.b16 %v4203, %v4195
    %v5596 = vpack.c.b16 %v4204, %v4196
    %v5597 = vpack.c.b16 %v4205, %v4197
    %v5598 = vpack.c.b16 %v4206, %v4198
    %v5599 = vpack.c.b16 %v4207, %v4199
    %v5600 = vpack.c.b16 %v4208, %v4200
    %v5601 = vpack.c.b16 %v4209, %v4201
    %v5602 = vpack.c.b16 %v4210, %v4202
    %v5603 = vpack.c.b16 %v4219, %v4211
    %v5604 = vpack.c.b16 %v4220, %v4212
    %v5605 = vpack.c.b16 %v4221, %v4213
    %v5606 = vpack.c.b16 %v4222, %v4214
    %v5607 = vpack.c.b16 %v4223, %v4215
    %v5608 = vpack.c.b16 %v4224, %v4216
    %v5609 = vpack.c.b16 %v4225, %v4217
    %v5610 = vpack.c.b16 %v4226, %v4218
    %v5611 = vpack.c.b16 %v4235, %v4227
    %v5612 = vpack.c.b16 %v4236, %v4228
    %v5613 = vpack.c.b16 %v4237, %v4229
    %v5614 = vpack.c.b16 %v4238, %v4230
    %v5615 = vpack.c.b16 %v4239, %v4231
    %v5616 = vpack.c.b16 %v4240, %v4232
    %v5617 = vpack.c.b16 %v4241, %v4233
    %v5618 = vpack.c.b16 %v4242, %v4234
    %v5619 = vpack.c.b16 %v4251, %v4243
    %v5620 = vpack.c.b16 %v4252, %v4244
    %v5621 = vpack.c.b16 %v4253, %v4245
    %v5622 = vpack.c.b16 %v4254, %v4246
    %v5623 = vpack.c.b16 %v4255, %v4247
    %v5624 = vpack.c.b16 %v4256, %v4248
    %v5625 = vpack.c.b16 %v4257, %v4249
    %v5626 = vpack.c.b16 %v4258, %v4250
    %v5627 = vpack.c.b16 %v4267, %v4259
    %v5628 = vpack.c.b16 %v4268, %v4260
    %v5629 = vpack.c.b16 %v4269, %v4261
    %v5630 = vpack.c.b16 %v4270, %v4262
    %v5631 = vpack.c.b16 %v4271, %v4263
    %v5632 = vpack.c.b16 %v4272, %v4264
    %v5633 = vpack.c.b16 %v4273, %v4265
    %v5634 = vpack.c.b16 %v4274, %v4266
    %v5635 = vpack.c.b16 %v4283, %v4275
    %v5636 = vpack.c.b16 %v4284, %v4276
    %v5637 = vpack.c.b16 %v4285, %v4277
    %v5638 = vpack.c.b16 %v4286, %v4278
    %v5639 = vpack.c.b16 %v4287, %v4279
    %v5640 = vpack.c.b16 %v4288, %v4280
    %v5641 = vpack.c.b16 %v4289, %v4281
    %v5642 = vpack.c.b16 %v4290, %v4282
    %v5643 = vpack.c.b16 %v4299, %v4291
    %v5644 = vpack.c.b16 %v4300, %v4292
    %v5645 = vpack.c.b16 %v4301, %v4293
    %v5646 = vpack.c.b16 %v4302, %v4294
    %v5647 = vpack.c.b16 %v4303, %v4295
    %v5648 = vpack.c.b16 %v4304, %v4296
    %v5649 = vpack.c.b16 %v4305, %v4297
    %v5650 = vpack.c.b16 %v4306, %v4298
    %v5651 = vpack.c.b16 %v4315, %v4307
    %v5652 = vpack.c.b16 %v4316, %v4308
    %v5653 = vpack.c.b16 %v4317, %v4309
    %v5654 = vpack.c.b16 %v4318, %v4310
    %v5655 = vpack.c.b16 %v4319, %v4311
    %v5656 = vpack.c.b16 %v4320, %v4312
    %v5657 = vpack.c.b16 %v4321, %v4313
    %v5658 = vpack.c.b16 %v4322, %v4314
    %v5659 = vpack.c.b16 %v4331, %v4323
    %v5660 = vpack.c.b16 %v4332, %v4324
    %v5661 = vpack.c.b16 %v4333, %v4325
    %v5662 = vpack.c.b16 %v4334, %v4326
    %v5663 = vpack.c.b16 %v4335, %v4327
    %v5664 = vpack.c.b16 %v4336, %v4328
    %v5665 = vpack.c.b16 %v4337, %v4329
    %v5666 = vpack.c.b16 %v4338, %v4330
    %v5667 = vpack.c.b16 %v4347, %v4339
    %v5668 = vpack.c.b16 %v4348, %v4340
    %v5669 = vpack.c.b16 %v4349, %v4341
    %v5670 = vpack.c.b16 %v4350, %v4342
    %v5671 = vpack.c.b16 %v4351, %v4343
    %v5672 = vpack.c.b16 %v4352, %v4344
    %v5673 = vpack.c.b16 %v4353, %v4345
    %v5674 = vpack.c.b16 %v4354, %v4346
    %v5675 = vpack.c.b16 %v4363, %v4355
    %v5676 = vpack.c.b16 %v4364, %v4356
    %v5677 = vpack.c.b16 %v4365, %v4357
    %v5678 = vpack.c.b16 %v4366, %v4358
    %v5679 = vpack.c.b16 %v4367, %v4359
    %v5680 = vpack.c.b16 %v4368, %v4360
    %v5681 = vpack.c.b16 %v4369, %v4361
    %v5682 = vpack.c.b16 %v4370, %v4362
    %v5683 = vpack.c.b16 %v4379, %v4371
    %v5684 = vpack.c.b16 %v4380, %v4372
    %v5685 = vpack.c.b16 %v4381, %v4373
    %v5686 = vpack.c.b16 %v4382, %v4374
    %v5687 = vpack.c.b16 %v4383, %v4375
    %v5688 = vpack.c.b16 %v4384, %v4376
    %v5689 = vpack.c.b16 %v4385, %v4377
    %v5690 = vpack.c.b16 %v4386, %v4378
    %v5691 = vpack.c.b16 %v4395, %v4387
    %v5692 = vpack.c.b16 %v4396, %v4388
    %v5693 = vpack.c.b16 %v4397, %v4389
    %v5694 = vpack.c.b16 %v4398, %v4390
    %v5695 = vpack.c.b16 %v4399, %v4391
    %v5696 = vpack.c.b16 %v4400, %v4392
    %v5697 = vpack.c.b16 %v4401, %v4393
    %v5698 = vpack.c.b16 %v4402, %v4394
    %v5699 = vpack.c.b16 %v4411, %v4403
    %v5700 = vpack.c.b16 %v4412, %v4404
    %v5701 = vpack.c.b16 %v4413, %v4405
    %v5702 = vpack.c.b16 %v4414, %v4406
    %v5703 = vpack.c.b16 %v4415, %v4407
    %v5704 = vpack.c.b16 %v4416, %v4408
    %v5705 = vpack.c.b16 %v4417, %v4409
    %v5706 = vpack.c.b16 %v4418, %v4410
    %v5707 = vpack.c.b16 %v4427, %v4419
    %v5708 = vpack.c.b16 %v4428, %v4420
    %v5709 = vpack.c.b16 %v4429, %v4421
    %v5710 = vpack.c.b16 %v4430, %v4422
    %v5711 = vpack.c.b16 %v4431, %v4423
    %v5712 = vpack.c.b16 %v4432, %v4424
    %v5713 = vpack.c.b16 %v4433, %v4425
    %v5714 = vpack.c.b16 %v4434, %v4426
    %v5715 = vpack.c.b16 %v4443, %v4435
    %v5716 = vpack.c.b16 %v4444, %v4436
    %v5717 = vpack.c.b16 %v4445, %v4437
    %v5718 = vpack.c.b16 %v4446, %v4438
    %v5719 = vpack.c.b16 %v4447, %v4439
    %v5720 = vpack.c.b16 %v4448, %v4440
    %v5721 = vpack.c.b16 %v4449, %v4441
    %v5722 = vpack.c.b16 %v4450, %v4442
    %v5723 = vpack.c.b16 %v4459, %v4451
    %v5724 = vpack.c.b16 %v4460, %v4452
    %v5725 = vpack.c.b16 %v4461, %v4453
    %v5726 = vpack.c.b16 %v4462, %v4454
    %v5727 = vpack.c.b16 %v4463, %v4455
    %v5728 = vpack.c.b16 %v4464, %v4456
    %v5729 = vpack.c.b16 %v4465, %v4457
    %v5730 = vpack.c.b16 %v4466, %v4458
    %v5731 = vpack.c.b16 %v4475, %v4467
    %v5732 = vpack.c.b16 %v4476, %v4468
    %v5733 = vpack.c.b16 %v4477, %v4469
    %v5734 = vpack.c.b16 %v4478, %v4470
    %v5735 = vpack.c.b16 %v4479, %v4471
    %v5736 = vpack.c.b16 %v4480, %v4472
    %v5737 = vpack.c.b16 %v4481, %v4473
    %v5738 = vpack.c.b16 %v4482, %v4474
    %v5739 = vpack.c.b16 %v4491, %v4483
    %v5740 = vpack.c.b16 %v4492, %v4484
    %v5741 = vpack.c.b16 %v4493, %v4485
    %v5742 = vpack.c.b16 %v4494, %v4486
    %v5743 = vpack.c.b16 %v4495, %v4487
    %v5744 = vpack.c.b16 %v4496, %v4488
    %v5745 = vpack.c.b16 %v4497, %v4489
    %v5746 = vpack.c.b16 %v4498, %v4490
    %v5747 = vpack.c.b16 %v4507, %v4499
    %v5748 = vpack.c.b16 %v4508, %v4500
    %v5749 = vpack.c.b16 %v4509, %v4501
    %v5750 = vpack.c.b16 %v4510, %v4502
    %v5751 = vpack.c.b16 %v4511, %v4503
    %v5752 = vpack.c.b16 %v4512, %v4504
    %v5753 = vpack.c.b16 %v4513, %v4505
    %v5754 = vpack.c.b16 %v4514, %v4506
    %v5755 = vpack.c.b16 %v4523, %v4515
    %v5756 = vpack.c.b16 %v4524, %v4516
    %v5757 = vpack.c.b16 %v4525, %v4517
    %v5758 = vpack.c.b16 %v4526, %v4518
    %v5759 = vpack.c.b16 %v4527, %v4519
    %v5760 = vpack.c.b16 %v4528, %v4520
    %v5761 = vpack.c.b16 %v4529, %v4521
    %v5762 = vpack.c.b16 %v4530, %v4522
    %v5763 = vpack.c.b16 %v4539, %v4531
    %v5764 = vpack.c.b16 %v4540, %v4532
    %v5765 = vpack.c.b16 %v4541, %v4533
    %v5766 = vpack.c.b16 %v4542, %v4534
    %v5767 = vpack.c.b16 %v4543, %v4535
    %v5768 = vpack.c.b16 %v4544, %v4536
    %v5769 = vpack.c.b16 %v4545, %v4537
    %v5770 = vpack.c.b16 %v4546, %v4538
    %v5771 = vpack.c.b16 %v4555, %v4547
    %v5772 = vpack.c.b16 %v4556, %v4548
    %v5773 = vpack.c.b16 %v4557, %v4549
    %v5774 = vpack.c.b16 %v4558, %v4550
    %v5775 = vpack.c.b16 %v4559, %v4551
    %v5776 = vpack.c.b16 %v4560, %v4552
    %v5777 = vpack.c.b16 %v4561, %v4553
    %v5778 = vpack.c.b16 %v4562, %v4554
    %v5779 = vpack.c.b16 %v4571, %v4563
    %v5780 = vpack.c.b16 %v4572, %v4564
    %v5781 = vpack.c.b16 %v4573, %v4565
    %v5782 = vpack.c.b16 %v4574, %v4566
    %v5783 = vpack.c.b16 %v4575, %v4567
    %v5784 = vpack.c.b16 %v4576, %v4568
    %v5785 = vpack.c.b16 %v4577, %v4569
    %v5786 = vpack.c.b16 %v4578, %v4570
    %v5787 = vpack.c.b16 %v4587, %v4579
    %v5788 = vpack.c.b16 %v4588, %v4580
    %v5789 = vpack.c.b16 %v4589, %v4581
    %v5790 = vpack.c.b16 %v4590, %v4582
    %v5791 = vpack.c.b16 %v4591, %v4583
    %v5792 = vpack.c.b16 %v4592, %v4584
    %v5793 = vpack.c.b16 %v4593, %v4585
    %v5794 = vpack.c.b16 %v4594, %v4586
    %v5795 = vpack.c.b16 %v4603, %v4595
    %v5796 = vpack.c.b16 %v4604, %v4596
    %v5797 = vpack.c.b16 %v4605, %v4597
    %v5798 = vpack.c.b16 %v4606, %v4598
    %v5799 = vpack.c.b16 %v4607, %v4599
    %v5800 = vpack.c.b16 %v4608, %v4600
    %v5801 = vpack.c.b16 %v4609, %v4601
    %v5802 = vpack.c.b16 %v4610, %v4602
    %v5803 = vpack.c.b16 %v4619, %v4611
    %v5804 = vpack.c.b16 %v4620, %v4612
    %v5805 = vpack.c.b16 %v4621, %v4613
    %v5806 = vpack.c.b16 %v4622, %v4614
    %v5807 = vpack.c.b16 %v4623, %v4615
    %v5808 = vpack.c.b16 %v4624, %v4616
    %v5809 = vpack.c.b16 %v4625, %v4617
    %v5810 = vpack.c.b16 %v4626, %v4618
    %v5811 = vpack.c.b16 %v4635, %v4627
    %v5812 = vpack.c.b16 %v4636, %v4628
    %v5813 = vpack.c.b16 %v4637, %v4629
    %v5814 = vpack.c.b16 %v4638, %v4630
    %v5815 = vpack.c.b16 %v4639, %v4631
    %v5816 = vpack.c.b16 %v4640, %v4632
    %v5817 = vpack.c.b16 %v4641, %v4633
    %v5818 = vpack.c.b16 %v4642, %v4634
    %v5819 = vpack.c.b16 %v4651, %v4643
    %v5820 = vpack.c.b16 %v4652, %v4644
    %v5821 = vpack.c.b16 %v4653, %v4645
    %v5822 = vpack.c.b16 %v4654, %v4646
    %v5823 = vpack.c.b16 %v4655, %v4647
    %v5824 = vpack.c.b16 %v4656, %v4648
    %v5825 = vpack.c.b16 %v4657, %v4649
    %v5826 = vpack.c.b16 %v4658, %v4650
    %v5827 = vpack.c.b16 %v4667, %v4659
    %v5828 = vpack.c.b16 %v4668, %v4660
    %v5829 = vpack.c.b16 %v4669, %v4661
    %v5830 = vpack.c.b16 %v4670, %v4662
    %v5831 = vpack.c.b16 %v4671, %v4663
    %v5832 = vpack.c.b16 %v4672, %v4664
    %v5833 = vpack.c.b16 %v4673, %v4665
    %v5834 = vpack.c.b16 %v4674, %v4666
    %v5835 = vpack.c.b16 %v4683, %v4675
    %v5836 = vpack.c.b16 %v4684, %v4676
    %v5837 = vpack.c.b16 %v4685, %v4677
    %v5838 = vpack.c.b16 %v4686, %v4678
    %v5839 = vpack.c.b16 %v4687, %v4679
    %v5840 = vpack.c.b16 %v4688, %v4680
    %v5841 = vpack.c.b16 %v4689, %v4681
    %v5842 = vpack.c.b16 %v4690, %v4682
    %v5843 = vpack.c.b16 %v4699, %v4691
    %v5844 = vpack.c.b16 %v4700, %v4692
    %v5845 = vpack.c.b16 %v4701, %v4693
    %v5846 = vpack.c.b16 %v4702, %v4694
    %v5847 = vpack.c.b16 %v4703, %v4695
    %v5848 = vpack.c.b16 %v4704, %v4696
    %v5849 = vpack.c.b16 %v4705, %v4697
    %v5850 = vpack.c.b16 %v4706, %v4698
    %v5851 = vpack.c.b16 %v4715, %v4707
    %v5852 = vpack.c.b16 %v4716, %v4708
    %v5853 = vpack.c.b16 %v4717, %v4709
    %v5854 = vpack.c.b16 %v4718, %v4710
    %v5855 = vpack.c.b16 %v4719, %v4711
    %v5856 = vpack.c.b16 %v4720, %v4712
    %v5857 = vpack.c.b16 %v4721, %v4713
    %v5858 = vpack.c.b16 %v4722, %v4714
    %v5859 = vpack.c.b16 %v4731, %v4723
    %v5860 = vpack.c.b16 %v4732, %v4724
    %v5861 = vpack.c.b16 %v4733, %v4725
    %v5862 = vpack.c.b16 %v4734, %v4726
    %v5863 = vpack.c.b16 %v4735, %v4727
    %v5864 = vpack.c.b16 %v4736, %v4728
    %v5865 = vpack.c.b16 %v4737, %v4729
    %v5866 = vpack.c.b16 %v4738, %v4730
    %v5867 = vpack.c.b16 %v4747, %v4739
    %v5868 = vpack.c.b16 %v4748, %v4740
    %v5869 = vpack.c.b16 %v4749, %v4741
    %v5870 = vpack.c.b16 %v4750, %v4742
    %v5871 = vpack.c.b16 %v4751, %v4743
    %v5872 = vpack.c.b16 %v4752, %v4744
    %v5873 = vpack.c.b16 %v4753, %v4745
    %v5874 = vpack.c.b16 %v4754, %v4746
    %v5875 = vpack.c.b16 %v4763, %v4755
    %v5876 = vpack.c.b16 %v4764, %v4756
    %v5877 = vpack.c.b16 %v4765, %v4757
    %v5878 = vpack.c.b16 %v4766, %v4758
    %v5879 = vpack.c.b16 %v4767, %v4759
    %v5880 = vpack.c.b16 %v4768, %v4760
    %v5881 = vpack.c.b16 %v4769, %v4761
    %v5882 = vpack.c.b16 %v4770, %v4762
    %v5883 = vpack.c.b16 %v4779, %v4771
    %v5884 = vpack.c.b16 %v4780, %v4772
    %v5885 = vpack.c.b16 %v4781, %v4773
    %v5886 = vpack.c.b16 %v4782, %v4774
    %v5887 = vpack.c.b16 %v4783, %v4775
    %v5888 = vpack.c.b16 %v4784, %v4776
    %v5889 = vpack.c.b16 %v4785, %v4777
    %v5890 = vpack.c.b16 %v4786, %v4778
    %v5891 = vpack.c.b16 %v4795, %v4787
    %v5892 = vpack.c.b16 %v4796, %v4788
    %v5893 = vpack.c.b16 %v4797, %v4789
    %v5894 = vpack.c.b16 %v4798, %v4790
    %v5895 = vpack.c.b16 %v4799, %v4791
    %v5896 = vpack.c.b16 %v4800, %v4792
    %v5897 = vpack.c.b16 %v4801, %v4793
    %v5898 = vpack.c.b16 %v4802, %v4794
    %v5899 = vpack.c.b16 %v4811, %v4803
    %v5900 = vpack.c.b16 %v4812, %v4804
    %v5901 = vpack.c.b16 %v4813, %v4805
    %v5902 = vpack.c.b16 %v4814, %v4806
    %v5903 = vpack.c.b16 %v4815, %v4807
    %v5904 = vpack.c.b16 %v4816, %v4808
    %v5905 = vpack.c.b16 %v4817, %v4809
    %v5906 = vpack.c.b16 %v4818, %v4810
    %v5907 = vpack.c.b16 %v4827, %v4819
    %v5908 = vpack.c.b16 %v4828, %v4820
    %v5909 = vpack.c.b16 %v4829, %v4821
    %v5910 = vpack.c.b16 %v4830, %v4822
    %v5911 = vpack.c.b16 %v4831, %v4823
    %v5912 = vpack.c.b16 %v4832, %v4824
    %v5913 = vpack.c.b16 %v4833, %v4825
    %v5914 = vpack.c.b16 %v4834, %v4826
    %v5915 = vpack.c.b16 %v4843, %v4835
    %v5916 = vpack.c.b16 %v4844, %v4836
    %v5917 = vpack.c.b16 %v4845, %v4837
    %v5918 = vpack.c.b16 %v4846, %v4838
    %v5919 = vpack.c.b16 %v4847, %v4839
    %v5920 = vpack.c.b16 %v4848, %v4840
    %v5921 = vpack.c.b16 %v4849, %v4841
    %v5922 = vpack.c.b16 %v4850, %v4842
    %v5923 = vpack.c.b16 %v4859, %v4851
    %v5924 = vpack.c.b16 %v4860, %v4852
    %v5925 = vpack.c.b16 %v4861, %v4853
    %v5926 = vpack.c.b16 %v4862, %v4854
    %v5927 = vpack.c.b16 %v4863, %v4855
    %v5928 = vpack.c.b16 %v4864, %v4856
    %v5929 = vpack.c.b16 %v4865, %v4857
    %v5930 = vpack.c.b16 %v4866, %v4858
    %v5931 = vpack.c.b16 %v4875, %v4867
    %v5932 = vpack.c.b16 %v4876, %v4868
    %v5933 = vpack.c.b16 %v4877, %v4869
    %v5934 = vpack.c.b16 %v4878, %v4870
    %v5935 = vpack.c.b16 %v4879, %v4871
    %v5936 = vpack.c.b16 %v4880, %v4872
    %v5937 = vpack.c.b16 %v4881, %v4873
    %v5938 = vpack.c.b16 %v4882, %v4874
    %v5939 = vpack.c.b16 %v4891, %v4883
    %v5940 = vpack.c.b16 %v4892, %v4884
    %v5941 = vpack.c.b16 %v4893, %v4885
    %v5942 = vpack.c.b16 %v4894, %v4886
    %v5943 = vpack.c.b16 %v4895, %v4887
    %v5944 = vpack.c.b16 %v4896, %v4888
    %v5945 = vpack.c.b16 %v4897, %v4889
    %v5946 = vpack.c.b16 %v4898, %v4890
    %v5947 = vpack.c.b16 %v4907, %v4899
    %v5948 = vpack.c.b16 %v4908, %v4900
    %v5949 = vpack.c.b16 %v4909, %v4901
    %v5950 = vpack.c.b16 %v4910, %v4902
    %v5951 = vpack.c.b16 %v4911, %v4903
    %v5952 = vpack.c.b16 %v4912, %v4904
    %v5953 = vpack.c.b16 %v4913, %v4905
    %v5954 = vpack.c.b16 %v4914, %v4906
    %v5955 = vpack.c.b16 %v4923, %v4915
    %v5956 = vpack.c.b16 %v4924, %v4916
    %v5957 = vpack.c.b16 %v4925, %v4917
    %v5958 = vpack.c.b16 %v4926, %v4918
    %v5959 = vpack.c.b16 %v4927, %v4919
    %v5960 = vpack.c.b16 %v4928, %v4920
    %v5961 = vpack.c.b16 %v4929, %v4921
    %v5962 = vpack.c.b16 %v4930, %v4922
    %v5963 = vpack.c.b16 %v4939, %v4931
    %v5964 = vpack.c.b16 %v4940, %v4932
    %v5965 = vpack.c.b16 %v4941, %v4933
    %v5966 = vpack.c.b16 %v4942, %v4934
    %v5967 = vpack.c.b16 %v4943, %v4935
    %v5968 = vpack.c.b16 %v4944, %v4936
    %v5969 = vpack.c.b16 %v4945, %v4937
    %v5970 = vpack.c.b16 %v4946, %v4938
    %6995 = vmatprep.subr.bf16.mxu0 %v5004
    %6996 = vmatpush1.bf16.msra.mxu0 %v5003
    %6997 = vmatprep.subr.bf16.mxu0 %v4996
    %6998 = vmatpush1.bf16.msra.mxu0 %v4995
    %6999 = vmatprep.subr.bf16.mxu0 %v4988
    %7000 = vmatpush1.bf16.msra.mxu0 %v4987
    %7001 = vmatprep.subr.bf16.mxu0 %v4980
    %7002 = vmatpush1.bf16.msra.mxu0 %v4979
    %7003 = vmatprep.subr.bf16.mxu0 %v4972
    %7004 = vmatpush1.bf16.msra.mxu0 %v4971
    %7005 = vmatprep.subr.bf16.mxu0 %v4964
    %7006 = vmatpush1.bf16.msra.mxu0 %v4963
    %7007 = vmatprep.subr.bf16.mxu0 %v4956
    %7008 = vmatpush1.bf16.msra.mxu0 %v4955
    %7009 = vmatprep.subr.bf16.mxu0 %v4948
    %7010 = vmatpush1.bf16.msra.mxu0 %v4947
    %7011 = vmatprep.subr.bf16.mxu0 %v5068
    %7012 = vmatpush2.bf16.msra.mxu0 %v5067
    %7013 = vmatprep.subr.bf16.mxu0 %v5060
    %7014 = vmatpush2.bf16.msra.mxu0 %v5059
    %7015 = vmatprep.subr.bf16.mxu0 %v5052
    %7016 = vmatpush2.bf16.msra.mxu0 %v5051
    %7017 = vmatprep.subr.bf16.mxu0 %v5044
    %7018 = vmatpush2.bf16.msra.mxu0 %v5043
    %7019 = vmatprep.subr.bf16.mxu0 %v5036
    %7020 = vmatpush2.bf16.msra.mxu0 %v5035
    %7021 = vmatprep.subr.bf16.mxu0 %v5028
    %7022 = vmatpush2.bf16.msra.mxu0 %v5027
    %7023 = vmatprep.subr.bf16.mxu0 %v5020
    %7024 = vmatpush2.bf16.msra.mxu0 %v5019
    %7025 = vmatprep.subr.bf16.mxu0 %v5012
    %7026 = vmatpush2.bf16.msra.mxu0 %v5011
    %7027 = vmatprep.mubr.bf16.mxu0 %v794
    %7028 = vmatmul.mubr.bf16.gmra.mxu0 %v793
    %v7029 = vpop.f32.mrf.mxu0
    %v7030 = vadd.f32 %v1838, %v7029
    %v7031 = vpop.f32.mrf.mxu0
    %v7032 = vadd.f32 %v1842, %v7031
    %v7033 = vpop.f32.mrf.mxu0
    %v7034 = vpop.f32.mrf.mxu0
    %7035 = vdwg.mxu0
    %7036 = vmatprep.subr.bf16.mxu0 %v5132
    %7037 = vmatpush1.bf16.msra.mxu0 %v5131
    %7038 = vmatprep.subr.bf16.mxu0 %v5124
    %7039 = vmatpush1.bf16.msra.mxu0 %v5123
    %7040 = vmatprep.subr.bf16.mxu0 %v5116
    %7041 = vmatpush1.bf16.msra.mxu0 %v5115
    %7042 = vmatprep.subr.bf16.mxu0 %v5108
    %7043 = vmatpush1.bf16.msra.mxu0 %v5107
    %7044 = vmatprep.subr.bf16.mxu0 %v5100
    %7045 = vmatpush1.bf16.msra.mxu0 %v5099
    %7046 = vmatprep.subr.bf16.mxu0 %v5092
    %7047 = vmatpush1.bf16.msra.mxu0 %v5091
    %7048 = vmatprep.subr.bf16.mxu0 %v5084
    %7049 = vmatpush1.bf16.msra.mxu0 %v5083
    %7050 = vmatprep.subr.bf16.mxu0 %v5076
    %7051 = vmatpush1.bf16.msra.mxu0 %v5075
    %7052 = vmatprep.subr.bf16.mxu0 %v5196
    %7053 = vmatpush2.bf16.msra.mxu0 %v5195
    %7054 = vmatprep.subr.bf16.mxu0 %v5188
    %7055 = vmatpush2.bf16.msra.mxu0 %v5187
    %7056 = vmatprep.subr.bf16.mxu0 %v5180
    %7057 = vmatpush2.bf16.msra.mxu0 %v5179
    %7058 = vmatprep.subr.bf16.mxu0 %v5172
    %7059 = vmatpush2.bf16.msra.mxu0 %v5171
    %7060 = vmatprep.subr.bf16.mxu0 %v5164
    %7061 = vmatpush2.bf16.msra.mxu0 %v5163
    %7062 = vmatprep.subr.bf16.mxu0 %v5156
    %7063 = vmatpush2.bf16.msra.mxu0 %v5155
    %7064 = vmatprep.subr.bf16.mxu0 %v5148
    %7065 = vmatpush2.bf16.msra.mxu0 %v5147
    %7066 = vmatprep.subr.bf16.mxu0 %v5140
    %7067 = vmatpush2.bf16.msra.mxu0 %v5139
    %7068 = vmatprep.mubr.bf16.mxu0 %v796
    %7069 = vmatmul.mubr.bf16.gmra.mxu0 %v795
    %v7070 = vpop.f32.mrf.mxu0
    %v7071 = vadd.f32 %v7030, %v7070
    %v7072 = vpop.f32.mrf.mxu0
    %v7073 = vadd.f32 %v7032, %v7072
    %v7074 = vpop.f32.mrf.mxu0
    %v7075 = vpop.f32.mrf.mxu0
    %7076 = vdwg.mxu0
    %7077 = vmatprep.subr.bf16.mxu0 %v5260
    %7078 = vmatpush1.bf16.msra.mxu0 %v5259
    %7079 = vmatprep.subr.bf16.mxu0 %v5252
    %7080 = vmatpush1.bf16.msra.mxu0 %v5251
    %7081 = vmatprep.subr.bf16.mxu0 %v5244
    %7082 = vmatpush1.bf16.msra.mxu0 %v5243
    %7083 = vmatprep.subr.bf16.mxu0 %v5236
    %7084 = vmatpush1.bf16.msra.mxu0 %v5235
    %7085 = vmatprep.subr.bf16.mxu0 %v5228
    %7086 = vmatpush1.bf16.msra.mxu0 %v5227
    %7087 = vmatprep.subr.bf16.mxu0 %v5220
    %7088 = vmatpush1.bf16.msra.mxu0 %v5219
    %7089 = vmatprep.subr.bf16.mxu0 %v5212
    %7090 = vmatpush1.bf16.msra.mxu0 %v5211
    %7091 = vmatprep.subr.bf16.mxu0 %v5204
    %7092 = vmatpush1.bf16.msra.mxu0 %v5203
    %7093 = vmatprep.subr.bf16.mxu0 %v5324
    %7094 = vmatpush2.bf16.msra.mxu0 %v5323
    %7095 = vmatprep.subr.bf16.mxu0 %v5316
    %7096 = vmatpush2.bf16.msra.mxu0 %v5315
    %7097 = vmatprep.subr.bf16.mxu0 %v5308
    %7098 = vmatpush2.bf16.msra.mxu0 %v5307
    %7099 = vmatprep.subr.bf16.mxu0 %v5300
    %7100 = vmatpush2.bf16.msra.mxu0 %v5299
    %7101 = vmatprep.subr.bf16.mxu0 %v5292
    %7102 = vmatpush2.bf16.msra.mxu0 %v5291
    %7103 = vmatprep.subr.bf16.mxu0 %v5284
    %7104 = vmatpush2.bf16.msra.mxu0 %v5283
    %7105 = vmatprep.subr.bf16.mxu0 %v5276
    %7106 = vmatpush2.bf16.msra.mxu0 %v5275
    %7107 = vmatprep.subr.bf16.mxu0 %v5268
    %7108 = vmatpush2.bf16.msra.mxu0 %v5267
    %7109 = vmatprep.mubr.bf16.mxu0 %v798
    %7110 = vmatmul.mubr.bf16.gmra.mxu0 %v797
    %v7111 = vpop.f32.mrf.mxu0
    %v7112 = vadd.f32 %v7071, %v7111
    %v7113 = vpop.f32.mrf.mxu0
    %v7114 = vadd.f32 %v7073, %v7113
    %v7115 = vpop.f32.mrf.mxu0
    %v7116 = vpop.f32.mrf.mxu0
    %7117 = vdwg.mxu0
    %7118 = vmatprep.subr.bf16.mxu0 %v5388
    %7119 = vmatpush1.bf16.msra.mxu0 %v5387
    %7120 = vmatprep.subr.bf16.mxu0 %v5380
    %7121 = vmatpush1.bf16.msra.mxu0 %v5379
    %7122 = vmatprep.subr.bf16.mxu0 %v5372
    %7123 = vmatpush1.bf16.msra.mxu0 %v5371
    %7124 = vmatprep.subr.bf16.mxu0 %v5364
    %7125 = vmatpush1.bf16.msra.mxu0 %v5363
    %7126 = vmatprep.subr.bf16.mxu0 %v5356
    %7127 = vmatpush1.bf16.msra.mxu0 %v5355
    %7128 = vmatprep.subr.bf16.mxu0 %v5348
    %7129 = vmatpush1.bf16.msra.mxu0 %v5347
    %7130 = vmatprep.subr.bf16.mxu0 %v5340
    %7131 = vmatpush1.bf16.msra.mxu0 %v5339
    %7132 = vmatprep.subr.bf16.mxu0 %v5332
    %7133 = vmatpush1.bf16.msra.mxu0 %v5331
    %7134 = vmatprep.subr.bf16.mxu0 %v5452
    %7135 = vmatpush2.bf16.msra.mxu0 %v5451
    %7136 = vmatprep.subr.bf16.mxu0 %v5444
    %7137 = vmatpush2.bf16.msra.mxu0 %v5443
    %7138 = vmatprep.subr.bf16.mxu0 %v5436
    %7139 = vmatpush2.bf16.msra.mxu0 %v5435
    %7140 = vmatprep.subr.bf16.mxu0 %v5428
    %7141 = vmatpush2.bf16.msra.mxu0 %v5427
    %7142 = vmatprep.subr.bf16.mxu0 %v5420
    %7143 = vmatpush2.bf16.msra.mxu0 %v5419
    %7144 = vmatprep.subr.bf16.mxu0 %v5412
    %7145 = vmatpush2.bf16.msra.mxu0 %v5411
    %7146 = vmatprep.subr.bf16.mxu0 %v5404
    %7147 = vmatpush2.bf16.msra.mxu0 %v5403
    %7148 = vmatprep.subr.bf16.mxu0 %v5396
    %7149 = vmatpush2.bf16.msra.mxu0 %v5395
    %7150 = vmatprep.mubr.bf16.mxu0 %v800
    %7151 = vmatmul.mubr.bf16.gmra.mxu0 %v799
    %v7152 = vpop.f32.mrf.mxu0
    %v7153 = vadd.f32 %v7112, %v7152
    %v7154 = vpop.f32.mrf.mxu0
    %v7155 = vadd.f32 %v7114, %v7154
    %v7156 = vpop.f32.mrf.mxu0
    %v7157 = vpop.f32.mrf.mxu0
    %7158 = vdwg.mxu0
    %7159 = vmatprep.subr.bf16.mxu0 %v5516
    %7160 = vmatpush1.bf16.msra.mxu0 %v5515
    %7161 = vmatprep.subr.bf16.mxu0 %v5508
    %7162 = vmatpush1.bf16.msra.mxu0 %v5507
    %7163 = vmatprep.subr.bf16.mxu0 %v5500
    %7164 = vmatpush1.bf16.msra.mxu0 %v5499
    %7165 = vmatprep.subr.bf16.mxu0 %v5492
    %7166 = vmatpush1.bf16.msra.mxu0 %v5491
    %7167 = vmatprep.subr.bf16.mxu0 %v5484
    %7168 = vmatpush1.bf16.msra.mxu0 %v5483
    %7169 = vmatprep.subr.bf16.mxu0 %v5476
    %7170 = vmatpush1.bf16.msra.mxu0 %v5475
    %7171 = vmatprep.subr.bf16.mxu0 %v5468
    %7172 = vmatpush1.bf16.msra.mxu0 %v5467
    %7173 = vmatprep.subr.bf16.mxu0 %v5460
    %7174 = vmatpush1.bf16.msra.mxu0 %v5459
    %7175 = vmatprep.subr.bf16.mxu0 %v5580
    %7176 = vmatpush2.bf16.msra.mxu0 %v5579
    %7177 = vmatprep.subr.bf16.mxu0 %v5572
    %7178 = vmatpush2.bf16.msra.mxu0 %v5571
    %7179 = vmatprep.subr.bf16.mxu0 %v5564
    %7180 = vmatpush2.bf16.msra.mxu0 %v5563
    %7181 = vmatprep.subr.bf16.mxu0 %v5556
    %7182 = vmatpush2.bf16.msra.mxu0 %v5555
    %7183 = vmatprep.subr.bf16.mxu0 %v5548
    %7184 = vmatpush2.bf16.msra.mxu0 %v5547
    %7185 = vmatprep.subr.bf16.mxu0 %v5540
    %7186 = vmatpush2.bf16.msra.mxu0 %v5539
    %7187 = vmatprep.subr.bf16.mxu0 %v5532
    %7188 = vmatpush2.bf16.msra.mxu0 %v5531
    %7189 = vmatprep.subr.bf16.mxu0 %v5524
    %7190 = vmatpush2.bf16.msra.mxu0 %v5523
    %7191 = vmatprep.mubr.bf16.mxu0 %v802
    %7192 = vmatmul.mubr.bf16.gmra.mxu0 %v801
    %v7193 = vpop.f32.mrf.mxu0
    %v7194 = vadd.f32 %v7153, %v7193
    %v7195 = vpop.f32.mrf.mxu0
    %v7196 = vadd.f32 %v7155, %v7195
    %v7197 = vpop.f32.mrf.mxu0
    %v7198 = vpop.f32.mrf.mxu0
    %7199 = vdwg.mxu0
    %7200 = vmatprep.subr.bf16.mxu0 %v5644
    %7201 = vmatpush1.bf16.msra.mxu0 %v5643
    %7202 = vmatprep.subr.bf16.mxu0 %v5636
    %7203 = vmatpush1.bf16.msra.mxu0 %v5635
    %7204 = vmatprep.subr.bf16.mxu0 %v5628
    %7205 = vmatpush1.bf16.msra.mxu0 %v5627
    %7206 = vmatprep.subr.bf16.mxu0 %v5620
    %7207 = vmatpush1.bf16.msra.mxu0 %v5619
    %7208 = vmatprep.subr.bf16.mxu0 %v5612
    %7209 = vmatpush1.bf16.msra.mxu0 %v5611
    %7210 = vmatprep.subr.bf16.mxu0 %v5604
    %7211 = vmatpush1.bf16.msra.mxu0 %v5603
    %7212 = vmatprep.subr.bf16.mxu0 %v5596
    %7213 = vmatpush1.bf16.msra.mxu0 %v5595
    %7214 = vmatprep.subr.bf16.mxu0 %v5588
    %7215 = vmatpush1.bf16.msra.mxu0 %v5587
    %7216 = vmatprep.subr.bf16.mxu0 %v5708
    %7217 = vmatpush2.bf16.msra.mxu0 %v5707
    %7218 = vmatprep.subr.bf16.mxu0 %v5700
    %7219 = vmatpush2.bf16.msra.mxu0 %v5699
    %7220 = vmatprep.subr.bf16.mxu0 %v5692
    %7221 = vmatpush2.bf16.msra.mxu0 %v5691
    %7222 = vmatprep.subr.bf16.mxu0 %v5684
    %7223 = vmatpush2.bf16.msra.mxu0 %v5683
    %7224 = vmatprep.subr.bf16.mxu0 %v5676
    %7225 = vmatpush2.bf16.msra.mxu0 %v5675
    %7226 = vmatprep.subr.bf16.mxu0 %v5668
    %7227 = vmatpush2.bf16.msra.mxu0 %v5667
    %7228 = vmatprep.subr.bf16.mxu0 %v5660
    %7229 = vmatpush2.bf16.msra.mxu0 %v5659
    %7230 = vmatprep.subr.bf16.mxu0 %v5652
    %7231 = vmatpush2.bf16.msra.mxu0 %v5651
    %7232 = vmatprep.mubr.bf16.mxu0 %v804
    %7233 = vmatmul.mubr.bf16.gmra.mxu0 %v803
    %v7234 = vpop.f32.mrf.mxu0
    %v7235 = vadd.f32 %v7194, %v7234
    %v7236 = vpop.f32.mrf.mxu0
    %v7237 = vadd.f32 %v7196, %v7236
    %v7238 = vpop.f32.mrf.mxu0
    %v7239 = vpop.f32.mrf.mxu0
    %7240 = vdwg.mxu0
    %7241 = vmatprep.subr.bf16.mxu0 %v5772
    %7242 = vmatpush1.bf16.msra.mxu0 %v5771
    %7243 = vmatprep.subr.bf16.mxu0 %v5764
    %7244 = vmatpush1.bf16.msra.mxu0 %v5763
    %7245 = vmatprep.subr.bf16.mxu0 %v5756
    %7246 = vmatpush1.bf16.msra.mxu0 %v5755
    %7247 = vmatprep.subr.bf16.mxu0 %v5748
    %7248 = vmatpush1.bf16.msra.mxu0 %v5747
    %7249 = vmatprep.subr.bf16.mxu0 %v5740
    %7250 = vmatpush1.bf16.msra.mxu0 %v5739
    %7251 = vmatprep.subr.bf16.mxu0 %v5732
    %7252 = vmatpush1.bf16.msra.mxu0 %v5731
    %7253 = vmatprep.subr.bf16.mxu0 %v5724
    %7254 = vmatpush1.bf16.msra.mxu0 %v5723
    %7255 = vmatprep.subr.bf16.mxu0 %v5716
    %7256 = vmatpush1.bf16.msra.mxu0 %v5715
    %7257 = vmatprep.subr.bf16.mxu0 %v5836
    %7258 = vmatpush2.bf16.msra.mxu0 %v5835
    %7259 = vmatprep.subr.bf16.mxu0 %v5828
    %7260 = vmatpush2.bf16.msra.mxu0 %v5827
    %7261 = vmatprep.subr.bf16.mxu0 %v5820
    %7262 = vmatpush2.bf16.msra.mxu0 %v5819
    %7263 = vmatprep.subr.bf16.mxu0 %v5812
    %7264 = vmatpush2.bf16.msra.mxu0 %v5811
    %7265 = vmatprep.subr.bf16.mxu0 %v5804
    %7266 = vmatpush2.bf16.msra.mxu0 %v5803
    %7267 = vmatprep.subr.bf16.mxu0 %v5796
    %7268 = vmatpush2.bf16.msra.mxu0 %v5795
    %7269 = vmatprep.subr.bf16.mxu0 %v5788
    %7270 = vmatpush2.bf16.msra.mxu0 %v5787
    %7271 = vmatprep.subr.bf16.mxu0 %v5780
    %7272 = vmatpush2.bf16.msra.mxu0 %v5779
    %7273 = vmatprep.mubr.bf16.mxu0 %v806
    %7274 = vmatmul.mubr.bf16.gmra.mxu0 %v805
    %v7275 = vpop.f32.mrf.mxu0
    %v7276 = vadd.f32 %v7235, %v7275
    %v7277 = vpop.f32.mrf.mxu0
    %v7278 = vadd.f32 %v7237, %v7277
    %v7279 = vpop.f32.mrf.mxu0
    %v7280 = vpop.f32.mrf.mxu0
    %7281 = vdwg.mxu0
    %7282 = vmatprep.subr.bf16.mxu0 %v5900
    %7283 = vmatpush1.bf16.msra.mxu0 %v5899
    %7284 = vmatprep.subr.bf16.mxu0 %v5892
    %7285 = vmatpush1.bf16.msra.mxu0 %v5891
    %7286 = vmatprep.subr.bf16.mxu0 %v5884
    %7287 = vmatpush1.bf16.msra.mxu0 %v5883
    %7288 = vmatprep.subr.bf16.mxu0 %v5876
    %7289 = vmatpush1.bf16.msra.mxu0 %v5875
    %7290 = vmatprep.subr.bf16.mxu0 %v5868
    %7291 = vmatpush1.bf16.msra.mxu0 %v5867
    %7292 = vmatprep.subr.bf16.mxu0 %v5860
    %7293 = vmatpush1.bf16.msra.mxu0 %v5859
    %7294 = vmatprep.subr.bf16.mxu0 %v5852
    %7295 = vmatpush1.bf16.msra.mxu0 %v5851
    %7296 = vmatprep.subr.bf16.mxu0 %v5844
    %7297 = vmatpush1.bf16.msra.mxu0 %v5843
    %7298 = vmatprep.subr.bf16.mxu0 %v5964
    %7299 = vmatpush2.bf16.msra.mxu0 %v5963
    %7300 = vmatprep.subr.bf16.mxu0 %v5956
    %7301 = vmatpush2.bf16.msra.mxu0 %v5955
    %7302 = vmatprep.subr.bf16.mxu0 %v5948
    %7303 = vmatpush2.bf16.msra.mxu0 %v5947
    %7304 = vmatprep.subr.bf16.mxu0 %v5940
    %7305 = vmatpush2.bf16.msra.mxu0 %v5939
    %7306 = vmatprep.subr.bf16.mxu0 %v5932
    %7307 = vmatpush2.bf16.msra.mxu0 %v5931
    %7308 = vmatprep.subr.bf16.mxu0 %v5924
    %7309 = vmatpush2.bf16.msra.mxu0 %v5923
    %7310 = vmatprep.subr.bf16.mxu0 %v5916
    %7311 = vmatpush2.bf16.msra.mxu0 %v5915
    %7312 = vmatprep.subr.bf16.mxu0 %v5908
    %7313 = vmatpush2.bf16.msra.mxu0 %v5907
    %7314 = vmatprep.mubr.bf16.mxu0 %v808
    %7315 = vmatmul.mubr.bf16.gmra.mxu0 %v807
    %v7316 = vpop.f32.mrf.mxu0
    %v7317 = vadd.f32 %v7276, %v7316
    %v7318 = vpop.f32.mrf.mxu0
    %v7319 = vadd.f32 %v7278, %v7318
    %v7320 = vpop.f32.mrf.mxu0
    %v7321 = vpop.f32.mrf.mxu0
    %7322 = vdwg.mxu0
    %7323 = vmatprep.subr.bf16.mxu0 %v5006
    %7324 = vmatpush1.bf16.msra.mxu0 %v5005
    %7325 = vmatprep.subr.bf16.mxu0 %v4998
    %7326 = vmatpush1.bf16.msra.mxu0 %v4997
    %7327 = vmatprep.subr.bf16.mxu0 %v4990
    %7328 = vmatpush1.bf16.msra.mxu0 %v4989
    %7329 = vmatprep.subr.bf16.mxu0 %v4982
    %7330 = vmatpush1.bf16.msra.mxu0 %v4981
    %7331 = vmatprep.subr.bf16.mxu0 %v4974
    %7332 = vmatpush1.bf16.msra.mxu0 %v4973
    %7333 = vmatprep.subr.bf16.mxu0 %v4966
    %7334 = vmatpush1.bf16.msra.mxu0 %v4965
    %7335 = vmatprep.subr.bf16.mxu0 %v4958
    %7336 = vmatpush1.bf16.msra.mxu0 %v4957
    %7337 = vmatprep.subr.bf16.mxu0 %v4950
    %7338 = vmatpush1.bf16.msra.mxu0 %v4949
    %7339 = vmatprep.subr.bf16.mxu0 %v5070
    %7340 = vmatpush2.bf16.msra.mxu0 %v5069
    %7341 = vmatprep.subr.bf16.mxu0 %v5062
    %7342 = vmatpush2.bf16.msra.mxu0 %v5061
    %7343 = vmatprep.subr.bf16.mxu0 %v5054
    %7344 = vmatpush2.bf16.msra.mxu0 %v5053
    %7345 = vmatprep.subr.bf16.mxu0 %v5046
    %7346 = vmatpush2.bf16.msra.mxu0 %v5045
    %7347 = vmatprep.subr.bf16.mxu0 %v5038
    %7348 = vmatpush2.bf16.msra.mxu0 %v5037
    %7349 = vmatprep.subr.bf16.mxu0 %v5030
    %7350 = vmatpush2.bf16.msra.mxu0 %v5029
    %7351 = vmatprep.subr.bf16.mxu0 %v5022
    %7352 = vmatpush2.bf16.msra.mxu0 %v5021
    %7353 = vmatprep.subr.bf16.mxu0 %v5014
    %7354 = vmatpush2.bf16.msra.mxu0 %v5013
    %7355 = vmatprep.mubr.bf16.mxu0 %v794
    %7356 = vmatmul.mubr.bf16.gmra.mxu0 %v793
    %v7357 = vpop.f32.mrf.mxu0
    %v7358 = vadd.f32 %v1846, %v7357
    %v7359 = vpop.f32.mrf.mxu0
    %v7360 = vadd.f32 %v1850, %v7359
    %v7361 = vpop.f32.mrf.mxu0
    %v7362 = vpop.f32.mrf.mxu0
    %7363 = vdwg.mxu0
    %7364 = vmatprep.subr.bf16.mxu0 %v5134
    %7365 = vmatpush1.bf16.msra.mxu0 %v5133
    %7366 = vmatprep.subr.bf16.mxu0 %v5126
    %7367 = vmatpush1.bf16.msra.mxu0 %v5125
    %7368 = vmatprep.subr.bf16.mxu0 %v5118
    %7369 = vmatpush1.bf16.msra.mxu0 %v5117
    %7370 = vmatprep.subr.bf16.mxu0 %v5110
    %7371 = vmatpush1.bf16.msra.mxu0 %v5109
    %7372 = vmatprep.subr.bf16.mxu0 %v5102
    %7373 = vmatpush1.bf16.msra.mxu0 %v5101
    %7374 = vmatprep.subr.bf16.mxu0 %v5094
    %7375 = vmatpush1.bf16.msra.mxu0 %v5093
    %7376 = vmatprep.subr.bf16.mxu0 %v5086
    %7377 = vmatpush1.bf16.msra.mxu0 %v5085
    %7378 = vmatprep.subr.bf16.mxu0 %v5078
    %7379 = vmatpush1.bf16.msra.mxu0 %v5077
    %7380 = vmatprep.subr.bf16.mxu0 %v5198
    %7381 = vmatpush2.bf16.msra.mxu0 %v5197
    %7382 = vmatprep.subr.bf16.mxu0 %v5190
    %7383 = vmatpush2.bf16.msra.mxu0 %v5189
    %7384 = vmatprep.subr.bf16.mxu0 %v5182
    %7385 = vmatpush2.bf16.msra.mxu0 %v5181
    %7386 = vmatprep.subr.bf16.mxu0 %v5174
    %7387 = vmatpush2.bf16.msra.mxu0 %v5173
    %7388 = vmatprep.subr.bf16.mxu0 %v5166
    %7389 = vmatpush2.bf16.msra.mxu0 %v5165
    %7390 = vmatprep.subr.bf16.mxu0 %v5158
    %7391 = vmatpush2.bf16.msra.mxu0 %v5157
    %7392 = vmatprep.subr.bf16.mxu0 %v5150
    %7393 = vmatpush2.bf16.msra.mxu0 %v5149
    %7394 = vmatprep.subr.bf16.mxu0 %v5142
    %7395 = vmatpush2.bf16.msra.mxu0 %v5141
    %7396 = vmatprep.mubr.bf16.mxu0 %v796
    %7397 = vmatmul.mubr.bf16.gmra.mxu0 %v795
    %v7398 = vpop.f32.mrf.mxu0
    %v7399 = vadd.f32 %v7358, %v7398
    %v7400 = vpop.f32.mrf.mxu0
    %v7401 = vadd.f32 %v7360, %v7400
    %v7402 = vpop.f32.mrf.mxu0
    %v7403 = vpop.f32.mrf.mxu0
    %7404 = vdwg.mxu0
    %7405 = vmatprep.subr.bf16.mxu0 %v5262
    %7406 = vmatpush1.bf16.msra.mxu0 %v5261
    %7407 = vmatprep.subr.bf16.mxu0 %v5254
    %7408 = vmatpush1.bf16.msra.mxu0 %v5253
    %7409 = vmatprep.subr.bf16.mxu0 %v5246
    %7410 = vmatpush1.bf16.msra.mxu0 %v5245
    %7411 = vmatprep.subr.bf16.mxu0 %v5238
    %7412 = vmatpush1.bf16.msra.mxu0 %v5237
    %7413 = vmatprep.subr.bf16.mxu0 %v5230
    %7414 = vmatpush1.bf16.msra.mxu0 %v5229
    %7415 = vmatprep.subr.bf16.mxu0 %v5222
    %7416 = vmatpush1.bf16.msra.mxu0 %v5221
    %7417 = vmatprep.subr.bf16.mxu0 %v5214
    %7418 = vmatpush1.bf16.msra.mxu0 %v5213
    %7419 = vmatprep.subr.bf16.mxu0 %v5206
    %7420 = vmatpush1.bf16.msra.mxu0 %v5205
    %7421 = vmatprep.subr.bf16.mxu0 %v5326
    %7422 = vmatpush2.bf16.msra.mxu0 %v5325
    %7423 = vmatprep.subr.bf16.mxu0 %v5318
    %7424 = vmatpush2.bf16.msra.mxu0 %v5317
    %7425 = vmatprep.subr.bf16.mxu0 %v5310
    %7426 = vmatpush2.bf16.msra.mxu0 %v5309
    %7427 = vmatprep.subr.bf16.mxu0 %v5302
    %7428 = vmatpush2.bf16.msra.mxu0 %v5301
    %7429 = vmatprep.subr.bf16.mxu0 %v5294
    %7430 = vmatpush2.bf16.msra.mxu0 %v5293
    %7431 = vmatprep.subr.bf16.mxu0 %v5286
    %7432 = vmatpush2.bf16.msra.mxu0 %v5285
    %7433 = vmatprep.subr.bf16.mxu0 %v5278
    %7434 = vmatpush2.bf16.msra.mxu0 %v5277
    %7435 = vmatprep.subr.bf16.mxu0 %v5270
    %7436 = vmatpush2.bf16.msra.mxu0 %v5269
    %7437 = vmatprep.mubr.bf16.mxu0 %v798
    %7438 = vmatmul.mubr.bf16.gmra.mxu0 %v797
    %v7439 = vpop.f32.mrf.mxu0
    %v7440 = vadd.f32 %v7399, %v7439
    %v7441 = vpop.f32.mrf.mxu0
    %v7442 = vadd.f32 %v7401, %v7441
    %v7443 = vpop.f32.mrf.mxu0
    %v7444 = vpop.f32.mrf.mxu0
    %7445 = vdwg.mxu0
    %7446 = vmatprep.subr.bf16.mxu0 %v5390
    %7447 = vmatpush1.bf16.msra.mxu0 %v5389
    %7448 = vmatprep.subr.bf16.mxu0 %v5382
    %7449 = vmatpush1.bf16.msra.mxu0 %v5381
    %7450 = vmatprep.subr.bf16.mxu0 %v5374
    %7451 = vmatpush1.bf16.msra.mxu0 %v5373
    %7452 = vmatprep.subr.bf16.mxu0 %v5366
    %7453 = vmatpush1.bf16.msra.mxu0 %v5365
    %7454 = vmatprep.subr.bf16.mxu0 %v5358
    %7455 = vmatpush1.bf16.msra.mxu0 %v5357
    %7456 = vmatprep.subr.bf16.mxu0 %v5350
    %7457 = vmatpush1.bf16.msra.mxu0 %v5349
    %7458 = vmatprep.subr.bf16.mxu0 %v5342
    %7459 = vmatpush1.bf16.msra.mxu0 %v5341
    %7460 = vmatprep.subr.bf16.mxu0 %v5334
    %7461 = vmatpush1.bf16.msra.mxu0 %v5333
    %7462 = vmatprep.subr.bf16.mxu0 %v5454
    %7463 = vmatpush2.bf16.msra.mxu0 %v5453
    %7464 = vmatprep.subr.bf16.mxu0 %v5446
    %7465 = vmatpush2.bf16.msra.mxu0 %v5445
    %7466 = vmatprep.subr.bf16.mxu0 %v5438
    %7467 = vmatpush2.bf16.msra.mxu0 %v5437
    %7468 = vmatprep.subr.bf16.mxu0 %v5430
    %7469 = vmatpush2.bf16.msra.mxu0 %v5429
    %7470 = vmatprep.subr.bf16.mxu0 %v5422
    %7471 = vmatpush2.bf16.msra.mxu0 %v5421
    %7472 = vmatprep.subr.bf16.mxu0 %v5414
    %7473 = vmatpush2.bf16.msra.mxu0 %v5413
    %7474 = vmatprep.subr.bf16.mxu0 %v5406
    %7475 = vmatpush2.bf16.msra.mxu0 %v5405
    %7476 = vmatprep.subr.bf16.mxu0 %v5398
    %7477 = vmatpush2.bf16.msra.mxu0 %v5397
    %7478 = vmatprep.mubr.bf16.mxu0 %v800
    %7479 = vmatmul.mubr.bf16.gmra.mxu0 %v799
    %v7480 = vpop.f32.mrf.mxu0
    %v7481 = vadd.f32 %v7440, %v7480
    %v7482 = vpop.f32.mrf.mxu0
    %v7483 = vadd.f32 %v7442, %v7482
    %v7484 = vpop.f32.mrf.mxu0
    %v7485 = vpop.f32.mrf.mxu0
    %7486 = vdwg.mxu0
    %7487 = vmatprep.subr.bf16.mxu0 %v5518
    %7488 = vmatpush1.bf16.msra.mxu0 %v5517
    %7489 = vmatprep.subr.bf16.mxu0 %v5510
    %7490 = vmatpush1.bf16.msra.mxu0 %v5509
    %7491 = vmatprep.subr.bf16.mxu0 %v5502
    %7492 = vmatpush1.bf16.msra.mxu0 %v5501
    %7493 = vmatprep.subr.bf16.mxu0 %v5494
    %7494 = vmatpush1.bf16.msra.mxu0 %v5493
    %7495 = vmatprep.subr.bf16.mxu0 %v5486
    %7496 = vmatpush1.bf16.msra.mxu0 %v5485
    %7497 = vmatprep.subr.bf16.mxu0 %v5478
    %7498 = vmatpush1.bf16.msra.mxu0 %v5477
    %7499 = vmatprep.subr.bf16.mxu0 %v5470
    %7500 = vmatpush1.bf16.msra.mxu0 %v5469
    %7501 = vmatprep.subr.bf16.mxu0 %v5462
    %7502 = vmatpush1.bf16.msra.mxu0 %v5461
    %7503 = vmatprep.subr.bf16.mxu0 %v5582
    %7504 = vmatpush2.bf16.msra.mxu0 %v5581
    %7505 = vmatprep.subr.bf16.mxu0 %v5574
    %7506 = vmatpush2.bf16.msra.mxu0 %v5573
    %7507 = vmatprep.subr.bf16.mxu0 %v5566
    %7508 = vmatpush2.bf16.msra.mxu0 %v5565
    %7509 = vmatprep.subr.bf16.mxu0 %v5558
    %7510 = vmatpush2.bf16.msra.mxu0 %v5557
    %7511 = vmatprep.subr.bf16.mxu0 %v5550
    %7512 = vmatpush2.bf16.msra.mxu0 %v5549
    %7513 = vmatprep.subr.bf16.mxu0 %v5542
    %7514 = vmatpush2.bf16.msra.mxu0 %v5541
    %7515 = vmatprep.subr.bf16.mxu0 %v5534
    %7516 = vmatpush2.bf16.msra.mxu0 %v5533
    %7517 = vmatprep.subr.bf16.mxu0 %v5526
    %7518 = vmatpush2.bf16.msra.mxu0 %v5525
    %7519 = vmatprep.mubr.bf16.mxu0 %v802
    %7520 = vmatmul.mubr.bf16.gmra.mxu0 %v801
    %v7521 = vpop.f32.mrf.mxu0
    %v7522 = vadd.f32 %v7481, %v7521
    %v7523 = vpop.f32.mrf.mxu0
    %v7524 = vadd.f32 %v7483, %v7523
    %v7525 = vpop.f32.mrf.mxu0
    %v7526 = vpop.f32.mrf.mxu0
    %7527 = vdwg.mxu0
    %7528 = vmatprep.subr.bf16.mxu0 %v5646
    %7529 = vmatpush1.bf16.msra.mxu0 %v5645
    %7530 = vmatprep.subr.bf16.mxu0 %v5638
    %7531 = vmatpush1.bf16.msra.mxu0 %v5637
    %7532 = vmatprep.subr.bf16.mxu0 %v5630
    %7533 = vmatpush1.bf16.msra.mxu0 %v5629
    %7534 = vmatprep.subr.bf16.mxu0 %v5622
    %7535 = vmatpush1.bf16.msra.mxu0 %v5621
    %7536 = vmatprep.subr.bf16.mxu0 %v5614
    %7537 = vmatpush1.bf16.msra.mxu0 %v5613
    %7538 = vmatprep.subr.bf16.mxu0 %v5606
    %7539 = vmatpush1.bf16.msra.mxu0 %v5605
    %7540 = vmatprep.subr.bf16.mxu0 %v5598
    %7541 = vmatpush1.bf16.msra.mxu0 %v5597
    %7542 = vmatprep.subr.bf16.mxu0 %v5590
    %7543 = vmatpush1.bf16.msra.mxu0 %v5589
    %7544 = vmatprep.subr.bf16.mxu0 %v5710
    %7545 = vmatpush2.bf16.msra.mxu0 %v5709
    %7546 = vmatprep.subr.bf16.mxu0 %v5702
    %7547 = vmatpush2.bf16.msra.mxu0 %v5701
    %7548 = vmatprep.subr.bf16.mxu0 %v5694
    %7549 = vmatpush2.bf16.msra.mxu0 %v5693
    %7550 = vmatprep.subr.bf16.mxu0 %v5686
    %7551 = vmatpush2.bf16.msra.mxu0 %v5685
    %7552 = vmatprep.subr.bf16.mxu0 %v5678
    %7553 = vmatpush2.bf16.msra.mxu0 %v5677
    %7554 = vmatprep.subr.bf16.mxu0 %v5670
    %7555 = vmatpush2.bf16.msra.mxu0 %v5669
    %7556 = vmatprep.subr.bf16.mxu0 %v5662
    %7557 = vmatpush2.bf16.msra.mxu0 %v5661
    %7558 = vmatprep.subr.bf16.mxu0 %v5654
    %7559 = vmatpush2.bf16.msra.mxu0 %v5653
    %7560 = vmatprep.mubr.bf16.mxu0 %v804
    %7561 = vmatmul.mubr.bf16.gmra.mxu0 %v803
    %v7562 = vpop.f32.mrf.mxu0
    %v7563 = vadd.f32 %v7522, %v7562
    %v7564 = vpop.f32.mrf.mxu0
    %v7565 = vadd.f32 %v7524, %v7564
    %v7566 = vpop.f32.mrf.mxu0
    %v7567 = vpop.f32.mrf.mxu0
    %7568 = vdwg.mxu0
    %7569 = vmatprep.subr.bf16.mxu0 %v5774
    %7570 = vmatpush1.bf16.msra.mxu0 %v5773
    %7571 = vmatprep.subr.bf16.mxu0 %v5766
    %7572 = vmatpush1.bf16.msra.mxu0 %v5765
    %7573 = vmatprep.subr.bf16.mxu0 %v5758
    %7574 = vmatpush1.bf16.msra.mxu0 %v5757
    %7575 = vmatprep.subr.bf16.mxu0 %v5750
    %7576 = vmatpush1.bf16.msra.mxu0 %v5749
    %7577 = vmatprep.subr.bf16.mxu0 %v5742
    %7578 = vmatpush1.bf16.msra.mxu0 %v5741
    %7579 = vmatprep.subr.bf16.mxu0 %v5734
    %7580 = vmatpush1.bf16.msra.mxu0 %v5733
    %7581 = vmatprep.subr.bf16.mxu0 %v5726
    %7582 = vmatpush1.bf16.msra.mxu0 %v5725
    %7583 = vmatprep.subr.bf16.mxu0 %v5718
    %7584 = vmatpush1.bf16.msra.mxu0 %v5717
    %7585 = vmatprep.subr.bf16.mxu0 %v5838
    %7586 = vmatpush2.bf16.msra.mxu0 %v5837
    %7587 = vmatprep.subr.bf16.mxu0 %v5830
    %7588 = vmatpush2.bf16.msra.mxu0 %v5829
    %7589 = vmatprep.subr.bf16.mxu0 %v5822
    %7590 = vmatpush2.bf16.msra.mxu0 %v5821
    %7591 = vmatprep.subr.bf16.mxu0 %v5814
    %7592 = vmatpush2.bf16.msra.mxu0 %v5813
    %7593 = vmatprep.subr.bf16.mxu0 %v5806
    %7594 = vmatpush2.bf16.msra.mxu0 %v5805
    %7595 = vmatprep.subr.bf16.mxu0 %v5798
    %7596 = vmatpush2.bf16.msra.mxu0 %v5797
    %7597 = vmatprep.subr.bf16.mxu0 %v5790
    %7598 = vmatpush2.bf16.msra.mxu0 %v5789
    %7599 = vmatprep.subr.bf16.mxu0 %v5782
    %7600 = vmatpush2.bf16.msra.mxu0 %v5781
    %7601 = vmatprep.mubr.bf16.mxu0 %v806
    %7602 = vmatmul.mubr.bf16.gmra.mxu0 %v805
    %v7603 = vpop.f32.mrf.mxu0
    %v7604 = vadd.f32 %v7563, %v7603
    %v7605 = vpop.f32.mrf.mxu0
    %v7606 = vadd.f32 %v7565, %v7605
    %v7607 = vpop.f32.mrf.mxu0
    %v7608 = vpop.f32.mrf.mxu0
    %7609 = vdwg.mxu0
    %7610 = vmatprep.subr.bf16.mxu0 %v5902
    %7611 = vmatpush1.bf16.msra.mxu0 %v5901
    %7612 = vmatprep.subr.bf16.mxu0 %v5894
    %7613 = vmatpush1.bf16.msra.mxu0 %v5893
    %7614 = vmatprep.subr.bf16.mxu0 %v5886
    %7615 = vmatpush1.bf16.msra.mxu0 %v5885
    %7616 = vmatprep.subr.bf16.mxu0 %v5878
    %7617 = vmatpush1.bf16.msra.mxu0 %v5877
    %7618 = vmatprep.subr.bf16.mxu0 %v5870
    %7619 = vmatpush1.bf16.msra.mxu0 %v5869
    %7620 = vmatprep.subr.bf16.mxu0 %v5862
    %7621 = vmatpush1.bf16.msra.mxu0 %v5861
    %7622 = vmatprep.subr.bf16.mxu0 %v5854
    %7623 = vmatpush1.bf16.msra.mxu0 %v5853
    %7624 = vmatprep.subr.bf16.mxu0 %v5846
    %7625 = vmatpush1.bf16.msra.mxu0 %v5845
    %7626 = vmatprep.subr.bf16.mxu0 %v5966
    %7627 = vmatpush2.bf16.msra.mxu0 %v5965
    %7628 = vmatprep.subr.bf16.mxu0 %v5958
    %7629 = vmatpush2.bf16.msra.mxu0 %v5957
    %7630 = vmatprep.subr.bf16.mxu0 %v5950
    %7631 = vmatpush2.bf16.msra.mxu0 %v5949
    %7632 = vmatprep.subr.bf16.mxu0 %v5942
    %7633 = vmatpush2.bf16.msra.mxu0 %v5941
    %7634 = vmatprep.subr.bf16.mxu0 %v5934
    %7635 = vmatpush2.bf16.msra.mxu0 %v5933
    %7636 = vmatprep.subr.bf16.mxu0 %v5926
    %7637 = vmatpush2.bf16.msra.mxu0 %v5925
    %7638 = vmatprep.subr.bf16.mxu0 %v5918
    %7639 = vmatpush2.bf16.msra.mxu0 %v5917
    %7640 = vmatprep.subr.bf16.mxu0 %v5910
    %7641 = vmatpush2.bf16.msra.mxu0 %v5909
    %7642 = vmatprep.mubr.bf16.mxu0 %v808
    %7643 = vmatmul.mubr.bf16.gmra.mxu0 %v807
    %v7644 = vpop.f32.mrf.mxu0
    %v7645 = vadd.f32 %v7604, %v7644
    %v7646 = vpop.f32.mrf.mxu0
    %v7647 = vadd.f32 %v7606, %v7646
    %v7648 = vpop.f32.mrf.mxu0
    %v7649 = vpop.f32.mrf.mxu0
    %7650 = vdwg.mxu0
    %7651 = vmatprep.subr.bf16.mxu0 %v5008
    %7652 = vmatpush1.bf16.msra.mxu0 %v5007
    %7653 = vmatprep.subr.bf16.mxu0 %v5000
    %7654 = vmatpush1.bf16.msra.mxu0 %v4999
    %7655 = vmatprep.subr.bf16.mxu0 %v4992
    %7656 = vmatpush1.bf16.msra.mxu0 %v4991
    %7657 = vmatprep.subr.bf16.mxu0 %v4984
    %7658 = vmatpush1.bf16.msra.mxu0 %v4983
    %7659 = vmatprep.subr.bf16.mxu0 %v4976
    %7660 = vmatpush1.bf16.msra.mxu0 %v4975
    %7661 = vmatprep.subr.bf16.mxu0 %v4968
    %7662 = vmatpush1.bf16.msra.mxu0 %v4967
    %7663 = vmatprep.subr.bf16.mxu0 %v4960
    %7664 = vmatpush1.bf16.msra.mxu0 %v4959
    %7665 = vmatprep.subr.bf16.mxu0 %v4952
    %7666 = vmatpush1.bf16.msra.mxu0 %v4951
    %7667 = vmatprep.subr.bf16.mxu0 %v5072
    %7668 = vmatpush2.bf16.msra.mxu0 %v5071
    %7669 = vmatprep.subr.bf16.mxu0 %v5064
    %7670 = vmatpush2.bf16.msra.mxu0 %v5063
    %7671 = vmatprep.subr.bf16.mxu0 %v5056
    %7672 = vmatpush2.bf16.msra.mxu0 %v5055
    %7673 = vmatprep.subr.bf16.mxu0 %v5048
    %7674 = vmatpush2.bf16.msra.mxu0 %v5047
    %7675 = vmatprep.subr.bf16.mxu0 %v5040
    %7676 = vmatpush2.bf16.msra.mxu0 %v5039
    %7677 = vmatprep.subr.bf16.mxu0 %v5032
    %7678 = vmatpush2.bf16.msra.mxu0 %v5031
    %7679 = vmatprep.subr.bf16.mxu0 %v5024
    %7680 = vmatpush2.bf16.msra.mxu0 %v5023
    %7681 = vmatprep.subr.bf16.mxu0 %v5016
    %7682 = vmatpush2.bf16.msra.mxu0 %v5015
    %7683 = vmatprep.mubr.bf16.mxu0 %v794
    %7684 = vmatmul.mubr.bf16.gmra.mxu0 %v793
    %v7685 = vpop.f32.mrf.mxu0
    %v7686 = vadd.f32 %v1854, %v7685
    %v7687 = vpop.f32.mrf.mxu0
    %v7688 = vadd.f32 %v1858, %v7687
    %v7689 = vpop.f32.mrf.mxu0
    %v7690 = vpop.f32.mrf.mxu0
    %7691 = vdwg.mxu0
    %7692 = vmatprep.subr.bf16.mxu0 %v5136
    %7693 = vmatpush1.bf16.msra.mxu0 %v5135
    %7694 = vmatprep.subr.bf16.mxu0 %v5128
    %7695 = vmatpush1.bf16.msra.mxu0 %v5127
    %7696 = vmatprep.subr.bf16.mxu0 %v5120
    %7697 = vmatpush1.bf16.msra.mxu0 %v5119
    %7698 = vmatprep.subr.bf16.mxu0 %v5112
    %7699 = vmatpush1.bf16.msra.mxu0 %v5111
    %7700 = vmatprep.subr.bf16.mxu0 %v5104
    %7701 = vmatpush1.bf16.msra.mxu0 %v5103
    %7702 = vmatprep.subr.bf16.mxu0 %v5096
    %7703 = vmatpush1.bf16.msra.mxu0 %v5095
    %7704 = vmatprep.subr.bf16.mxu0 %v5088
    %7705 = vmatpush1.bf16.msra.mxu0 %v5087
    %7706 = vmatprep.subr.bf16.mxu0 %v5080
    %7707 = vmatpush1.bf16.msra.mxu0 %v5079
    %7708 = vmatprep.subr.bf16.mxu0 %v5200
    %7709 = vmatpush2.bf16.msra.mxu0 %v5199
    %7710 = vmatprep.subr.bf16.mxu0 %v5192
    %7711 = vmatpush2.bf16.msra.mxu0 %v5191
    %7712 = vmatprep.subr.bf16.mxu0 %v5184
    %7713 = vmatpush2.bf16.msra.mxu0 %v5183
    %7714 = vmatprep.subr.bf16.mxu0 %v5176
    %7715 = vmatpush2.bf16.msra.mxu0 %v5175
    %7716 = vmatprep.subr.bf16.mxu0 %v5168
    %7717 = vmatpush2.bf16.msra.mxu0 %v5167
    %7718 = vmatprep.subr.bf16.mxu0 %v5160
    %7719 = vmatpush2.bf16.msra.mxu0 %v5159
    %7720 = vmatprep.subr.bf16.mxu0 %v5152
    %7721 = vmatpush2.bf16.msra.mxu0 %v5151
    %7722 = vmatprep.subr.bf16.mxu0 %v5144
    %7723 = vmatpush2.bf16.msra.mxu0 %v5143
    %7724 = vmatprep.mubr.bf16.mxu0 %v796
    %7725 = vmatmul.mubr.bf16.gmra.mxu0 %v795
    %v7726 = vpop.f32.mrf.mxu0
    %v7727 = vadd.f32 %v7686, %v7726
    %v7728 = vpop.f32.mrf.mxu0
    %v7729 = vadd.f32 %v7688, %v7728
    %v7730 = vpop.f32.mrf.mxu0
    %v7731 = vpop.f32.mrf.mxu0
    %7732 = vdwg.mxu0
    %7733 = vmatprep.subr.bf16.mxu0 %v5264
    %7734 = vmatpush1.bf16.msra.mxu0 %v5263
    %7735 = vmatprep.subr.bf16.mxu0 %v5256
    %7736 = vmatpush1.bf16.msra.mxu0 %v5255
    %7737 = vmatprep.subr.bf16.mxu0 %v5248
    %7738 = vmatpush1.bf16.msra.mxu0 %v5247
    %7739 = vmatprep.subr.bf16.mxu0 %v5240
    %7740 = vmatpush1.bf16.msra.mxu0 %v5239
    %7741 = vmatprep.subr.bf16.mxu0 %v5232
    %7742 = vmatpush1.bf16.msra.mxu0 %v5231
    %7743 = vmatprep.subr.bf16.mxu0 %v5224
    %7744 = vmatpush1.bf16.msra.mxu0 %v5223
    %7745 = vmatprep.subr.bf16.mxu0 %v5216
    %7746 = vmatpush1.bf16.msra.mxu0 %v5215
    %7747 = vmatprep.subr.bf16.mxu0 %v5208
    %7748 = vmatpush1.bf16.msra.mxu0 %v5207
    %7749 = vmatprep.subr.bf16.mxu0 %v5328
    %7750 = vmatpush2.bf16.msra.mxu0 %v5327
    %7751 = vmatprep.subr.bf16.mxu0 %v5320
    %7752 = vmatpush2.bf16.msra.mxu0 %v5319
    %7753 = vmatprep.subr.bf16.mxu0 %v5312
    %7754 = vmatpush2.bf16.msra.mxu0 %v5311
    %7755 = vmatprep.subr.bf16.mxu0 %v5304
    %7756 = vmatpush2.bf16.msra.mxu0 %v5303
    %7757 = vmatprep.subr.bf16.mxu0 %v5296
    %7758 = vmatpush2.bf16.msra.mxu0 %v5295
    %7759 = vmatprep.subr.bf16.mxu0 %v5288
    %7760 = vmatpush2.bf16.msra.mxu0 %v5287
    %7761 = vmatprep.subr.bf16.mxu0 %v5280
    %7762 = vmatpush2.bf16.msra.mxu0 %v5279
    %7763 = vmatprep.subr.bf16.mxu0 %v5272
    %7764 = vmatpush2.bf16.msra.mxu0 %v5271
    %7765 = vmatprep.mubr.bf16.mxu0 %v798
    %7766 = vmatmul.mubr.bf16.gmra.mxu0 %v797
    %v7767 = vpop.f32.mrf.mxu0
    %v7768 = vadd.f32 %v7727, %v7767
    %v7769 = vpop.f32.mrf.mxu0
    %v7770 = vadd.f32 %v7729, %v7769
    %v7771 = vpop.f32.mrf.mxu0
    %v7772 = vpop.f32.mrf.mxu0
    %7773 = vdwg.mxu0
    %7774 = vmatprep.subr.bf16.mxu0 %v5392
    %7775 = vmatpush1.bf16.msra.mxu0 %v5391
    %7776 = vmatprep.subr.bf16.mxu0 %v5384
    %7777 = vmatpush1.bf16.msra.mxu0 %v5383
    %7778 = vmatprep.subr.bf16.mxu0 %v5376
    %7779 = vmatpush1.bf16.msra.mxu0 %v5375
    %7780 = vmatprep.subr.bf16.mxu0 %v5368
    %7781 = vmatpush1.bf16.msra.mxu0 %v5367
    %7782 = vmatprep.subr.bf16.mxu0 %v5360
    %7783 = vmatpush1.bf16.msra.mxu0 %v5359
    %7784 = vmatprep.subr.bf16.mxu0 %v5352
    %7785 = vmatpush1.bf16.msra.mxu0 %v5351
    %7786 = vmatprep.subr.bf16.mxu0 %v5344
    %7787 = vmatpush1.bf16.msra.mxu0 %v5343
    %7788 = vmatprep.subr.bf16.mxu0 %v5336
    %7789 = vmatpush1.bf16.msra.mxu0 %v5335
    %7790 = vmatprep.subr.bf16.mxu0 %v5456
    %7791 = vmatpush2.bf16.msra.mxu0 %v5455
    %7792 = vmatprep.subr.bf16.mxu0 %v5448
    %7793 = vmatpush2.bf16.msra.mxu0 %v5447
    %7794 = vmatprep.subr.bf16.mxu0 %v5440
    %7795 = vmatpush2.bf16.msra.mxu0 %v5439
    %7796 = vmatprep.subr.bf16.mxu0 %v5432
    %7797 = vmatpush2.bf16.msra.mxu0 %v5431
    %7798 = vmatprep.subr.bf16.mxu0 %v5424
    %7799 = vmatpush2.bf16.msra.mxu0 %v5423
    %7800 = vmatprep.subr.bf16.mxu0 %v5416
    %7801 = vmatpush2.bf16.msra.mxu0 %v5415
    %7802 = vmatprep.subr.bf16.mxu0 %v5408
    %7803 = vmatpush2.bf16.msra.mxu0 %v5407
    %7804 = vmatprep.subr.bf16.mxu0 %v5400
    %7805 = vmatpush2.bf16.msra.mxu0 %v5399
    %7806 = vmatprep.mubr.bf16.mxu0 %v800
    %7807 = vmatmul.mubr.bf16.gmra.mxu0 %v799
    %v7808 = vpop.f32.mrf.mxu0
    %v7809 = vadd.f32 %v7768, %v7808
    %v7810 = vpop.f32.mrf.mxu0
    %v7811 = vadd.f32 %v7770, %v7810
    %v7812 = vpop.f32.mrf.mxu0
    %v7813 = vpop.f32.mrf.mxu0
    %7814 = vdwg.mxu0
    %7815 = vmatprep.subr.bf16.mxu0 %v5520
    %7816 = vmatpush1.bf16.msra.mxu0 %v5519
    %7817 = vmatprep.subr.bf16.mxu0 %v5512
    %7818 = vmatpush1.bf16.msra.mxu0 %v5511
    %7819 = vmatprep.subr.bf16.mxu0 %v5504
    %7820 = vmatpush1.bf16.msra.mxu0 %v5503
    %7821 = vmatprep.subr.bf16.mxu0 %v5496
    %7822 = vmatpush1.bf16.msra.mxu0 %v5495
    %7823 = vmatprep.subr.bf16.mxu0 %v5488
    %7824 = vmatpush1.bf16.msra.mxu0 %v5487
    %7825 = vmatprep.subr.bf16.mxu0 %v5480
    %7826 = vmatpush1.bf16.msra.mxu0 %v5479
    %7827 = vmatprep.subr.bf16.mxu0 %v5472
    %7828 = vmatpush1.bf16.msra.mxu0 %v5471
    %7829 = vmatprep.subr.bf16.mxu0 %v5464
    %7830 = vmatpush1.bf16.msra.mxu0 %v5463
    %7831 = vmatprep.subr.bf16.mxu0 %v5584
    %7832 = vmatpush2.bf16.msra.mxu0 %v5583
    %7833 = vmatprep.subr.bf16.mxu0 %v5576
    %7834 = vmatpush2.bf16.msra.mxu0 %v5575
    %7835 = vmatprep.subr.bf16.mxu0 %v5568
    %7836 = vmatpush2.bf16.msra.mxu0 %v5567
    %7837 = vmatprep.subr.bf16.mxu0 %v5560
    %7838 = vmatpush2.bf16.msra.mxu0 %v5559
    %7839 = vmatprep.subr.bf16.mxu0 %v5552
    %7840 = vmatpush2.bf16.msra.mxu0 %v5551
    %7841 = vmatprep.subr.bf16.mxu0 %v5544
    %7842 = vmatpush2.bf16.msra.mxu0 %v5543
    %7843 = vmatprep.subr.bf16.mxu0 %v5536
    %7844 = vmatpush2.bf16.msra.mxu0 %v5535
    %7845 = vmatprep.subr.bf16.mxu0 %v5528
    %7846 = vmatpush2.bf16.msra.mxu0 %v5527
    %7847 = vmatprep.mubr.bf16.mxu0 %v802
    %7848 = vmatmul.mubr.bf16.gmra.mxu0 %v801
    %v7849 = vpop.f32.mrf.mxu0
    %v7850 = vadd.f32 %v7809, %v7849
    %v7851 = vpop.f32.mrf.mxu0
    %v7852 = vadd.f32 %v7811, %v7851
    %v7853 = vpop.f32.mrf.mxu0
    %v7854 = vpop.f32.mrf.mxu0
    %7855 = vdwg.mxu0
    %7856 = vmatprep.subr.bf16.mxu0 %v5648
    %7857 = vmatpush1.bf16.msra.mxu0 %v5647
    %7858 = vmatprep.subr.bf16.mxu0 %v5640
    %7859 = vmatpush1.bf16.msra.mxu0 %v5639
    %7860 = vmatprep.subr.bf16.mxu0 %v5632
    %7861 = vmatpush1.bf16.msra.mxu0 %v5631
    %7862 = vmatprep.subr.bf16.mxu0 %v5624
    %7863 = vmatpush1.bf16.msra.mxu0 %v5623
    %7864 = vmatprep.subr.bf16.mxu0 %v5616
    %7865 = vmatpush1.bf16.msra.mxu0 %v5615
    %7866 = vmatprep.subr.bf16.mxu0 %v5608
    %7867 = vmatpush1.bf16.msra.mxu0 %v5607
    %7868 = vmatprep.subr.bf16.mxu0 %v5600
    %7869 = vmatpush1.bf16.msra.mxu0 %v5599
    %7870 = vmatprep.subr.bf16.mxu0 %v5592
    %7871 = vmatpush1.bf16.msra.mxu0 %v5591
    %7872 = vmatprep.subr.bf16.mxu0 %v5712
    %7873 = vmatpush2.bf16.msra.mxu0 %v5711
    %7874 = vmatprep.subr.bf16.mxu0 %v5704
    %7875 = vmatpush2.bf16.msra.mxu0 %v5703
    %7876 = vmatprep.subr.bf16.mxu0 %v5696
    %7877 = vmatpush2.bf16.msra.mxu0 %v5695
    %7878 = vmatprep.subr.bf16.mxu0 %v5688
    %7879 = vmatpush2.bf16.msra.mxu0 %v5687
    %7880 = vmatprep.subr.bf16.mxu0 %v5680
    %7881 = vmatpush2.bf16.msra.mxu0 %v5679
    %7882 = vmatprep.subr.bf16.mxu0 %v5672
    %7883 = vmatpush2.bf16.msra.mxu0 %v5671
    %7884 = vmatprep.subr.bf16.mxu0 %v5664
    %7885 = vmatpush2.bf16.msra.mxu0 %v5663
    %7886 = vmatprep.subr.bf16.mxu0 %v5656
    %7887 = vmatpush2.bf16.msra.mxu0 %v5655
    %7888 = vmatprep.mubr.bf16.mxu0 %v804
    %7889 = vmatmul.mubr.bf16.gmra.mxu0 %v803
    %v7890 = vpop.f32.mrf.mxu0
    %v7891 = vadd.f32 %v7850, %v7890
    %v7892 = vpop.f32.mrf.mxu0
    %v7893 = vadd.f32 %v7852, %v7892
    %v7894 = vpop.f32.mrf.mxu0
    %v7895 = vpop.f32.mrf.mxu0
    %7896 = vdwg.mxu0
    %7897 = vmatprep.subr.bf16.mxu0 %v5776
    %7898 = vmatpush1.bf16.msra.mxu0 %v5775
    %7899 = vmatprep.subr.bf16.mxu0 %v5768
    %7900 = vmatpush1.bf16.msra.mxu0 %v5767
    %7901 = vmatprep.subr.bf16.mxu0 %v5760
    %7902 = vmatpush1.bf16.msra.mxu0 %v5759
    %7903 = vmatprep.subr.bf16.mxu0 %v5752
    %7904 = vmatpush1.bf16.msra.mxu0 %v5751
    %7905 = vmatprep.subr.bf16.mxu0 %v5744
    %7906 = vmatpush1.bf16.msra.mxu0 %v5743
    %7907 = vmatprep.subr.bf16.mxu0 %v5736
    %7908 = vmatpush1.bf16.msra.mxu0 %v5735
    %7909 = vmatprep.subr.bf16.mxu0 %v5728
    %7910 = vmatpush1.bf16.msra.mxu0 %v5727
    %7911 = vmatprep.subr.bf16.mxu0 %v5720
    %7912 = vmatpush1.bf16.msra.mxu0 %v5719
    %7913 = vmatprep.subr.bf16.mxu0 %v5840
    %7914 = vmatpush2.bf16.msra.mxu0 %v5839
    %7915 = vmatprep.subr.bf16.mxu0 %v5832
    %7916 = vmatpush2.bf16.msra.mxu0 %v5831
    %7917 = vmatprep.subr.bf16.mxu0 %v5824
    %7918 = vmatpush2.bf16.msra.mxu0 %v5823
    %7919 = vmatprep.subr.bf16.mxu0 %v5816
    %7920 = vmatpush2.bf16.msra.mxu0 %v5815
    %7921 = vmatprep.subr.bf16.mxu0 %v5808
    %7922 = vmatpush2.bf16.msra.mxu0 %v5807
    %7923 = vmatprep.subr.bf16.mxu0 %v5800
    %7924 = vmatpush2.bf16.msra.mxu0 %v5799
    %7925 = vmatprep.subr.bf16.mxu0 %v5792
    %7926 = vmatpush2.bf16.msra.mxu0 %v5791
    %7927 = vmatprep.subr.bf16.mxu0 %v5784
    %7928 = vmatpush2.bf16.msra.mxu0 %v5783
    %7929 = vmatprep.mubr.bf16.mxu0 %v806
    %7930 = vmatmul.mubr.bf16.gmra.mxu0 %v805
    %v7931 = vpop.f32.mrf.mxu0
    %v7932 = vadd.f32 %v7891, %v7931
    %v7933 = vpop.f32.mrf.mxu0
    %v7934 = vadd.f32 %v7893, %v7933
    %v7935 = vpop.f32.mrf.mxu0
    %v7936 = vpop.f32.mrf.mxu0
    %7937 = vdwg.mxu0
    %7938 = vmatprep.subr.bf16.mxu0 %v5904
    %7939 = vmatpush1.bf16.msra.mxu0 %v5903
    %7940 = vmatprep.subr.bf16.mxu0 %v5896
    %7941 = vmatpush1.bf16.msra.mxu0 %v5895
    %7942 = vmatprep.subr.bf16.mxu0 %v5888
    %7943 = vmatpush1.bf16.msra.mxu0 %v5887
    %7944 = vmatprep.subr.bf16.mxu0 %v5880
    %7945 = vmatpush1.bf16.msra.mxu0 %v5879
    %7946 = vmatprep.subr.bf16.mxu0 %v5872
    %7947 = vmatpush1.bf16.msra.mxu0 %v5871
    %7948 = vmatprep.subr.bf16.mxu0 %v5864
    %7949 = vmatpush1.bf16.msra.mxu0 %v5863
    %7950 = vmatprep.subr.bf16.mxu0 %v5856
    %7951 = vmatpush1.bf16.msra.mxu0 %v5855
    %7952 = vmatprep.subr.bf16.mxu0 %v5848
    %7953 = vmatpush1.bf16.msra.mxu0 %v5847
    %7954 = vmatprep.subr.bf16.mxu0 %v5968
    %7955 = vmatpush2.bf16.msra.mxu0 %v5967
    %7956 = vmatprep.subr.bf16.mxu0 %v5960
    %7957 = vmatpush2.bf16.msra.mxu0 %v5959
    %7958 = vmatprep.subr.bf16.mxu0 %v5952
    %7959 = vmatpush2.bf16.msra.mxu0 %v5951
    %7960 = vmatprep.subr.bf16.mxu0 %v5944
    %7961 = vmatpush2.bf16.msra.mxu0 %v5943
    %7962 = vmatprep.subr.bf16.mxu0 %v5936
    %7963 = vmatpush2.bf16.msra.mxu0 %v5935
    %7964 = vmatprep.subr.bf16.mxu0 %v5928
    %7965 = vmatpush2.bf16.msra.mxu0 %v5927
    %7966 = vmatprep.subr.bf16.mxu0 %v5920
    %7967 = vmatpush2.bf16.msra.mxu0 %v5919
    %7968 = vmatprep.subr.bf16.mxu0 %v5912
    %7969 = vmatpush2.bf16.msra.mxu0 %v5911
    %7970 = vmatprep.mubr.bf16.mxu0 %v808
    %7971 = vmatmul.mubr.bf16.gmra.mxu0 %v807
    %v7972 = vpop.f32.mrf.mxu0
    %v7973 = vadd.f32 %v7932, %v7972
    %v7974 = vpop.f32.mrf.mxu0
    %v7975 = vadd.f32 %v7934, %v7974
    %v7976 = vpop.f32.mrf.mxu0
    %v7977 = vpop.f32.mrf.mxu0
    %7978 = vdwg.mxu0
    %7979 = vmatprep.subr.bf16.mxu0 %v5010
    %7980 = vmatpush1.bf16.msra.mxu0 %v5009
    %7981 = vmatprep.subr.bf16.mxu0 %v5002
    %7982 = vmatpush1.bf16.msra.mxu0 %v5001
    %7983 = vmatprep.subr.bf16.mxu0 %v4994
    %7984 = vmatpush1.bf16.msra.mxu0 %v4993
    %7985 = vmatprep.subr.bf16.mxu0 %v4986
    %7986 = vmatpush1.bf16.msra.mxu0 %v4985
    %7987 = vmatprep.subr.bf16.mxu0 %v4978
    %7988 = vmatpush1.bf16.msra.mxu0 %v4977
    %7989 = vmatprep.subr.bf16.mxu0 %v4970
    %7990 = vmatpush1.bf16.msra.mxu0 %v4969
    %7991 = vmatprep.subr.bf16.mxu0 %v4962
    %7992 = vmatpush1.bf16.msra.mxu0 %v4961
    %7993 = vmatprep.subr.bf16.mxu0 %v4954
    %7994 = vmatpush1.bf16.msra.mxu0 %v4953
    %7995 = vmatprep.subr.bf16.mxu0 %v5074
    %7996 = vmatpush2.bf16.msra.mxu0 %v5073
    %7997 = vmatprep.subr.bf16.mxu0 %v5066
    %7998 = vmatpush2.bf16.msra.mxu0 %v5065
    %7999 = vmatprep.subr.bf16.mxu0 %v5058
    %8000 = vmatpush2.bf16.msra.mxu0 %v5057
    %8001 = vmatprep.subr.bf16.mxu0 %v5050
    %8002 = vmatpush2.bf16.msra.mxu0 %v5049
    %8003 = vmatprep.subr.bf16.mxu0 %v5042
    %8004 = vmatpush2.bf16.msra.mxu0 %v5041
    %8005 = vmatprep.subr.bf16.mxu0 %v5034
    %8006 = vmatpush2.bf16.msra.mxu0 %v5033
    %8007 = vmatprep.subr.bf16.mxu0 %v5026
    %8008 = vmatpush2.bf16.msra.mxu0 %v5025
    %8009 = vmatprep.subr.bf16.mxu0 %v5018
    %8010 = vmatpush2.bf16.msra.mxu0 %v5017
    %8011 = vmatprep.mubr.bf16.mxu0 %v794
    %8012 = vmatmul.mubr.bf16.gmra.mxu0 %v793
    %v8013 = vpop.f32.mrf.mxu0
    %v8014 = vadd.f32 %v1862, %v8013
    %v8015 = vpop.f32.mrf.mxu0
    %v8016 = vadd.f32 %v1866, %v8015
    %v8017 = vpop.f32.mrf.mxu0
    %v8018 = vpop.f32.mrf.mxu0
    %8019 = vdwg.mxu0
    %8020 = vmatprep.subr.bf16.mxu0 %v5138
    %8021 = vmatpush1.bf16.msra.mxu0 %v5137
    %8022 = vmatprep.subr.bf16.mxu0 %v5130
    %8023 = vmatpush1.bf16.msra.mxu0 %v5129
    %8024 = vmatprep.subr.bf16.mxu0 %v5122
    %8025 = vmatpush1.bf16.msra.mxu0 %v5121
    %8026 = vmatprep.subr.bf16.mxu0 %v5114
    %8027 = vmatpush1.bf16.msra.mxu0 %v5113
    %8028 = vmatprep.subr.bf16.mxu0 %v5106
    %8029 = vmatpush1.bf16.msra.mxu0 %v5105
    %8030 = vmatprep.subr.bf16.mxu0 %v5098
    %8031 = vmatpush1.bf16.msra.mxu0 %v5097
    %8032 = vmatprep.subr.bf16.mxu0 %v5090
    %8033 = vmatpush1.bf16.msra.mxu0 %v5089
    %8034 = vmatprep.subr.bf16.mxu0 %v5082
    %8035 = vmatpush1.bf16.msra.mxu0 %v5081
    %8036 = vmatprep.subr.bf16.mxu0 %v5202
    %8037 = vmatpush2.bf16.msra.mxu0 %v5201
    %8038 = vmatprep.subr.bf16.mxu0 %v5194
    %8039 = vmatpush2.bf16.msra.mxu0 %v5193
    %8040 = vmatprep.subr.bf16.mxu0 %v5186
    %8041 = vmatpush2.bf16.msra.mxu0 %v5185
    %8042 = vmatprep.subr.bf16.mxu0 %v5178
    %8043 = vmatpush2.bf16.msra.mxu0 %v5177
    %8044 = vmatprep.subr.bf16.mxu0 %v5170
    %8045 = vmatpush2.bf16.msra.mxu0 %v5169
    %8046 = vmatprep.subr.bf16.mxu0 %v5162
    %8047 = vmatpush2.bf16.msra.mxu0 %v5161
    %8048 = vmatprep.subr.bf16.mxu0 %v5154
    %8049 = vmatpush2.bf16.msra.mxu0 %v5153
    %8050 = vmatprep.subr.bf16.mxu0 %v5146
    %8051 = vmatpush2.bf16.msra.mxu0 %v5145
    %8052 = vmatprep.mubr.bf16.mxu0 %v796
    %8053 = vmatmul.mubr.bf16.gmra.mxu0 %v795
    %v8054 = vpop.f32.mrf.mxu0
    %v8055 = vadd.f32 %v8014, %v8054
    %v8056 = vpop.f32.mrf.mxu0
    %v8057 = vadd.f32 %v8016, %v8056
    %v8058 = vpop.f32.mrf.mxu0
    %v8059 = vpop.f32.mrf.mxu0
    %8060 = vdwg.mxu0
    %8061 = vmatprep.subr.bf16.mxu0 %v5266
    %8062 = vmatpush1.bf16.msra.mxu0 %v5265
    %8063 = vmatprep.subr.bf16.mxu0 %v5258
    %8064 = vmatpush1.bf16.msra.mxu0 %v5257
    %8065 = vmatprep.subr.bf16.mxu0 %v5250
    %8066 = vmatpush1.bf16.msra.mxu0 %v5249
    %8067 = vmatprep.subr.bf16.mxu0 %v5242
    %8068 = vmatpush1.bf16.msra.mxu0 %v5241
    %8069 = vmatprep.subr.bf16.mxu0 %v5234
    %8070 = vmatpush1.bf16.msra.mxu0 %v5233
    %8071 = vmatprep.subr.bf16.mxu0 %v5226
    %8072 = vmatpush1.bf16.msra.mxu0 %v5225
    %8073 = vmatprep.subr.bf16.mxu0 %v5218
    %8074 = vmatpush1.bf16.msra.mxu0 %v5217
    %8075 = vmatprep.subr.bf16.mxu0 %v5210
    %8076 = vmatpush1.bf16.msra.mxu0 %v5209
    %8077 = vmatprep.subr.bf16.mxu0 %v5330
    %8078 = vmatpush2.bf16.msra.mxu0 %v5329
    %8079 = vmatprep.subr.bf16.mxu0 %v5322
    %8080 = vmatpush2.bf16.msra.mxu0 %v5321
    %8081 = vmatprep.subr.bf16.mxu0 %v5314
    %8082 = vmatpush2.bf16.msra.mxu0 %v5313
    %8083 = vmatprep.subr.bf16.mxu0 %v5306
    %8084 = vmatpush2.bf16.msra.mxu0 %v5305
    %8085 = vmatprep.subr.bf16.mxu0 %v5298
    %8086 = vmatpush2.bf16.msra.mxu0 %v5297
    %8087 = vmatprep.subr.bf16.mxu0 %v5290
    %8088 = vmatpush2.bf16.msra.mxu0 %v5289
    %8089 = vmatprep.subr.bf16.mxu0 %v5282
    %8090 = vmatpush2.bf16.msra.mxu0 %v5281
    %8091 = vmatprep.subr.bf16.mxu0 %v5274
    %8092 = vmatpush2.bf16.msra.mxu0 %v5273
    %8093 = vmatprep.mubr.bf16.mxu0 %v798
    %8094 = vmatmul.mubr.bf16.gmra.mxu0 %v797
    %v8095 = vpop.f32.mrf.mxu0
    %v8096 = vadd.f32 %v8055, %v8095
    %v8097 = vpop.f32.mrf.mxu0
    %v8098 = vadd.f32 %v8057, %v8097
    %v8099 = vpop.f32.mrf.mxu0
    %v8100 = vpop.f32.mrf.mxu0
    %8101 = vdwg.mxu0
    %8102 = vmatprep.subr.bf16.mxu0 %v5394
    %8103 = vmatpush1.bf16.msra.mxu0 %v5393
    %8104 = vmatprep.subr.bf16.mxu0 %v5386
    %8105 = vmatpush1.bf16.msra.mxu0 %v5385
    %8106 = vmatprep.subr.bf16.mxu0 %v5378
    %8107 = vmatpush1.bf16.msra.mxu0 %v5377
    %8108 = vmatprep.subr.bf16.mxu0 %v5370
    %8109 = vmatpush1.bf16.msra.mxu0 %v5369
    %8110 = vmatprep.subr.bf16.mxu0 %v5362
    %8111 = vmatpush1.bf16.msra.mxu0 %v5361
    %8112 = vmatprep.subr.bf16.mxu0 %v5354
    %8113 = vmatpush1.bf16.msra.mxu0 %v5353
    %8114 = vmatprep.subr.bf16.mxu0 %v5346
    %8115 = vmatpush1.bf16.msra.mxu0 %v5345
    %8116 = vmatprep.subr.bf16.mxu0 %v5338
    %8117 = vmatpush1.bf16.msra.mxu0 %v5337
    %8118 = vmatprep.subr.bf16.mxu0 %v5458
    %8119 = vmatpush2.bf16.msra.mxu0 %v5457
    %8120 = vmatprep.subr.bf16.mxu0 %v5450
    %8121 = vmatpush2.bf16.msra.mxu0 %v5449
    %8122 = vmatprep.subr.bf16.mxu0 %v5442
    %8123 = vmatpush2.bf16.msra.mxu0 %v5441
    %8124 = vmatprep.subr.bf16.mxu0 %v5434
    %8125 = vmatpush2.bf16.msra.mxu0 %v5433
    %8126 = vmatprep.subr.bf16.mxu0 %v5426
    %8127 = vmatpush2.bf16.msra.mxu0 %v5425
    %8128 = vmatprep.subr.bf16.mxu0 %v5418
    %8129 = vmatpush2.bf16.msra.mxu0 %v5417
    %8130 = vmatprep.subr.bf16.mxu0 %v5410
    %8131 = vmatpush2.bf16.msra.mxu0 %v5409
    %8132 = vmatprep.subr.bf16.mxu0 %v5402
    %8133 = vmatpush2.bf16.msra.mxu0 %v5401
    %8134 = vmatprep.mubr.bf16.mxu0 %v800
    %8135 = vmatmul.mubr.bf16.gmra.mxu0 %v799
    %v8136 = vpop.f32.mrf.mxu0
    %v8137 = vadd.f32 %v8096, %v8136
    %v8138 = vpop.f32.mrf.mxu0
    %v8139 = vadd.f32 %v8098, %v8138
    %v8140 = vpop.f32.mrf.mxu0
    %v8141 = vpop.f32.mrf.mxu0
    %8142 = vdwg.mxu0
    %8143 = vmatprep.subr.bf16.mxu0 %v5522
    %8144 = vmatpush1.bf16.msra.mxu0 %v5521
    %8145 = vmatprep.subr.bf16.mxu0 %v5514
    %8146 = vmatpush1.bf16.msra.mxu0 %v5513
    %8147 = vmatprep.subr.bf16.mxu0 %v5506
    %8148 = vmatpush1.bf16.msra.mxu0 %v5505
    %8149 = vmatprep.subr.bf16.mxu0 %v5498
    %8150 = vmatpush1.bf16.msra.mxu0 %v5497
    %8151 = vmatprep.subr.bf16.mxu0 %v5490
    %8152 = vmatpush1.bf16.msra.mxu0 %v5489
    %8153 = vmatprep.subr.bf16.mxu0 %v5482
    %8154 = vmatpush1.bf16.msra.mxu0 %v5481
    %8155 = vmatprep.subr.bf16.mxu0 %v5474
    %8156 = vmatpush1.bf16.msra.mxu0 %v5473
    %8157 = vmatprep.subr.bf16.mxu0 %v5466
    %8158 = vmatpush1.bf16.msra.mxu0 %v5465
    %8159 = vmatprep.subr.bf16.mxu0 %v5586
    %8160 = vmatpush2.bf16.msra.mxu0 %v5585
    %8161 = vmatprep.subr.bf16.mxu0 %v5578
    %8162 = vmatpush2.bf16.msra.mxu0 %v5577
    %8163 = vmatprep.subr.bf16.mxu0 %v5570
    %8164 = vmatpush2.bf16.msra.mxu0 %v5569
    %8165 = vmatprep.subr.bf16.mxu0 %v5562
    %8166 = vmatpush2.bf16.msra.mxu0 %v5561
    %8167 = vmatprep.subr.bf16.mxu0 %v5554
    %8168 = vmatpush2.bf16.msra.mxu0 %v5553
    %8169 = vmatprep.subr.bf16.mxu0 %v5546
    %8170 = vmatpush2.bf16.msra.mxu0 %v5545
    %8171 = vmatprep.subr.bf16.mxu0 %v5538
    %8172 = vmatpush2.bf16.msra.mxu0 %v5537
    %8173 = vmatprep.subr.bf16.mxu0 %v5530
    %8174 = vmatpush2.bf16.msra.mxu0 %v5529
    %8175 = vmatprep.mubr.bf16.mxu0 %v802
    %8176 = vmatmul.mubr.bf16.gmra.mxu0 %v801
    %v8177 = vpop.f32.mrf.mxu0
    %v8178 = vadd.f32 %v8137, %v8177
    %v8179 = vpop.f32.mrf.mxu0
    %v8180 = vadd.f32 %v8139, %v8179
    %v8181 = vpop.f32.mrf.mxu0
    %v8182 = vpop.f32.mrf.mxu0
    %8183 = vdwg.mxu0
    %8184 = vmatprep.subr.bf16.mxu0 %v5650
    %8185 = vmatpush1.bf16.msra.mxu0 %v5649
    %8186 = vmatprep.subr.bf16.mxu0 %v5642
    %8187 = vmatpush1.bf16.msra.mxu0 %v5641
    %8188 = vmatprep.subr.bf16.mxu0 %v5634
    %8189 = vmatpush1.bf16.msra.mxu0 %v5633
    %8190 = vmatprep.subr.bf16.mxu0 %v5626
    %8191 = vmatpush1.bf16.msra.mxu0 %v5625
    %8192 = vmatprep.subr.bf16.mxu0 %v5618
    %8193 = vmatpush1.bf16.msra.mxu0 %v5617
    %8194 = vmatprep.subr.bf16.mxu0 %v5610
    %8195 = vmatpush1.bf16.msra.mxu0 %v5609
    %8196 = vmatprep.subr.bf16.mxu0 %v5602
    %8197 = vmatpush1.bf16.msra.mxu0 %v5601
    %8198 = vmatprep.subr.bf16.mxu0 %v5594
    %8199 = vmatpush1.bf16.msra.mxu0 %v5593
    %8200 = vmatprep.subr.bf16.mxu0 %v5714
    %8201 = vmatpush2.bf16.msra.mxu0 %v5713
    %8202 = vmatprep.subr.bf16.mxu0 %v5706
    %8203 = vmatpush2.bf16.msra.mxu0 %v5705
    %8204 = vmatprep.subr.bf16.mxu0 %v5698
    %8205 = vmatpush2.bf16.msra.mxu0 %v5697
    %8206 = vmatprep.subr.bf16.mxu0 %v5690
    %8207 = vmatpush2.bf16.msra.mxu0 %v5689
    %8208 = vmatprep.subr.bf16.mxu0 %v5682
    %8209 = vmatpush2.bf16.msra.mxu0 %v5681
    %8210 = vmatprep.subr.bf16.mxu0 %v5674
    %8211 = vmatpush2.bf16.msra.mxu0 %v5673
    %8212 = vmatprep.subr.bf16.mxu0 %v5666
    %8213 = vmatpush2.bf16.msra.mxu0 %v5665
    %8214 = vmatprep.subr.bf16.mxu0 %v5658
    %8215 = vmatpush2.bf16.msra.mxu0 %v5657
    %8216 = vmatprep.mubr.bf16.mxu0 %v804
    %8217 = vmatmul.mubr.bf16.gmra.mxu0 %v803
    %v8218 = vpop.f32.mrf.mxu0
    %v8219 = vadd.f32 %v8178, %v8218
    %v8220 = vpop.f32.mrf.mxu0
    %v8221 = vadd.f32 %v8180, %v8220
    %v8222 = vpop.f32.mrf.mxu0
    %v8223 = vpop.f32.mrf.mxu0
    %8224 = vdwg.mxu0
    %8225 = vmatprep.subr.bf16.mxu0 %v5778
    %8226 = vmatpush1.bf16.msra.mxu0 %v5777
    %8227 = vmatprep.subr.bf16.mxu0 %v5770
    %8228 = vmatpush1.bf16.msra.mxu0 %v5769
    %8229 = vmatprep.subr.bf16.mxu0 %v5762
    %8230 = vmatpush1.bf16.msra.mxu0 %v5761
    %8231 = vmatprep.subr.bf16.mxu0 %v5754
    %8232 = vmatpush1.bf16.msra.mxu0 %v5753
    %8233 = vmatprep.subr.bf16.mxu0 %v5746
    %8234 = vmatpush1.bf16.msra.mxu0 %v5745
    %8235 = vmatprep.subr.bf16.mxu0 %v5738
    %8236 = vmatpush1.bf16.msra.mxu0 %v5737
    %8237 = vmatprep.subr.bf16.mxu0 %v5730
    %8238 = vmatpush1.bf16.msra.mxu0 %v5729
    %8239 = vmatprep.subr.bf16.mxu0 %v5722
    %8240 = vmatpush1.bf16.msra.mxu0 %v5721
    %8241 = vmatprep.subr.bf16.mxu0 %v5842
    %8242 = vmatpush2.bf16.msra.mxu0 %v5841
    %8243 = vmatprep.subr.bf16.mxu0 %v5834
    %8244 = vmatpush2.bf16.msra.mxu0 %v5833
    %8245 = vmatprep.subr.bf16.mxu0 %v5826
    %8246 = vmatpush2.bf16.msra.mxu0 %v5825
    %8247 = vmatprep.subr.bf16.mxu0 %v5818
    %8248 = vmatpush2.bf16.msra.mxu0 %v5817
    %8249 = vmatprep.subr.bf16.mxu0 %v5810
    %8250 = vmatpush2.bf16.msra.mxu0 %v5809
    %8251 = vmatprep.subr.bf16.mxu0 %v5802
    %8252 = vmatpush2.bf16.msra.mxu0 %v5801
    %8253 = vmatprep.subr.bf16.mxu0 %v5794
    %8254 = vmatpush2.bf16.msra.mxu0 %v5793
    %8255 = vmatprep.subr.bf16.mxu0 %v5786
    %8256 = vmatpush2.bf16.msra.mxu0 %v5785
    %8257 = vmatprep.mubr.bf16.mxu0 %v806
    %8258 = vmatmul.mubr.bf16.gmra.mxu0 %v805
    %v8259 = vpop.f32.mrf.mxu0
    %v8260 = vadd.f32 %v8219, %v8259
    %v8261 = vpop.f32.mrf.mxu0
    %v8262 = vadd.f32 %v8221, %v8261
    %v8263 = vpop.f32.mrf.mxu0
    %v8264 = vpop.f32.mrf.mxu0
    %8265 = vdwg.mxu0
    %8266 = vmatprep.subr.bf16.mxu0 %v5906
    %8267 = vmatpush1.bf16.msra.mxu0 %v5905
    %8268 = vmatprep.subr.bf16.mxu0 %v5898
    %8269 = vmatpush1.bf16.msra.mxu0 %v5897
    %8270 = vmatprep.subr.bf16.mxu0 %v5890
    %8271 = vmatpush1.bf16.msra.mxu0 %v5889
    %8272 = vmatprep.subr.bf16.mxu0 %v5882
    %8273 = vmatpush1.bf16.msra.mxu0 %v5881
    %8274 = vmatprep.subr.bf16.mxu0 %v5874
    %8275 = vmatpush1.bf16.msra.mxu0 %v5873
    %8276 = vmatprep.subr.bf16.mxu0 %v5866
    %8277 = vmatpush1.bf16.msra.mxu0 %v5865
    %8278 = vmatprep.subr.bf16.mxu0 %v5858
    %8279 = vmatpush1.bf16.msra.mxu0 %v5857
    %8280 = vmatprep.subr.bf16.mxu0 %v5850
    %8281 = vmatpush1.bf16.msra.mxu0 %v5849
    %8282 = vmatprep.subr.bf16.mxu0 %v5970
    %8283 = vmatpush2.bf16.msra.mxu0 %v5969
    %8284 = vmatprep.subr.bf16.mxu0 %v5962
    %8285 = vmatpush2.bf16.msra.mxu0 %v5961
    %8286 = vmatprep.subr.bf16.mxu0 %v5954
    %8287 = vmatpush2.bf16.msra.mxu0 %v5953
    %8288 = vmatprep.subr.bf16.mxu0 %v5946
    %8289 = vmatpush2.bf16.msra.mxu0 %v5945
    %8290 = vmatprep.subr.bf16.mxu0 %v5938
    %8291 = vmatpush2.bf16.msra.mxu0 %v5937
    %8292 = vmatprep.subr.bf16.mxu0 %v5930
    %8293 = vmatpush2.bf16.msra.mxu0 %v5929
    %8294 = vmatprep.subr.bf16.mxu0 %v5922
    %8295 = vmatpush2.bf16.msra.mxu0 %v5921
    %8296 = vmatprep.subr.bf16.mxu0 %v5914
    %8297 = vmatpush2.bf16.msra.mxu0 %v5913
    %8298 = vmatprep.mubr.bf16.mxu0 %v808
    %8299 = vmatmul.mubr.bf16.gmra.mxu0 %v807
    %v8300 = vpop.f32.mrf.mxu0
    %v8301 = vadd.f32 %v8260, %v8300
    %v8302 = vpop.f32.mrf.mxu0
    %v8303 = vadd.f32 %v8262, %v8302
    %v8304 = vpop.f32.mrf.mxu0
    %v8305 = vpop.f32.mrf.mxu0
    %8306 = vdwg.mxu0
    %v8307 = vmax.f32 %v7317, 0.0
    %v8308 = vmax.f32 %v7319, 0.0
    %v8309 = vmax.f32 %v7645, 0.0
    %v8310 = vmax.f32 %v7647, 0.0
    %v8311 = vmax.f32 %v7973, 0.0
    %v8312 = vmax.f32 %v7975, 0.0
    %v8313 = vmax.f32 %v8301, 0.0
    %v8314 = vmax.f32 %v8303, 0.0
    %v8315 = vpack.c.bf16 %v8307, %v8307
    %v8316 = vpack.c.bf16 %v8308, %v8308
    %v8317 = vpack.c.bf16 %v8309, %v8309
    %v8318 = vpack.c.bf16 %v8310, %v8310
    %v8319 = vpack.c.bf16 %v8311, %v8311
    %v8320 = vpack.c.bf16 %v8312, %v8312
    %v8321 = vpack.c.bf16 %v8313, %v8313
    %v8322 = vpack.c.bf16 %v8314, %v8314
    %v8323 = vld [vmem:[#allocation11] sm:$0xff]
    %v8324 = vld [vmem:[#allocation11 + $0x8] sm:$0xff]
    %v8325 = vld [vmem:[#allocation11 + $0x10] sm:$0xff]
    %v8326 = vld [vmem:[#allocation11 + $0x18] sm:$0xff]
    %v8327 = vld [vmem:[#allocation11 + $0x20] sm:$0xff]
    %v8328 = vld [vmem:[#allocation11 + $0x28] sm:$0xff]
    %v8329 = vld [vmem:[#allocation11 + $0x30] sm:$0xff]
    %v8330 = vld [vmem:[#allocation11 + $0x38] sm:$0xff]
    %v8331 = vld [vmem:[#allocation11 + $0x40] sm:$0xff]
    %v8332 = vld [vmem:[#allocation11 + $0x48] sm:$0xff]
    %v8333 = vld [vmem:[#allocation11 + $0x50] sm:$0xff]
    %v8334 = vld [vmem:[#allocation11 + $0x58] sm:$0xff]
    %v8335 = vld [vmem:[#allocation11 + $0x60] sm:$0xff]
    %v8336 = vld [vmem:[#allocation11 + $0x68] sm:$0xff]
    %v8337 = vld [vmem:[#allocation11 + $0x70] sm:$0xff]
    %v8338 = vld [vmem:[#allocation11 + $0x78] sm:$0xff]
    %v8339 = vld [vmem:[#allocation11 + $0x80] sm:$0xff]
    %v8340 = vld [vmem:[#allocation11 + $0x88] sm:$0xff]
    %v8341 = vld [vmem:[#allocation11 + $0x90] sm:$0xff]
    %v8342 = vld [vmem:[#allocation11 + $0x98] sm:$0xff]
    %v8343 = vld [vmem:[#allocation11 + $0xa0] sm:$0xff]
    %v8344 = vld [vmem:[#allocation11 + $0xa8] sm:$0xff]
    %v8345 = vld [vmem:[#allocation11 + $0xb0] sm:$0xff]
    %v8346 = vld [vmem:[#allocation11 + $0xb8] sm:$0xff]
    %v8347 = vld [vmem:[#allocation11 + $0xc0] sm:$0xff]
    %v8348 = vld [vmem:[#allocation11 + $0xc8] sm:$0xff]
    %v8349 = vld [vmem:[#allocation11 + $0xd0] sm:$0xff]
    %v8350 = vld [vmem:[#allocation11 + $0xd8] sm:$0xff]
    %v8351 = vld [vmem:[#allocation11 + $0xe0] sm:$0xff]
    %v8352 = vld [vmem:[#allocation11 + $0xe8] sm:$0xff]
    %v8353 = vld [vmem:[#allocation11 + $0xf0] sm:$0xff]
    %v8354 = vld [vmem:[#allocation11 + $0xf8] sm:$0xff]
    %v8355 = vld [vmem:[#allocation11 + $0x100] sm:$0xff]
    %v8356 = vld [vmem:[#allocation11 + $0x108] sm:$0xff]
    %v8357 = vld [vmem:[#allocation11 + $0x110] sm:$0xff]
    %v8358 = vld [vmem:[#allocation11 + $0x118] sm:$0xff]
    %v8359 = vld [vmem:[#allocation11 + $0x120] sm:$0xff]
    %v8360 = vld [vmem:[#allocation11 + $0x128] sm:$0xff]
    %v8361 = vld [vmem:[#allocation11 + $0x130] sm:$0xff]
    %v8362 = vld [vmem:[#allocation11 + $0x138] sm:$0xff]
    %v8363 = vld [vmem:[#allocation11 + $0x140] sm:$0xff]
    %v8364 = vld [vmem:[#allocation11 + $0x148] sm:$0xff]
    %v8365 = vld [vmem:[#allocation11 + $0x150] sm:$0xff]
    %v8366 = vld [vmem:[#allocation11 + $0x158] sm:$0xff]
    %v8367 = vld [vmem:[#allocation11 + $0x160] sm:$0xff]
    %v8368 = vld [vmem:[#allocation11 + $0x168] sm:$0xff]
    %v8369 = vld [vmem:[#allocation11 + $0x170] sm:$0xff]
    %v8370 = vld [vmem:[#allocation11 + $0x178] sm:$0xff]
    %v8371 = vld [vmem:[#allocation11 + $0x180] sm:$0xff]
    %v8372 = vld [vmem:[#allocation11 + $0x188] sm:$0xff]
    %v8373 = vld [vmem:[#allocation11 + $0x190] sm:$0xff]
    %v8374 = vld [vmem:[#allocation11 + $0x198] sm:$0xff]
    %v8375 = vld [vmem:[#allocation11 + $0x1a0] sm:$0xff]
    %v8376 = vld [vmem:[#allocation11 + $0x1a8] sm:$0xff]
    %v8377 = vld [vmem:[#allocation11 + $0x1b0] sm:$0xff]
    %v8378 = vld [vmem:[#allocation11 + $0x1b8] sm:$0xff]
    %v8379 = vld [vmem:[#allocation11 + $0x1c0] sm:$0xff]
    %v8380 = vld [vmem:[#allocation11 + $0x1c8] sm:$0xff]
    %v8381 = vld [vmem:[#allocation11 + $0x1d0] sm:$0xff]
    %v8382 = vld [vmem:[#allocation11 + $0x1d8] sm:$0xff]
    %v8383 = vld [vmem:[#allocation11 + $0x1e0] sm:$0xff]
    %v8384 = vld [vmem:[#allocation11 + $0x1e8] sm:$0xff]
    %v8385 = vld [vmem:[#allocation11 + $0x1f0] sm:$0xff]
    %v8386 = vld [vmem:[#allocation11 + $0x1f8] sm:$0xff]
    %v8387 = vld [vmem:[#allocation11 + $0x200] sm:$0xff]
    %v8388 = vld [vmem:[#allocation11 + $0x208] sm:$0xff]
    %v8389 = vld [vmem:[#allocation11 + $0x210] sm:$0xff]
    %v8390 = vld [vmem:[#allocation11 + $0x218] sm:$0xff]
    %v8391 = vld [vmem:[#allocation11 + $0x220] sm:$0xff]
    %v8392 = vld [vmem:[#allocation11 + $0x228] sm:$0xff]
    %v8393 = vld [vmem:[#allocation11 + $0x230] sm:$0xff]
    %v8394 = vld [vmem:[#allocation11 + $0x238] sm:$0xff]
    %v8395 = vld [vmem:[#allocation11 + $0x240] sm:$0xff]
    %v8396 = vld [vmem:[#allocation11 + $0x248] sm:$0xff]
    %v8397 = vld [vmem:[#allocation11 + $0x250] sm:$0xff]
    %v8398 = vld [vmem:[#allocation11 + $0x258] sm:$0xff]
    %v8399 = vld [vmem:[#allocation11 + $0x260] sm:$0xff]
    %v8400 = vld [vmem:[#allocation11 + $0x268] sm:$0xff]
    %v8401 = vld [vmem:[#allocation11 + $0x270] sm:$0xff]
    %v8402 = vld [vmem:[#allocation11 + $0x278] sm:$0xff]
    %v8403 = vld [vmem:[#allocation11 + $0x280] sm:$0xff]
    %v8404 = vld [vmem:[#allocation11 + $0x288] sm:$0xff]
    %v8405 = vld [vmem:[#allocation11 + $0x290] sm:$0xff]
    %v8406 = vld [vmem:[#allocation11 + $0x298] sm:$0xff]
    %v8407 = vld [vmem:[#allocation11 + $0x2a0] sm:$0xff]
    %v8408 = vld [vmem:[#allocation11 + $0x2a8] sm:$0xff]
    %v8409 = vld [vmem:[#allocation11 + $0x2b0] sm:$0xff]
    %v8410 = vld [vmem:[#allocation11 + $0x2b8] sm:$0xff]
    %v8411 = vld [vmem:[#allocation11 + $0x2c0] sm:$0xff]
    %v8412 = vld [vmem:[#allocation11 + $0x2c8] sm:$0xff]
    %v8413 = vld [vmem:[#allocation11 + $0x2d0] sm:$0xff]
    %v8414 = vld [vmem:[#allocation11 + $0x2d8] sm:$0xff]
    %v8415 = vld [vmem:[#allocation11 + $0x2e0] sm:$0xff]
    %v8416 = vld [vmem:[#allocation11 + $0x2e8] sm:$0xff]
    %v8417 = vld [vmem:[#allocation11 + $0x2f0] sm:$0xff]
    %v8418 = vld [vmem:[#allocation11 + $0x2f8] sm:$0xff]
    %v8419 = vld [vmem:[#allocation11 + $0x300] sm:$0xff]
    %v8420 = vld [vmem:[#allocation11 + $0x308] sm:$0xff]
    %v8421 = vld [vmem:[#allocation11 + $0x310] sm:$0xff]
    %v8422 = vld [vmem:[#allocation11 + $0x318] sm:$0xff]
    %v8423 = vld [vmem:[#allocation11 + $0x320] sm:$0xff]
    %v8424 = vld [vmem:[#allocation11 + $0x328] sm:$0xff]
    %v8425 = vld [vmem:[#allocation11 + $0x330] sm:$0xff]
    %v8426 = vld [vmem:[#allocation11 + $0x338] sm:$0xff]
    %v8427 = vld [vmem:[#allocation11 + $0x340] sm:$0xff]
    %v8428 = vld [vmem:[#allocation11 + $0x348] sm:$0xff]
    %v8429 = vld [vmem:[#allocation11 + $0x350] sm:$0xff]
    %v8430 = vld [vmem:[#allocation11 + $0x358] sm:$0xff]
    %v8431 = vld [vmem:[#allocation11 + $0x360] sm:$0xff]
    %v8432 = vld [vmem:[#allocation11 + $0x368] sm:$0xff]
    %v8433 = vld [vmem:[#allocation11 + $0x370] sm:$0xff]
    %v8434 = vld [vmem:[#allocation11 + $0x378] sm:$0xff]
    %v8435 = vld [vmem:[#allocation11 + $0x380] sm:$0xff]
    %v8436 = vld [vmem:[#allocation11 + $0x388] sm:$0xff]
    %v8437 = vld [vmem:[#allocation11 + $0x390] sm:$0xff]
    %v8438 = vld [vmem:[#allocation11 + $0x398] sm:$0xff]
    %v8439 = vld [vmem:[#allocation11 + $0x3a0] sm:$0xff]
    %v8440 = vld [vmem:[#allocation11 + $0x3a8] sm:$0xff]
    %v8441 = vld [vmem:[#allocation11 + $0x3b0] sm:$0xff]
    %v8442 = vld [vmem:[#allocation11 + $0x3b8] sm:$0xff]
    %v8443 = vld [vmem:[#allocation11 + $0x3c0] sm:$0xff]
    %v8444 = vld [vmem:[#allocation11 + $0x3c8] sm:$0xff]
    %v8445 = vld [vmem:[#allocation11 + $0x3d0] sm:$0xff]
    %v8446 = vld [vmem:[#allocation11 + $0x3d8] sm:$0xff]
    %v8447 = vld [vmem:[#allocation11 + $0x3e0] sm:$0xff]
    %v8448 = vld [vmem:[#allocation11 + $0x3e8] sm:$0xff]
    %v8449 = vld [vmem:[#allocation11 + $0x3f0] sm:$0xff]
    %v8450 = vld [vmem:[#allocation11 + $0x3f8] sm:$0xff]
    %v8451 = vld [vmem:[#allocation11 + $0x400] sm:$0xff]
    %v8452 = vld [vmem:[#allocation11 + $0x408] sm:$0xff]
    %v8453 = vld [vmem:[#allocation11 + $0x410] sm:$0xff]
    %v8454 = vld [vmem:[#allocation11 + $0x418] sm:$0xff]
    %v8455 = vld [vmem:[#allocation11 + $0x420] sm:$0xff]
    %v8456 = vld [vmem:[#allocation11 + $0x428] sm:$0xff]
    %v8457 = vld [vmem:[#allocation11 + $0x430] sm:$0xff]
    %v8458 = vld [vmem:[#allocation11 + $0x438] sm:$0xff]
    %v8459 = vld [vmem:[#allocation11 + $0x440] sm:$0xff]
    %v8460 = vld [vmem:[#allocation11 + $0x448] sm:$0xff]
    %v8461 = vld [vmem:[#allocation11 + $0x450] sm:$0xff]
    %v8462 = vld [vmem:[#allocation11 + $0x458] sm:$0xff]
    %v8463 = vld [vmem:[#allocation11 + $0x460] sm:$0xff]
    %v8464 = vld [vmem:[#allocation11 + $0x468] sm:$0xff]
    %v8465 = vld [vmem:[#allocation11 + $0x470] sm:$0xff]
    %v8466 = vld [vmem:[#allocation11 + $0x478] sm:$0xff]
    %v8467 = vld [vmem:[#allocation11 + $0x480] sm:$0xff]
    %v8468 = vld [vmem:[#allocation11 + $0x488] sm:$0xff]
    %v8469 = vld [vmem:[#allocation11 + $0x490] sm:$0xff]
    %v8470 = vld [vmem:[#allocation11 + $0x498] sm:$0xff]
    %v8471 = vld [vmem:[#allocation11 + $0x4a0] sm:$0xff]
    %v8472 = vld [vmem:[#allocation11 + $0x4a8] sm:$0xff]
    %v8473 = vld [vmem:[#allocation11 + $0x4b0] sm:$0xff]
    %v8474 = vld [vmem:[#allocation11 + $0x4b8] sm:$0xff]
    %v8475 = vld [vmem:[#allocation11 + $0x4c0] sm:$0xff]
    %v8476 = vld [vmem:[#allocation11 + $0x4c8] sm:$0xff]
    %v8477 = vld [vmem:[#allocation11 + $0x4d0] sm:$0xff]
    %v8478 = vld [vmem:[#allocation11 + $0x4d8] sm:$0xff]
    %v8479 = vld [vmem:[#allocation11 + $0x4e0] sm:$0xff]
    %v8480 = vld [vmem:[#allocation11 + $0x4e8] sm:$0xff]
    %v8481 = vld [vmem:[#allocation11 + $0x4f0] sm:$0xff]
    %v8482 = vld [vmem:[#allocation11 + $0x4f8] sm:$0xff]
    %v8483 = vld [vmem:[#allocation11 + $0x500] sm:$0xff]
    %v8484 = vld [vmem:[#allocation11 + $0x508] sm:$0xff]
    %v8485 = vld [vmem:[#allocation11 + $0x510] sm:$0xff]
    %v8486 = vld [vmem:[#allocation11 + $0x518] sm:$0xff]
    %v8487 = vld [vmem:[#allocation11 + $0x520] sm:$0xff]
    %v8488 = vld [vmem:[#allocation11 + $0x528] sm:$0xff]
    %v8489 = vld [vmem:[#allocation11 + $0x530] sm:$0xff]
    %v8490 = vld [vmem:[#allocation11 + $0x538] sm:$0xff]
    %v8491 = vld [vmem:[#allocation11 + $0x540] sm:$0xff]
    %v8492 = vld [vmem:[#allocation11 + $0x548] sm:$0xff]
    %v8493 = vld [vmem:[#allocation11 + $0x550] sm:$0xff]
    %v8494 = vld [vmem:[#allocation11 + $0x558] sm:$0xff]
    %v8495 = vld [vmem:[#allocation11 + $0x560] sm:$0xff]
    %v8496 = vld [vmem:[#allocation11 + $0x568] sm:$0xff]
    %v8497 = vld [vmem:[#allocation11 + $0x570] sm:$0xff]
    %v8498 = vld [vmem:[#allocation11 + $0x578] sm:$0xff]
    %v8499 = vld [vmem:[#allocation11 + $0x580] sm:$0xff]
    %v8500 = vld [vmem:[#allocation11 + $0x588] sm:$0xff]
    %v8501 = vld [vmem:[#allocation11 + $0x590] sm:$0xff]
    %v8502 = vld [vmem:[#allocation11 + $0x598] sm:$0xff]
    %v8503 = vld [vmem:[#allocation11 + $0x5a0] sm:$0xff]
    %v8504 = vld [vmem:[#allocation11 + $0x5a8] sm:$0xff]
    %v8505 = vld [vmem:[#allocation11 + $0x5b0] sm:$0xff]
    %v8506 = vld [vmem:[#allocation11 + $0x5b8] sm:$0xff]
    %v8507 = vld [vmem:[#allocation11 + $0x5c0] sm:$0xff]
    %v8508 = vld [vmem:[#allocation11 + $0x5c8] sm:$0xff]
    %v8509 = vld [vmem:[#allocation11 + $0x5d0] sm:$0xff]
    %v8510 = vld [vmem:[#allocation11 + $0x5d8] sm:$0xff]
    %v8511 = vld [vmem:[#allocation11 + $0x5e0] sm:$0xff]
    %v8512 = vld [vmem:[#allocation11 + $0x5e8] sm:$0xff]
    %v8513 = vld [vmem:[#allocation11 + $0x5f0] sm:$0xff]
    %v8514 = vld [vmem:[#allocation11 + $0x5f8] sm:$0xff]
    %v8515 = vld [vmem:[#allocation11 + $0x600] sm:$0xff]
    %v8516 = vld [vmem:[#allocation11 + $0x608] sm:$0xff]
    %v8517 = vld [vmem:[#allocation11 + $0x610] sm:$0xff]
    %v8518 = vld [vmem:[#allocation11 + $0x618] sm:$0xff]
    %v8519 = vld [vmem:[#allocation11 + $0x620] sm:$0xff]
    %v8520 = vld [vmem:[#allocation11 + $0x628] sm:$0xff]
    %v8521 = vld [vmem:[#allocation11 + $0x630] sm:$0xff]
    %v8522 = vld [vmem:[#allocation11 + $0x638] sm:$0xff]
    %v8523 = vld [vmem:[#allocation11 + $0x640] sm:$0xff]
    %v8524 = vld [vmem:[#allocation11 + $0x648] sm:$0xff]
    %v8525 = vld [vmem:[#allocation11 + $0x650] sm:$0xff]
    %v8526 = vld [vmem:[#allocation11 + $0x658] sm:$0xff]
    %v8527 = vld [vmem:[#allocation11 + $0x660] sm:$0xff]
    %v8528 = vld [vmem:[#allocation11 + $0x668] sm:$0xff]
    %v8529 = vld [vmem:[#allocation11 + $0x670] sm:$0xff]
    %v8530 = vld [vmem:[#allocation11 + $0x678] sm:$0xff]
    %v8531 = vld [vmem:[#allocation11 + $0x680] sm:$0xff]
    %v8532 = vld [vmem:[#allocation11 + $0x688] sm:$0xff]
    %v8533 = vld [vmem:[#allocation11 + $0x690] sm:$0xff]
    %v8534 = vld [vmem:[#allocation11 + $0x698] sm:$0xff]
    %v8535 = vld [vmem:[#allocation11 + $0x6a0] sm:$0xff]
    %v8536 = vld [vmem:[#allocation11 + $0x6a8] sm:$0xff]
    %v8537 = vld [vmem:[#allocation11 + $0x6b0] sm:$0xff]
    %v8538 = vld [vmem:[#allocation11 + $0x6b8] sm:$0xff]
    %v8539 = vld [vmem:[#allocation11 + $0x6c0] sm:$0xff]
    %v8540 = vld [vmem:[#allocation11 + $0x6c8] sm:$0xff]
    %v8541 = vld [vmem:[#allocation11 + $0x6d0] sm:$0xff]
    %v8542 = vld [vmem:[#allocation11 + $0x6d8] sm:$0xff]
    %v8543 = vld [vmem:[#allocation11 + $0x6e0] sm:$0xff]
    %v8544 = vld [vmem:[#allocation11 + $0x6e8] sm:$0xff]
    %v8545 = vld [vmem:[#allocation11 + $0x6f0] sm:$0xff]
    %v8546 = vld [vmem:[#allocation11 + $0x6f8] sm:$0xff]
    %v8547 = vld [vmem:[#allocation11 + $0x700] sm:$0xff]
    %v8548 = vld [vmem:[#allocation11 + $0x708] sm:$0xff]
    %v8549 = vld [vmem:[#allocation11 + $0x710] sm:$0xff]
    %v8550 = vld [vmem:[#allocation11 + $0x718] sm:$0xff]
    %v8551 = vld [vmem:[#allocation11 + $0x720] sm:$0xff]
    %v8552 = vld [vmem:[#allocation11 + $0x728] sm:$0xff]
    %v8553 = vld [vmem:[#allocation11 + $0x730] sm:$0xff]
    %v8554 = vld [vmem:[#allocation11 + $0x738] sm:$0xff]
    %v8555 = vld [vmem:[#allocation11 + $0x740] sm:$0xff]
    %v8556 = vld [vmem:[#allocation11 + $0x748] sm:$0xff]
    %v8557 = vld [vmem:[#allocation11 + $0x750] sm:$0xff]
    %v8558 = vld [vmem:[#allocation11 + $0x758] sm:$0xff]
    %v8559 = vld [vmem:[#allocation11 + $0x760] sm:$0xff]
    %v8560 = vld [vmem:[#allocation11 + $0x768] sm:$0xff]
    %v8561 = vld [vmem:[#allocation11 + $0x770] sm:$0xff]
    %v8562 = vld [vmem:[#allocation11 + $0x778] sm:$0xff]
    %v8563 = vld [vmem:[#allocation11 + $0x780] sm:$0xff]
    %v8564 = vld [vmem:[#allocation11 + $0x788] sm:$0xff]
    %v8565 = vld [vmem:[#allocation11 + $0x790] sm:$0xff]
    %v8566 = vld [vmem:[#allocation11 + $0x798] sm:$0xff]
    %v8567 = vld [vmem:[#allocation11 + $0x7a0] sm:$0xff]
    %v8568 = vld [vmem:[#allocation11 + $0x7a8] sm:$0xff]
    %v8569 = vld [vmem:[#allocation11 + $0x7b0] sm:$0xff]
    %v8570 = vld [vmem:[#allocation11 + $0x7b8] sm:$0xff]
    %v8571 = vld [vmem:[#allocation11 + $0x7c0] sm:$0xff]
    %v8572 = vld [vmem:[#allocation11 + $0x7c8] sm:$0xff]
    %v8573 = vld [vmem:[#allocation11 + $0x7d0] sm:$0xff]
    %v8574 = vld [vmem:[#allocation11 + $0x7d8] sm:$0xff]
    %v8575 = vld [vmem:[#allocation11 + $0x7e0] sm:$0xff]
    %v8576 = vld [vmem:[#allocation11 + $0x7e8] sm:$0xff]
    %v8577 = vld [vmem:[#allocation11 + $0x7f0] sm:$0xff]
    %v8578 = vld [vmem:[#allocation11 + $0x7f8] sm:$0xff]
    %v8579 = vld [vmem:[#allocation13] sm:$0xf]
    %v8581 = vlaneseq
    %v8582 = vshrl.u32 %v8581, 7
    %v8583 = vsub.s32 0, %v8582
    %v8584 = vrot.slane %v8579, %v8583
    %v8585 = vlaneseq
    %v8586 = vshrl.u32 %v8585, 7
    %v8587 = vsub.s32 1, %v8586
    %v8588 = vrot.slane %v8579, %v8587
    %v8589 = vlaneseq
    %v8590 = vshrl.u32 %v8589, 7
    %v8591 = vsub.s32 2, %v8590
    %v8592 = vrot.slane %v8579, %v8591
    %v8593 = vlaneseq
    %v8594 = vshrl.u32 %v8593, 7
    %v8595 = vsub.s32 3, %v8594
    %v8596 = vrot.slane %v8579, %v8595
    %v8857 = vunpack.c.l.b16 %v8323
    %v8858 = vunpack.c.h.b16 %v8323
    %v8859 = vunpack.c.l.b16 %v8324
    %v8860 = vunpack.c.h.b16 %v8324
    %v8861 = vunpack.c.l.b16 %v8325
    %v8862 = vunpack.c.h.b16 %v8325
    %v8863 = vunpack.c.l.b16 %v8326
    %v8864 = vunpack.c.h.b16 %v8326
    %v8865 = vunpack.c.l.b16 %v8327
    %v8866 = vunpack.c.h.b16 %v8327
    %v8867 = vunpack.c.l.b16 %v8328
    %v8868 = vunpack.c.h.b16 %v8328
    %v8869 = vunpack.c.l.b16 %v8329
    %v8870 = vunpack.c.h.b16 %v8329
    %v8871 = vunpack.c.l.b16 %v8330
    %v8872 = vunpack.c.h.b16 %v8330
    %v8873 = vunpack.c.l.b16 %v8331
    %v8874 = vunpack.c.h.b16 %v8331
    %v8875 = vunpack.c.l.b16 %v8332
    %v8876 = vunpack.c.h.b16 %v8332
    %v8877 = vunpack.c.l.b16 %v8333
    %v8878 = vunpack.c.h.b16 %v8333
    %v8879 = vunpack.c.l.b16 %v8334
    %v8880 = vunpack.c.h.b16 %v8334
    %v8881 = vunpack.c.l.b16 %v8335
    %v8882 = vunpack.c.h.b16 %v8335
    %v8883 = vunpack.c.l.b16 %v8336
    %v8884 = vunpack.c.h.b16 %v8336
    %v8885 = vunpack.c.l.b16 %v8337
    %v8886 = vunpack.c.h.b16 %v8337
    %v8887 = vunpack.c.l.b16 %v8338
    %v8888 = vunpack.c.h.b16 %v8338
    %v8889 = vunpack.c.l.b16 %v8339
    %v8890 = vunpack.c.h.b16 %v8339
    %v8891 = vunpack.c.l.b16 %v8340
    %v8892 = vunpack.c.h.b16 %v8340
    %v8893 = vunpack.c.l.b16 %v8341
    %v8894 = vunpack.c.h.b16 %v8341
    %v8895 = vunpack.c.l.b16 %v8342
    %v8896 = vunpack.c.h.b16 %v8342
    %v8897 = vunpack.c.l.b16 %v8343
    %v8898 = vunpack.c.h.b16 %v8343
    %v8899 = vunpack.c.l.b16 %v8344
    %v8900 = vunpack.c.h.b16 %v8344
    %v8901 = vunpack.c.l.b16 %v8345
    %v8902 = vunpack.c.h.b16 %v8345
    %v8903 = vunpack.c.l.b16 %v8346
    %v8904 = vunpack.c.h.b16 %v8346
    %v8905 = vunpack.c.l.b16 %v8347
    %v8906 = vunpack.c.h.b16 %v8347
    %v8907 = vunpack.c.l.b16 %v8348
    %v8908 = vunpack.c.h.b16 %v8348
    %v8909 = vunpack.c.l.b16 %v8349
    %v8910 = vunpack.c.h.b16 %v8349
    %v8911 = vunpack.c.l.b16 %v8350
    %v8912 = vunpack.c.h.b16 %v8350
    %v8913 = vunpack.c.l.b16 %v8351
    %v8914 = vunpack.c.h.b16 %v8351
    %v8915 = vunpack.c.l.b16 %v8352
    %v8916 = vunpack.c.h.b16 %v8352
    %v8917 = vunpack.c.l.b16 %v8353
    %v8918 = vunpack.c.h.b16 %v8353
    %v8919 = vunpack.c.l.b16 %v8354
    %v8920 = vunpack.c.h.b16 %v8354
    %v8921 = vunpack.c.l.b16 %v8355
    %v8922 = vunpack.c.h.b16 %v8355
    %v8923 = vunpack.c.l.b16 %v8356
    %v8924 = vunpack.c.h.b16 %v8356
    %v8925 = vunpack.c.l.b16 %v8357
    %v8926 = vunpack.c.h.b16 %v8357
    %v8927 = vunpack.c.l.b16 %v8358
    %v8928 = vunpack.c.h.b16 %v8358
    %v8929 = vunpack.c.l.b16 %v8359
    %v8930 = vunpack.c.h.b16 %v8359
    %v8931 = vunpack.c.l.b16 %v8360
    %v8932 = vunpack.c.h.b16 %v8360
    %v8933 = vunpack.c.l.b16 %v8361
    %v8934 = vunpack.c.h.b16 %v8361
    %v8935 = vunpack.c.l.b16 %v8362
    %v8936 = vunpack.c.h.b16 %v8362
    %v8937 = vunpack.c.l.b16 %v8363
    %v8938 = vunpack.c.h.b16 %v8363
    %v8939 = vunpack.c.l.b16 %v8364
    %v8940 = vunpack.c.h.b16 %v8364
    %v8941 = vunpack.c.l.b16 %v8365
    %v8942 = vunpack.c.h.b16 %v8365
    %v8943 = vunpack.c.l.b16 %v8366
    %v8944 = vunpack.c.h.b16 %v8366
    %v8945 = vunpack.c.l.b16 %v8367
    %v8946 = vunpack.c.h.b16 %v8367
    %v8947 = vunpack.c.l.b16 %v8368
    %v8948 = vunpack.c.h.b16 %v8368
    %v8949 = vunpack.c.l.b16 %v8369
    %v8950 = vunpack.c.h.b16 %v8369
    %v8951 = vunpack.c.l.b16 %v8370
    %v8952 = vunpack.c.h.b16 %v8370
    %v8953 = vunpack.c.l.b16 %v8371
    %v8954 = vunpack.c.h.b16 %v8371
    %v8955 = vunpack.c.l.b16 %v8372
    %v8956 = vunpack.c.h.b16 %v8372
    %v8957 = vunpack.c.l.b16 %v8373
    %v8958 = vunpack.c.h.b16 %v8373
    %v8959 = vunpack.c.l.b16 %v8374
    %v8960 = vunpack.c.h.b16 %v8374
    %v8961 = vunpack.c.l.b16 %v8375
    %v8962 = vunpack.c.h.b16 %v8375
    %v8963 = vunpack.c.l.b16 %v8376
    %v8964 = vunpack.c.h.b16 %v8376
    %v8965 = vunpack.c.l.b16 %v8377
    %v8966 = vunpack.c.h.b16 %v8377
    %v8967 = vunpack.c.l.b16 %v8378
    %v8968 = vunpack.c.h.b16 %v8378
    %v8969 = vunpack.c.l.b16 %v8379
    %v8970 = vunpack.c.h.b16 %v8379
    %v8971 = vunpack.c.l.b16 %v8380
    %v8972 = vunpack.c.h.b16 %v8380
    %v8973 = vunpack.c.l.b16 %v8381
    %v8974 = vunpack.c.h.b16 %v8381
    %v8975 = vunpack.c.l.b16 %v8382
    %v8976 = vunpack.c.h.b16 %v8382
    %v8977 = vunpack.c.l.b16 %v8383
    %v8978 = vunpack.c.h.b16 %v8383
    %v8979 = vunpack.c.l.b16 %v8384
    %v8980 = vunpack.c.h.b16 %v8384
    %v8981 = vunpack.c.l.b16 %v8385
    %v8982 = vunpack.c.h.b16 %v8385
    %v8983 = vunpack.c.l.b16 %v8386
    %v8984 = vunpack.c.h.b16 %v8386
    %v8985 = vunpack.c.l.b16 %v8387
    %v8986 = vunpack.c.h.b16 %v8387
    %v8987 = vunpack.c.l.b16 %v8388
    %v8988 = vunpack.c.h.b16 %v8388
    %v8989 = vunpack.c.l.b16 %v8389
    %v8990 = vunpack.c.h.b16 %v8389
    %v8991 = vunpack.c.l.b16 %v8390
    %v8992 = vunpack.c.h.b16 %v8390
    %v8993 = vunpack.c.l.b16 %v8391
    %v8994 = vunpack.c.h.b16 %v8391
    %v8995 = vunpack.c.l.b16 %v8392
    %v8996 = vunpack.c.h.b16 %v8392
    %v8997 = vunpack.c.l.b16 %v8393
    %v8998 = vunpack.c.h.b16 %v8393
    %v8999 = vunpack.c.l.b16 %v8394
    %v9000 = vunpack.c.h.b16 %v8394
    %v9001 = vunpack.c.l.b16 %v8395
    %v9002 = vunpack.c.h.b16 %v8395
    %v9003 = vunpack.c.l.b16 %v8396
    %v9004 = vunpack.c.h.b16 %v8396
    %v9005 = vunpack.c.l.b16 %v8397
    %v9006 = vunpack.c.h.b16 %v8397
    %v9007 = vunpack.c.l.b16 %v8398
    %v9008 = vunpack.c.h.b16 %v8398
    %v9009 = vunpack.c.l.b16 %v8399
    %v9010 = vunpack.c.h.b16 %v8399
    %v9011 = vunpack.c.l.b16 %v8400
    %v9012 = vunpack.c.h.b16 %v8400
    %v9013 = vunpack.c.l.b16 %v8401
    %v9014 = vunpack.c.h.b16 %v8401
    %v9015 = vunpack.c.l.b16 %v8402
    %v9016 = vunpack.c.h.b16 %v8402
    %v9017 = vunpack.c.l.b16 %v8403
    %v9018 = vunpack.c.h.b16 %v8403
    %v9019 = vunpack.c.l.b16 %v8404
    %v9020 = vunpack.c.h.b16 %v8404
    %v9021 = vunpack.c.l.b16 %v8405
    %v9022 = vunpack.c.h.b16 %v8405
    %v9023 = vunpack.c.l.b16 %v8406
    %v9024 = vunpack.c.h.b16 %v8406
    %v9025 = vunpack.c.l.b16 %v8407
    %v9026 = vunpack.c.h.b16 %v8407
    %v9027 = vunpack.c.l.b16 %v8408
    %v9028 = vunpack.c.h.b16 %v8408
    %v9029 = vunpack.c.l.b16 %v8409
    %v9030 = vunpack.c.h.b16 %v8409
    %v9031 = vunpack.c.l.b16 %v8410
    %v9032 = vunpack.c.h.b16 %v8410
    %v9033 = vunpack.c.l.b16 %v8411
    %v9034 = vunpack.c.h.b16 %v8411
    %v9035 = vunpack.c.l.b16 %v8412
    %v9036 = vunpack.c.h.b16 %v8412
    %v9037 = vunpack.c.l.b16 %v8413
    %v9038 = vunpack.c.h.b16 %v8413
    %v9039 = vunpack.c.l.b16 %v8414
    %v9040 = vunpack.c.h.b16 %v8414
    %v9041 = vunpack.c.l.b16 %v8415
    %v9042 = vunpack.c.h.b16 %v8415
    %v9043 = vunpack.c.l.b16 %v8416
    %v9044 = vunpack.c.h.b16 %v8416
    %v9045 = vunpack.c.l.b16 %v8417
    %v9046 = vunpack.c.h.b16 %v8417
    %v9047 = vunpack.c.l.b16 %v8418
    %v9048 = vunpack.c.h.b16 %v8418
    %v9049 = vunpack.c.l.b16 %v8419
    %v9050 = vunpack.c.h.b16 %v8419
    %v9051 = vunpack.c.l.b16 %v8420
    %v9052 = vunpack.c.h.b16 %v8420
    %v9053 = vunpack.c.l.b16 %v8421
    %v9054 = vunpack.c.h.b16 %v8421
    %v9055 = vunpack.c.l.b16 %v8422
    %v9056 = vunpack.c.h.b16 %v8422
    %v9057 = vunpack.c.l.b16 %v8423
    %v9058 = vunpack.c.h.b16 %v8423
    %v9059 = vunpack.c.l.b16 %v8424
    %v9060 = vunpack.c.h.b16 %v8424
    %v9061 = vunpack.c.l.b16 %v8425
    %v9062 = vunpack.c.h.b16 %v8425
    %v9063 = vunpack.c.l.b16 %v8426
    %v9064 = vunpack.c.h.b16 %v8426
    %v9065 = vunpack.c.l.b16 %v8427
    %v9066 = vunpack.c.h.b16 %v8427
    %v9067 = vunpack.c.l.b16 %v8428
    %v9068 = vunpack.c.h.b16 %v8428
    %v9069 = vunpack.c.l.b16 %v8429
    %v9070 = vunpack.c.h.b16 %v8429
    %v9071 = vunpack.c.l.b16 %v8430
    %v9072 = vunpack.c.h.b16 %v8430
    %v9073 = vunpack.c.l.b16 %v8431
    %v9074 = vunpack.c.h.b16 %v8431
    %v9075 = vunpack.c.l.b16 %v8432
    %v9076 = vunpack.c.h.b16 %v8432
    %v9077 = vunpack.c.l.b16 %v8433
    %v9078 = vunpack.c.h.b16 %v8433
    %v9079 = vunpack.c.l.b16 %v8434
    %v9080 = vunpack.c.h.b16 %v8434
    %v9081 = vunpack.c.l.b16 %v8435
    %v9082 = vunpack.c.h.b16 %v8435
    %v9083 = vunpack.c.l.b16 %v8436
    %v9084 = vunpack.c.h.b16 %v8436
    %v9085 = vunpack.c.l.b16 %v8437
    %v9086 = vunpack.c.h.b16 %v8437
    %v9087 = vunpack.c.l.b16 %v8438
    %v9088 = vunpack.c.h.b16 %v8438
    %v9089 = vunpack.c.l.b16 %v8439
    %v9090 = vunpack.c.h.b16 %v8439
    %v9091 = vunpack.c.l.b16 %v8440
    %v9092 = vunpack.c.h.b16 %v8440
    %v9093 = vunpack.c.l.b16 %v8441
    %v9094 = vunpack.c.h.b16 %v8441
    %v9095 = vunpack.c.l.b16 %v8442
    %v9096 = vunpack.c.h.b16 %v8442
    %v9097 = vunpack.c.l.b16 %v8443
    %v9098 = vunpack.c.h.b16 %v8443
    %v9099 = vunpack.c.l.b16 %v8444
    %v9100 = vunpack.c.h.b16 %v8444
    %v9101 = vunpack.c.l.b16 %v8445
    %v9102 = vunpack.c.h.b16 %v8445
    %v9103 = vunpack.c.l.b16 %v8446
    %v9104 = vunpack.c.h.b16 %v8446
    %v9105 = vunpack.c.l.b16 %v8447
    %v9106 = vunpack.c.h.b16 %v8447
    %v9107 = vunpack.c.l.b16 %v8448
    %v9108 = vunpack.c.h.b16 %v8448
    %v9109 = vunpack.c.l.b16 %v8449
    %v9110 = vunpack.c.h.b16 %v8449
    %v9111 = vunpack.c.l.b16 %v8450
    %v9112 = vunpack.c.h.b16 %v8450
    %v9113 = vunpack.c.l.b16 %v8451
    %v9114 = vunpack.c.h.b16 %v8451
    %v9115 = vunpack.c.l.b16 %v8452
    %v9116 = vunpack.c.h.b16 %v8452
    %v9117 = vunpack.c.l.b16 %v8453
    %v9118 = vunpack.c.h.b16 %v8453
    %v9119 = vunpack.c.l.b16 %v8454
    %v9120 = vunpack.c.h.b16 %v8454
    %v9121 = vunpack.c.l.b16 %v8455
    %v9122 = vunpack.c.h.b16 %v8455
    %v9123 = vunpack.c.l.b16 %v8456
    %v9124 = vunpack.c.h.b16 %v8456
    %v9125 = vunpack.c.l.b16 %v8457
    %v9126 = vunpack.c.h.b16 %v8457
    %v9127 = vunpack.c.l.b16 %v8458
    %v9128 = vunpack.c.h.b16 %v8458
    %v9129 = vunpack.c.l.b16 %v8459
    %v9130 = vunpack.c.h.b16 %v8459
    %v9131 = vunpack.c.l.b16 %v8460
    %v9132 = vunpack.c.h.b16 %v8460
    %v9133 = vunpack.c.l.b16 %v8461
    %v9134 = vunpack.c.h.b16 %v8461
    %v9135 = vunpack.c.l.b16 %v8462
    %v9136 = vunpack.c.h.b16 %v8462
    %v9137 = vunpack.c.l.b16 %v8463
    %v9138 = vunpack.c.h.b16 %v8463
    %v9139 = vunpack.c.l.b16 %v8464
    %v9140 = vunpack.c.h.b16 %v8464
    %v9141 = vunpack.c.l.b16 %v8465
    %v9142 = vunpack.c.h.b16 %v8465
    %v9143 = vunpack.c.l.b16 %v8466
    %v9144 = vunpack.c.h.b16 %v8466
    %v9145 = vunpack.c.l.b16 %v8467
    %v9146 = vunpack.c.h.b16 %v8467
    %v9147 = vunpack.c.l.b16 %v8468
    %v9148 = vunpack.c.h.b16 %v8468
    %v9149 = vunpack.c.l.b16 %v8469
    %v9150 = vunpack.c.h.b16 %v8469
    %v9151 = vunpack.c.l.b16 %v8470
    %v9152 = vunpack.c.h.b16 %v8470
    %v9153 = vunpack.c.l.b16 %v8471
    %v9154 = vunpack.c.h.b16 %v8471
    %v9155 = vunpack.c.l.b16 %v8472
    %v9156 = vunpack.c.h.b16 %v8472
    %v9157 = vunpack.c.l.b16 %v8473
    %v9158 = vunpack.c.h.b16 %v8473
    %v9159 = vunpack.c.l.b16 %v8474
    %v9160 = vunpack.c.h.b16 %v8474
    %v9161 = vunpack.c.l.b16 %v8475
    %v9162 = vunpack.c.h.b16 %v8475
    %v9163 = vunpack.c.l.b16 %v8476
    %v9164 = vunpack.c.h.b16 %v8476
    %v9165 = vunpack.c.l.b16 %v8477
    %v9166 = vunpack.c.h.b16 %v8477
    %v9167 = vunpack.c.l.b16 %v8478
    %v9168 = vunpack.c.h.b16 %v8478
    %v9169 = vunpack.c.l.b16 %v8479
    %v9170 = vunpack.c.h.b16 %v8479
    %v9171 = vunpack.c.l.b16 %v8480
    %v9172 = vunpack.c.h.b16 %v8480
    %v9173 = vunpack.c.l.b16 %v8481
    %v9174 = vunpack.c.h.b16 %v8481
    %v9175 = vunpack.c.l.b16 %v8482
    %v9176 = vunpack.c.h.b16 %v8482
    %v9177 = vunpack.c.l.b16 %v8483
    %v9178 = vunpack.c.h.b16 %v8483
    %v9179 = vunpack.c.l.b16 %v8484
    %v9180 = vunpack.c.h.b16 %v8484
    %v9181 = vunpack.c.l.b16 %v8485
    %v9182 = vunpack.c.h.b16 %v8485
    %v9183 = vunpack.c.l.b16 %v8486
    %v9184 = vunpack.c.h.b16 %v8486
    %v9185 = vunpack.c.l.b16 %v8487
    %v9186 = vunpack.c.h.b16 %v8487
    %v9187 = vunpack.c.l.b16 %v8488
    %v9188 = vunpack.c.h.b16 %v8488
    %v9189 = vunpack.c.l.b16 %v8489
    %v9190 = vunpack.c.h.b16 %v8489
    %v9191 = vunpack.c.l.b16 %v8490
    %v9192 = vunpack.c.h.b16 %v8490
    %v9193 = vunpack.c.l.b16 %v8491
    %v9194 = vunpack.c.h.b16 %v8491
    %v9195 = vunpack.c.l.b16 %v8492
    %v9196 = vunpack.c.h.b16 %v8492
    %v9197 = vunpack.c.l.b16 %v8493
    %v9198 = vunpack.c.h.b16 %v8493
    %v9199 = vunpack.c.l.b16 %v8494
    %v9200 = vunpack.c.h.b16 %v8494
    %v9201 = vunpack.c.l.b16 %v8495
    %v9202 = vunpack.c.h.b16 %v8495
    %v9203 = vunpack.c.l.b16 %v8496
    %v9204 = vunpack.c.h.b16 %v8496
    %v9205 = vunpack.c.l.b16 %v8497
    %v9206 = vunpack.c.h.b16 %v8497
    %v9207 = vunpack.c.l.b16 %v8498
    %v9208 = vunpack.c.h.b16 %v8498
    %v9209 = vunpack.c.l.b16 %v8499
    %v9210 = vunpack.c.h.b16 %v8499
    %v9211 = vunpack.c.l.b16 %v8500
    %v9212 = vunpack.c.h.b16 %v8500
    %v9213 = vunpack.c.l.b16 %v8501
    %v9214 = vunpack.c.h.b16 %v8501
    %v9215 = vunpack.c.l.b16 %v8502
    %v9216 = vunpack.c.h.b16 %v8502
    %v9217 = vunpack.c.l.b16 %v8503
    %v9218 = vunpack.c.h.b16 %v8503
    %v9219 = vunpack.c.l.b16 %v8504
    %v9220 = vunpack.c.h.b16 %v8504
    %v9221 = vunpack.c.l.b16 %v8505
    %v9222 = vunpack.c.h.b16 %v8505
    %v9223 = vunpack.c.l.b16 %v8506
    %v9224 = vunpack.c.h.b16 %v8506
    %v9225 = vunpack.c.l.b16 %v8507
    %v9226 = vunpack.c.h.b16 %v8507
    %v9227 = vunpack.c.l.b16 %v8508
    %v9228 = vunpack.c.h.b16 %v8508
    %v9229 = vunpack.c.l.b16 %v8509
    %v9230 = vunpack.c.h.b16 %v8509
    %v9231 = vunpack.c.l.b16 %v8510
    %v9232 = vunpack.c.h.b16 %v8510
    %v9233 = vunpack.c.l.b16 %v8511
    %v9234 = vunpack.c.h.b16 %v8511
    %v9235 = vunpack.c.l.b16 %v8512
    %v9236 = vunpack.c.h.b16 %v8512
    %v9237 = vunpack.c.l.b16 %v8513
    %v9238 = vunpack.c.h.b16 %v8513
    %v9239 = vunpack.c.l.b16 %v8514
    %v9240 = vunpack.c.h.b16 %v8514
    %v9241 = vunpack.c.l.b16 %v8515
    %v9242 = vunpack.c.h.b16 %v8515
    %v9243 = vunpack.c.l.b16 %v8516
    %v9244 = vunpack.c.h.b16 %v8516
    %v9245 = vunpack.c.l.b16 %v8517
    %v9246 = vunpack.c.h.b16 %v8517
    %v9247 = vunpack.c.l.b16 %v8518
    %v9248 = vunpack.c.h.b16 %v8518
    %v9249 = vunpack.c.l.b16 %v8519
    %v9250 = vunpack.c.h.b16 %v8519
    %v9251 = vunpack.c.l.b16 %v8520
    %v9252 = vunpack.c.h.b16 %v8520
    %v9253 = vunpack.c.l.b16 %v8521
    %v9254 = vunpack.c.h.b16 %v8521
    %v9255 = vunpack.c.l.b16 %v8522
    %v9256 = vunpack.c.h.b16 %v8522
    %v9257 = vunpack.c.l.b16 %v8523
    %v9258 = vunpack.c.h.b16 %v8523
    %v9259 = vunpack.c.l.b16 %v8524
    %v9260 = vunpack.c.h.b16 %v8524
    %v9261 = vunpack.c.l.b16 %v8525
    %v9262 = vunpack.c.h.b16 %v8525
    %v9263 = vunpack.c.l.b16 %v8526
    %v9264 = vunpack.c.h.b16 %v8526
    %v9265 = vunpack.c.l.b16 %v8527
    %v9266 = vunpack.c.h.b16 %v8527
    %v9267 = vunpack.c.l.b16 %v8528
    %v9268 = vunpack.c.h.b16 %v8528
    %v9269 = vunpack.c.l.b16 %v8529
    %v9270 = vunpack.c.h.b16 %v8529
    %v9271 = vunpack.c.l.b16 %v8530
    %v9272 = vunpack.c.h.b16 %v8530
    %v9273 = vunpack.c.l.b16 %v8531
    %v9274 = vunpack.c.h.b16 %v8531
    %v9275 = vunpack.c.l.b16 %v8532
    %v9276 = vunpack.c.h.b16 %v8532
    %v9277 = vunpack.c.l.b16 %v8533
    %v9278 = vunpack.c.h.b16 %v8533
    %v9279 = vunpack.c.l.b16 %v8534
    %v9280 = vunpack.c.h.b16 %v8534
    %v9281 = vunpack.c.l.b16 %v8535
    %v9282 = vunpack.c.h.b16 %v8535
    %v9283 = vunpack.c.l.b16 %v8536
    %v9284 = vunpack.c.h.b16 %v8536
    %v9285 = vunpack.c.l.b16 %v8537
    %v9286 = vunpack.c.h.b16 %v8537
    %v9287 = vunpack.c.l.b16 %v8538
    %v9288 = vunpack.c.h.b16 %v8538
    %v9289 = vunpack.c.l.b16 %v8539
    %v9290 = vunpack.c.h.b16 %v8539
    %v9291 = vunpack.c.l.b16 %v8540
    %v9292 = vunpack.c.h.b16 %v8540
    %v9293 = vunpack.c.l.b16 %v8541
    %v9294 = vunpack.c.h.b16 %v8541
    %v9295 = vunpack.c.l.b16 %v8542
    %v9296 = vunpack.c.h.b16 %v8542
    %v9297 = vunpack.c.l.b16 %v8543
    %v9298 = vunpack.c.h.b16 %v8543
    %v9299 = vunpack.c.l.b16 %v8544
    %v9300 = vunpack.c.h.b16 %v8544
    %v9301 = vunpack.c.l.b16 %v8545
    %v9302 = vunpack.c.h.b16 %v8545
    %v9303 = vunpack.c.l.b16 %v8546
    %v9304 = vunpack.c.h.b16 %v8546
    %v9305 = vunpack.c.l.b16 %v8547
    %v9306 = vunpack.c.h.b16 %v8547
    %v9307 = vunpack.c.l.b16 %v8548
    %v9308 = vunpack.c.h.b16 %v8548
    %v9309 = vunpack.c.l.b16 %v8549
    %v9310 = vunpack.c.h.b16 %v8549
    %v9311 = vunpack.c.l.b16 %v8550
    %v9312 = vunpack.c.h.b16 %v8550
    %v9313 = vunpack.c.l.b16 %v8551
    %v9314 = vunpack.c.h.b16 %v8551
    %v9315 = vunpack.c.l.b16 %v8552
    %v9316 = vunpack.c.h.b16 %v8552
    %v9317 = vunpack.c.l.b16 %v8553
    %v9318 = vunpack.c.h.b16 %v8553
    %v9319 = vunpack.c.l.b16 %v8554
    %v9320 = vunpack.c.h.b16 %v8554
    %v9321 = vunpack.c.l.b16 %v8555
    %v9322 = vunpack.c.h.b16 %v8555
    %v9323 = vunpack.c.l.b16 %v8556
    %v9324 = vunpack.c.h.b16 %v8556
    %v9325 = vunpack.c.l.b16 %v8557
    %v9326 = vunpack.c.h.b16 %v8557
    %v9327 = vunpack.c.l.b16 %v8558
    %v9328 = vunpack.c.h.b16 %v8558
    %v9329 = vunpack.c.l.b16 %v8559
    %v9330 = vunpack.c.h.b16 %v8559
    %v9331 = vunpack.c.l.b16 %v8560
    %v9332 = vunpack.c.h.b16 %v8560
    %v9333 = vunpack.c.l.b16 %v8561
    %v9334 = vunpack.c.h.b16 %v8561
    %v9335 = vunpack.c.l.b16 %v8562
    %v9336 = vunpack.c.h.b16 %v8562
    %v9337 = vunpack.c.l.b16 %v8563
    %v9338 = vunpack.c.h.b16 %v8563
    %v9339 = vunpack.c.l.b16 %v8564
    %v9340 = vunpack.c.h.b16 %v8564
    %v9341 = vunpack.c.l.b16 %v8565
    %v9342 = vunpack.c.h.b16 %v8565
    %v9343 = vunpack.c.l.b16 %v8566
    %v9344 = vunpack.c.h.b16 %v8566
    %v9345 = vunpack.c.l.b16 %v8567
    %v9346 = vunpack.c.h.b16 %v8567
    %v9347 = vunpack.c.l.b16 %v8568
    %v9348 = vunpack.c.h.b16 %v8568
    %v9349 = vunpack.c.l.b16 %v8569
    %v9350 = vunpack.c.h.b16 %v8569
    %v9351 = vunpack.c.l.b16 %v8570
    %v9352 = vunpack.c.h.b16 %v8570
    %v9353 = vunpack.c.l.b16 %v8571
    %v9354 = vunpack.c.h.b16 %v8571
    %v9355 = vunpack.c.l.b16 %v8572
    %v9356 = vunpack.c.h.b16 %v8572
    %v9357 = vunpack.c.l.b16 %v8573
    %v9358 = vunpack.c.h.b16 %v8573
    %v9359 = vunpack.c.l.b16 %v8574
    %v9360 = vunpack.c.h.b16 %v8574
    %v9361 = vunpack.c.l.b16 %v8575
    %v9362 = vunpack.c.h.b16 %v8575
    %v9363 = vunpack.c.l.b16 %v8576
    %v9364 = vunpack.c.h.b16 %v8576
    %v9365 = vunpack.c.l.b16 %v8577
    %v9366 = vunpack.c.h.b16 %v8577
    %v9367 = vunpack.c.l.b16 %v8578
    %v9368 = vunpack.c.h.b16 %v8578
    %v9369 = vpack.c.b16 %v8861, %v8857
    %v9370 = vpack.c.b16 %v8862, %v8858
    %v9371 = vpack.c.b16 %v8863, %v8859
    %v9372 = vpack.c.b16 %v8864, %v8860
    %v9373 = vpack.c.b16 %v8869, %v8865
    %v9374 = vpack.c.b16 %v8870, %v8866
    %v9375 = vpack.c.b16 %v8871, %v8867
    %v9376 = vpack.c.b16 %v8872, %v8868
    %v9377 = vpack.c.b16 %v8877, %v8873
    %v9378 = vpack.c.b16 %v8878, %v8874
    %v9379 = vpack.c.b16 %v8879, %v8875
    %v9380 = vpack.c.b16 %v8880, %v8876
    %v9381 = vpack.c.b16 %v8885, %v8881
    %v9382 = vpack.c.b16 %v8886, %v8882
    %v9383 = vpack.c.b16 %v8887, %v8883
    %v9384 = vpack.c.b16 %v8888, %v8884
    %v9385 = vpack.c.b16 %v8893, %v8889
    %v9386 = vpack.c.b16 %v8894, %v8890
    %v9387 = vpack.c.b16 %v8895, %v8891
    %v9388 = vpack.c.b16 %v8896, %v8892
    %v9389 = vpack.c.b16 %v8901, %v8897
    %v9390 = vpack.c.b16 %v8902, %v8898
    %v9391 = vpack.c.b16 %v8903, %v8899
    %v9392 = vpack.c.b16 %v8904, %v8900
    %v9393 = vpack.c.b16 %v8909, %v8905
    %v9394 = vpack.c.b16 %v8910, %v8906
    %v9395 = vpack.c.b16 %v8911, %v8907
    %v9396 = vpack.c.b16 %v8912, %v8908
    %v9397 = vpack.c.b16 %v8917, %v8913
    %v9398 = vpack.c.b16 %v8918, %v8914
    %v9399 = vpack.c.b16 %v8919, %v8915
    %v9400 = vpack.c.b16 %v8920, %v8916
    %v9401 = vpack.c.b16 %v8925, %v8921
    %v9402 = vpack.c.b16 %v8926, %v8922
    %v9403 = vpack.c.b16 %v8927, %v8923
    %v9404 = vpack.c.b16 %v8928, %v8924
    %v9405 = vpack.c.b16 %v8933, %v8929
    %v9406 = vpack.c.b16 %v8934, %v8930
    %v9407 = vpack.c.b16 %v8935, %v8931
    %v9408 = vpack.c.b16 %v8936, %v8932
    %v9409 = vpack.c.b16 %v8941, %v8937
    %v9410 = vpack.c.b16 %v8942, %v8938
    %v9411 = vpack.c.b16 %v8943, %v8939
    %v9412 = vpack.c.b16 %v8944, %v8940
    %v9413 = vpack.c.b16 %v8949, %v8945
    %v9414 = vpack.c.b16 %v8950, %v8946
    %v9415 = vpack.c.b16 %v8951, %v8947
    %v9416 = vpack.c.b16 %v8952, %v8948
    %v9417 = vpack.c.b16 %v8957, %v8953
    %v9418 = vpack.c.b16 %v8958, %v8954
    %v9419 = vpack.c.b16 %v8959, %v8955
    %v9420 = vpack.c.b16 %v8960, %v8956
    %v9421 = vpack.c.b16 %v8965, %v8961
    %v9422 = vpack.c.b16 %v8966, %v8962
    %v9423 = vpack.c.b16 %v8967, %v8963
    %v9424 = vpack.c.b16 %v8968, %v8964
    %v9425 = vpack.c.b16 %v8973, %v8969
    %v9426 = vpack.c.b16 %v8974, %v8970
    %v9427 = vpack.c.b16 %v8975, %v8971
    %v9428 = vpack.c.b16 %v8976, %v8972
    %v9429 = vpack.c.b16 %v8981, %v8977
    %v9430 = vpack.c.b16 %v8982, %v8978
    %v9431 = vpack.c.b16 %v8983, %v8979
    %v9432 = vpack.c.b16 %v8984, %v8980
    %v9433 = vpack.c.b16 %v8989, %v8985
    %v9434 = vpack.c.b16 %v8990, %v8986
    %v9435 = vpack.c.b16 %v8991, %v8987
    %v9436 = vpack.c.b16 %v8992, %v8988
    %v9437 = vpack.c.b16 %v8997, %v8993
    %v9438 = vpack.c.b16 %v8998, %v8994
    %v9439 = vpack.c.b16 %v8999, %v8995
    %v9440 = vpack.c.b16 %v9000, %v8996
    %v9441 = vpack.c.b16 %v9005, %v9001
    %v9442 = vpack.c.b16 %v9006, %v9002
    %v9443 = vpack.c.b16 %v9007, %v9003
    %v9444 = vpack.c.b16 %v9008, %v9004
    %v9445 = vpack.c.b16 %v9013, %v9009
    %v9446 = vpack.c.b16 %v9014, %v9010
    %v9447 = vpack.c.b16 %v9015, %v9011
    %v9448 = vpack.c.b16 %v9016, %v9012
    %v9449 = vpack.c.b16 %v9021, %v9017
    %v9450 = vpack.c.b16 %v9022, %v9018
    %v9451 = vpack.c.b16 %v9023, %v9019
    %v9452 = vpack.c.b16 %v9024, %v9020
    %v9453 = vpack.c.b16 %v9029, %v9025
    %v9454 = vpack.c.b16 %v9030, %v9026
    %v9455 = vpack.c.b16 %v9031, %v9027
    %v9456 = vpack.c.b16 %v9032, %v9028
    %v9457 = vpack.c.b16 %v9037, %v9033
    %v9458 = vpack.c.b16 %v9038, %v9034
    %v9459 = vpack.c.b16 %v9039, %v9035
    %v9460 = vpack.c.b16 %v9040, %v9036
    %v9461 = vpack.c.b16 %v9045, %v9041
    %v9462 = vpack.c.b16 %v9046, %v9042
    %v9463 = vpack.c.b16 %v9047, %v9043
    %v9464 = vpack.c.b16 %v9048, %v9044
    %v9465 = vpack.c.b16 %v9053, %v9049
    %v9466 = vpack.c.b16 %v9054, %v9050
    %v9467 = vpack.c.b16 %v9055, %v9051
    %v9468 = vpack.c.b16 %v9056, %v9052
    %v9469 = vpack.c.b16 %v9061, %v9057
    %v9470 = vpack.c.b16 %v9062, %v9058
    %v9471 = vpack.c.b16 %v9063, %v9059
    %v9472 = vpack.c.b16 %v9064, %v9060
    %v9473 = vpack.c.b16 %v9069, %v9065
    %v9474 = vpack.c.b16 %v9070, %v9066
    %v9475 = vpack.c.b16 %v9071, %v9067
    %v9476 = vpack.c.b16 %v9072, %v9068
    %v9477 = vpack.c.b16 %v9077, %v9073
    %v9478 = vpack.c.b16 %v9078, %v9074
    %v9479 = vpack.c.b16 %v9079, %v9075
    %v9480 = vpack.c.b16 %v9080, %v9076
    %v9481 = vpack.c.b16 %v9085, %v9081
    %v9482 = vpack.c.b16 %v9086, %v9082
    %v9483 = vpack.c.b16 %v9087, %v9083
    %v9484 = vpack.c.b16 %v9088, %v9084
    %v9485 = vpack.c.b16 %v9093, %v9089
    %v9486 = vpack.c.b16 %v9094, %v9090
    %v9487 = vpack.c.b16 %v9095, %v9091
    %v9488 = vpack.c.b16 %v9096, %v9092
    %v9489 = vpack.c.b16 %v9101, %v9097
    %v9490 = vpack.c.b16 %v9102, %v9098
    %v9491 = vpack.c.b16 %v9103, %v9099
    %v9492 = vpack.c.b16 %v9104, %v9100
    %v9493 = vpack.c.b16 %v9109, %v9105
    %v9494 = vpack.c.b16 %v9110, %v9106
    %v9495 = vpack.c.b16 %v9111, %v9107
    %v9496 = vpack.c.b16 %v9112, %v9108
    %v9497 = vpack.c.b16 %v9117, %v9113
    %v9498 = vpack.c.b16 %v9118, %v9114
    %v9499 = vpack.c.b16 %v9119, %v9115
    %v9500 = vpack.c.b16 %v9120, %v9116
    %v9501 = vpack.c.b16 %v9125, %v9121
    %v9502 = vpack.c.b16 %v9126, %v9122
    %v9503 = vpack.c.b16 %v9127, %v9123
    %v9504 = vpack.c.b16 %v9128, %v9124
    %v9505 = vpack.c.b16 %v9133, %v9129
    %v9506 = vpack.c.b16 %v9134, %v9130
    %v9507 = vpack.c.b16 %v9135, %v9131
    %v9508 = vpack.c.b16 %v9136, %v9132
    %v9509 = vpack.c.b16 %v9141, %v9137
    %v9510 = vpack.c.b16 %v9142, %v9138
    %v9511 = vpack.c.b16 %v9143, %v9139
    %v9512 = vpack.c.b16 %v9144, %v9140
    %v9513 = vpack.c.b16 %v9149, %v9145
    %v9514 = vpack.c.b16 %v9150, %v9146
    %v9515 = vpack.c.b16 %v9151, %v9147
    %v9516 = vpack.c.b16 %v9152, %v9148
    %v9517 = vpack.c.b16 %v9157, %v9153
    %v9518 = vpack.c.b16 %v9158, %v9154
    %v9519 = vpack.c.b16 %v9159, %v9155
    %v9520 = vpack.c.b16 %v9160, %v9156
    %v9521 = vpack.c.b16 %v9165, %v9161
    %v9522 = vpack.c.b16 %v9166, %v9162
    %v9523 = vpack.c.b16 %v9167, %v9163
    %v9524 = vpack.c.b16 %v9168, %v9164
    %v9525 = vpack.c.b16 %v9173, %v9169
    %v9526 = vpack.c.b16 %v9174, %v9170
    %v9527 = vpack.c.b16 %v9175, %v9171
    %v9528 = vpack.c.b16 %v9176, %v9172
    %v9529 = vpack.c.b16 %v9181, %v9177
    %v9530 = vpack.c.b16 %v9182, %v9178
    %v9531 = vpack.c.b16 %v9183, %v9179
    %v9532 = vpack.c.b16 %v9184, %v9180
    %v9533 = vpack.c.b16 %v9189, %v9185
    %v9534 = vpack.c.b16 %v9190, %v9186
    %v9535 = vpack.c.b16 %v9191, %v9187
    %v9536 = vpack.c.b16 %v9192, %v9188
    %v9537 = vpack.c.b16 %v9197, %v9193
    %v9538 = vpack.c.b16 %v9198, %v9194
    %v9539 = vpack.c.b16 %v9199, %v9195
    %v9540 = vpack.c.b16 %v9200, %v9196
    %v9541 = vpack.c.b16 %v9205, %v9201
    %v9542 = vpack.c.b16 %v9206, %v9202
    %v9543 = vpack.c.b16 %v9207, %v9203
    %v9544 = vpack.c.b16 %v9208, %v9204
    %v9545 = vpack.c.b16 %v9213, %v9209
    %v9546 = vpack.c.b16 %v9214, %v9210
    %v9547 = vpack.c.b16 %v9215, %v9211
    %v9548 = vpack.c.b16 %v9216, %v9212
    %v9549 = vpack.c.b16 %v9221, %v9217
    %v9550 = vpack.c.b16 %v9222, %v9218
    %v9551 = vpack.c.b16 %v9223, %v9219
    %v9552 = vpack.c.b16 %v9224, %v9220
    %v9553 = vpack.c.b16 %v9229, %v9225
    %v9554 = vpack.c.b16 %v9230, %v9226
    %v9555 = vpack.c.b16 %v9231, %v9227
    %v9556 = vpack.c.b16 %v9232, %v9228
    %v9557 = vpack.c.b16 %v9237, %v9233
    %v9558 = vpack.c.b16 %v9238, %v9234
    %v9559 = vpack.c.b16 %v9239, %v9235
    %v9560 = vpack.c.b16 %v9240, %v9236
    %v9561 = vpack.c.b16 %v9245, %v9241
    %v9562 = vpack.c.b16 %v9246, %v9242
    %v9563 = vpack.c.b16 %v9247, %v9243
    %v9564 = vpack.c.b16 %v9248, %v9244
    %v9565 = vpack.c.b16 %v9253, %v9249
    %v9566 = vpack.c.b16 %v9254, %v9250
    %v9567 = vpack.c.b16 %v9255, %v9251
    %v9568 = vpack.c.b16 %v9256, %v9252
    %v9569 = vpack.c.b16 %v9261, %v9257
    %v9570 = vpack.c.b16 %v9262, %v9258
    %v9571 = vpack.c.b16 %v9263, %v9259
    %v9572 = vpack.c.b16 %v9264, %v9260
    %v9573 = vpack.c.b16 %v9269, %v9265
    %v9574 = vpack.c.b16 %v9270, %v9266
    %v9575 = vpack.c.b16 %v9271, %v9267
    %v9576 = vpack.c.b16 %v9272, %v9268
    %v9577 = vpack.c.b16 %v9277, %v9273
    %v9578 = vpack.c.b16 %v9278, %v9274
    %v9579 = vpack.c.b16 %v9279, %v9275
    %v9580 = vpack.c.b16 %v9280, %v9276
    %v9581 = vpack.c.b16 %v9285, %v9281
    %v9582 = vpack.c.b16 %v9286, %v9282
    %v9583 = vpack.c.b16 %v9287, %v9283
    %v9584 = vpack.c.b16 %v9288, %v9284
    %v9585 = vpack.c.b16 %v9293, %v9289
    %v9586 = vpack.c.b16 %v9294, %v9290
    %v9587 = vpack.c.b16 %v9295, %v9291
    %v9588 = vpack.c.b16 %v9296, %v9292
    %v9589 = vpack.c.b16 %v9301, %v9297
    %v9590 = vpack.c.b16 %v9302, %v9298
    %v9591 = vpack.c.b16 %v9303, %v9299
    %v9592 = vpack.c.b16 %v9304, %v9300
    %v9593 = vpack.c.b16 %v9309, %v9305
    %v9594 = vpack.c.b16 %v9310, %v9306
    %v9595 = vpack.c.b16 %v9311, %v9307
    %v9596 = vpack.c.b16 %v9312, %v9308
    %v9597 = vpack.c.b16 %v9317, %v9313
    %v9598 = vpack.c.b16 %v9318, %v9314
    %v9599 = vpack.c.b16 %v9319, %v9315
    %v9600 = vpack.c.b16 %v9320, %v9316
    %v9601 = vpack.c.b16 %v9325, %v9321
    %v9602 = vpack.c.b16 %v9326, %v9322
    %v9603 = vpack.c.b16 %v9327, %v9323
    %v9604 = vpack.c.b16 %v9328, %v9324
    %v9605 = vpack.c.b16 %v9333, %v9329
    %v9606 = vpack.c.b16 %v9334, %v9330
    %v9607 = vpack.c.b16 %v9335, %v9331
    %v9608 = vpack.c.b16 %v9336, %v9332
    %v9609 = vpack.c.b16 %v9341, %v9337
    %v9610 = vpack.c.b16 %v9342, %v9338
    %v9611 = vpack.c.b16 %v9343, %v9339
    %v9612 = vpack.c.b16 %v9344, %v9340
    %v9613 = vpack.c.b16 %v9349, %v9345
    %v9614 = vpack.c.b16 %v9350, %v9346
    %v9615 = vpack.c.b16 %v9351, %v9347
    %v9616 = vpack.c.b16 %v9352, %v9348
    %v9617 = vpack.c.b16 %v9357, %v9353
    %v9618 = vpack.c.b16 %v9358, %v9354
    %v9619 = vpack.c.b16 %v9359, %v9355
    %v9620 = vpack.c.b16 %v9360, %v9356
    %v9621 = vpack.c.b16 %v9365, %v9361
    %v9622 = vpack.c.b16 %v9366, %v9362
    %v9623 = vpack.c.b16 %v9367, %v9363
    %v9624 = vpack.c.b16 %v9368, %v9364
    %9881 = vmatprep.subr.bf16.mxu0 %v9398
    %9882 = vmatpush1.bf16.msra.mxu0 %v9397
    %9883 = vmatprep.subr.bf16.mxu0 %v9394
    %9884 = vmatpush1.bf16.msra.mxu0 %v9393
    %9885 = vmatprep.subr.bf16.mxu0 %v9390
    %9886 = vmatpush1.bf16.msra.mxu0 %v9389
    %9887 = vmatprep.subr.bf16.mxu0 %v9386
    %9888 = vmatpush1.bf16.msra.mxu0 %v9385
    %9889 = vmatprep.subr.bf16.mxu0 %v9382
    %9890 = vmatpush1.bf16.msra.mxu0 %v9381
    %9891 = vmatprep.subr.bf16.mxu0 %v9378
    %9892 = vmatpush1.bf16.msra.mxu0 %v9377
    %9893 = vmatprep.subr.bf16.mxu0 %v9374
    %9894 = vmatpush1.bf16.msra.mxu0 %v9373
    %9895 = vmatprep.subr.bf16.mxu0 %v9370
    %9896 = vmatpush1.bf16.msra.mxu0 %v9369
    %9897 = vmatprep.subr.bf16.mxu0 %v9430
    %9898 = vmatpush2.bf16.msra.mxu0 %v9429
    %9899 = vmatprep.subr.bf16.mxu0 %v9426
    %9900 = vmatpush2.bf16.msra.mxu0 %v9425
    %9901 = vmatprep.subr.bf16.mxu0 %v9422
    %9902 = vmatpush2.bf16.msra.mxu0 %v9421
    %9903 = vmatprep.subr.bf16.mxu0 %v9418
    %9904 = vmatpush2.bf16.msra.mxu0 %v9417
    %9905 = vmatprep.subr.bf16.mxu0 %v9414
    %9906 = vmatpush2.bf16.msra.mxu0 %v9413
    %9907 = vmatprep.subr.bf16.mxu0 %v9410
    %9908 = vmatpush2.bf16.msra.mxu0 %v9409
    %9909 = vmatprep.subr.bf16.mxu0 %v9406
    %9910 = vmatpush2.bf16.msra.mxu0 %v9405
    %9911 = vmatprep.subr.bf16.mxu0 %v9402
    %9912 = vmatpush2.bf16.msra.mxu0 %v9401
    %9913 = vmatprep.mubr.bf16.mxu0 %v8316
    %9914 = vmatmul.mubr.bf16.gmra.mxu0 %v8315
    %v9915 = vpop.f32.mrf.mxu0
    %v9916 = vadd.f32 %v8584, %v9915
    %v9917 = vpop.f32.mrf.mxu0
    %v9918 = vadd.f32 %v8588, %v9917
    %v9919 = vpop.f32.mrf.mxu0
    %v9920 = vpop.f32.mrf.mxu0
    %9921 = vdwg.mxu0
    %9922 = vmatprep.subr.bf16.mxu0 %v9462
    %9923 = vmatpush1.bf16.msra.mxu0 %v9461
    %9924 = vmatprep.subr.bf16.mxu0 %v9458
    %9925 = vmatpush1.bf16.msra.mxu0 %v9457
    %9926 = vmatprep.subr.bf16.mxu0 %v9454
    %9927 = vmatpush1.bf16.msra.mxu0 %v9453
    %9928 = vmatprep.subr.bf16.mxu0 %v9450
    %9929 = vmatpush1.bf16.msra.mxu0 %v9449
    %9930 = vmatprep.subr.bf16.mxu0 %v9446
    %9931 = vmatpush1.bf16.msra.mxu0 %v9445
    %9932 = vmatprep.subr.bf16.mxu0 %v9442
    %9933 = vmatpush1.bf16.msra.mxu0 %v9441
    %9934 = vmatprep.subr.bf16.mxu0 %v9438
    %9935 = vmatpush1.bf16.msra.mxu0 %v9437
    %9936 = vmatprep.subr.bf16.mxu0 %v9434
    %9937 = vmatpush1.bf16.msra.mxu0 %v9433
    %9938 = vmatprep.subr.bf16.mxu0 %v9494
    %9939 = vmatpush2.bf16.msra.mxu0 %v9493
    %9940 = vmatprep.subr.bf16.mxu0 %v9490
    %9941 = vmatpush2.bf16.msra.mxu0 %v9489
    %9942 = vmatprep.subr.bf16.mxu0 %v9486
    %9943 = vmatpush2.bf16.msra.mxu0 %v9485
    %9944 = vmatprep.subr.bf16.mxu0 %v9482
    %9945 = vmatpush2.bf16.msra.mxu0 %v9481
    %9946 = vmatprep.subr.bf16.mxu0 %v9478
    %9947 = vmatpush2.bf16.msra.mxu0 %v9477
    %9948 = vmatprep.subr.bf16.mxu0 %v9474
    %9949 = vmatpush2.bf16.msra.mxu0 %v9473
    %9950 = vmatprep.subr.bf16.mxu0 %v9470
    %9951 = vmatpush2.bf16.msra.mxu0 %v9469
    %9952 = vmatprep.subr.bf16.mxu0 %v9466
    %9953 = vmatpush2.bf16.msra.mxu0 %v9465
    %9954 = vmatprep.mubr.bf16.mxu0 %v8318
    %9955 = vmatmul.mubr.bf16.gmra.mxu0 %v8317
    %v9956 = vpop.f32.mrf.mxu0
    %v9957 = vadd.f32 %v9916, %v9956
    %v9958 = vpop.f32.mrf.mxu0
    %v9959 = vadd.f32 %v9918, %v9958
    %v9960 = vpop.f32.mrf.mxu0
    %v9961 = vpop.f32.mrf.mxu0
    %9962 = vdwg.mxu0
    %9963 = vmatprep.subr.bf16.mxu0 %v9526
    %9964 = vmatpush1.bf16.msra.mxu0 %v9525
    %9965 = vmatprep.subr.bf16.mxu0 %v9522
    %9966 = vmatpush1.bf16.msra.mxu0 %v9521
    %9967 = vmatprep.subr.bf16.mxu0 %v9518
    %9968 = vmatpush1.bf16.msra.mxu0 %v9517
    %9969 = vmatprep.subr.bf16.mxu0 %v9514
    %9970 = vmatpush1.bf16.msra.mxu0 %v9513
    %9971 = vmatprep.subr.bf16.mxu0 %v9510
    %9972 = vmatpush1.bf16.msra.mxu0 %v9509
    %9973 = vmatprep.subr.bf16.mxu0 %v9506
    %9974 = vmatpush1.bf16.msra.mxu0 %v9505
    %9975 = vmatprep.subr.bf16.mxu0 %v9502
    %9976 = vmatpush1.bf16.msra.mxu0 %v9501
    %9977 = vmatprep.subr.bf16.mxu0 %v9498
    %9978 = vmatpush1.bf16.msra.mxu0 %v9497
    %9979 = vmatprep.subr.bf16.mxu0 %v9558
    %9980 = vmatpush2.bf16.msra.mxu0 %v9557
    %9981 = vmatprep.subr.bf16.mxu0 %v9554
    %9982 = vmatpush2.bf16.msra.mxu0 %v9553
    %9983 = vmatprep.subr.bf16.mxu0 %v9550
    %9984 = vmatpush2.bf16.msra.mxu0 %v9549
    %9985 = vmatprep.subr.bf16.mxu0 %v9546
    %9986 = vmatpush2.bf16.msra.mxu0 %v9545
    %9987 = vmatprep.subr.bf16.mxu0 %v9542
    %9988 = vmatpush2.bf16.msra.mxu0 %v9541
    %9989 = vmatprep.subr.bf16.mxu0 %v9538
    %9990 = vmatpush2.bf16.msra.mxu0 %v9537
    %9991 = vmatprep.subr.bf16.mxu0 %v9534
    %9992 = vmatpush2.bf16.msra.mxu0 %v9533
    %9993 = vmatprep.subr.bf16.mxu0 %v9530
    %9994 = vmatpush2.bf16.msra.mxu0 %v9529
    %9995 = vmatprep.mubr.bf16.mxu0 %v8320
    %9996 = vmatmul.mubr.bf16.gmra.mxu0 %v8319
    %v9997 = vpop.f32.mrf.mxu0
    %v9998 = vadd.f32 %v9957, %v9997
    %v9999 = vpop.f32.mrf.mxu0
    %v10000 = vadd.f32 %v9959, %v9999
    %v10001 = vpop.f32.mrf.mxu0
    %v10002 = vpop.f32.mrf.mxu0
    %10003 = vdwg.mxu0
    %10004 = vmatprep.subr.bf16.mxu0 %v9590
    %10005 = vmatpush1.bf16.msra.mxu0 %v9589
    %10006 = vmatprep.subr.bf16.mxu0 %v9586
    %10007 = vmatpush1.bf16.msra.mxu0 %v9585
    %10008 = vmatprep.subr.bf16.mxu0 %v9582
    %10009 = vmatpush1.bf16.msra.mxu0 %v9581
    %10010 = vmatprep.subr.bf16.mxu0 %v9578
    %10011 = vmatpush1.bf16.msra.mxu0 %v9577
    %10012 = vmatprep.subr.bf16.mxu0 %v9574
    %10013 = vmatpush1.bf16.msra.mxu0 %v9573
    %10014 = vmatprep.subr.bf16.mxu0 %v9570
    %10015 = vmatpush1.bf16.msra.mxu0 %v9569
    %10016 = vmatprep.subr.bf16.mxu0 %v9566
    %10017 = vmatpush1.bf16.msra.mxu0 %v9565
    %10018 = vmatprep.subr.bf16.mxu0 %v9562
    %10019 = vmatpush1.bf16.msra.mxu0 %v9561
    %10020 = vmatprep.subr.bf16.mxu0 %v9622
    %10021 = vmatpush2.bf16.msra.mxu0 %v9621
    %10022 = vmatprep.subr.bf16.mxu0 %v9618
    %10023 = vmatpush2.bf16.msra.mxu0 %v9617
    %10024 = vmatprep.subr.bf16.mxu0 %v9614
    %10025 = vmatpush2.bf16.msra.mxu0 %v9613
    %10026 = vmatprep.subr.bf16.mxu0 %v9610
    %10027 = vmatpush2.bf16.msra.mxu0 %v9609
    %10028 = vmatprep.subr.bf16.mxu0 %v9606
    %10029 = vmatpush2.bf16.msra.mxu0 %v9605
    %10030 = vmatprep.subr.bf16.mxu0 %v9602
    %10031 = vmatpush2.bf16.msra.mxu0 %v9601
    %10032 = vmatprep.subr.bf16.mxu0 %v9598
    %10033 = vmatpush2.bf16.msra.mxu0 %v9597
    %10034 = vmatprep.subr.bf16.mxu0 %v9594
    %10035 = vmatpush2.bf16.msra.mxu0 %v9593
    %10036 = vmatprep.mubr.bf16.mxu0 %v8322
    %10037 = vmatmul.mubr.bf16.gmra.mxu0 %v8321
    %v10038 = vpop.f32.mrf.mxu0
    %v10039 = vadd.f32 %v9998, %v10038
    %v10040 = vpop.f32.mrf.mxu0
    %v10041 = vadd.f32 %v10000, %v10040
    %v10042 = vpop.f32.mrf.mxu0
    %v10043 = vpop.f32.mrf.mxu0
    %10044 = vdwg.mxu0
    %10045 = vmatprep.subr.bf16.mxu0 %v9400
    %10046 = vmatpush1.bf16.msra.mxu0 %v9399
    %10047 = vmatprep.subr.bf16.mxu0 %v9396
    %10048 = vmatpush1.bf16.msra.mxu0 %v9395
    %10049 = vmatprep.subr.bf16.mxu0 %v9392
    %10050 = vmatpush1.bf16.msra.mxu0 %v9391
    %10051 = vmatprep.subr.bf16.mxu0 %v9388
    %10052 = vmatpush1.bf16.msra.mxu0 %v9387
    %10053 = vmatprep.subr.bf16.mxu0 %v9384
    %10054 = vmatpush1.bf16.msra.mxu0 %v9383
    %10055 = vmatprep.subr.bf16.mxu0 %v9380
    %10056 = vmatpush1.bf16.msra.mxu0 %v9379
    %10057 = vmatprep.subr.bf16.mxu0 %v9376
    %10058 = vmatpush1.bf16.msra.mxu0 %v9375
    %10059 = vmatprep.subr.bf16.mxu0 %v9372
    %10060 = vmatpush1.bf16.msra.mxu0 %v9371
    %10061 = vmatprep.subr.bf16.mxu0 %v9432
    %10062 = vmatpush2.bf16.msra.mxu0 %v9431
    %10063 = vmatprep.subr.bf16.mxu0 %v9428
    %10064 = vmatpush2.bf16.msra.mxu0 %v9427
    %10065 = vmatprep.subr.bf16.mxu0 %v9424
    %10066 = vmatpush2.bf16.msra.mxu0 %v9423
    %10067 = vmatprep.subr.bf16.mxu0 %v9420
    %10068 = vmatpush2.bf16.msra.mxu0 %v9419
    %10069 = vmatprep.subr.bf16.mxu0 %v9416
    %10070 = vmatpush2.bf16.msra.mxu0 %v9415
    %10071 = vmatprep.subr.bf16.mxu0 %v9412
    %10072 = vmatpush2.bf16.msra.mxu0 %v9411
    %10073 = vmatprep.subr.bf16.mxu0 %v9408
    %10074 = vmatpush2.bf16.msra.mxu0 %v9407
    %10075 = vmatprep.subr.bf16.mxu0 %v9404
    %10076 = vmatpush2.bf16.msra.mxu0 %v9403
    %10077 = vmatprep.mubr.bf16.mxu0 %v8316
    %10078 = vmatmul.mubr.bf16.gmra.mxu0 %v8315
    %v10079 = vpop.f32.mrf.mxu0
    %v10080 = vadd.f32 %v8592, %v10079
    %v10081 = vpop.f32.mrf.mxu0
    %v10082 = vadd.f32 %v8596, %v10081
    %v10083 = vpop.f32.mrf.mxu0
    %v10084 = vpop.f32.mrf.mxu0
    %10085 = vdwg.mxu0
    %10086 = vmatprep.subr.bf16.mxu0 %v9464
    %10087 = vmatpush1.bf16.msra.mxu0 %v9463
    %10088 = vmatprep.subr.bf16.mxu0 %v9460
    %10089 = vmatpush1.bf16.msra.mxu0 %v9459
    %10090 = vmatprep.subr.bf16.mxu0 %v9456
    %10091 = vmatpush1.bf16.msra.mxu0 %v9455
    %10092 = vmatprep.subr.bf16.mxu0 %v9452
    %10093 = vmatpush1.bf16.msra.mxu0 %v9451
    %10094 = vmatprep.subr.bf16.mxu0 %v9448
    %10095 = vmatpush1.bf16.msra.mxu0 %v9447
    %10096 = vmatprep.subr.bf16.mxu0 %v9444
    %10097 = vmatpush1.bf16.msra.mxu0 %v9443
    %10098 = vmatprep.subr.bf16.mxu0 %v9440
    %10099 = vmatpush1.bf16.msra.mxu0 %v9439
    %10100 = vmatprep.subr.bf16.mxu0 %v9436
    %10101 = vmatpush1.bf16.msra.mxu0 %v9435
    %10102 = vmatprep.subr.bf16.mxu0 %v9496
    %10103 = vmatpush2.bf16.msra.mxu0 %v9495
    %10104 = vmatprep.subr.bf16.mxu0 %v9492
    %10105 = vmatpush2.bf16.msra.mxu0 %v9491
    %10106 = vmatprep.subr.bf16.mxu0 %v9488
    %10107 = vmatpush2.bf16.msra.mxu0 %v9487
    %10108 = vmatprep.subr.bf16.mxu0 %v9484
    %10109 = vmatpush2.bf16.msra.mxu0 %v9483
    %10110 = vmatprep.subr.bf16.mxu0 %v9480
    %10111 = vmatpush2.bf16.msra.mxu0 %v9479
    %10112 = vmatprep.subr.bf16.mxu0 %v9476
    %10113 = vmatpush2.bf16.msra.mxu0 %v9475
    %10114 = vmatprep.subr.bf16.mxu0 %v9472
    %10115 = vmatpush2.bf16.msra.mxu0 %v9471
    %10116 = vmatprep.subr.bf16.mxu0 %v9468
    %10117 = vmatpush2.bf16.msra.mxu0 %v9467
    %10118 = vmatprep.mubr.bf16.mxu0 %v8318
    %10119 = vmatmul.mubr.bf16.gmra.mxu0 %v8317
    %v10120 = vpop.f32.mrf.mxu0
    %v10121 = vadd.f32 %v10080, %v10120
    %v10122 = vpop.f32.mrf.mxu0
    %v10123 = vadd.f32 %v10082, %v10122
    %v10124 = vpop.f32.mrf.mxu0
    %v10125 = vpop.f32.mrf.mxu0
    %10126 = vdwg.mxu0
    %10127 = vmatprep.subr.bf16.mxu0 %v9528
    %10128 = vmatpush1.bf16.msra.mxu0 %v9527
    %10129 = vmatprep.subr.bf16.mxu0 %v9524
    %10130 = vmatpush1.bf16.msra.mxu0 %v9523
    %10131 = vmatprep.subr.bf16.mxu0 %v9520
    %10132 = vmatpush1.bf16.msra.mxu0 %v9519
    %10133 = vmatprep.subr.bf16.mxu0 %v9516
    %10134 = vmatpush1.bf16.msra.mxu0 %v9515
    %10135 = vmatprep.subr.bf16.mxu0 %v9512
    %10136 = vmatpush1.bf16.msra.mxu0 %v9511
    %10137 = vmatprep.subr.bf16.mxu0 %v9508
    %10138 = vmatpush1.bf16.msra.mxu0 %v9507
    %10139 = vmatprep.subr.bf16.mxu0 %v9504
    %10140 = vmatpush1.bf16.msra.mxu0 %v9503
    %10141 = vmatprep.subr.bf16.mxu0 %v9500
    %10142 = vmatpush1.bf16.msra.mxu0 %v9499
    %10143 = vmatprep.subr.bf16.mxu0 %v9560
    %10144 = vmatpush2.bf16.msra.mxu0 %v9559
    %10145 = vmatprep.subr.bf16.mxu0 %v9556
    %10146 = vmatpush2.bf16.msra.mxu0 %v9555
    %10147 = vmatprep.subr.bf16.mxu0 %v9552
    %10148 = vmatpush2.bf16.msra.mxu0 %v9551
    %10149 = vmatprep.subr.bf16.mxu0 %v9548
    %10150 = vmatpush2.bf16.msra.mxu0 %v9547
    %10151 = vmatprep.subr.bf16.mxu0 %v9544
    %10152 = vmatpush2.bf16.msra.mxu0 %v9543
    %10153 = vmatprep.subr.bf16.mxu0 %v9540
    %10154 = vmatpush2.bf16.msra.mxu0 %v9539
    %10155 = vmatprep.subr.bf16.mxu0 %v9536
    %10156 = vmatpush2.bf16.msra.mxu0 %v9535
    %10157 = vmatprep.subr.bf16.mxu0 %v9532
    %10158 = vmatpush2.bf16.msra.mxu0 %v9531
    %10159 = vmatprep.mubr.bf16.mxu0 %v8320
    %10160 = vmatmul.mubr.bf16.gmra.mxu0 %v8319
    %v10161 = vpop.f32.mrf.mxu0
    %v10162 = vadd.f32 %v10121, %v10161
    %v10163 = vpop.f32.mrf.mxu0
    %v10164 = vadd.f32 %v10123, %v10163
    %v10165 = vpop.f32.mrf.mxu0
    %v10166 = vpop.f32.mrf.mxu0
    %10167 = vdwg.mxu0
    %10168 = vmatprep.subr.bf16.mxu0 %v9592
    %10169 = vmatpush1.bf16.msra.mxu0 %v9591
    %10170 = vmatprep.subr.bf16.mxu0 %v9588
    %10171 = vmatpush1.bf16.msra.mxu0 %v9587
    %10172 = vmatprep.subr.bf16.mxu0 %v9584
    %10173 = vmatpush1.bf16.msra.mxu0 %v9583
    %10174 = vmatprep.subr.bf16.mxu0 %v9580
    %10175 = vmatpush1.bf16.msra.mxu0 %v9579
    %10176 = vmatprep.subr.bf16.mxu0 %v9576
    %10177 = vmatpush1.bf16.msra.mxu0 %v9575
    %10178 = vmatprep.subr.bf16.mxu0 %v9572
    %10179 = vmatpush1.bf16.msra.mxu0 %v9571
    %10180 = vmatprep.subr.bf16.mxu0 %v9568
    %10181 = vmatpush1.bf16.msra.mxu0 %v9567
    %10182 = vmatprep.subr.bf16.mxu0 %v9564
    %10183 = vmatpush1.bf16.msra.mxu0 %v9563
    %10184 = vmatprep.subr.bf16.mxu0 %v9624
    %10185 = vmatpush2.bf16.msra.mxu0 %v9623
    %10186 = vmatprep.subr.bf16.mxu0 %v9620
    %10187 = vmatpush2.bf16.msra.mxu0 %v9619
    %10188 = vmatprep.subr.bf16.mxu0 %v9616
    %10189 = vmatpush2.bf16.msra.mxu0 %v9615
    %10190 = vmatprep.subr.bf16.mxu0 %v9612
    %10191 = vmatpush2.bf16.msra.mxu0 %v9611
    %10192 = vmatprep.subr.bf16.mxu0 %v9608
    %10193 = vmatpush2.bf16.msra.mxu0 %v9607
    %10194 = vmatprep.subr.bf16.mxu0 %v9604
    %10195 = vmatpush2.bf16.msra.mxu0 %v9603
    %10196 = vmatprep.subr.bf16.mxu0 %v9600
    %10197 = vmatpush2.bf16.msra.mxu0 %v9599
    %10198 = vmatprep.subr.bf16.mxu0 %v9596
    %10199 = vmatpush2.bf16.msra.mxu0 %v9595
    %10200 = vmatprep.mubr.bf16.mxu0 %v8322
    %10201 = vmatmul.mubr.bf16.gmra.mxu0 %v8321
    %v10202 = vpop.f32.mrf.mxu0
    %v10203 = vadd.f32 %v10162, %v10202
    %v10204 = vpop.f32.mrf.mxu0
    %v10205 = vadd.f32 %v10164, %v10204
    %v10206 = vpop.f32.mrf.mxu0
    %v10207 = vpop.f32.mrf.mxu0
    %10208 = vdwg.mxu0
    %v10209 = vmax.f32 %v10039, 0.0
    %v10210 = vmax.f32 %v10041, 0.0
    %v10211 = vmax.f32 %v10203, 0.0
    %v10212 = vmax.f32 %v10205, 0.0
    %v10213 = vpack.c.bf16 %v10209, %v10209
    %v10214 = vpack.c.bf16 %v10210, %v10210
    %v10215 = vpack.c.bf16 %v10211, %v10211
    %v10216 = vpack.c.bf16 %v10212, %v10212
    %v10217 = vld [vmem:[#allocation14] sm:$0xff]
    %v10218 = vld [vmem:[#allocation14 + $0x8] sm:$0xff]
    %v10219 = vld [vmem:[#allocation14 + $0x10] sm:$0xff]
    %v10220 = vld [vmem:[#allocation14 + $0x18] sm:$0xff]
    %v10221 = vld [vmem:[#allocation14 + $0x20] sm:$0xff]
    %v10222 = vld [vmem:[#allocation14 + $0x28] sm:$0xff]
    %v10223 = vld [vmem:[#allocation14 + $0x30] sm:$0xff]
    %v10224 = vld [vmem:[#allocation14 + $0x38] sm:$0xff]
    %v10225 = vld [vmem:[#allocation14 + $0x40] sm:$0xff]
    %v10226 = vld [vmem:[#allocation14 + $0x48] sm:$0xff]
    %v10227 = vld [vmem:[#allocation14 + $0x50] sm:$0xff]
    %v10228 = vld [vmem:[#allocation14 + $0x58] sm:$0xff]
    %v10229 = vld [vmem:[#allocation14 + $0x60] sm:$0xff]
    %v10230 = vld [vmem:[#allocation14 + $0x68] sm:$0xff]
    %v10231 = vld [vmem:[#allocation14 + $0x70] sm:$0xff]
    %v10232 = vld [vmem:[#allocation14 + $0x78] sm:$0xff]
    %v10233 = vld [vmem:[#allocation14 + $0x80] sm:$0xff]
    %v10234 = vld [vmem:[#allocation14 + $0x88] sm:$0xff]
    %v10235 = vld [vmem:[#allocation14 + $0x90] sm:$0xff]
    %v10236 = vld [vmem:[#allocation14 + $0x98] sm:$0xff]
    %v10237 = vld [vmem:[#allocation14 + $0xa0] sm:$0xff]
    %v10238 = vld [vmem:[#allocation14 + $0xa8] sm:$0xff]
    %v10239 = vld [vmem:[#allocation14 + $0xb0] sm:$0xff]
    %v10240 = vld [vmem:[#allocation14 + $0xb8] sm:$0xff]
    %v10241 = vld [vmem:[#allocation14 + $0xc0] sm:$0xff]
    %v10242 = vld [vmem:[#allocation14 + $0xc8] sm:$0xff]
    %v10243 = vld [vmem:[#allocation14 + $0xd0] sm:$0xff]
    %v10244 = vld [vmem:[#allocation14 + $0xd8] sm:$0xff]
    %v10245 = vld [vmem:[#allocation14 + $0xe0] sm:$0xff]
    %v10246 = vld [vmem:[#allocation14 + $0xe8] sm:$0xff]
    %v10247 = vld [vmem:[#allocation14 + $0xf0] sm:$0xff]
    %v10248 = vld [vmem:[#allocation14 + $0xf8] sm:$0xff]
    %v10249 = vld [vmem:[#allocation14 + $0x100] sm:$0xff]
    %v10250 = vld [vmem:[#allocation14 + $0x108] sm:$0xff]
    %v10251 = vld [vmem:[#allocation14 + $0x110] sm:$0xff]
    %v10252 = vld [vmem:[#allocation14 + $0x118] sm:$0xff]
    %v10253 = vld [vmem:[#allocation14 + $0x120] sm:$0xff]
    %v10254 = vld [vmem:[#allocation14 + $0x128] sm:$0xff]
    %v10255 = vld [vmem:[#allocation14 + $0x130] sm:$0xff]
    %v10256 = vld [vmem:[#allocation14 + $0x138] sm:$0xff]
    %v10257 = vld [vmem:[#allocation14 + $0x140] sm:$0xff]
    %v10258 = vld [vmem:[#allocation14 + $0x148] sm:$0xff]
    %v10259 = vld [vmem:[#allocation14 + $0x150] sm:$0xff]
    %v10260 = vld [vmem:[#allocation14 + $0x158] sm:$0xff]
    %v10261 = vld [vmem:[#allocation14 + $0x160] sm:$0xff]
    %v10262 = vld [vmem:[#allocation14 + $0x168] sm:$0xff]
    %v10263 = vld [vmem:[#allocation14 + $0x170] sm:$0xff]
    %v10264 = vld [vmem:[#allocation14 + $0x178] sm:$0xff]
    %v10265 = vld [vmem:[#allocation14 + $0x180] sm:$0xff]
    %v10266 = vld [vmem:[#allocation14 + $0x188] sm:$0xff]
    %v10267 = vld [vmem:[#allocation14 + $0x190] sm:$0xff]
    %v10268 = vld [vmem:[#allocation14 + $0x198] sm:$0xff]
    %v10269 = vld [vmem:[#allocation14 + $0x1a0] sm:$0xff]
    %v10270 = vld [vmem:[#allocation14 + $0x1a8] sm:$0xff]
    %v10271 = vld [vmem:[#allocation14 + $0x1b0] sm:$0xff]
    %v10272 = vld [vmem:[#allocation14 + $0x1b8] sm:$0xff]
    %v10273 = vld [vmem:[#allocation14 + $0x1c0] sm:$0xff]
    %v10274 = vld [vmem:[#allocation14 + $0x1c8] sm:$0xff]
    %v10275 = vld [vmem:[#allocation14 + $0x1d0] sm:$0xff]
    %v10276 = vld [vmem:[#allocation14 + $0x1d8] sm:$0xff]
    %v10277 = vld [vmem:[#allocation14 + $0x1e0] sm:$0xff]
    %v10278 = vld [vmem:[#allocation14 + $0x1e8] sm:$0xff]
    %v10279 = vld [vmem:[#allocation14 + $0x1f0] sm:$0xff]
    %v10280 = vld [vmem:[#allocation14 + $0x1f8] sm:$0xff]
    %v10281 = vld [vmem:[#allocation16] sm:$0x3]
    %v10283 = vlaneseq
    %v10284 = vshrl.u32 %v10283, 7
    %v10285 = vsub.s32 0, %v10284
    %v10286 = vrot.slane %v10281, %v10285
    %v10287 = vlaneseq
    %v10288 = vshrl.u32 %v10287, 7
    %v10289 = vsub.s32 1, %v10288
    %v10290 = vrot.slane %v10281, %v10289
    %v10357 = vunpack.c.l.b16 %v10217
    %v10358 = vunpack.c.h.b16 %v10217
    %v10359 = vunpack.c.l.b16 %v10218
    %v10360 = vunpack.c.h.b16 %v10218
    %v10361 = vunpack.c.l.b16 %v10219
    %v10362 = vunpack.c.h.b16 %v10219
    %v10363 = vunpack.c.l.b16 %v10220
    %v10364 = vunpack.c.h.b16 %v10220
    %v10365 = vunpack.c.l.b16 %v10221
    %v10366 = vunpack.c.h.b16 %v10221
    %v10367 = vunpack.c.l.b16 %v10222
    %v10368 = vunpack.c.h.b16 %v10222
    %v10369 = vunpack.c.l.b16 %v10223
    %v10370 = vunpack.c.h.b16 %v10223
    %v10371 = vunpack.c.l.b16 %v10224
    %v10372 = vunpack.c.h.b16 %v10224
    %v10373 = vunpack.c.l.b16 %v10225
    %v10374 = vunpack.c.h.b16 %v10225
    %v10375 = vunpack.c.l.b16 %v10226
    %v10376 = vunpack.c.h.b16 %v10226
    %v10377 = vunpack.c.l.b16 %v10227
    %v10378 = vunpack.c.h.b16 %v10227
    %v10379 = vunpack.c.l.b16 %v10228
    %v10380 = vunpack.c.h.b16 %v10228
    %v10381 = vunpack.c.l.b16 %v10229
    %v10382 = vunpack.c.h.b16 %v10229
    %v10383 = vunpack.c.l.b16 %v10230
    %v10384 = vunpack.c.h.b16 %v10230
    %v10385 = vunpack.c.l.b16 %v10231
    %v10386 = vunpack.c.h.b16 %v10231
    %v10387 = vunpack.c.l.b16 %v10232
    %v10388 = vunpack.c.h.b16 %v10232
    %v10389 = vunpack.c.l.b16 %v10233
    %v10390 = vunpack.c.h.b16 %v10233
    %v10391 = vunpack.c.l.b16 %v10234
    %v10392 = vunpack.c.h.b16 %v10234
    %v10393 = vunpack.c.l.b16 %v10235
    %v10394 = vunpack.c.h.b16 %v10235
    %v10395 = vunpack.c.l.b16 %v10236
    %v10396 = vunpack.c.h.b16 %v10236
    %v10397 = vunpack.c.l.b16 %v10237
    %v10398 = vunpack.c.h.b16 %v10237
    %v10399 = vunpack.c.l.b16 %v10238
    %v10400 = vunpack.c.h.b16 %v10238
    %v10401 = vunpack.c.l.b16 %v10239
    %v10402 = vunpack.c.h.b16 %v10239
    %v10403 = vunpack.c.l.b16 %v10240
    %v10404 = vunpack.c.h.b16 %v10240
    %v10405 = vunpack.c.l.b16 %v10241
    %v10406 = vunpack.c.h.b16 %v10241
    %v10407 = vunpack.c.l.b16 %v10242
    %v10408 = vunpack.c.h.b16 %v10242
    %v10409 = vunpack.c.l.b16 %v10243
    %v10410 = vunpack.c.h.b16 %v10243
    %v10411 = vunpack.c.l.b16 %v10244
    %v10412 = vunpack.c.h.b16 %v10244
    %v10413 = vunpack.c.l.b16 %v10245
    %v10414 = vunpack.c.h.b16 %v10245
    %v10415 = vunpack.c.l.b16 %v10246
    %v10416 = vunpack.c.h.b16 %v10246
    %v10417 = vunpack.c.l.b16 %v10247
    %v10418 = vunpack.c.h.b16 %v10247
    %v10419 = vunpack.c.l.b16 %v10248
    %v10420 = vunpack.c.h.b16 %v10248
    %v10421 = vunpack.c.l.b16 %v10249
    %v10422 = vunpack.c.h.b16 %v10249
    %v10423 = vunpack.c.l.b16 %v10250
    %v10424 = vunpack.c.h.b16 %v10250
    %v10425 = vunpack.c.l.b16 %v10251
    %v10426 = vunpack.c.h.b16 %v10251
    %v10427 = vunpack.c.l.b16 %v10252
    %v10428 = vunpack.c.h.b16 %v10252
    %v10429 = vunpack.c.l.b16 %v10253
    %v10430 = vunpack.c.h.b16 %v10253
    %v10431 = vunpack.c.l.b16 %v10254
    %v10432 = vunpack.c.h.b16 %v10254
    %v10433 = vunpack.c.l.b16 %v10255
    %v10434 = vunpack.c.h.b16 %v10255
    %v10435 = vunpack.c.l.b16 %v10256
    %v10436 = vunpack.c.h.b16 %v10256
    %v10437 = vunpack.c.l.b16 %v10257
    %v10438 = vunpack.c.h.b16 %v10257
    %v10439 = vunpack.c.l.b16 %v10258
    %v10440 = vunpack.c.h.b16 %v10258
    %v10441 = vunpack.c.l.b16 %v10259
    %v10442 = vunpack.c.h.b16 %v10259
    %v10443 = vunpack.c.l.b16 %v10260
    %v10444 = vunpack.c.h.b16 %v10260
    %v10445 = vunpack.c.l.b16 %v10261
    %v10446 = vunpack.c.h.b16 %v10261
    %v10447 = vunpack.c.l.b16 %v10262
    %v10448 = vunpack.c.h.b16 %v10262
    %v10449 = vunpack.c.l.b16 %v10263
    %v10450 = vunpack.c.h.b16 %v10263
    %v10451 = vunpack.c.l.b16 %v10264
    %v10452 = vunpack.c.h.b16 %v10264
    %v10453 = vunpack.c.l.b16 %v10265
    %v10454 = vunpack.c.h.b16 %v10265
    %v10455 = vunpack.c.l.b16 %v10266
    %v10456 = vunpack.c.h.b16 %v10266
    %v10457 = vunpack.c.l.b16 %v10267
    %v10458 = vunpack.c.h.b16 %v10267
    %v10459 = vunpack.c.l.b16 %v10268
    %v10460 = vunpack.c.h.b16 %v10268
    %v10461 = vunpack.c.l.b16 %v10269
    %v10462 = vunpack.c.h.b16 %v10269
    %v10463 = vunpack.c.l.b16 %v10270
    %v10464 = vunpack.c.h.b16 %v10270
    %v10465 = vunpack.c.l.b16 %v10271
    %v10466 = vunpack.c.h.b16 %v10271
    %v10467 = vunpack.c.l.b16 %v10272
    %v10468 = vunpack.c.h.b16 %v10272
    %v10469 = vunpack.c.l.b16 %v10273
    %v10470 = vunpack.c.h.b16 %v10273
    %v10471 = vunpack.c.l.b16 %v10274
    %v10472 = vunpack.c.h.b16 %v10274
    %v10473 = vunpack.c.l.b16 %v10275
    %v10474 = vunpack.c.h.b16 %v10275
    %v10475 = vunpack.c.l.b16 %v10276
    %v10476 = vunpack.c.h.b16 %v10276
    %v10477 = vunpack.c.l.b16 %v10277
    %v10478 = vunpack.c.h.b16 %v10277
    %v10479 = vunpack.c.l.b16 %v10278
    %v10480 = vunpack.c.h.b16 %v10278
    %v10481 = vunpack.c.l.b16 %v10279
    %v10482 = vunpack.c.h.b16 %v10279
    %v10483 = vunpack.c.l.b16 %v10280
    %v10484 = vunpack.c.h.b16 %v10280
    %v10485 = vpack.c.b16 %v10359, %v10357
    %v10486 = vpack.c.b16 %v10360, %v10358
    %v10487 = vpack.c.b16 %v10363, %v10361
    %v10488 = vpack.c.b16 %v10364, %v10362
    %v10489 = vpack.c.b16 %v10367, %v10365
    %v10490 = vpack.c.b16 %v10368, %v10366
    %v10491 = vpack.c.b16 %v10371, %v10369
    %v10492 = vpack.c.b16 %v10372, %v10370
    %v10493 = vpack.c.b16 %v10375, %v10373
    %v10494 = vpack.c.b16 %v10376, %v10374
    %v10495 = vpack.c.b16 %v10379, %v10377
    %v10496 = vpack.c.b16 %v10380, %v10378
    %v10497 = vpack.c.b16 %v10383, %v10381
    %v10498 = vpack.c.b16 %v10384, %v10382
    %v10499 = vpack.c.b16 %v10387, %v10385
    %v10500 = vpack.c.b16 %v10388, %v10386
    %v10501 = vpack.c.b16 %v10391, %v10389
    %v10502 = vpack.c.b16 %v10392, %v10390
    %v10503 = vpack.c.b16 %v10395, %v10393
    %v10504 = vpack.c.b16 %v10396, %v10394
    %v10505 = vpack.c.b16 %v10399, %v10397
    %v10506 = vpack.c.b16 %v10400, %v10398
    %v10507 = vpack.c.b16 %v10403, %v10401
    %v10508 = vpack.c.b16 %v10404, %v10402
    %v10509 = vpack.c.b16 %v10407, %v10405
    %v10510 = vpack.c.b16 %v10408, %v10406
    %v10511 = vpack.c.b16 %v10411, %v10409
    %v10512 = vpack.c.b16 %v10412, %v10410
    %v10513 = vpack.c.b16 %v10415, %v10413
    %v10514 = vpack.c.b16 %v10416, %v10414
    %v10515 = vpack.c.b16 %v10419, %v10417
    %v10516 = vpack.c.b16 %v10420, %v10418
    %v10517 = vpack.c.b16 %v10423, %v10421
    %v10518 = vpack.c.b16 %v10424, %v10422
    %v10519 = vpack.c.b16 %v10427, %v10425
    %v10520 = vpack.c.b16 %v10428, %v10426
    %v10521 = vpack.c.b16 %v10431, %v10429
    %v10522 = vpack.c.b16 %v10432, %v10430
    %v10523 = vpack.c.b16 %v10435, %v10433
    %v10524 = vpack.c.b16 %v10436, %v10434
    %v10525 = vpack.c.b16 %v10439, %v10437
    %v10526 = vpack.c.b16 %v10440, %v10438
    %v10527 = vpack.c.b16 %v10443, %v10441
    %v10528 = vpack.c.b16 %v10444, %v10442
    %v10529 = vpack.c.b16 %v10447, %v10445
    %v10530 = vpack.c.b16 %v10448, %v10446
    %v10531 = vpack.c.b16 %v10451, %v10449
    %v10532 = vpack.c.b16 %v10452, %v10450
    %v10533 = vpack.c.b16 %v10455, %v10453
    %v10534 = vpack.c.b16 %v10456, %v10454
    %v10535 = vpack.c.b16 %v10459, %v10457
    %v10536 = vpack.c.b16 %v10460, %v10458
    %v10537 = vpack.c.b16 %v10463, %v10461
    %v10538 = vpack.c.b16 %v10464, %v10462
    %v10539 = vpack.c.b16 %v10467, %v10465
    %v10540 = vpack.c.b16 %v10468, %v10466
    %v10541 = vpack.c.b16 %v10471, %v10469
    %v10542 = vpack.c.b16 %v10472, %v10470
    %v10543 = vpack.c.b16 %v10475, %v10473
    %v10544 = vpack.c.b16 %v10476, %v10474
    %v10545 = vpack.c.b16 %v10479, %v10477
    %v10546 = vpack.c.b16 %v10480, %v10478
    %v10547 = vpack.c.b16 %v10483, %v10481
    %v10548 = vpack.c.b16 %v10484, %v10482
    %10613 = vmatprep.subr.bf16.mxu0 %v10500
    %10614 = vmatpush1.bf16.msra.mxu0 %v10499
    %10615 = vmatprep.subr.bf16.mxu0 %v10498
    %10616 = vmatpush1.bf16.msra.mxu0 %v10497
    %10617 = vmatprep.subr.bf16.mxu0 %v10496
    %10618 = vmatpush1.bf16.msra.mxu0 %v10495
    %10619 = vmatprep.subr.bf16.mxu0 %v10494
    %10620 = vmatpush1.bf16.msra.mxu0 %v10493
    %10621 = vmatprep.subr.bf16.mxu0 %v10492
    %10622 = vmatpush1.bf16.msra.mxu0 %v10491
    %10623 = vmatprep.subr.bf16.mxu0 %v10490
    %10624 = vmatpush1.bf16.msra.mxu0 %v10489
    %10625 = vmatprep.subr.bf16.mxu0 %v10488
    %10626 = vmatpush1.bf16.msra.mxu0 %v10487
    %10627 = vmatprep.subr.bf16.mxu0 %v10486
    %10628 = vmatpush1.bf16.msra.mxu0 %v10485
    %10629 = vmatprep.subr.bf16.mxu0 %v10516
    %10630 = vmatpush2.bf16.msra.mxu0 %v10515
    %10631 = vmatprep.subr.bf16.mxu0 %v10514
    %10632 = vmatpush2.bf16.msra.mxu0 %v10513
    %10633 = vmatprep.subr.bf16.mxu0 %v10512
    %10634 = vmatpush2.bf16.msra.mxu0 %v10511
    %10635 = vmatprep.subr.bf16.mxu0 %v10510
    %10636 = vmatpush2.bf16.msra.mxu0 %v10509
    %10637 = vmatprep.subr.bf16.mxu0 %v10508
    %10638 = vmatpush2.bf16.msra.mxu0 %v10507
    %10639 = vmatprep.subr.bf16.mxu0 %v10506
    %10640 = vmatpush2.bf16.msra.mxu0 %v10505
    %10641 = vmatprep.subr.bf16.mxu0 %v10504
    %10642 = vmatpush2.bf16.msra.mxu0 %v10503
    %10643 = vmatprep.subr.bf16.mxu0 %v10502
    %10644 = vmatpush2.bf16.msra.mxu0 %v10501
    %10645 = vmatprep.mubr.bf16.mxu0 %v10214
    %10646 = vmatmul.mubr.bf16.gmra.mxu0 %v10213
    %v10647 = vpop.f32.mrf.mxu0
    %v10648 = vadd.f32 %v10286, %v10647
    %v10649 = vpop.f32.mrf.mxu0
    %v10650 = vadd.f32 %v10290, %v10649
    %v10651 = vpop.f32.mrf.mxu0
    %v10652 = vpop.f32.mrf.mxu0
    %10653 = vdwg.mxu0
    %10654 = vmatprep.subr.bf16.mxu0 %v10532
    %10655 = vmatpush1.bf16.msra.mxu0 %v10531
    %10656 = vmatprep.subr.bf16.mxu0 %v10530
    %10657 = vmatpush1.bf16.msra.mxu0 %v10529
    %10658 = vmatprep.subr.bf16.mxu0 %v10528
    %10659 = vmatpush1.bf16.msra.mxu0 %v10527
    %10660 = vmatprep.subr.bf16.mxu0 %v10526
    %10661 = vmatpush1.bf16.msra.mxu0 %v10525
    %10662 = vmatprep.subr.bf16.mxu0 %v10524
    %10663 = vmatpush1.bf16.msra.mxu0 %v10523
    %10664 = vmatprep.subr.bf16.mxu0 %v10522
    %10665 = vmatpush1.bf16.msra.mxu0 %v10521
    %10666 = vmatprep.subr.bf16.mxu0 %v10520
    %10667 = vmatpush1.bf16.msra.mxu0 %v10519
    %10668 = vmatprep.subr.bf16.mxu0 %v10518
    %10669 = vmatpush1.bf16.msra.mxu0 %v10517
    %10670 = vmatprep.subr.bf16.mxu0 %v10548
    %10671 = vmatpush2.bf16.msra.mxu0 %v10547
    %10672 = vmatprep.subr.bf16.mxu0 %v10546
    %10673 = vmatpush2.bf16.msra.mxu0 %v10545
    %10674 = vmatprep.subr.bf16.mxu0 %v10544
    %10675 = vmatpush2.bf16.msra.mxu0 %v10543
    %10676 = vmatprep.subr.bf16.mxu0 %v10542
    %10677 = vmatpush2.bf16.msra.mxu0 %v10541
    %10678 = vmatprep.subr.bf16.mxu0 %v10540
    %10679 = vmatpush2.bf16.msra.mxu0 %v10539
    %10680 = vmatprep.subr.bf16.mxu0 %v10538
    %10681 = vmatpush2.bf16.msra.mxu0 %v10537
    %10682 = vmatprep.subr.bf16.mxu0 %v10536
    %10683 = vmatpush2.bf16.msra.mxu0 %v10535
    %10684 = vmatprep.subr.bf16.mxu0 %v10534
    %10685 = vmatpush2.bf16.msra.mxu0 %v10533
    %10686 = vmatprep.mubr.bf16.mxu0 %v10216
    %10687 = vmatmul.mubr.bf16.gmra.mxu0 %v10215
    %v10688 = vpop.f32.mrf.mxu0
    %v10689 = vadd.f32 %v10648, %v10688
    %v10690 = vpop.f32.mrf.mxu0
    %v10691 = vadd.f32 %v10650, %v10690
    %v10692 = vpop.f32.mrf.mxu0
    %v10693 = vpop.f32.mrf.mxu0
    %10694 = vdwg.mxu0
    %v10695 = vmax.f32 %v10689, 0.0
    %v10696 = vmax.f32 %v10691, 0.0
    %v10699 = vcombine.low %v10695, %v10696
    %v10701 = vunpack.c.l.s4 1983009808
    %v10702 = vunpack.c.0.s8 %v10701
    %v10703 = vlaneseq
    %v10704 = vshrl.u32 %v10703, 7
    %v10705 = vsub.s32 %v10702, %v10704
    %v10706 = vrot.slane %v10699, %v10705
    %10708 = vst [vmem:[#allocation19] sm:$0xf] %v10706
    %v10709 = vpack.c.bf16 %v10695, %v10695
    %v10710 = vpack.c.bf16 %v10696, %v10696
    %v10711 = vld [vmem:[%s9] sm:$0xf]
    %v10712 = vld [vmem:[%s9 + $0x4] sm:$0xf]
    %v10713 = vld [vmem:[%s9 + $0x8] sm:$0xf]
    %v10714 = vld [vmem:[%s9 + $0xc] sm:$0xf]
    %v10715 = vld [vmem:[%s9 + $0x10] sm:$0xf]
    %v10716 = vld [vmem:[%s9 + $0x14] sm:$0xf]
    %v10717 = vld [vmem:[%s9 + $0x18] sm:$0xf]
    %v10718 = vld [vmem:[%s9 + $0x1c] sm:$0xf]
    %v10719 = vld [vmem:[%s9 + $0x20] sm:$0xf]
    %v10720 = vld [vmem:[%s9 + $0x24] sm:$0xf]
    %v10721 = vld [vmem:[%s9 + $0x28] sm:$0xf]
    %v10722 = vld [vmem:[%s9 + $0x2c] sm:$0xf]
    %v10723 = vld [vmem:[%s9 + $0x30] sm:$0xf]
    %v10724 = vld [vmem:[%s9 + $0x34] sm:$0xf]
    %v10725 = vld [vmem:[%s9 + $0x38] sm:$0xf]
    %v10726 = vld [vmem:[%s9 + $0x3c] sm:$0xf]
    %v10727 = vld [vmem:[%s9 + $0x40] sm:$0xf]
    %v10728 = vld [vmem:[%s9 + $0x44] sm:$0xf]
    %v10729 = vld [vmem:[%s9 + $0x48] sm:$0xf]
    %v10730 = vld [vmem:[%s9 + $0x4c] sm:$0xf]
    %v10731 = vld [vmem:[%s9 + $0x50] sm:$0xf]
    %v10732 = vld [vmem:[%s9 + $0x54] sm:$0xf]
    %v10733 = vld [vmem:[%s9 + $0x58] sm:$0xf]
    %v10734 = vld [vmem:[%s9 + $0x5c] sm:$0xf]
    %v10735 = vld [vmem:[%s9 + $0x60] sm:$0xf]
    %v10736 = vld [vmem:[%s9 + $0x64] sm:$0xf]
    %v10737 = vld [vmem:[%s9 + $0x68] sm:$0xf]
    %v10738 = vld [vmem:[%s9 + $0x6c] sm:$0xf]
    %v10739 = vld [vmem:[%s9 + $0x70] sm:$0xf]
    %v10740 = vld [vmem:[%s9 + $0x74] sm:$0xf]
    %v10741 = vld [vmem:[%s9 + $0x78] sm:$0xf]
    %v10742 = vld [vmem:[%s9 + $0x7c] sm:$0xf]
    %v10743 = vld [vmem:[#allocation17] sm:$0x1]
    %v10745 = vlaneseq
    %v10746 = vshrl.u32 %v10745, 7
    %v10747 = vsub.s32 0, %v10746
    %v10748 = vrot.slane %v10743, %v10747
    %v10782 = vunpack.c.l.b16 %v10711
    %v10783 = vunpack.c.l.b16 %v10712
    %v10784 = vunpack.c.l.b16 %v10713
    %v10785 = vunpack.c.l.b16 %v10714
    %v10786 = vunpack.c.l.b16 %v10715
    %v10787 = vunpack.c.l.b16 %v10716
    %v10788 = vunpack.c.l.b16 %v10717
    %v10789 = vunpack.c.l.b16 %v10718
    %v10790 = vunpack.c.l.b16 %v10719
    %v10791 = vunpack.c.l.b16 %v10720
    %v10792 = vunpack.c.l.b16 %v10721
    %v10793 = vunpack.c.l.b16 %v10722
    %v10794 = vunpack.c.l.b16 %v10723
    %v10795 = vunpack.c.l.b16 %v10724
    %v10796 = vunpack.c.l.b16 %v10725
    %v10797 = vunpack.c.l.b16 %v10726
    %v10798 = vunpack.c.l.b16 %v10727
    %v10799 = vunpack.c.l.b16 %v10728
    %v10800 = vunpack.c.l.b16 %v10729
    %v10801 = vunpack.c.l.b16 %v10730
    %v10802 = vunpack.c.l.b16 %v10731
    %v10803 = vunpack.c.l.b16 %v10732
    %v10804 = vunpack.c.l.b16 %v10733
    %v10805 = vunpack.c.l.b16 %v10734
    %v10806 = vunpack.c.l.b16 %v10735
    %v10807 = vunpack.c.l.b16 %v10736
    %v10808 = vunpack.c.l.b16 %v10737
    %v10809 = vunpack.c.l.b16 %v10738
    %v10810 = vunpack.c.l.b16 %v10739
    %v10811 = vunpack.c.l.b16 %v10740
    %v10812 = vunpack.c.l.b16 %v10741
    %v10813 = vunpack.c.l.b16 %v10742
    %v10814 = vpack.c.b16 %v10783, %v10782
    %v10815 = vpack.c.b16 %v10785, %v10784
    %v10816 = vpack.c.b16 %v10787, %v10786
    %v10817 = vpack.c.b16 %v10789, %v10788
    %v10818 = vpack.c.b16 %v10791, %v10790
    %v10819 = vpack.c.b16 %v10793, %v10792
    %v10820 = vpack.c.b16 %v10795, %v10794
    %v10821 = vpack.c.b16 %v10797, %v10796
    %v10822 = vpack.c.b16 %v10799, %v10798
    %v10823 = vpack.c.b16 %v10801, %v10800
    %v10824 = vpack.c.b16 %v10803, %v10802
    %v10825 = vpack.c.b16 %v10805, %v10804
    %v10826 = vpack.c.b16 %v10807, %v10806
    %v10827 = vpack.c.b16 %v10809, %v10808
    %v10828 = vpack.c.b16 %v10811, %v10810
    %v10829 = vpack.c.b16 %v10813, %v10812
    %10846 = vmatprep.subr.bf16.mxu0 0
    %10847 = vmatpush1.bf16.msra.mxu0 %v10821
    %10848 = vmatprep.subr.bf16.mxu0 0
    %10849 = vmatpush1.bf16.msra.mxu0 %v10820
    %10850 = vmatprep.subr.bf16.mxu0 0
    %10851 = vmatpush1.bf16.msra.mxu0 %v10819
    %10852 = vmatprep.subr.bf16.mxu0 0
    %10853 = vmatpush1.bf16.msra.mxu0 %v10818
    %10854 = vmatprep.subr.bf16.mxu0 0
    %10855 = vmatpush1.bf16.msra.mxu0 %v10817
    %10856 = vmatprep.subr.bf16.mxu0 0
    %10857 = vmatpush1.bf16.msra.mxu0 %v10816
    %10858 = vmatprep.subr.bf16.mxu0 0
    %10859 = vmatpush1.bf16.msra.mxu0 %v10815
    %10860 = vmatprep.subr.bf16.mxu0 0
    %10861 = vmatpush1.bf16.msra.mxu0 %v10814
    %10862 = vmatprep.subr.bf16.mxu0 0
    %10863 = vmatpush2.bf16.msra.mxu0 %v10829
    %10864 = vmatprep.subr.bf16.mxu0 0
    %10865 = vmatpush2.bf16.msra.mxu0 %v10828
    %10866 = vmatprep.subr.bf16.mxu0 0
    %10867 = vmatpush2.bf16.msra.mxu0 %v10827
    %10868 = vmatprep.subr.bf16.mxu0 0
    %10869 = vmatpush2.bf16.msra.mxu0 %v10826
    %10870 = vmatprep.subr.bf16.mxu0 0
    %10871 = vmatpush2.bf16.msra.mxu0 %v10825
    %10872 = vmatprep.subr.bf16.mxu0 0
    %10873 = vmatpush2.bf16.msra.mxu0 %v10824
    %10874 = vmatprep.subr.bf16.mxu0 0
    %10875 = vmatpush2.bf16.msra.mxu0 %v10823
    %10876 = vmatprep.subr.bf16.mxu0 0
    %10877 = vmatpush2.bf16.msra.mxu0 %v10822
    %10878 = vmatprep.mubr.bf16.mxu0 %v10710
    %10879 = vmatmul.mubr.bf16.gmra.mxu0 %v10709
    %v10880 = vpop.f32.mrf.mxu0
    %v10881 = vadd.f32 %v10748, %v10880
    %v10882 = vpop.f32.mrf.mxu0
    %v10883 = vpop.f32.mrf.mxu0
    %v10884 = vpop.f32.mrf.mxu0
    %10885 = vdwg.mxu0
    %v10886 = vmul.f32 %v10881, 0.5
    %v10887 = vtanh.pop %v10886
    %v10888 = vadd.f32 %v10887, 1.0
    %v10889 = vmul.f32 %v10888, 0.5
    %vm10890 = vcmask 41984
    %10891 = vst.msk [vmem:[#allocation20] sm:$0x3] %vm10890, %v10889
    // Predicated region
    $region86: #{network.1} parent=1 // pred_check
      _
    $region87: #{network.1} parent=1 // pred_check_branch
      %10893 = sbr.rel (0) target = $region89
    $region88: #{network.1} parent=1 // pred_region
      %s10895 = ssub.s32 64, 64
      %10896 = vsyncadd [#allocation4], %s10895
      %s10898 = sshll.u32 [#allocation19], 4
      %s10899 = int_to_ptr.vmem [resolvable:$true] %s10898
      %10901 = dma.vmem_to_hbm [thread:$0]  %s10899, 64, %s11, [#allocation4]
    $region89: #{network.1} parent=1 // pred_fallthru
      _
    // Predicated region
    $region90: #{network.1} parent=1 // pred_check
      _
    $region91: #{network.1} parent=1 // pred_check_branch
      %10903 = sbr.rel (0) target = $region93
    $region92: #{network.1} parent=1 // pred_region
      %s10905 = ssub.s32 32, 32
      %10906 = vsyncadd [#allocation21], %s10905
      %s10908 = sshll.u32 [#allocation20], 4
      %s10909 = int_to_ptr.vmem [resolvable:$true] %s10908
      %10911 = dma.vmem_to_hbm [thread:$0]  %s10909, 32, %s12, [#allocation21]
    $region93: #{network.1} parent=1 // pred_fallthru
      _
    // Predicated region
    $region94: #{network.1} parent=1 // pred_check
      _
    $region95: #{network.1} parent=1 // pred_check_branch
      %10913 = sbr.rel (0) target = $region97
    $region96: #{network.1} parent=1 // pred_region
      %10914 = dma.done [#allocation4], 64
    $region97: #{network.1} parent=1 // pred_fallthru
      _
    // Predicated region
    $region98: #{network.1} parent=1 // pred_check
      _
    $region99: #{network.1} parent=1 // pred_check_branch
      %10916 = sbr.rel (0) target = $region101
    $region100: #{network.1} parent=1 // pred_region
      %10917 = dma.done [#allocation21], 32
    $region101: #{network.1} parent=1 // pred_fallthru
      _
    %10918 = vsyncpa [#allocation3], 1
    %10919 = vsyncpa [#allocation6], 1
    %10920 = vsyncpa [#allocation9], 1
    %10921 = vsyncpa [#allocation12], 1
    %10922 = vsyncpa [#allocation15], 1
    %10923 = vsyncpa [#allocation18], 1
    %10924 = vsyncpa [#allocation4], 1
    %10925 = vsyncpa [#allocation21], 1

</llo_original>
